<compile_context>
chip_gen: v6e
topology: v6e:2x2x1
jax: 0.10.0
libtpu: 0.0.40
codegen_flags: <defaults>
</compile_context>

<pallas_src>
import jax
import jax.numpy as jnp
from jax.experimental import pallas as pl
from jax.experimental.pallas import tpu as pltpu

# --- module hyperparameters (from the PyTorch file) ---
HIDDEN_SIZE = 8
INPUT_SIZE = 8
NUM_CLASSES = 5
NUM_LAYERS = 3
FC1_OUT = 128


def lstm1_kernel(x_ref, w_ih_ref, w_hh_ref, b_ref,
                 fc1_w_ref, fc1_b_ref, fc2_w_ref, fc2_b_ref, out_ref):
    """Layer-major LSTM over time-major input (T, B, I).

    Gate order is PyTorch's (i, f, g, o); the g-gate columns of w_ih / w_hh / b are
    pre-scaled by 2 in the wrapper so tanh(g) = 2*sigmoid(2g) - 1 and a single sigmoid
    covers all four gates (2 EUP pushes per step instead of 3).
    """
    T, B, I = x_ref.shape
    H = HIDDEN_SIZE
    L = NUM_LAYERS
    f32 = jnp.float32

    # Time-major flat sequence, rows ordered (t, b) -> contiguous per-step slices.
    seq = x_ref[...].reshape(T * B, I)

    h_last = None
    for l in range(L):                               # static unroll over layers
        # ---- weights for this layer, read ONCE (outside the time loop) ----
        w_ih_l = w_ih_ref[l]                         # (in, 4H)
        w_hh_l = w_hh_ref[l]                         # (H, 4H)
        b_l = b_ref[l]                               # (1, 4H)

        # ---- ONE batched input-to-hidden projection over all timesteps (one MXU push) ----
        pre = jnp.dot(seq, w_ih_l, preferred_element_type=f32) + b_l    # (T*B, 4H)
        pre_ts = [pre[t * B:(t + 1) * B, :] for t in range(T)]          # static slices

        # Recurrent weight rows, pre-broadcast once per layer (hoisted out of the loop;
        # JAX does not CSE broadcast_in_dim inside the unrolled time loop).
        w_hh_rows = [jnp.broadcast_to(w_hh_l[k:k + 1, :], (B, 4 * H)) for k in range(H)]

        # ---- serial recurrence: h/c live in vregs; no MXU, no VMEM on the chain ----
        h = jnp.zeros((B, H), f32)
        c = jnp.zeros((B, H), f32)
        hs = []
        for t in range(T):
            # h @ w_hh as an H=8-term VPU broadcast-MAC, tree-summed (3 adds deep)
            parts = [h[:, k:k + 1] * w_hh_rows[k] for k in range(H)]
            while len(parts) > 1:
                parts = [parts[j] + parts[j + 1] for j in range(0, len(parts), 2)]
            gates = pre_ts[t] + parts[0]                                 # (B, 4H)

            s = jax.nn.sigmoid(gates)                # single EUP push over all 4 gates
            i_g = s[:, 0 * H:1 * H]
            f_g = s[:, 1 * H:2 * H]
            g_g = 2.0 * s[:, 2 * H:3 * H] - 1.0      # tanh(g): g columns pre-scaled by 2
            o_g = s[:, 3 * H:4 * H]
            c = f_g * c + i_g * g_g
            h = o_g * jnp.tanh(c)                    # second (and last) EUP push
            if l < L - 1:
                hs.append(h)
        h_last = h

        if l < L - 1:
            # Stack the hidden sequence at the layer boundary (values only; never
            # touches VMEM scratch, no per-step masked stores). Rows stay (t, b)-ordered.
            seq = jnp.stack(hs, axis=0).reshape(T * B, H)

    # ---- head: fc_1 -> ReLU -> fc -> LogSoftmax (fused, no intermediate spill) ----
    z1 = jnp.dot(h_last, fc1_w_ref[...], preferred_element_type=f32) + fc1_b_ref[...]
    z1 = jnp.maximum(z1, 0.0)
    z2 = jnp.dot(z1, fc2_w_ref[...], preferred_element_type=f32) + fc2_b_ref[...]
    z2 = z2 - jnp.max(z2, axis=-1, keepdims=True)
    out_ref[...] = z2 - jnp.log(jnp.sum(jnp.exp(z2), axis=-1, keepdims=True))


def lstm1_forward(x, params, *, batch_block=None):
    """x: (B, T, I) batch-first float32 (PyTorch layout). Returns (B, 5) log-probs."""
    B, T, I = x.shape
    assert I == INPUT_SIZE
    (w_ih, w_hh, b, fc1_w, fc1_b, fc2_w, fc2_b) = params
    H, L, C, F1 = HIDDEN_SIZE, NUM_LAYERS, NUM_CLASSES, FC1_OUT

    # Grid policy: one program covering the whole batch (v5e/v6e have one TensorCore,
    # so extra grid steps are pure serial overhead).  On v7x with B >= 16, pass
    # batch_block = B // 2 (8-aligned) so grid=(2,) + "parallel" puts one half-batch
    # on each TensorCore.
    if batch_block is None:
        batch_block = B
    assert B % batch_block == 0
    assert batch_block == B or batch_block % 8 == 0, "sub-batch blocks must be 8-aligned"
    grid = (B // batch_block,)

    # One XLA transpose in the wrapper (outside the kernel): time-major input.
    x_t = jnp.transpose(x, (1, 0, 2))                                   # (T, B, I)

    def full(shape):                                 # whole-array block, fixed at origin
        n = len(shape)
        return pl.BlockSpec(shape, lambda i: (0,) * n)

    out = pl.pallas_call(
        lstm1_kernel,
        out_shape=jax.ShapeDtypeStruct((B, C), jnp.float32),
        grid=grid,
        in_specs=[
            pl.BlockSpec((T, batch_block, I), lambda i: (0, i, 0)),      # x (time-major)
            full((L, I, 4 * H)),                                         # w_ih (scaled g)
            full((L, H, 4 * H)),                                         # w_hh (scaled g)
            full((L, 1, 4 * H)),                                         # b (summed, scaled g)
            full((H, F1)),                                               # fc1_w
            full((1, F1)),                                               # fc1_b
            full((F1, C)),                                               # fc2_w
            full((1, C)),                                                # fc2_b
        ],
        out_specs=pl.BlockSpec((batch_block, C), lambda i: (i, 0)),
        compiler_params=pltpu.CompilerParams(
            dimension_semantics=("parallel",),       # batch blocks are independent
        ),
    )(x_t, w_ih, w_hh, b, fc1_w, fc1_b, fc2_w, fc2_b)
    return out


# ----------------------------------------------------------------------------------
# Parameter handling: raw params follow PyTorch layout/gate order (i, f, g, o).
# prepare_params() transposes weights, sums the two biases, and folds a x2 scale into
# the g-gate columns (tanh(g) = 2*sigmoid(2g) - 1 inside the kernel).
# ----------------------------------------------------------------------------------
def init_params(key):
    H, I, C, L, F1 = HIDDEN_SIZE, INPUT_SIZE, NUM_CLASSES, NUM_LAYERS, FC1_OUT
    kH = 1.0 / jnp.sqrt(jnp.float32(H))
    kF = 1.0 / jnp.sqrt(jnp.float32(F1))
    keys = jax.random.split(key, 8)
    u = lambda kk, shp, bound: jax.random.uniform(kk, shp, jnp.float32, -bound, bound)

    # PyTorch LSTM layout: (4H, in) / (4H, H), gate order (i, f, g, o). (I == H here.)
    w_ih = u(keys[0], (L, 4 * H, I), kH)
    w_hh = u(keys[1], (L, 4 * H, H), kH)
    b_ih = u(keys[2], (L, 4 * H), kH)
    b_hh = u(keys[3], (L, 4 * H), kH)

    fc1_w = u(keys[4], (F1, H), kH)          # nn.Linear(H, 128).weight
    fc1_b = u(keys[5], (F1,), kH)
    fc2_w = u(keys[6], (C, F1), kF)          # nn.Linear(128, 5).weight
    fc2_b = u(keys[7], (C,), kF)
    return (w_ih, w_hh, b_ih, b_hh, fc1_w, fc1_b, fc2_w, fc2_b)


def prepare_params(raw):
    (w_ih, w_hh, b_ih, b_hh, fc1_w, fc1_b, fc2_w, fc2_b) = raw
    H = HIDDEN_SIZE
    # Fold a x2 scale into the g-gate columns (PyTorch order: g is columns 2H:3H).
    scale = jnp.ones((4 * H,), jnp.float32).at[2 * H:3 * H].set(2.0)
    w_ih_k = jnp.transpose(w_ih, (0, 2, 1)) * scale        # (L, in, 4H)
    w_hh_k = jnp.transpose(w_hh, (0, 2, 1)) * scale        # (L, H, 4H)
    b_k = ((b_ih + b_hh) * scale)[:, None, :]              # (L, 1, 4H)
    return (w_ih_k, w_hh_k, b_k,
            fc1_w.T, fc1_b[None, :],                       # (H, 128), (1, 128)
            fc2_w.T, fc2_b[None, :])                       # (128, 5), (1, 5)


def lstm1_reference(x, raw):
    """Pure-JAX reference mirroring PyTorch nn.LSTM + head semantics exactly."""
    (w_ih, w_hh, b_ih, b_hh, fc1_w, fc1_b, fc2_w, fc2_b) = raw
    B, T, _ = x.shape
    H, L = HIDDEN_SIZE, NUM_LAYERS
    h = [jnp.zeros((B, H), jnp.float32) for _ in range(L)]
    c = [jnp.zeros((B, H), jnp.float32) for _ in range(L)]
    for t in range(T):
        inp = x[:, t, :]
        for l in range(L):
            gates = inp @ w_ih[l].T + h[l] @ w_hh[l].T + b_ih[l] + b_hh[l]
            i_g = jax.nn.sigmoid(gates[:, 0 * H:1 * H])
            f_g = jax.nn.sigmoid(gates[:, 1 * H:2 * H])
            g_g = jnp.tanh(gates[:, 2 * H:3 * H])
            o_g = jax.nn.sigmoid(gates[:, 3 * H:4 * H])
            c[l] = f_g * c[l] + i_g * g_g
            h[l] = o_g * jnp.tanh(c[l])
            inp = h[l]
    out = jnp.maximum(h[-1] @ fc1_w.T + fc1_b, 0.0) @ fc2_w.T + fc2_b
    return jax.nn.log_softmax(out, axis=1)


if __name__ == "__main__":
    key = jax.random.PRNGKey(0)
    pkey, xkey = jax.random.split(key)

    raw = init_params(pkey)
    params = prepare_params(raw)

    B, T = 2, 16  # small test shapes (module's seq_length=1000 is just a stored attribute)
    x = jax.random.normal(xkey, (B, T, INPUT_SIZE), jnp.float32)

    out = jax.block_until_ready(lstm1_forward(x, params))
    ref = jax.block_until_ready(lstm1_reference(x, raw))

    assert out.shape == (B, NUM_CLASSES)
    assert jnp.all(jnp.isfinite(out))
    assert jnp.allclose(out, ref, rtol=1e-3, atol=1e-3), (out, ref)

    print("KERNEL_OK")
</pallas_src>

<mosaic_0001>
module attributes {stable_mosaic.version = 11 : i64} {
  func.func @lstm1_kernel(%arg0: i32, %arg1: memref<16x2x8xf32, #tpu.memory_space<vmem>>, %arg2: memref<3x8x32xf32, #tpu.memory_space<vmem>>, %arg3: memref<3x8x32xf32, #tpu.memory_space<vmem>>, %arg4: memref<3x1x32xf32, #tpu.memory_space<vmem>>, %arg5: memref<8x128xf32, #tpu.memory_space<vmem>>, %arg6: memref<1x128xf32, #tpu.memory_space<vmem>>, %arg7: memref<128x5xf32, #tpu.memory_space<vmem>>, %arg8: memref<1x5xf32, #tpu.memory_space<vmem>>, %arg9: memref<2x5xf32, #tpu.memory_space<vmem>>) attributes {dimension_semantics = [#tpu.dimension_semantics<parallel>], iteration_bounds = array<i64: 1>, scalar_prefetch = 0 : i64, scratch_operands = 0 : i64, tpu.core_type = #tpu.core_type<tc>, window_params = [{transform_indices = @transform_0, window_bounds = array<i64: 16, 2, 8>}, {pipeline_mode = #tpu.pipeline_mode<synchronous>, transform_indices = @transform_1, window_bounds = array<i64: 3, 8, 32>}, {pipeline_mode = #tpu.pipeline_mode<synchronous>, transform_indices = @transform_2, window_bounds = array<i64: 3, 8, 32>}, {pipeline_mode = #tpu.pipeline_mode<synchronous>, transform_indices = @transform_3, window_bounds = array<i64: 3, 1, 32>}, {pipeline_mode = #tpu.pipeline_mode<synchronous>, transform_indices = @transform_4, window_bounds = array<i64: 8, 128>}, {pipeline_mode = #tpu.pipeline_mode<synchronous>, transform_indices = @transform_5, window_bounds = array<i64: 1, 128>}, {pipeline_mode = #tpu.pipeline_mode<synchronous>, transform_indices = @transform_6, window_bounds = array<i64: 128, 5>}, {pipeline_mode = #tpu.pipeline_mode<synchronous>, transform_indices = @transform_7, window_bounds = array<i64: 1, 5>}, {transform_indices = @transform_8, window_bounds = array<i64: 2, 5>}]} {
    %c0 = arith.constant 0 : index
    %c0_0 = arith.constant 0 : index
    %c0_1 = arith.constant 0 : index
    %0 = vector.load %arg1[%c0, %c0_0, %c0_1] : memref<16x2x8xf32, #tpu.memory_space<vmem>>, vector<16x2x8xf32>
    %1 = vector.shape_cast %0 : vector<16x2x8xf32> to vector<32x8xf32>
    %c0_2 = arith.constant 0 : index
    %c0_3 = arith.constant 0 : index
    %c0_4 = arith.constant 0 : index
    %2 = vector.load %arg2[%c0_2, %c0_3, %c0_4] : memref<3x8x32xf32, #tpu.memory_space<vmem>>, vector<1x8x32xf32>
    %3 = vector.shape_cast %2 : vector<1x8x32xf32> to vector<8x32xf32>
    %c0_5 = arith.constant 0 : index
    %c0_6 = arith.constant 0 : index
    %c0_7 = arith.constant 0 : index
    %4 = vector.load %arg3[%c0_5, %c0_6, %c0_7] : memref<3x8x32xf32, #tpu.memory_space<vmem>>, vector<1x8x32xf32>
    %5 = vector.shape_cast %4 : vector<1x8x32xf32> to vector<8x32xf32>
    %c0_8 = arith.constant 0 : index
    %c0_9 = arith.constant 0 : index
    %c0_10 = arith.constant 0 : index
    %6 = vector.load %arg4[%c0_8, %c0_9, %c0_10] : memref<3x1x32xf32, #tpu.memory_space<vmem>>, vector<1x1x32xf32>
    %7 = vector.shape_cast %6 : vector<1x1x32xf32> to vector<1x32xf32>
    %cst = arith.constant dense<0.000000e+00> : vector<32x32xf32>
    %8 = tpu.matmul %1, %3, %cst {dimension_numbers = #tpu.dot_dimension_numbers<[1], [0], [0], [1], [0, 0, 1, 1], [], []>} : vector<32x8xf32>, vector<8x32xf32>, vector<32x32xf32> -> vector<32x32xf32>
    %9 = vector.broadcast %7 : vector<1x32xf32> to vector<32x32xf32>
    %10 = arith.addf %8, %9 : vector<32x32xf32>
    %11 = vector.extract_strided_slice %10 {offsets = [0, 0], sizes = [2, 32], strides = [1, 1]} : vector<32x32xf32> to vector<2x32xf32>
    %12 = vector.extract_strided_slice %10 {offsets = [2, 0], sizes = [2, 32], strides = [1, 1]} : vector<32x32xf32> to vector<2x32xf32>
    %13 = vector.extract_strided_slice %10 {offsets = [4, 0], sizes = [2, 32], strides = [1, 1]} : vector<32x32xf32> to vector<2x32xf32>
    %14 = vector.extract_strided_slice %10 {offsets = [6, 0], sizes = [2, 32], strides = [1, 1]} : vector<32x32xf32> to vector<2x32xf32>
    %15 = vector.extract_strided_slice %10 {offsets = [8, 0], sizes = [2, 32], strides = [1, 1]} : vector<32x32xf32> to vector<2x32xf32>
    %16 = vector.extract_strided_slice %10 {offsets = [10, 0], sizes = [2, 32], strides = [1, 1]} : vector<32x32xf32> to vector<2x32xf32>
    %17 = vector.extract_strided_slice %10 {offsets = [12, 0], sizes = [2, 32], strides = [1, 1]} : vector<32x32xf32> to vector<2x32xf32>
    %18 = vector.extract_strided_slice %10 {offsets = [14, 0], sizes = [2, 32], strides = [1, 1]} : vector<32x32xf32> to vector<2x32xf32>
    %19 = vector.extract_strided_slice %10 {offsets = [16, 0], sizes = [2, 32], strides = [1, 1]} : vector<32x32xf32> to vector<2x32xf32>
    %20 = vector.extract_strided_slice %10 {offsets = [18, 0], sizes = [2, 32], strides = [1, 1]} : vector<32x32xf32> to vector<2x32xf32>
    %21 = vector.extract_strided_slice %10 {offsets = [20, 0], sizes = [2, 32], strides = [1, 1]} : vector<32x32xf32> to vector<2x32xf32>
    %22 = vector.extract_strided_slice %10 {offsets = [22, 0], sizes = [2, 32], strides = [1, 1]} : vector<32x32xf32> to vector<2x32xf32>
    %23 = vector.extract_strided_slice %10 {offsets = [24, 0], sizes = [2, 32], strides = [1, 1]} : vector<32x32xf32> to vector<2x32xf32>
    %24 = vector.extract_strided_slice %10 {offsets = [26, 0], sizes = [2, 32], strides = [1, 1]} : vector<32x32xf32> to vector<2x32xf32>
    %25 = vector.extract_strided_slice %10 {offsets = [28, 0], sizes = [2, 32], strides = [1, 1]} : vector<32x32xf32> to vector<2x32xf32>
    %26 = vector.extract_strided_slice %10 {offsets = [30, 0], sizes = [2, 32], strides = [1, 1]} : vector<32x32xf32> to vector<2x32xf32>
    %27 = vector.extract_strided_slice %5 {offsets = [0, 0], sizes = [1, 32], strides = [1, 1]} : vector<8x32xf32> to vector<1x32xf32>
    %28 = vector.shape_cast %27 : vector<1x32xf32> to vector<1x32xf32>
    %29 = vector.broadcast %28 : vector<1x32xf32> to vector<2x32xf32>
    %30 = vector.extract_strided_slice %5 {offsets = [1, 0], sizes = [1, 32], strides = [1, 1]} : vector<8x32xf32> to vector<1x32xf32>
    %31 = vector.shape_cast %30 : vector<1x32xf32> to vector<1x32xf32>
    %32 = vector.broadcast %31 : vector<1x32xf32> to vector<2x32xf32>
    %33 = vector.extract_strided_slice %5 {offsets = [2, 0], sizes = [1, 32], strides = [1, 1]} : vector<8x32xf32> to vector<1x32xf32>
    %34 = vector.shape_cast %33 : vector<1x32xf32> to vector<1x32xf32>
    %35 = vector.broadcast %34 : vector<1x32xf32> to vector<2x32xf32>
    %36 = vector.extract_strided_slice %5 {offsets = [3, 0], sizes = [1, 32], strides = [1, 1]} : vector<8x32xf32> to vector<1x32xf32>
    %37 = vector.shape_cast %36 : vector<1x32xf32> to vector<1x32xf32>
    %38 = vector.broadcast %37 : vector<1x32xf32> to vector<2x32xf32>
    %39 = vector.extract_strided_slice %5 {offsets = [4, 0], sizes = [1, 32], strides = [1, 1]} : vector<8x32xf32> to vector<1x32xf32>
    %40 = vector.shape_cast %39 : vector<1x32xf32> to vector<1x32xf32>
    %41 = vector.broadcast %40 : vector<1x32xf32> to vector<2x32xf32>
    %42 = vector.extract_strided_slice %5 {offsets = [5, 0], sizes = [1, 32], strides = [1, 1]} : vector<8x32xf32> to vector<1x32xf32>
    %43 = vector.shape_cast %42 : vector<1x32xf32> to vector<1x32xf32>
    %44 = vector.broadcast %43 : vector<1x32xf32> to vector<2x32xf32>
    %45 = vector.extract_strided_slice %5 {offsets = [6, 0], sizes = [1, 32], strides = [1, 1]} : vector<8x32xf32> to vector<1x32xf32>
    %46 = vector.shape_cast %45 : vector<1x32xf32> to vector<1x32xf32>
    %47 = vector.broadcast %46 : vector<1x32xf32> to vector<2x32xf32>
    %48 = vector.extract_strided_slice %5 {offsets = [7, 0], sizes = [1, 32], strides = [1, 1]} : vector<8x32xf32> to vector<1x32xf32>
    %49 = vector.shape_cast %48 : vector<1x32xf32> to vector<1x32xf32>
    %50 = vector.broadcast %49 : vector<1x32xf32> to vector<2x32xf32>
    %cst_11 = arith.constant 0.000000e+00 : f32
    %51 = vector.broadcast %cst_11 : f32 to vector<2x8xf32>
    %cst_12 = arith.constant 0.000000e+00 : f32
    %52 = vector.broadcast %cst_12 : f32 to vector<2x8xf32>
    %53 = vector.extract_strided_slice %51 {offsets = [0, 0], sizes = [2, 1], strides = [1, 1]} : vector<2x8xf32> to vector<2x1xf32>
    %54 = vector.broadcast %53 : vector<2x1xf32> to vector<2x32xf32>
    %55 = arith.mulf %54, %29 : vector<2x32xf32>
    %56 = vector.extract_strided_slice %51 {offsets = [0, 1], sizes = [2, 1], strides = [1, 1]} : vector<2x8xf32> to vector<2x1xf32>
    %57 = vector.broadcast %56 : vector<2x1xf32> to vector<2x32xf32>
    %58 = arith.mulf %57, %32 : vector<2x32xf32>
    %59 = vector.extract_strided_slice %51 {offsets = [0, 2], sizes = [2, 1], strides = [1, 1]} : vector<2x8xf32> to vector<2x1xf32>
    %60 = vector.broadcast %59 : vector<2x1xf32> to vector<2x32xf32>
    %61 = arith.mulf %60, %35 : vector<2x32xf32>
    %62 = vector.extract_strided_slice %51 {offsets = [0, 3], sizes = [2, 1], strides = [1, 1]} : vector<2x8xf32> to vector<2x1xf32>
    %63 = vector.broadcast %62 : vector<2x1xf32> to vector<2x32xf32>
    %64 = arith.mulf %63, %38 : vector<2x32xf32>
    %65 = vector.extract_strided_slice %51 {offsets = [0, 4], sizes = [2, 1], strides = [1, 1]} : vector<2x8xf32> to vector<2x1xf32>
    %66 = vector.broadcast %65 : vector<2x1xf32> to vector<2x32xf32>
    %67 = arith.mulf %66, %41 : vector<2x32xf32>
    %68 = vector.extract_strided_slice %51 {offsets = [0, 5], sizes = [2, 1], strides = [1, 1]} : vector<2x8xf32> to vector<2x1xf32>
    %69 = vector.broadcast %68 : vector<2x1xf32> to vector<2x32xf32>
    %70 = arith.mulf %69, %44 : vector<2x32xf32>
    %71 = vector.extract_strided_slice %51 {offsets = [0, 6], sizes = [2, 1], strides = [1, 1]} : vector<2x8xf32> to vector<2x1xf32>
    %72 = vector.broadcast %71 : vector<2x1xf32> to vector<2x32xf32>
    %73 = arith.mulf %72, %47 : vector<2x32xf32>
    %74 = vector.extract_strided_slice %51 {offsets = [0, 7], sizes = [2, 1], strides = [1, 1]} : vector<2x8xf32> to vector<2x1xf32>
    %75 = vector.broadcast %74 : vector<2x1xf32> to vector<2x32xf32>
    %76 = arith.mulf %75, %50 : vector<2x32xf32>
    %77 = arith.addf %55, %58 : vector<2x32xf32>
    %78 = arith.addf %61, %64 : vector<2x32xf32>
    %79 = arith.addf %67, %70 : vector<2x32xf32>
    %80 = arith.addf %73, %76 : vector<2x32xf32>
    %81 = arith.addf %77, %78 : vector<2x32xf32>
    %82 = arith.addf %79, %80 : vector<2x32xf32>
    %83 = arith.addf %81, %82 : vector<2x32xf32>
    %84 = arith.addf %11, %83 : vector<2x32xf32>
    %85 = arith.negf %84 : vector<2x32xf32>
    %86 = math.exp %85 : vector<2x32xf32>
    %cst_13 = arith.constant 1.000000e+00 : f32
    %87 = vector.broadcast %cst_13 : f32 to vector<2x32xf32>
    %88 = arith.addf %87, %86 : vector<2x32xf32>
    %89 = arith.divf %87, %88 : vector<2x32xf32>
    %90 = vector.extract_strided_slice %89 {offsets = [0, 0], sizes = [2, 8], strides = [1, 1]} : vector<2x32xf32> to vector<2x8xf32>
    %91 = vector.extract_strided_slice %89 {offsets = [0, 8], sizes = [2, 8], strides = [1, 1]} : vector<2x32xf32> to vector<2x8xf32>
    %92 = vector.extract_strided_slice %89 {offsets = [0, 16], sizes = [2, 8], strides = [1, 1]} : vector<2x32xf32> to vector<2x8xf32>
    %cst_14 = arith.constant 2.000000e+00 : f32
    %93 = vector.broadcast %cst_14 : f32 to vector<2x8xf32>
    %94 = arith.mulf %93, %92 : vector<2x8xf32>
    %cst_15 = arith.constant 1.000000e+00 : f32
    %95 = vector.broadcast %cst_15 : f32 to vector<2x8xf32>
    %96 = arith.subf %94, %95 : vector<2x8xf32>
    %97 = vector.extract_strided_slice %89 {offsets = [0, 24], sizes = [2, 8], strides = [1, 1]} : vector<2x32xf32> to vector<2x8xf32>
    %98 = arith.mulf %91, %52 : vector<2x8xf32>
    %99 = arith.mulf %90, %96 : vector<2x8xf32>
    %100 = arith.addf %98, %99 : vector<2x8xf32>
    %101 = math.tanh %100 : vector<2x8xf32>
    %102 = arith.mulf %97, %101 : vector<2x8xf32>
    %103 = vector.extract_strided_slice %102 {offsets = [0, 0], sizes = [2, 1], strides = [1, 1]} : vector<2x8xf32> to vector<2x1xf32>
    %104 = vector.broadcast %103 : vector<2x1xf32> to vector<2x32xf32>
    %105 = arith.mulf %104, %29 : vector<2x32xf32>
    %106 = vector.extract_strided_slice %102 {offsets = [0, 1], sizes = [2, 1], strides = [1, 1]} : vector<2x8xf32> to vector<2x1xf32>
    %107 = vector.broadcast %106 : vector<2x1xf32> to vector<2x32xf32>
    %108 = arith.mulf %107, %32 : vector<2x32xf32>
    %109 = vector.extract_strided_slice %102 {offsets = [0, 2], sizes = [2, 1], strides = [1, 1]} : vector<2x8xf32> to vector<2x1xf32>
    %110 = vector.broadcast %109 : vector<2x1xf32> to vector<2x32xf32>
    %111 = arith.mulf %110, %35 : vector<2x32xf32>
    %112 = vector.extract_strided_slice %102 {offsets = [0, 3], sizes = [2, 1], strides = [1, 1]} : vector<2x8xf32> to vector<2x1xf32>
    %113 = vector.broadcast %112 : vector<2x1xf32> to vector<2x32xf32>
    %114 = arith.mulf %113, %38 : vector<2x32xf32>
    %115 = vector.extract_strided_slice %102 {offsets = [0, 4], sizes = [2, 1], strides = [1, 1]} : vector<2x8xf32> to vector<2x1xf32>
    %116 = vector.broadcast %115 : vector<2x1xf32> to vector<2x32xf32>
    %117 = arith.mulf %116, %41 : vector<2x32xf32>
    %118 = vector.extract_strided_slice %102 {offsets = [0, 5], sizes = [2, 1], strides = [1, 1]} : vector<2x8xf32> to vector<2x1xf32>
    %119 = vector.broadcast %118 : vector<2x1xf32> to vector<2x32xf32>
    %120 = arith.mulf %119, %44 : vector<2x32xf32>
    %121 = vector.extract_strided_slice %102 {offsets = [0, 6], sizes = [2, 1], strides = [1, 1]} : vector<2x8xf32> to vector<2x1xf32>
    %122 = vector.broadcast %121 : vector<2x1xf32> to vector<2x32xf32>
    %123 = arith.mulf %122, %47 : vector<2x32xf32>
    %124 = vector.extract_strided_slice %102 {offsets = [0, 7], sizes = [2, 1], strides = [1, 1]} : vector<2x8xf32> to vector<2x1xf32>
    %125 = vector.broadcast %124 : vector<2x1xf32> to vector<2x32xf32>
    %126 = arith.mulf %125, %50 : vector<2x32xf32>
    %127 = arith.addf %105, %108 : vector<2x32xf32>
    %128 = arith.addf %111, %114 : vector<2x32xf32>
    %129 = arith.addf %117, %120 : vector<2x32xf32>
    %130 = arith.addf %123, %126 : vector<2x32xf32>
    %131 = arith.addf %127, %128 : vector<2x32xf32>
    %132 = arith.addf %129, %130 : vector<2x32xf32>
    %133 = arith.addf %131, %132 : vector<2x32xf32>
    %134 = arith.addf %12, %133 : vector<2x32xf32>
    %135 = arith.negf %134 : vector<2x32xf32>
    %136 = math.exp %135 : vector<2x32xf32>
    %cst_16 = arith.constant 1.000000e+00 : f32
    %137 = vector.broadcast %cst_16 : f32 to vector<2x32xf32>
    %138 = arith.addf %137, %136 : vector<2x32xf32>
    %139 = arith.divf %137, %138 : vector<2x32xf32>
    %140 = vector.extract_strided_slice %139 {offsets = [0, 0], sizes = [2, 8], strides = [1, 1]} : vector<2x32xf32> to vector<2x8xf32>
    %141 = vector.extract_strided_slice %139 {offsets = [0, 8], sizes = [2, 8], strides = [1, 1]} : vector<2x32xf32> to vector<2x8xf32>
    %142 = vector.extract_strided_slice %139 {offsets = [0, 16], sizes = [2, 8], strides = [1, 1]} : vector<2x32xf32> to vector<2x8xf32>
    %cst_17 = arith.constant 2.000000e+00 : f32
    %143 = vector.broadcast %cst_17 : f32 to vector<2x8xf32>
    %144 = arith.mulf %143, %142 : vector<2x8xf32>
    %cst_18 = arith.constant 1.000000e+00 : f32
    %145 = vector.broadcast %cst_18 : f32 to vector<2x8xf32>
    %146 = arith.subf %144, %145 : vector<2x8xf32>
    %147 = vector.extract_strided_slice %139 {offsets = [0, 24], sizes = [2, 8], strides = [1, 1]} : vector<2x32xf32> to vector<2x8xf32>
    %148 = arith.mulf %141, %100 : vector<2x8xf32>
    %149 = arith.mulf %140, %146 : vector<2x8xf32>
    %150 = arith.addf %148, %149 : vector<2x8xf32>
    %151 = math.tanh %150 : vector<2x8xf32>
    %152 = arith.mulf %147, %151 : vector<2x8xf32>
    %153 = vector.extract_strided_slice %152 {offsets = [0, 0], sizes = [2, 1], strides = [1, 1]} : vector<2x8xf32> to vector<2x1xf32>
    %154 = vector.broadcast %153 : vector<2x1xf32> to vector<2x32xf32>
    %155 = arith.mulf %154, %29 : vector<2x32xf32>
    %156 = vector.extract_strided_slice %152 {offsets = [0, 1], sizes = [2, 1], strides = [1, 1]} : vector<2x8xf32> to vector<2x1xf32>
    %157 = vector.broadcast %156 : vector<2x1xf32> to vector<2x32xf32>
    %158 = arith.mulf %157, %32 : vector<2x32xf32>
    %159 = vector.extract_strided_slice %152 {offsets = [0, 2], sizes = [2, 1], strides = [1, 1]} : vector<2x8xf32> to vector<2x1xf32>
    %160 = vector.broadcast %159 : vector<2x1xf32> to vector<2x32xf32>
    %161 = arith.mulf %160, %35 : vector<2x32xf32>
    %162 = vector.extract_strided_slice %152 {offsets = [0, 3], sizes = [2, 1], strides = [1, 1]} : vector<2x8xf32> to vector<2x1xf32>
    %163 = vector.broadcast %162 : vector<2x1xf32> to vector<2x32xf32>
    %164 = arith.mulf %163, %38 : vector<2x32xf32>
    %165 = vector.extract_strided_slice %152 {offsets = [0, 4], sizes = [2, 1], strides = [1, 1]} : vector<2x8xf32> to vector<2x1xf32>
    %166 = vector.broadcast %165 : vector<2x1xf32> to vector<2x32xf32>
    %167 = arith.mulf %166, %41 : vector<2x32xf32>
    %168 = vector.extract_strided_slice %152 {offsets = [0, 5], sizes = [2, 1], strides = [1, 1]} : vector<2x8xf32> to vector<2x1xf32>
    %169 = vector.broadcast %168 : vector<2x1xf32> to vector<2x32xf32>
    %170 = arith.mulf %169, %44 : vector<2x32xf32>
    %171 = vector.extract_strided_slice %152 {offsets = [0, 6], sizes = [2, 1], strides = [1, 1]} : vector<2x8xf32> to vector<2x1xf32>
    %172 = vector.broadcast %171 : vector<2x1xf32> to vector<2x32xf32>
    %173 = arith.mulf %172, %47 : vector<2x32xf32>
    %174 = vector.extract_strided_slice %152 {offsets = [0, 7], sizes = [2, 1], strides = [1, 1]} : vector<2x8xf32> to vector<2x1xf32>
    %175 = vector.broadcast %174 : vector<2x1xf32> to vector<2x32xf32>
    %176 = arith.mulf %175, %50 : vector<2x32xf32>
    %177 = arith.addf %155, %158 : vector<2x32xf32>
    %178 = arith.addf %161, %164 : vector<2x32xf32>
    %179 = arith.addf %167, %170 : vector<2x32xf32>
    %180 = arith.addf %173, %176 : vector<2x32xf32>
    %181 = arith.addf %177, %178 : vector<2x32xf32>
    %182 = arith.addf %179, %180 : vector<2x32xf32>
    %183 = arith.addf %181, %182 : vector<2x32xf32>
    %184 = arith.addf %13, %183 : vector<2x32xf32>
    %185 = arith.negf %184 : vector<2x32xf32>
    %186 = math.exp %185 : vector<2x32xf32>
    %cst_19 = arith.constant 1.000000e+00 : f32
    %187 = vector.broadcast %cst_19 : f32 to vector<2x32xf32>
    %188 = arith.addf %187, %186 : vector<2x32xf32>
    %189 = arith.divf %187, %188 : vector<2x32xf32>
    %190 = vector.extract_strided_slice %189 {offsets = [0, 0], sizes = [2, 8], strides = [1, 1]} : vector<2x32xf32> to vector<2x8xf32>
    %191 = vector.extract_strided_slice %189 {offsets = [0, 8], sizes = [2, 8], strides = [1, 1]} : vector<2x32xf32> to vector<2x8xf32>
    %192 = vector.extract_strided_slice %189 {offsets = [0, 16], sizes = [2, 8], strides = [1, 1]} : vector<2x32xf32> to vector<2x8xf32>
    %cst_20 = arith.constant 2.000000e+00 : f32
    %193 = vector.broadcast %cst_20 : f32 to vector<2x8xf32>
    %194 = arith.mulf %193, %192 : vector<2x8xf32>
    %cst_21 = arith.constant 1.000000e+00 : f32
    %195 = vector.broadcast %cst_21 : f32 to vector<2x8xf32>
    %196 = arith.subf %194, %195 : vector<2x8xf32>
    %197 = vector.extract_strided_slice %189 {offsets = [0, 24], sizes = [2, 8], strides = [1, 1]} : vector<2x32xf32> to vector<2x8xf32>
    %198 = arith.mulf %191, %150 : vector<2x8xf32>
    %199 = arith.mulf %190, %196 : vector<2x8xf32>
    %200 = arith.addf %198, %199 : vector<2x8xf32>
    %201 = math.tanh %200 : vector<2x8xf32>
    %202 = arith.mulf %197, %201 : vector<2x8xf32>
    %203 = vector.extract_strided_slice %202 {offsets = [0, 0], sizes = [2, 1], strides = [1, 1]} : vector<2x8xf32> to vector<2x1xf32>
    %204 = vector.broadcast %203 : vector<2x1xf32> to vector<2x32xf32>
    %205 = arith.mulf %204, %29 : vector<2x32xf32>
    %206 = vector.extract_strided_slice %202 {offsets = [0, 1], sizes = [2, 1], strides = [1, 1]} : vector<2x8xf32> to vector<2x1xf32>
    %207 = vector.broadcast %206 : vector<2x1xf32> to vector<2x32xf32>
    %208 = arith.mulf %207, %32 : vector<2x32xf32>
    %209 = vector.extract_strided_slice %202 {offsets = [0, 2], sizes = [2, 1], strides = [1, 1]} : vector<2x8xf32> to vector<2x1xf32>
    %210 = vector.broadcast %209 : vector<2x1xf32> to vector<2x32xf32>
    %211 = arith.mulf %210, %35 : vector<2x32xf32>
    %212 = vector.extract_strided_slice %202 {offsets = [0, 3], sizes = [2, 1], strides = [1, 1]} : vector<2x8xf32> to vector<2x1xf32>
    %213 = vector.broadcast %212 : vector<2x1xf32> to vector<2x32xf32>
    %214 = arith.mulf %213, %38 : vector<2x32xf32>
    %215 = vector.extract_strided_slice %202 {offsets = [0, 4], sizes = [2, 1], strides = [1, 1]} : vector<2x8xf32> to vector<2x1xf32>
    %216 = vector.broadcast %215 : vector<2x1xf32> to vector<2x32xf32>
    %217 = arith.mulf %216, %41 : vector<2x32xf32>
    %218 = vector.extract_strided_slice %202 {offsets = [0, 5], sizes = [2, 1], strides = [1, 1]} : vector<2x8xf32> to vector<2x1xf32>
    %219 = vector.broadcast %218 : vector<2x1xf32> to vector<2x32xf32>
    %220 = arith.mulf %219, %44 : vector<2x32xf32>
    %221 = vector.extract_strided_slice %202 {offsets = [0, 6], sizes = [2, 1], strides = [1, 1]} : vector<2x8xf32> to vector<2x1xf32>
    %222 = vector.broadcast %221 : vector<2x1xf32> to vector<2x32xf32>
    %223 = arith.mulf %222, %47 : vector<2x32xf32>
    %224 = vector.extract_strided_slice %202 {offsets = [0, 7], sizes = [2, 1], strides = [1, 1]} : vector<2x8xf32> to vector<2x1xf32>
    %225 = vector.broadcast %224 : vector<2x1xf32> to vector<2x32xf32>
    %226 = arith.mulf %225, %50 : vector<2x32xf32>
    %227 = arith.addf %205, %208 : vector<2x32xf32>
    %228 = arith.addf %211, %214 : vector<2x32xf32>
    %229 = arith.addf %217, %220 : vector<2x32xf32>
    %230 = arith.addf %223, %226 : vector<2x32xf32>
    %231 = arith.addf %227, %228 : vector<2x32xf32>
    %232 = arith.addf %229, %230 : vector<2x32xf32>
    %233 = arith.addf %231, %232 : vector<2x32xf32>
    %234 = arith.addf %14, %233 : vector<2x32xf32>
    %235 = arith.negf %234 : vector<2x32xf32>
    %236 = math.exp %235 : vector<2x32xf32>
    %cst_22 = arith.constant 1.000000e+00 : f32
    %237 = vector.broadcast %cst_22 : f32 to vector<2x32xf32>
    %238 = arith.addf %237, %236 : vector<2x32xf32>
    %239 = arith.divf %237, %238 : vector<2x32xf32>
    %240 = vector.extract_strided_slice %239 {offsets = [0, 0], sizes = [2, 8], strides = [1, 1]} : vector<2x32xf32> to vector<2x8xf32>
    %241 = vector.extract_strided_slice %239 {offsets = [0, 8], sizes = [2, 8], strides = [1, 1]} : vector<2x32xf32> to vector<2x8xf32>
    %242 = vector.extract_strided_slice %239 {offsets = [0, 16], sizes = [2, 8], strides = [1, 1]} : vector<2x32xf32> to vector<2x8xf32>
    %cst_23 = arith.constant 2.000000e+00 : f32
    %243 = vector.broadcast %cst_23 : f32 to vector<2x8xf32>
    %244 = arith.mulf %243, %242 : vector<2x8xf32>
    %cst_24 = arith.constant 1.000000e+00 : f32
    %245 = vector.broadcast %cst_24 : f32 to vector<2x8xf32>
    %246 = arith.subf %244, %245 : vector<2x8xf32>
    %247 = vector.extract_strided_slice %239 {offsets = [0, 24], sizes = [2, 8], strides = [1, 1]} : vector<2x32xf32> to vector<2x8xf32>
    %248 = arith.mulf %241, %200 : vector<2x8xf32>
    %249 = arith.mulf %240, %246 : vector<2x8xf32>
    %250 = arith.addf %248, %249 : vector<2x8xf32>
    %251 = math.tanh %250 : vector<2x8xf32>
    %252 = arith.mulf %247, %251 : vector<2x8xf32>
    %253 = vector.extract_strided_slice %252 {offsets = [0, 0], sizes = [2, 1], strides = [1, 1]} : vector<2x8xf32> to vector<2x1xf32>
    %254 = vector.broadcast %253 : vector<2x1xf32> to vector<2x32xf32>
    %255 = arith.mulf %254, %29 : vector<2x32xf32>
    %256 = vector.extract_strided_slice %252 {offsets = [0, 1], sizes = [2, 1], strides = [1, 1]} : vector<2x8xf32> to vector<2x1xf32>
    %257 = vector.broadcast %256 : vector<2x1xf32> to vector<2x32xf32>
    %258 = arith.mulf %257, %32 : vector<2x32xf32>
    %259 = vector.extract_strided_slice %252 {offsets = [0, 2], sizes = [2, 1], strides = [1, 1]} : vector<2x8xf32> to vector<2x1xf32>
    %260 = vector.broadcast %259 : vector<2x1xf32> to vector<2x32xf32>
    %261 = arith.mulf %260, %35 : vector<2x32xf32>
    %262 = vector.extract_strided_slice %252 {offsets = [0, 3], sizes = [2, 1], strides = [1, 1]} : vector<2x8xf32> to vector<2x1xf32>
    %263 = vector.broadcast %262 : vector<2x1xf32> to vector<2x32xf32>
    %264 = arith.mulf %263, %38 : vector<2x32xf32>
    %265 = vector.extract_strided_slice %252 {offsets = [0, 4], sizes = [2, 1], strides = [1, 1]} : vector<2x8xf32> to vector<2x1xf32>
    %266 = vector.broadcast %265 : vector<2x1xf32> to vector<2x32xf32>
    %267 = arith.mulf %266, %41 : vector<2x32xf32>
    %268 = vector.extract_strided_slice %252 {offsets = [0, 5], sizes = [2, 1], strides = [1, 1]} : vector<2x8xf32> to vector<2x1xf32>
    %269 = vector.broadcast %268 : vector<2x1xf32> to vector<2x32xf32>
    %270 = arith.mulf %269, %44 : vector<2x32xf32>
    %271 = vector.extract_strided_slice %252 {offsets = [0, 6], sizes = [2, 1], strides = [1, 1]} : vector<2x8xf32> to vector<2x1xf32>
    %272 = vector.broadcast %271 : vector<2x1xf32> to vector<2x32xf32>
    %273 = arith.mulf %272, %47 : vector<2x32xf32>
    %274 = vector.extract_strided_slice %252 {offsets = [0, 7], sizes = [2, 1], strides = [1, 1]} : vector<2x8xf32> to vector<2x1xf32>
    %275 = vector.broadcast %274 : vector<2x1xf32> to vector<2x32xf32>
    %276 = arith.mulf %275, %50 : vector<2x32xf32>
    %277 = arith.addf %255, %258 : vector<2x32xf32>
    %278 = arith.addf %261, %264 : vector<2x32xf32>
    %279 = arith.addf %267, %270 : vector<2x32xf32>
    %280 = arith.addf %273, %276 : vector<2x32xf32>
    %281 = arith.addf %277, %278 : vector<2x32xf32>
    %282 = arith.addf %279, %280 : vector<2x32xf32>
    %283 = arith.addf %281, %282 : vector<2x32xf32>
    %284 = arith.addf %15, %283 : vector<2x32xf32>
    %285 = arith.negf %284 : vector<2x32xf32>
    %286 = math.exp %285 : vector<2x32xf32>
    %cst_25 = arith.constant 1.000000e+00 : f32
    %287 = vector.broadcast %cst_25 : f32 to vector<2x32xf32>
    %288 = arith.addf %287, %286 : vector<2x32xf32>
    %289 = arith.divf %287, %288 : vector<2x32xf32>
    %290 = vector.extract_strided_slice %289 {offsets = [0, 0], sizes = [2, 8], strides = [1, 1]} : vector<2x32xf32> to vector<2x8xf32>
    %291 = vector.extract_strided_slice %289 {offsets = [0, 8], sizes = [2, 8], strides = [1, 1]} : vector<2x32xf32> to vector<2x8xf32>
    %292 = vector.extract_strided_slice %289 {offsets = [0, 16], sizes = [2, 8], strides = [1, 1]} : vector<2x32xf32> to vector<2x8xf32>
    %cst_26 = arith.constant 2.000000e+00 : f32
    %293 = vector.broadcast %cst_26 : f32 to vector<2x8xf32>
    %294 = arith.mulf %293, %292 : vector<2x8xf32>
    %cst_27 = arith.constant 1.000000e+00 : f32
    %295 = vector.broadcast %cst_27 : f32 to vector<2x8xf32>
    %296 = arith.subf %294, %295 : vector<2x8xf32>
    %297 = vector.extract_strided_slice %289 {offsets = [0, 24], sizes = [2, 8], strides = [1, 1]} : vector<2x32xf32> to vector<2x8xf32>
    %298 = arith.mulf %291, %250 : vector<2x8xf32>
    %299 = arith.mulf %290, %296 : vector<2x8xf32>
    %300 = arith.addf %298, %299 : vector<2x8xf32>
    %301 = math.tanh %300 : vector<2x8xf32>
    %302 = arith.mulf %297, %301 : vector<2x8xf32>
    %303 = vector.extract_strided_slice %302 {offsets = [0, 0], sizes = [2, 1], strides = [1, 1]} : vector<2x8xf32> to vector<2x1xf32>
    %304 = vector.broadcast %303 : vector<2x1xf32> to vector<2x32xf32>
    %305 = arith.mulf %304, %29 : vector<2x32xf32>
    %306 = vector.extract_strided_slice %302 {offsets = [0, 1], sizes = [2, 1], strides = [1, 1]} : vector<2x8xf32> to vector<2x1xf32>
    %307 = vector.broadcast %306 : vector<2x1xf32> to vector<2x32xf32>
    %308 = arith.mulf %307, %32 : vector<2x32xf32>
    %309 = vector.extract_strided_slice %302 {offsets = [0, 2], sizes = [2, 1], strides = [1, 1]} : vector<2x8xf32> to vector<2x1xf32>
    %310 = vector.broadcast %309 : vector<2x1xf32> to vector<2x32xf32>
    %311 = arith.mulf %310, %35 : vector<2x32xf32>
    %312 = vector.extract_strided_slice %302 {offsets = [0, 3], sizes = [2, 1], strides = [1, 1]} : vector<2x8xf32> to vector<2x1xf32>
    %313 = vector.broadcast %312 : vector<2x1xf32> to vector<2x32xf32>
    %314 = arith.mulf %313, %38 : vector<2x32xf32>
    %315 = vector.extract_strided_slice %302 {offsets = [0, 4], sizes = [2, 1], strides = [1, 1]} : vector<2x8xf32> to vector<2x1xf32>
    %316 = vector.broadcast %315 : vector<2x1xf32> to vector<2x32xf32>
    %317 = arith.mulf %316, %41 : vector<2x32xf32>
    %318 = vector.extract_strided_slice %302 {offsets = [0, 5], sizes = [2, 1], strides = [1, 1]} : vector<2x8xf32> to vector<2x1xf32>
    %319 = vector.broadcast %318 : vector<2x1xf32> to vector<2x32xf32>
    %320 = arith.mulf %319, %44 : vector<2x32xf32>
    %321 = vector.extract_strided_slice %302 {offsets = [0, 6], sizes = [2, 1], strides = [1, 1]} : vector<2x8xf32> to vector<2x1xf32>
    %322 = vector.broadcast %321 : vector<2x1xf32> to vector<2x32xf32>
    %323 = arith.mulf %322, %47 : vector<2x32xf32>
    %324 = vector.extract_strided_slice %302 {offsets = [0, 7], sizes = [2, 1], strides = [1, 1]} : vector<2x8xf32> to vector<2x1xf32>
    %325 = vector.broadcast %324 : vector<2x1xf32> to vector<2x32xf32>
    %326 = arith.mulf %325, %50 : vector<2x32xf32>
    %327 = arith.addf %305, %308 : vector<2x32xf32>
    %328 = arith.addf %311, %314 : vector<2x32xf32>
    %329 = arith.addf %317, %320 : vector<2x32xf32>
    %330 = arith.addf %323, %326 : vector<2x32xf32>
    %331 = arith.addf %327, %328 : vector<2x32xf32>
    %332 = arith.addf %329, %330 : vector<2x32xf32>
    %333 = arith.addf %331, %332 : vector<2x32xf32>
    %334 = arith.addf %16, %333 : vector<2x32xf32>
    %335 = arith.negf %334 : vector<2x32xf32>
    %336 = math.exp %335 : vector<2x32xf32>
    %cst_28 = arith.constant 1.000000e+00 : f32
    %337 = vector.broadcast %cst_28 : f32 to vector<2x32xf32>
    %338 = arith.addf %337, %336 : vector<2x32xf32>
    %339 = arith.divf %337, %338 : vector<2x32xf32>
    %340 = vector.extract_strided_slice %339 {offsets = [0, 0], sizes = [2, 8], strides = [1, 1]} : vector<2x32xf32> to vector<2x8xf32>
    %341 = vector.extract_strided_slice %339 {offsets = [0, 8], sizes = [2, 8], strides = [1, 1]} : vector<2x32xf32> to vector<2x8xf32>
    %342 = vector.extract_strided_slice %339 {offsets = [0, 16], sizes = [2, 8], strides = [1, 1]} : vector<2x32xf32> to vector<2x8xf32>
    %cst_29 = arith.constant 2.000000e+00 : f32
    %343 = vector.broadcast %cst_29 : f32 to vector<2x8xf32>
    %344 = arith.mulf %343, %342 : vector<2x8xf32>
    %cst_30 = arith.constant 1.000000e+00 : f32
    %345 = vector.broadcast %cst_30 : f32 to vector<2x8xf32>
    %346 = arith.subf %344, %345 : vector<2x8xf32>
    %347 = vector.extract_strided_slice %339 {offsets = [0, 24], sizes = [2, 8], strides = [1, 1]} : vector<2x32xf32> to vector<2x8xf32>
    %348 = arith.mulf %341, %300 : vector<2x8xf32>
    %349 = arith.mulf %340, %346 : vector<2x8xf32>
    %350 = arith.addf %348, %349 : vector<2x8xf32>
    %351 = math.tanh %350 : vector<2x8xf32>
    %352 = arith.mulf %347, %351 : vector<2x8xf32>
    %353 = vector.extract_strided_slice %352 {offsets = [0, 0], sizes = [2, 1], strides = [1, 1]} : vector<2x8xf32> to vector<2x1xf32>
    %354 = vector.broadcast %353 : vector<2x1xf32> to vector<2x32xf32>
    %355 = arith.mulf %354, %29 : vector<2x32xf32>
    %356 = vector.extract_strided_slice %352 {offsets = [0, 1], sizes = [2, 1], strides = [1, 1]} : vector<2x8xf32> to vector<2x1xf32>
    %357 = vector.broadcast %356 : vector<2x1xf32> to vector<2x32xf32>
    %358 = arith.mulf %357, %32 : vector<2x32xf32>
    %359 = vector.extract_strided_slice %352 {offsets = [0, 2], sizes = [2, 1], strides = [1, 1]} : vector<2x8xf32> to vector<2x1xf32>
    %360 = vector.broadcast %359 : vector<2x1xf32> to vector<2x32xf32>
    %361 = arith.mulf %360, %35 : vector<2x32xf32>
    %362 = vector.extract_strided_slice %352 {offsets = [0, 3], sizes = [2, 1], strides = [1, 1]} : vector<2x8xf32> to vector<2x1xf32>
    %363 = vector.broadcast %362 : vector<2x1xf32> to vector<2x32xf32>
    %364 = arith.mulf %363, %38 : vector<2x32xf32>
    %365 = vector.extract_strided_slice %352 {offsets = [0, 4], sizes = [2, 1], strides = [1, 1]} : vector<2x8xf32> to vector<2x1xf32>
    %366 = vector.broadcast %365 : vector<2x1xf32> to vector<2x32xf32>
    %367 = arith.mulf %366, %41 : vector<2x32xf32>
    %368 = vector.extract_strided_slice %352 {offsets = [0, 5], sizes = [2, 1], strides = [1, 1]} : vector<2x8xf32> to vector<2x1xf32>
    %369 = vector.broadcast %368 : vector<2x1xf32> to vector<2x32xf32>
    %370 = arith.mulf %369, %44 : vector<2x32xf32>
    %371 = vector.extract_strided_slice %352 {offsets = [0, 6], sizes = [2, 1], strides = [1, 1]} : vector<2x8xf32> to vector<2x1xf32>
    %372 = vector.broadcast %371 : vector<2x1xf32> to vector<2x32xf32>
    %373 = arith.mulf %372, %47 : vector<2x32xf32>
    %374 = vector.extract_strided_slice %352 {offsets = [0, 7], sizes = [2, 1], strides = [1, 1]} : vector<2x8xf32> to vector<2x1xf32>
    %375 = vector.broadcast %374 : vector<2x1xf32> to vector<2x32xf32>
    %376 = arith.mulf %375, %50 : vector<2x32xf32>
    %377 = arith.addf %355, %358 : vector<2x32xf32>
    %378 = arith.addf %361, %364 : vector<2x32xf32>
    %379 = arith.addf %367, %370 : vector<2x32xf32>
    %380 = arith.addf %373, %376 : vector<2x32xf32>
    %381 = arith.addf %377, %378 : vector<2x32xf32>
    %382 = arith.addf %379, %380 : vector<2x32xf32>
    %383 = arith.addf %381, %382 : vector<2x32xf32>
    %384 = arith.addf %17, %383 : vector<2x32xf32>
    %385 = arith.negf %384 : vector<2x32xf32>
    %386 = math.exp %385 : vector<2x32xf32>
    %cst_31 = arith.constant 1.000000e+00 : f32
    %387 = vector.broadcast %cst_31 : f32 to vector<2x32xf32>
    %388 = arith.addf %387, %386 : vector<2x32xf32>
    %389 = arith.divf %387, %388 : vector<2x32xf32>
    %390 = vector.extract_strided_slice %389 {offsets = [0, 0], sizes = [2, 8], strides = [1, 1]} : vector<2x32xf32> to vector<2x8xf32>
    %391 = vector.extract_strided_slice %389 {offsets = [0, 8], sizes = [2, 8], strides = [1, 1]} : vector<2x32xf32> to vector<2x8xf32>
    %392 = vector.extract_strided_slice %389 {offsets = [0, 16], sizes = [2, 8], strides = [1, 1]} : vector<2x32xf32> to vector<2x8xf32>
    %cst_32 = arith.constant 2.000000e+00 : f32
    %393 = vector.broadcast %cst_32 : f32 to vector<2x8xf32>
    %394 = arith.mulf %393, %392 : vector<2x8xf32>
    %cst_33 = arith.constant 1.000000e+00 : f32
    %395 = vector.broadcast %cst_33 : f32 to vector<2x8xf32>
    %396 = arith.subf %394, %395 : vector<2x8xf32>
    %397 = vector.extract_strided_slice %389 {offsets = [0, 24], sizes = [2, 8], strides = [1, 1]} : vector<2x32xf32> to vector<2x8xf32>
    %398 = arith.mulf %391, %350 : vector<2x8xf32>
    %399 = arith.mulf %390, %396 : vector<2x8xf32>
    %400 = arith.addf %398, %399 : vector<2x8xf32>
    %401 = math.tanh %400 : vector<2x8xf32>
    %402 = arith.mulf %397, %401 : vector<2x8xf32>
    %403 = vector.extract_strided_slice %402 {offsets = [0, 0], sizes = [2, 1], strides = [1, 1]} : vector<2x8xf32> to vector<2x1xf32>
    %404 = vector.broadcast %403 : vector<2x1xf32> to vector<2x32xf32>
    %405 = arith.mulf %404, %29 : vector<2x32xf32>
    %406 = vector.extract_strided_slice %402 {offsets = [0, 1], sizes = [2, 1], strides = [1, 1]} : vector<2x8xf32> to vector<2x1xf32>
    %407 = vector.broadcast %406 : vector<2x1xf32> to vector<2x32xf32>
    %408 = arith.mulf %407, %32 : vector<2x32xf32>
    %409 = vector.extract_strided_slice %402 {offsets = [0, 2], sizes = [2, 1], strides = [1, 1]} : vector<2x8xf32> to vector<2x1xf32>
    %410 = vector.broadcast %409 : vector<2x1xf32> to vector<2x32xf32>
    %411 = arith.mulf %410, %35 : vector<2x32xf32>
    %412 = vector.extract_strided_slice %402 {offsets = [0, 3], sizes = [2, 1], strides = [1, 1]} : vector<2x8xf32> to vector<2x1xf32>
    %413 = vector.broadcast %412 : vector<2x1xf32> to vector<2x32xf32>
    %414 = arith.mulf %413, %38 : vector<2x32xf32>
    %415 = vector.extract_strided_slice %402 {offsets = [0, 4], sizes = [2, 1], strides = [1, 1]} : vector<2x8xf32> to vector<2x1xf32>
    %416 = vector.broadcast %415 : vector<2x1xf32> to vector<2x32xf32>
    %417 = arith.mulf %416, %41 : vector<2x32xf32>
    %418 = vector.extract_strided_slice %402 {offsets = [0, 5], sizes = [2, 1], strides = [1, 1]} : vector<2x8xf32> to vector<2x1xf32>
    %419 = vector.broadcast %418 : vector<2x1xf32> to vector<2x32xf32>
    %420 = arith.mulf %419, %44 : vector<2x32xf32>
    %421 = vector.extract_strided_slice %402 {offsets = [0, 6], sizes = [2, 1], strides = [1, 1]} : vector<2x8xf32> to vector<2x1xf32>
    %422 = vector.broadcast %421 : vector<2x1xf32> to vector<2x32xf32>
    %423 = arith.mulf %422, %47 : vector<2x32xf32>
    %424 = vector.extract_strided_slice %402 {offsets = [0, 7], sizes = [2, 1], strides = [1, 1]} : vector<2x8xf32> to vector<2x1xf32>
    %425 = vector.broadcast %424 : vector<2x1xf32> to vector<2x32xf32>
    %426 = arith.mulf %425, %50 : vector<2x32xf32>
    %427 = arith.addf %405, %408 : vector<2x32xf32>
    %428 = arith.addf %411, %414 : vector<2x32xf32>
    %429 = arith.addf %417, %420 : vector<2x32xf32>
    %430 = arith.addf %423, %426 : vector<2x32xf32>
    %431 = arith.addf %427, %428 : vector<2x32xf32>
    %432 = arith.addf %429, %430 : vector<2x32xf32>
    %433 = arith.addf %431, %432 : vector<2x32xf32>
    %434 = arith.addf %18, %433 : vector<2x32xf32>
    %435 = arith.negf %434 : vector<2x32xf32>
    %436 = math.exp %435 : vector<2x32xf32>
    %cst_34 = arith.constant 1.000000e+00 : f32
    %437 = vector.broadcast %cst_34 : f32 to vector<2x32xf32>
    %438 = arith.addf %437, %436 : vector<2x32xf32>
    %439 = arith.divf %437, %438 : vector<2x32xf32>
    %440 = vector.extract_strided_slice %439 {offsets = [0, 0], sizes = [2, 8], strides = [1, 1]} : vector<2x32xf32> to vector<2x8xf32>
    %441 = vector.extract_strided_slice %439 {offsets = [0, 8], sizes = [2, 8], strides = [1, 1]} : vector<2x32xf32> to vector<2x8xf32>
    %442 = vector.extract_strided_slice %439 {offsets = [0, 16], sizes = [2, 8], strides = [1, 1]} : vector<2x32xf32> to vector<2x8xf32>
    %cst_35 = arith.constant 2.000000e+00 : f32
    %443 = vector.broadcast %cst_35 : f32 to vector<2x8xf32>
    %444 = arith.mulf %443, %442 : vector<2x8xf32>
    %cst_36 = arith.constant 1.000000e+00 : f32
    %445 = vector.broadcast %cst_36 : f32 to vector<2x8xf32>
    %446 = arith.subf %444, %445 : vector<2x8xf32>
    %447 = vector.extract_strided_slice %439 {offsets = [0, 24], sizes = [2, 8], strides = [1, 1]} : vector<2x32xf32> to vector<2x8xf32>
    %448 = arith.mulf %441, %400 : vector<2x8xf32>
    %449 = arith.mulf %440, %446 : vector<2x8xf32>
    %450 = arith.addf %448, %449 : vector<2x8xf32>
    %451 = math.tanh %450 : vector<2x8xf32>
    %452 = arith.mulf %447, %451 : vector<2x8xf32>
    %453 = vector.extract_strided_slice %452 {offsets = [0, 0], sizes = [2, 1], strides = [1, 1]} : vector<2x8xf32> to vector<2x1xf32>
    %454 = vector.broadcast %453 : vector<2x1xf32> to vector<2x32xf32>
    %455 = arith.mulf %454, %29 : vector<2x32xf32>
    %456 = vector.extract_strided_slice %452 {offsets = [0, 1], sizes = [2, 1], strides = [1, 1]} : vector<2x8xf32> to vector<2x1xf32>
    %457 = vector.broadcast %456 : vector<2x1xf32> to vector<2x32xf32>
    %458 = arith.mulf %457, %32 : vector<2x32xf32>
    %459 = vector.extract_strided_slice %452 {offsets = [0, 2], sizes = [2, 1], strides = [1, 1]} : vector<2x8xf32> to vector<2x1xf32>
    %460 = vector.broadcast %459 : vector<2x1xf32> to vector<2x32xf32>
    %461 = arith.mulf %460, %35 : vector<2x32xf32>
    %462 = vector.extract_strided_slice %452 {offsets = [0, 3], sizes = [2, 1], strides = [1, 1]} : vector<2x8xf32> to vector<2x1xf32>
    %463 = vector.broadcast %462 : vector<2x1xf32> to vector<2x32xf32>
    %464 = arith.mulf %463, %38 : vector<2x32xf32>
    %465 = vector.extract_strided_slice %452 {offsets = [0, 4], sizes = [2, 1], strides = [1, 1]} : vector<2x8xf32> to vector<2x1xf32>
    %466 = vector.broadcast %465 : vector<2x1xf32> to vector<2x32xf32>
    %467 = arith.mulf %466, %41 : vector<2x32xf32>
    %468 = vector.extract_strided_slice %452 {offsets = [0, 5], sizes = [2, 1], strides = [1, 1]} : vector<2x8xf32> to vector<2x1xf32>
    %469 = vector.broadcast %468 : vector<2x1xf32> to vector<2x32xf32>
    %470 = arith.mulf %469, %44 : vector<2x32xf32>
    %471 = vector.extract_strided_slice %452 {offsets = [0, 6], sizes = [2, 1], strides = [1, 1]} : vector<2x8xf32> to vector<2x1xf32>
    %472 = vector.broadcast %471 : vector<2x1xf32> to vector<2x32xf32>
    %473 = arith.mulf %472, %47 : vector<2x32xf32>
    %474 = vector.extract_strided_slice %452 {offsets = [0, 7], sizes = [2, 1], strides = [1, 1]} : vector<2x8xf32> to vector<2x1xf32>
    %475 = vector.broadcast %474 : vector<2x1xf32> to vector<2x32xf32>
    %476 = arith.mulf %475, %50 : vector<2x32xf32>
    %477 = arith.addf %455, %458 : vector<2x32xf32>
    %478 = arith.addf %461, %464 : vector<2x32xf32>
    %479 = arith.addf %467, %470 : vector<2x32xf32>
    %480 = arith.addf %473, %476 : vector<2x32xf32>
    %481 = arith.addf %477, %478 : vector<2x32xf32>
    %482 = arith.addf %479, %480 : vector<2x32xf32>
    %483 = arith.addf %481, %482 : vector<2x32xf32>
    %484 = arith.addf %19, %483 : vector<2x32xf32>
    %485 = arith.negf %484 : vector<2x32xf32>
    %486 = math.exp %485 : vector<2x32xf32>
    %cst_37 = arith.constant 1.000000e+00 : f32
    %487 = vector.broadcast %cst_37 : f32 to vector<2x32xf32>
    %488 = arith.addf %487, %486 : vector<2x32xf32>
    %489 = arith.divf %487, %488 : vector<2x32xf32>
    %490 = vector.extract_strided_slice %489 {offsets = [0, 0], sizes = [2, 8], strides = [1, 1]} : vector<2x32xf32> to vector<2x8xf32>
    %491 = vector.extract_strided_slice %489 {offsets = [0, 8], sizes = [2, 8], strides = [1, 1]} : vector<2x32xf32> to vector<2x8xf32>
    %492 = vector.extract_strided_slice %489 {offsets = [0, 16], sizes = [2, 8], strides = [1, 1]} : vector<2x32xf32> to vector<2x8xf32>
    %cst_38 = arith.constant 2.000000e+00 : f32
    %493 = vector.broadcast %cst_38 : f32 to vector<2x8xf32>
    %494 = arith.mulf %493, %492 : vector<2x8xf32>
    %cst_39 = arith.constant 1.000000e+00 : f32
    %495 = vector.broadcast %cst_39 : f32 to vector<2x8xf32>
    %496 = arith.subf %494, %495 : vector<2x8xf32>
    %497 = vector.extract_strided_slice %489 {offsets = [0, 24], sizes = [2, 8], strides = [1, 1]} : vector<2x32xf32> to vector<2x8xf32>
    %498 = arith.mulf %491, %450 : vector<2x8xf32>
    %499 = arith.mulf %490, %496 : vector<2x8xf32>
    %500 = arith.addf %498, %499 : vector<2x8xf32>
    %501 = math.tanh %500 : vector<2x8xf32>
    %502 = arith.mulf %497, %501 : vector<2x8xf32>
    %503 = vector.extract_strided_slice %502 {offsets = [0, 0], sizes = [2, 1], strides = [1, 1]} : vector<2x8xf32> to vector<2x1xf32>
    %504 = vector.broadcast %503 : vector<2x1xf32> to vector<2x32xf32>
    %505 = arith.mulf %504, %29 : vector<2x32xf32>
    %506 = vector.extract_strided_slice %502 {offsets = [0, 1], sizes = [2, 1], strides = [1, 1]} : vector<2x8xf32> to vector<2x1xf32>
    %507 = vector.broadcast %506 : vector<2x1xf32> to vector<2x32xf32>
    %508 = arith.mulf %507, %32 : vector<2x32xf32>
    %509 = vector.extract_strided_slice %502 {offsets = [0, 2], sizes = [2, 1], strides = [1, 1]} : vector<2x8xf32> to vector<2x1xf32>
    %510 = vector.broadcast %509 : vector<2x1xf32> to vector<2x32xf32>
    %511 = arith.mulf %510, %35 : vector<2x32xf32>
    %512 = vector.extract_strided_slice %502 {offsets = [0, 3], sizes = [2, 1], strides = [1, 1]} : vector<2x8xf32> to vector<2x1xf32>
    %513 = vector.broadcast %512 : vector<2x1xf32> to vector<2x32xf32>
    %514 = arith.mulf %513, %38 : vector<2x32xf32>
    %515 = vector.extract_strided_slice %502 {offsets = [0, 4], sizes = [2, 1], strides = [1, 1]} : vector<2x8xf32> to vector<2x1xf32>
    %516 = vector.broadcast %515 : vector<2x1xf32> to vector<2x32xf32>
    %517 = arith.mulf %516, %41 : vector<2x32xf32>
    %518 = vector.extract_strided_slice %502 {offsets = [0, 5], sizes = [2, 1], strides = [1, 1]} : vector<2x8xf32> to vector<2x1xf32>
    %519 = vector.broadcast %518 : vector<2x1xf32> to vector<2x32xf32>
    %520 = arith.mulf %519, %44 : vector<2x32xf32>
    %521 = vector.extract_strided_slice %502 {offsets = [0, 6], sizes = [2, 1], strides = [1, 1]} : vector<2x8xf32> to vector<2x1xf32>
    %522 = vector.broadcast %521 : vector<2x1xf32> to vector<2x32xf32>
    %523 = arith.mulf %522, %47 : vector<2x32xf32>
    %524 = vector.extract_strided_slice %502 {offsets = [0, 7], sizes = [2, 1], strides = [1, 1]} : vector<2x8xf32> to vector<2x1xf32>
    %525 = vector.broadcast %524 : vector<2x1xf32> to vector<2x32xf32>
    %526 = arith.mulf %525, %50 : vector<2x32xf32>
    %527 = arith.addf %505, %508 : vector<2x32xf32>
    %528 = arith.addf %511, %514 : vector<2x32xf32>
    %529 = arith.addf %517, %520 : vector<2x32xf32>
    %530 = arith.addf %523, %526 : vector<2x32xf32>
    %531 = arith.addf %527, %528 : vector<2x32xf32>
    %532 = arith.addf %529, %530 : vector<2x32xf32>
    %533 = arith.addf %531, %532 : vector<2x32xf32>
    %534 = arith.addf %20, %533 : vector<2x32xf32>
    %535 = arith.negf %534 : vector<2x32xf32>
    %536 = math.exp %535 : vector<2x32xf32>
    %cst_40 = arith.constant 1.000000e+00 : f32
    %537 = vector.broadcast %cst_40 : f32 to vector<2x32xf32>
    %538 = arith.addf %537, %536 : vector<2x32xf32>
    %539 = arith.divf %537, %538 : vector<2x32xf32>
    %540 = vector.extract_strided_slice %539 {offsets = [0, 0], sizes = [2, 8], strides = [1, 1]} : vector<2x32xf32> to vector<2x8xf32>
    %541 = vector.extract_strided_slice %539 {offsets = [0, 8], sizes = [2, 8], strides = [1, 1]} : vector<2x32xf32> to vector<2x8xf32>
    %542 = vector.extract_strided_slice %539 {offsets = [0, 16], sizes = [2, 8], strides = [1, 1]} : vector<2x32xf32> to vector<2x8xf32>
    %cst_41 = arith.constant 2.000000e+00 : f32
    %543 = vector.broadcast %cst_41 : f32 to vector<2x8xf32>
    %544 = arith.mulf %543, %542 : vector<2x8xf32>
    %cst_42 = arith.constant 1.000000e+00 : f32
    %545 = vector.broadcast %cst_42 : f32 to vector<2x8xf32>
    %546 = arith.subf %544, %545 : vector<2x8xf32>
    %547 = vector.extract_strided_slice %539 {offsets = [0, 24], sizes = [2, 8], strides = [1, 1]} : vector<2x32xf32> to vector<2x8xf32>
    %548 = arith.mulf %541, %500 : vector<2x8xf32>
    %549 = arith.mulf %540, %546 : vector<2x8xf32>
    %550 = arith.addf %548, %549 : vector<2x8xf32>
    %551 = math.tanh %550 : vector<2x8xf32>
    %552 = arith.mulf %547, %551 : vector<2x8xf32>
    %553 = vector.extract_strided_slice %552 {offsets = [0, 0], sizes = [2, 1], strides = [1, 1]} : vector<2x8xf32> to vector<2x1xf32>
    %554 = vector.broadcast %553 : vector<2x1xf32> to vector<2x32xf32>
    %555 = arith.mulf %554, %29 : vector<2x32xf32>
    %556 = vector.extract_strided_slice %552 {offsets = [0, 1], sizes = [2, 1], strides = [1, 1]} : vector<2x8xf32> to vector<2x1xf32>
    %557 = vector.broadcast %556 : vector<2x1xf32> to vector<2x32xf32>
    %558 = arith.mulf %557, %32 : vector<2x32xf32>
    %559 = vector.extract_strided_slice %552 {offsets = [0, 2], sizes = [2, 1], strides = [1, 1]} : vector<2x8xf32> to vector<2x1xf32>
    %560 = vector.broadcast %559 : vector<2x1xf32> to vector<2x32xf32>
    %561 = arith.mulf %560, %35 : vector<2x32xf32>
    %562 = vector.extract_strided_slice %552 {offsets = [0, 3], sizes = [2, 1], strides = [1, 1]} : vector<2x8xf32> to vector<2x1xf32>
    %563 = vector.broadcast %562 : vector<2x1xf32> to vector<2x32xf32>
    %564 = arith.mulf %563, %38 : vector<2x32xf32>
    %565 = vector.extract_strided_slice %552 {offsets = [0, 4], sizes = [2, 1], strides = [1, 1]} : vector<2x8xf32> to vector<2x1xf32>
    %566 = vector.broadcast %565 : vector<2x1xf32> to vector<2x32xf32>
    %567 = arith.mulf %566, %41 : vector<2x32xf32>
    %568 = vector.extract_strided_slice %552 {offsets = [0, 5], sizes = [2, 1], strides = [1, 1]} : vector<2x8xf32> to vector<2x1xf32>
    %569 = vector.broadcast %568 : vector<2x1xf32> to vector<2x32xf32>
    %570 = arith.mulf %569, %44 : vector<2x32xf32>
    %571 = vector.extract_strided_slice %552 {offsets = [0, 6], sizes = [2, 1], strides = [1, 1]} : vector<2x8xf32> to vector<2x1xf32>
    %572 = vector.broadcast %571 : vector<2x1xf32> to vector<2x32xf32>
    %573 = arith.mulf %572, %47 : vector<2x32xf32>
    %574 = vector.extract_strided_slice %552 {offsets = [0, 7], sizes = [2, 1], strides = [1, 1]} : vector<2x8xf32> to vector<2x1xf32>
    %575 = vector.broadcast %574 : vector<2x1xf32> to vector<2x32xf32>
    %576 = arith.mulf %575, %50 : vector<2x32xf32>
    %577 = arith.addf %555, %558 : vector<2x32xf32>
    %578 = arith.addf %561, %564 : vector<2x32xf32>
    %579 = arith.addf %567, %570 : vector<2x32xf32>
    %580 = arith.addf %573, %576 : vector<2x32xf32>
    %581 = arith.addf %577, %578 : vector<2x32xf32>
    %582 = arith.addf %579, %580 : vector<2x32xf32>
    %583 = arith.addf %581, %582 : vector<2x32xf32>
    %584 = arith.addf %21, %583 : vector<2x32xf32>
    %585 = arith.negf %584 : vector<2x32xf32>
    %586 = math.exp %585 : vector<2x32xf32>
    %cst_43 = arith.constant 1.000000e+00 : f32
    %587 = vector.broadcast %cst_43 : f32 to vector<2x32xf32>
    %588 = arith.addf %587, %586 : vector<2x32xf32>
    %589 = arith.divf %587, %588 : vector<2x32xf32>
    %590 = vector.extract_strided_slice %589 {offsets = [0, 0], sizes = [2, 8], strides = [1, 1]} : vector<2x32xf32> to vector<2x8xf32>
    %591 = vector.extract_strided_slice %589 {offsets = [0, 8], sizes = [2, 8], strides = [1, 1]} : vector<2x32xf32> to vector<2x8xf32>
    %592 = vector.extract_strided_slice %589 {offsets = [0, 16], sizes = [2, 8], strides = [1, 1]} : vector<2x32xf32> to vector<2x8xf32>
    %cst_44 = arith.constant 2.000000e+00 : f32
    %593 = vector.broadcast %cst_44 : f32 to vector<2x8xf32>
    %594 = arith.mulf %593, %592 : vector<2x8xf32>
    %cst_45 = arith.constant 1.000000e+00 : f32
    %595 = vector.broadcast %cst_45 : f32 to vector<2x8xf32>
    %596 = arith.subf %594, %595 : vector<2x8xf32>
    %597 = vector.extract_strided_slice %589 {offsets = [0, 24], sizes = [2, 8], strides = [1, 1]} : vector<2x32xf32> to vector<2x8xf32>
    %598 = arith.mulf %591, %550 : vector<2x8xf32>
    %599 = arith.mulf %590, %596 : vector<2x8xf32>
    %600 = arith.addf %598, %599 : vector<2x8xf32>
    %601 = math.tanh %600 : vector<2x8xf32>
    %602 = arith.mulf %597, %601 : vector<2x8xf32>
    %603 = vector.extract_strided_slice %602 {offsets = [0, 0], sizes = [2, 1], strides = [1, 1]} : vector<2x8xf32> to vector<2x1xf32>
    %604 = vector.broadcast %603 : vector<2x1xf32> to vector<2x32xf32>
    %605 = arith.mulf %604, %29 : vector<2x32xf32>
    %606 = vector.extract_strided_slice %602 {offsets = [0, 1], sizes = [2, 1], strides = [1, 1]} : vector<2x8xf32> to vector<2x1xf32>
    %607 = vector.broadcast %606 : vector<2x1xf32> to vector<2x32xf32>
    %608 = arith.mulf %607, %32 : vector<2x32xf32>
    %609 = vector.extract_strided_slice %602 {offsets = [0, 2], sizes = [2, 1], strides = [1, 1]} : vector<2x8xf32> to vector<2x1xf32>
    %610 = vector.broadcast %609 : vector<2x1xf32> to vector<2x32xf32>
    %611 = arith.mulf %610, %35 : vector<2x32xf32>
    %612 = vector.extract_strided_slice %602 {offsets = [0, 3], sizes = [2, 1], strides = [1, 1]} : vector<2x8xf32> to vector<2x1xf32>
    %613 = vector.broadcast %612 : vector<2x1xf32> to vector<2x32xf32>
    %614 = arith.mulf %613, %38 : vector<2x32xf32>
    %615 = vector.extract_strided_slice %602 {offsets = [0, 4], sizes = [2, 1], strides = [1, 1]} : vector<2x8xf32> to vector<2x1xf32>
    %616 = vector.broadcast %615 : vector<2x1xf32> to vector<2x32xf32>
    %617 = arith.mulf %616, %41 : vector<2x32xf32>
    %618 = vector.extract_strided_slice %602 {offsets = [0, 5], sizes = [2, 1], strides = [1, 1]} : vector<2x8xf32> to vector<2x1xf32>
    %619 = vector.broadcast %618 : vector<2x1xf32> to vector<2x32xf32>
    %620 = arith.mulf %619, %44 : vector<2x32xf32>
    %621 = vector.extract_strided_slice %602 {offsets = [0, 6], sizes = [2, 1], strides = [1, 1]} : vector<2x8xf32> to vector<2x1xf32>
    %622 = vector.broadcast %621 : vector<2x1xf32> to vector<2x32xf32>
    %623 = arith.mulf %622, %47 : vector<2x32xf32>
    %624 = vector.extract_strided_slice %602 {offsets = [0, 7], sizes = [2, 1], strides = [1, 1]} : vector<2x8xf32> to vector<2x1xf32>
    %625 = vector.broadcast %624 : vector<2x1xf32> to vector<2x32xf32>
    %626 = arith.mulf %625, %50 : vector<2x32xf32>
    %627 = arith.addf %605, %608 : vector<2x32xf32>
    %628 = arith.addf %611, %614 : vector<2x32xf32>
    %629 = arith.addf %617, %620 : vector<2x32xf32>
    %630 = arith.addf %623, %626 : vector<2x32xf32>
    %631 = arith.addf %627, %628 : vector<2x32xf32>
    %632 = arith.addf %629, %630 : vector<2x32xf32>
    %633 = arith.addf %631, %632 : vector<2x32xf32>
    %634 = arith.addf %22, %633 : vector<2x32xf32>
    %635 = arith.negf %634 : vector<2x32xf32>
    %636 = math.exp %635 : vector<2x32xf32>
    %cst_46 = arith.constant 1.000000e+00 : f32
    %637 = vector.broadcast %cst_46 : f32 to vector<2x32xf32>
    %638 = arith.addf %637, %636 : vector<2x32xf32>
    %639 = arith.divf %637, %638 : vector<2x32xf32>
    %640 = vector.extract_strided_slice %639 {offsets = [0, 0], sizes = [2, 8], strides = [1, 1]} : vector<2x32xf32> to vector<2x8xf32>
    %641 = vector.extract_strided_slice %639 {offsets = [0, 8], sizes = [2, 8], strides = [1, 1]} : vector<2x32xf32> to vector<2x8xf32>
    %642 = vector.extract_strided_slice %639 {offsets = [0, 16], sizes = [2, 8], strides = [1, 1]} : vector<2x32xf32> to vector<2x8xf32>
    %cst_47 = arith.constant 2.000000e+00 : f32
    %643 = vector.broadcast %cst_47 : f32 to vector<2x8xf32>
    %644 = arith.mulf %643, %642 : vector<2x8xf32>
    %cst_48 = arith.constant 1.000000e+00 : f32
    %645 = vector.broadcast %cst_48 : f32 to vector<2x8xf32>
    %646 = arith.subf %644, %645 : vector<2x8xf32>
    %647 = vector.extract_strided_slice %639 {offsets = [0, 24], sizes = [2, 8], strides = [1, 1]} : vector<2x32xf32> to vector<2x8xf32>
    %648 = arith.mulf %641, %600 : vector<2x8xf32>
    %649 = arith.mulf %640, %646 : vector<2x8xf32>
    %650 = arith.addf %648, %649 : vector<2x8xf32>
    %651 = math.tanh %650 : vector<2x8xf32>
    %652 = arith.mulf %647, %651 : vector<2x8xf32>
    %653 = vector.extract_strided_slice %652 {offsets = [0, 0], sizes = [2, 1], strides = [1, 1]} : vector<2x8xf32> to vector<2x1xf32>
    %654 = vector.broadcast %653 : vector<2x1xf32> to vector<2x32xf32>
    %655 = arith.mulf %654, %29 : vector<2x32xf32>
    %656 = vector.extract_strided_slice %652 {offsets = [0, 1], sizes = [2, 1], strides = [1, 1]} : vector<2x8xf32> to vector<2x1xf32>
    %657 = vector.broadcast %656 : vector<2x1xf32> to vector<2x32xf32>
    %658 = arith.mulf %657, %32 : vector<2x32xf32>
    %659 = vector.extract_strided_slice %652 {offsets = [0, 2], sizes = [2, 1], strides = [1, 1]} : vector<2x8xf32> to vector<2x1xf32>
    %660 = vector.broadcast %659 : vector<2x1xf32> to vector<2x32xf32>
    %661 = arith.mulf %660, %35 : vector<2x32xf32>
    %662 = vector.extract_strided_slice %652 {offsets = [0, 3], sizes = [2, 1], strides = [1, 1]} : vector<2x8xf32> to vector<2x1xf32>
    %663 = vector.broadcast %662 : vector<2x1xf32> to vector<2x32xf32>
    %664 = arith.mulf %663, %38 : vector<2x32xf32>
    %665 = vector.extract_strided_slice %652 {offsets = [0, 4], sizes = [2, 1], strides = [1, 1]} : vector<2x8xf32> to vector<2x1xf32>
    %666 = vector.broadcast %665 : vector<2x1xf32> to vector<2x32xf32>
    %667 = arith.mulf %666, %41 : vector<2x32xf32>
    %668 = vector.extract_strided_slice %652 {offsets = [0, 5], sizes = [2, 1], strides = [1, 1]} : vector<2x8xf32> to vector<2x1xf32>
    %669 = vector.broadcast %668 : vector<2x1xf32> to vector<2x32xf32>
    %670 = arith.mulf %669, %44 : vector<2x32xf32>
    %671 = vector.extract_strided_slice %652 {offsets = [0, 6], sizes = [2, 1], strides = [1, 1]} : vector<2x8xf32> to vector<2x1xf32>
    %672 = vector.broadcast %671 : vector<2x1xf32> to vector<2x32xf32>
    %673 = arith.mulf %672, %47 : vector<2x32xf32>
    %674 = vector.extract_strided_slice %652 {offsets = [0, 7], sizes = [2, 1], strides = [1, 1]} : vector<2x8xf32> to vector<2x1xf32>
    %675 = vector.broadcast %674 : vector<2x1xf32> to vector<2x32xf32>
    %676 = arith.mulf %675, %50 : vector<2x32xf32>
    %677 = arith.addf %655, %658 : vector<2x32xf32>
    %678 = arith.addf %661, %664 : vector<2x32xf32>
    %679 = arith.addf %667, %670 : vector<2x32xf32>
    %680 = arith.addf %673, %676 : vector<2x32xf32>
    %681 = arith.addf %677, %678 : vector<2x32xf32>
    %682 = arith.addf %679, %680 : vector<2x32xf32>
    %683 = arith.addf %681, %682 : vector<2x32xf32>
    %684 = arith.addf %23, %683 : vector<2x32xf32>
    %685 = arith.negf %684 : vector<2x32xf32>
    %686 = math.exp %685 : vector<2x32xf32>
    %cst_49 = arith.constant 1.000000e+00 : f32
    %687 = vector.broadcast %cst_49 : f32 to vector<2x32xf32>
    %688 = arith.addf %687, %686 : vector<2x32xf32>
    %689 = arith.divf %687, %688 : vector<2x32xf32>
    %690 = vector.extract_strided_slice %689 {offsets = [0, 0], sizes = [2, 8], strides = [1, 1]} : vector<2x32xf32> to vector<2x8xf32>
    %691 = vector.extract_strided_slice %689 {offsets = [0, 8], sizes = [2, 8], strides = [1, 1]} : vector<2x32xf32> to vector<2x8xf32>
    %692 = vector.extract_strided_slice %689 {offsets = [0, 16], sizes = [2, 8], strides = [1, 1]} : vector<2x32xf32> to vector<2x8xf32>
    %cst_50 = arith.constant 2.000000e+00 : f32
    %693 = vector.broadcast %cst_50 : f32 to vector<2x8xf32>
    %694 = arith.mulf %693, %692 : vector<2x8xf32>
    %cst_51 = arith.constant 1.000000e+00 : f32
    %695 = vector.broadcast %cst_51 : f32 to vector<2x8xf32>
    %696 = arith.subf %694, %695 : vector<2x8xf32>
    %697 = vector.extract_strided_slice %689 {offsets = [0, 24], sizes = [2, 8], strides = [1, 1]} : vector<2x32xf32> to vector<2x8xf32>
    %698 = arith.mulf %691, %650 : vector<2x8xf32>
    %699 = arith.mulf %690, %696 : vector<2x8xf32>
    %700 = arith.addf %698, %699 : vector<2x8xf32>
    %701 = math.tanh %700 : vector<2x8xf32>
    %702 = arith.mulf %697, %701 : vector<2x8xf32>
    %703 = vector.extract_strided_slice %702 {offsets = [0, 0], sizes = [2, 1], strides = [1, 1]} : vector<2x8xf32> to vector<2x1xf32>
    %704 = vector.broadcast %703 : vector<2x1xf32> to vector<2x32xf32>
    %705 = arith.mulf %704, %29 : vector<2x32xf32>
    %706 = vector.extract_strided_slice %702 {offsets = [0, 1], sizes = [2, 1], strides = [1, 1]} : vector<2x8xf32> to vector<2x1xf32>
    %707 = vector.broadcast %706 : vector<2x1xf32> to vector<2x32xf32>
    %708 = arith.mulf %707, %32 : vector<2x32xf32>
    %709 = vector.extract_strided_slice %702 {offsets = [0, 2], sizes = [2, 1], strides = [1, 1]} : vector<2x8xf32> to vector<2x1xf32>
    %710 = vector.broadcast %709 : vector<2x1xf32> to vector<2x32xf32>
    %711 = arith.mulf %710, %35 : vector<2x32xf32>
    %712 = vector.extract_strided_slice %702 {offsets = [0, 3], sizes = [2, 1], strides = [1, 1]} : vector<2x8xf32> to vector<2x1xf32>
    %713 = vector.broadcast %712 : vector<2x1xf32> to vector<2x32xf32>
    %714 = arith.mulf %713, %38 : vector<2x32xf32>
    %715 = vector.extract_strided_slice %702 {offsets = [0, 4], sizes = [2, 1], strides = [1, 1]} : vector<2x8xf32> to vector<2x1xf32>
    %716 = vector.broadcast %715 : vector<2x1xf32> to vector<2x32xf32>
    %717 = arith.mulf %716, %41 : vector<2x32xf32>
    %718 = vector.extract_strided_slice %702 {offsets = [0, 5], sizes = [2, 1], strides = [1, 1]} : vector<2x8xf32> to vector<2x1xf32>
    %719 = vector.broadcast %718 : vector<2x1xf32> to vector<2x32xf32>
    %720 = arith.mulf %719, %44 : vector<2x32xf32>
    %721 = vector.extract_strided_slice %702 {offsets = [0, 6], sizes = [2, 1], strides = [1, 1]} : vector<2x8xf32> to vector<2x1xf32>
    %722 = vector.broadcast %721 : vector<2x1xf32> to vector<2x32xf32>
    %723 = arith.mulf %722, %47 : vector<2x32xf32>
    %724 = vector.extract_strided_slice %702 {offsets = [0, 7], sizes = [2, 1], strides = [1, 1]} : vector<2x8xf32> to vector<2x1xf32>
    %725 = vector.broadcast %724 : vector<2x1xf32> to vector<2x32xf32>
    %726 = arith.mulf %725, %50 : vector<2x32xf32>
    %727 = arith.addf %705, %708 : vector<2x32xf32>
    %728 = arith.addf %711, %714 : vector<2x32xf32>
    %729 = arith.addf %717, %720 : vector<2x32xf32>
    %730 = arith.addf %723, %726 : vector<2x32xf32>
    %731 = arith.addf %727, %728 : vector<2x32xf32>
    %732 = arith.addf %729, %730 : vector<2x32xf32>
    %733 = arith.addf %731, %732 : vector<2x32xf32>
    %734 = arith.addf %24, %733 : vector<2x32xf32>
    %735 = arith.negf %734 : vector<2x32xf32>
    %736 = math.exp %735 : vector<2x32xf32>
    %cst_52 = arith.constant 1.000000e+00 : f32
    %737 = vector.broadcast %cst_52 : f32 to vector<2x32xf32>
    %738 = arith.addf %737, %736 : vector<2x32xf32>
    %739 = arith.divf %737, %738 : vector<2x32xf32>
    %740 = vector.extract_strided_slice %739 {offsets = [0, 0], sizes = [2, 8], strides = [1, 1]} : vector<2x32xf32> to vector<2x8xf32>
    %741 = vector.extract_strided_slice %739 {offsets = [0, 8], sizes = [2, 8], strides = [1, 1]} : vector<2x32xf32> to vector<2x8xf32>
    %742 = vector.extract_strided_slice %739 {offsets = [0, 16], sizes = [2, 8], strides = [1, 1]} : vector<2x32xf32> to vector<2x8xf32>
    %cst_53 = arith.constant 2.000000e+00 : f32
    %743 = vector.broadcast %cst_53 : f32 to vector<2x8xf32>
    %744 = arith.mulf %743, %742 : vector<2x8xf32>
    %cst_54 = arith.constant 1.000000e+00 : f32
    %745 = vector.broadcast %cst_54 : f32 to vector<2x8xf32>
    %746 = arith.subf %744, %745 : vector<2x8xf32>
    %747 = vector.extract_strided_slice %739 {offsets = [0, 24], sizes = [2, 8], strides = [1, 1]} : vector<2x32xf32> to vector<2x8xf32>
    %748 = arith.mulf %741, %700 : vector<2x8xf32>
    %749 = arith.mulf %740, %746 : vector<2x8xf32>
    %750 = arith.addf %748, %749 : vector<2x8xf32>
    %751 = math.tanh %750 : vector<2x8xf32>
    %752 = arith.mulf %747, %751 : vector<2x8xf32>
    %753 = vector.extract_strided_slice %752 {offsets = [0, 0], sizes = [2, 1], strides = [1, 1]} : vector<2x8xf32> to vector<2x1xf32>
    %754 = vector.broadcast %753 : vector<2x1xf32> to vector<2x32xf32>
    %755 = arith.mulf %754, %29 : vector<2x32xf32>
    %756 = vector.extract_strided_slice %752 {offsets = [0, 1], sizes = [2, 1], strides = [1, 1]} : vector<2x8xf32> to vector<2x1xf32>
    %757 = vector.broadcast %756 : vector<2x1xf32> to vector<2x32xf32>
    %758 = arith.mulf %757, %32 : vector<2x32xf32>
    %759 = vector.extract_strided_slice %752 {offsets = [0, 2], sizes = [2, 1], strides = [1, 1]} : vector<2x8xf32> to vector<2x1xf32>
    %760 = vector.broadcast %759 : vector<2x1xf32> to vector<2x32xf32>
    %761 = arith.mulf %760, %35 : vector<2x32xf32>
    %762 = vector.extract_strided_slice %752 {offsets = [0, 3], sizes = [2, 1], strides = [1, 1]} : vector<2x8xf32> to vector<2x1xf32>
    %763 = vector.broadcast %762 : vector<2x1xf32> to vector<2x32xf32>
    %764 = arith.mulf %763, %38 : vector<2x32xf32>
    %765 = vector.extract_strided_slice %752 {offsets = [0, 4], sizes = [2, 1], strides = [1, 1]} : vector<2x8xf32> to vector<2x1xf32>
    %766 = vector.broadcast %765 : vector<2x1xf32> to vector<2x32xf32>
    %767 = arith.mulf %766, %41 : vector<2x32xf32>
    %768 = vector.extract_strided_slice %752 {offsets = [0, 5], sizes = [2, 1], strides = [1, 1]} : vector<2x8xf32> to vector<2x1xf32>
    %769 = vector.broadcast %768 : vector<2x1xf32> to vector<2x32xf32>
    %770 = arith.mulf %769, %44 : vector<2x32xf32>
    %771 = vector.extract_strided_slice %752 {offsets = [0, 6], sizes = [2, 1], strides = [1, 1]} : vector<2x8xf32> to vector<2x1xf32>
    %772 = vector.broadcast %771 : vector<2x1xf32> to vector<2x32xf32>
    %773 = arith.mulf %772, %47 : vector<2x32xf32>
    %774 = vector.extract_strided_slice %752 {offsets = [0, 7], sizes = [2, 1], strides = [1, 1]} : vector<2x8xf32> to vector<2x1xf32>
    %775 = vector.broadcast %774 : vector<2x1xf32> to vector<2x32xf32>
    %776 = arith.mulf %775, %50 : vector<2x32xf32>
    %777 = arith.addf %755, %758 : vector<2x32xf32>
    %778 = arith.addf %761, %764 : vector<2x32xf32>
    %779 = arith.addf %767, %770 : vector<2x32xf32>
    %780 = arith.addf %773, %776 : vector<2x32xf32>
    %781 = arith.addf %777, %778 : vector<2x32xf32>
    %782 = arith.addf %779, %780 : vector<2x32xf32>
    %783 = arith.addf %781, %782 : vector<2x32xf32>
    %784 = arith.addf %25, %783 : vector<2x32xf32>
    %785 = arith.negf %784 : vector<2x32xf32>
    %786 = math.exp %785 : vector<2x32xf32>
    %cst_55 = arith.constant 1.000000e+00 : f32
    %787 = vector.broadcast %cst_55 : f32 to vector<2x32xf32>
    %788 = arith.addf %787, %786 : vector<2x32xf32>
    %789 = arith.divf %787, %788 : vector<2x32xf32>
    %790 = vector.extract_strided_slice %789 {offsets = [0, 0], sizes = [2, 8], strides = [1, 1]} : vector<2x32xf32> to vector<2x8xf32>
    %791 = vector.extract_strided_slice %789 {offsets = [0, 8], sizes = [2, 8], strides = [1, 1]} : vector<2x32xf32> to vector<2x8xf32>
    %792 = vector.extract_strided_slice %789 {offsets = [0, 16], sizes = [2, 8], strides = [1, 1]} : vector<2x32xf32> to vector<2x8xf32>
    %cst_56 = arith.constant 2.000000e+00 : f32
    %793 = vector.broadcast %cst_56 : f32 to vector<2x8xf32>
    %794 = arith.mulf %793, %792 : vector<2x8xf32>
    %cst_57 = arith.constant 1.000000e+00 : f32
    %795 = vector.broadcast %cst_57 : f32 to vector<2x8xf32>
    %796 = arith.subf %794, %795 : vector<2x8xf32>
    %797 = vector.extract_strided_slice %789 {offsets = [0, 24], sizes = [2, 8], strides = [1, 1]} : vector<2x32xf32> to vector<2x8xf32>
    %798 = arith.mulf %791, %750 : vector<2x8xf32>
    %799 = arith.mulf %790, %796 : vector<2x8xf32>
    %800 = arith.addf %798, %799 : vector<2x8xf32>
    %801 = math.tanh %800 : vector<2x8xf32>
    %802 = arith.mulf %797, %801 : vector<2x8xf32>
    %803 = vector.extract_strided_slice %802 {offsets = [0, 0], sizes = [2, 1], strides = [1, 1]} : vector<2x8xf32> to vector<2x1xf32>
    %804 = vector.broadcast %803 : vector<2x1xf32> to vector<2x32xf32>
    %805 = arith.mulf %804, %29 : vector<2x32xf32>
    %806 = vector.extract_strided_slice %802 {offsets = [0, 1], sizes = [2, 1], strides = [1, 1]} : vector<2x8xf32> to vector<2x1xf32>
    %807 = vector.broadcast %806 : vector<2x1xf32> to vector<2x32xf32>
    %808 = arith.mulf %807, %32 : vector<2x32xf32>
    %809 = vector.extract_strided_slice %802 {offsets = [0, 2], sizes = [2, 1], strides = [1, 1]} : vector<2x8xf32> to vector<2x1xf32>
    %810 = vector.broadcast %809 : vector<2x1xf32> to vector<2x32xf32>
    %811 = arith.mulf %810, %35 : vector<2x32xf32>
    %812 = vector.extract_strided_slice %802 {offsets = [0, 3], sizes = [2, 1], strides = [1, 1]} : vector<2x8xf32> to vector<2x1xf32>
    %813 = vector.broadcast %812 : vector<2x1xf32> to vector<2x32xf32>
    %814 = arith.mulf %813, %38 : vector<2x32xf32>
    %815 = vector.extract_strided_slice %802 {offsets = [0, 4], sizes = [2, 1], strides = [1, 1]} : vector<2x8xf32> to vector<2x1xf32>
    %816 = vector.broadcast %815 : vector<2x1xf32> to vector<2x32xf32>
    %817 = arith.mulf %816, %41 : vector<2x32xf32>
    %818 = vector.extract_strided_slice %802 {offsets = [0, 5], sizes = [2, 1], strides = [1, 1]} : vector<2x8xf32> to vector<2x1xf32>
    %819 = vector.broadcast %818 : vector<2x1xf32> to vector<2x32xf32>
    %820 = arith.mulf %819, %44 : vector<2x32xf32>
    %821 = vector.extract_strided_slice %802 {offsets = [0, 6], sizes = [2, 1], strides = [1, 1]} : vector<2x8xf32> to vector<2x1xf32>
    %822 = vector.broadcast %821 : vector<2x1xf32> to vector<2x32xf32>
    %823 = arith.mulf %822, %47 : vector<2x32xf32>
    %824 = vector.extract_strided_slice %802 {offsets = [0, 7], sizes = [2, 1], strides = [1, 1]} : vector<2x8xf32> to vector<2x1xf32>
    %825 = vector.broadcast %824 : vector<2x1xf32> to vector<2x32xf32>
    %826 = arith.mulf %825, %50 : vector<2x32xf32>
    %827 = arith.addf %805, %808 : vector<2x32xf32>
    %828 = arith.addf %811, %814 : vector<2x32xf32>
    %829 = arith.addf %817, %820 : vector<2x32xf32>
    %830 = arith.addf %823, %826 : vector<2x32xf32>
    %831 = arith.addf %827, %828 : vector<2x32xf32>
    %832 = arith.addf %829, %830 : vector<2x32xf32>
    %833 = arith.addf %831, %832 : vector<2x32xf32>
    %834 = arith.addf %26, %833 : vector<2x32xf32>
    %835 = arith.negf %834 : vector<2x32xf32>
    %836 = math.exp %835 : vector<2x32xf32>
    %cst_58 = arith.constant 1.000000e+00 : f32
    %837 = vector.broadcast %cst_58 : f32 to vector<2x32xf32>
    %838 = arith.addf %837, %836 : vector<2x32xf32>
    %839 = arith.divf %837, %838 : vector<2x32xf32>
    %840 = vector.extract_strided_slice %839 {offsets = [0, 0], sizes = [2, 8], strides = [1, 1]} : vector<2x32xf32> to vector<2x8xf32>
    %841 = vector.extract_strided_slice %839 {offsets = [0, 8], sizes = [2, 8], strides = [1, 1]} : vector<2x32xf32> to vector<2x8xf32>
    %842 = vector.extract_strided_slice %839 {offsets = [0, 16], sizes = [2, 8], strides = [1, 1]} : vector<2x32xf32> to vector<2x8xf32>
    %cst_59 = arith.constant 2.000000e+00 : f32
    %843 = vector.broadcast %cst_59 : f32 to vector<2x8xf32>
    %844 = arith.mulf %843, %842 : vector<2x8xf32>
    %cst_60 = arith.constant 1.000000e+00 : f32
    %845 = vector.broadcast %cst_60 : f32 to vector<2x8xf32>
    %846 = arith.subf %844, %845 : vector<2x8xf32>
    %847 = vector.extract_strided_slice %839 {offsets = [0, 24], sizes = [2, 8], strides = [1, 1]} : vector<2x32xf32> to vector<2x8xf32>
    %848 = arith.mulf %841, %800 : vector<2x8xf32>
    %849 = arith.mulf %840, %846 : vector<2x8xf32>
    %850 = arith.addf %848, %849 : vector<2x8xf32>
    %851 = math.tanh %850 : vector<2x8xf32>
    %852 = arith.mulf %847, %851 : vector<2x8xf32>
    %853 = vector.shape_cast %102 : vector<2x8xf32> to vector<1x2x8xf32>
    %854 = vector.shape_cast %152 : vector<2x8xf32> to vector<1x2x8xf32>
    %855 = vector.shape_cast %202 : vector<2x8xf32> to vector<1x2x8xf32>
    %856 = vector.shape_cast %252 : vector<2x8xf32> to vector<1x2x8xf32>
    %857 = vector.shape_cast %302 : vector<2x8xf32> to vector<1x2x8xf32>
    %858 = vector.shape_cast %352 : vector<2x8xf32> to vector<1x2x8xf32>
    %859 = vector.shape_cast %402 : vector<2x8xf32> to vector<1x2x8xf32>
    %860 = vector.shape_cast %452 : vector<2x8xf32> to vector<1x2x8xf32>
    %861 = vector.shape_cast %502 : vector<2x8xf32> to vector<1x2x8xf32>
    %862 = vector.shape_cast %552 : vector<2x8xf32> to vector<1x2x8xf32>
    %863 = vector.shape_cast %602 : vector<2x8xf32> to vector<1x2x8xf32>
    %864 = vector.shape_cast %652 : vector<2x8xf32> to vector<1x2x8xf32>
    %865 = vector.shape_cast %702 : vector<2x8xf32> to vector<1x2x8xf32>
    %866 = vector.shape_cast %752 : vector<2x8xf32> to vector<1x2x8xf32>
    %867 = vector.shape_cast %802 : vector<2x8xf32> to vector<1x2x8xf32>
    %868 = vector.shape_cast %852 : vector<2x8xf32> to vector<1x2x8xf32>
    %869 = tpu.concatenate %853, %854, %855, %856, %857, %858, %859, %860, %861, %862, %863, %864, %865, %866, %867, %868 in 0 : vector<1x2x8xf32>, vector<1x2x8xf32>, vector<1x2x8xf32>, vector<1x2x8xf32>, vector<1x2x8xf32>, vector<1x2x8xf32>, vector<1x2x8xf32>, vector<1x2x8xf32>, vector<1x2x8xf32>, vector<1x2x8xf32>, vector<1x2x8xf32>, vector<1x2x8xf32>, vector<1x2x8xf32>, vector<1x2x8xf32>, vector<1x2x8xf32>, vector<1x2x8xf32> -> vector<16x2x8xf32>
    %870 = vector.shape_cast %869 : vector<16x2x8xf32> to vector<32x8xf32>
    %c1 = arith.constant 1 : index
    %c0_61 = arith.constant 0 : index
    %c0_62 = arith.constant 0 : index
    %871 = vector.load %arg2[%c1, %c0_61, %c0_62] : memref<3x8x32xf32, #tpu.memory_space<vmem>>, vector<1x8x32xf32>
    %872 = vector.shape_cast %871 : vector<1x8x32xf32> to vector<8x32xf32>
    %c1_63 = arith.constant 1 : index
    %c0_64 = arith.constant 0 : index
    %c0_65 = arith.constant 0 : index
    %873 = vector.load %arg3[%c1_63, %c0_64, %c0_65] : memref<3x8x32xf32, #tpu.memory_space<vmem>>, vector<1x8x32xf32>
    %874 = vector.shape_cast %873 : vector<1x8x32xf32> to vector<8x32xf32>
    %c1_66 = arith.constant 1 : index
    %c0_67 = arith.constant 0 : index
    %c0_68 = arith.constant 0 : index
    %875 = vector.load %arg4[%c1_66, %c0_67, %c0_68] : memref<3x1x32xf32, #tpu.memory_space<vmem>>, vector<1x1x32xf32>
    %876 = vector.shape_cast %875 : vector<1x1x32xf32> to vector<1x32xf32>
    %cst_69 = arith.constant dense<0.000000e+00> : vector<32x32xf32>
    %877 = tpu.matmul %870, %872, %cst_69 {dimension_numbers = #tpu.dot_dimension_numbers<[1], [0], [0], [1], [0, 0, 1, 1], [], []>} : vector<32x8xf32>, vector<8x32xf32>, vector<32x32xf32> -> vector<32x32xf32>
    %878 = vector.broadcast %876 : vector<1x32xf32> to vector<32x32xf32>
    %879 = arith.addf %877, %878 : vector<32x32xf32>
    %880 = vector.extract_strided_slice %879 {offsets = [0, 0], sizes = [2, 32], strides = [1, 1]} : vector<32x32xf32> to vector<2x32xf32>
    %881 = vector.extract_strided_slice %879 {offsets = [2, 0], sizes = [2, 32], strides = [1, 1]} : vector<32x32xf32> to vector<2x32xf32>
    %882 = vector.extract_strided_slice %879 {offsets = [4, 0], sizes = [2, 32], strides = [1, 1]} : vector<32x32xf32> to vector<2x32xf32>
    %883 = vector.extract_strided_slice %879 {offsets = [6, 0], sizes = [2, 32], strides = [1, 1]} : vector<32x32xf32> to vector<2x32xf32>
    %884 = vector.extract_strided_slice %879 {offsets = [8, 0], sizes = [2, 32], strides = [1, 1]} : vector<32x32xf32> to vector<2x32xf32>
    %885 = vector.extract_strided_slice %879 {offsets = [10, 0], sizes = [2, 32], strides = [1, 1]} : vector<32x32xf32> to vector<2x32xf32>
    %886 = vector.extract_strided_slice %879 {offsets = [12, 0], sizes = [2, 32], strides = [1, 1]} : vector<32x32xf32> to vector<2x32xf32>
    %887 = vector.extract_strided_slice %879 {offsets = [14, 0], sizes = [2, 32], strides = [1, 1]} : vector<32x32xf32> to vector<2x32xf32>
    %888 = vector.extract_strided_slice %879 {offsets = [16, 0], sizes = [2, 32], strides = [1, 1]} : vector<32x32xf32> to vector<2x32xf32>
    %889 = vector.extract_strided_slice %879 {offsets = [18, 0], sizes = [2, 32], strides = [1, 1]} : vector<32x32xf32> to vector<2x32xf32>
    %890 = vector.extract_strided_slice %879 {offsets = [20, 0], sizes = [2, 32], strides = [1, 1]} : vector<32x32xf32> to vector<2x32xf32>
    %891 = vector.extract_strided_slice %879 {offsets = [22, 0], sizes = [2, 32], strides = [1, 1]} : vector<32x32xf32> to vector<2x32xf32>
    %892 = vector.extract_strided_slice %879 {offsets = [24, 0], sizes = [2, 32], strides = [1, 1]} : vector<32x32xf32> to vector<2x32xf32>
    %893 = vector.extract_strided_slice %879 {offsets = [26, 0], sizes = [2, 32], strides = [1, 1]} : vector<32x32xf32> to vector<2x32xf32>
    %894 = vector.extract_strided_slice %879 {offsets = [28, 0], sizes = [2, 32], strides = [1, 1]} : vector<32x32xf32> to vector<2x32xf32>
    %895 = vector.extract_strided_slice %879 {offsets = [30, 0], sizes = [2, 32], strides = [1, 1]} : vector<32x32xf32> to vector<2x32xf32>
    %896 = vector.extract_strided_slice %874 {offsets = [0, 0], sizes = [1, 32], strides = [1, 1]} : vector<8x32xf32> to vector<1x32xf32>
    %897 = vector.shape_cast %896 : vector<1x32xf32> to vector<1x32xf32>
    %898 = vector.broadcast %897 : vector<1x32xf32> to vector<2x32xf32>
    %899 = vector.extract_strided_slice %874 {offsets = [1, 0], sizes = [1, 32], strides = [1, 1]} : vector<8x32xf32> to vector<1x32xf32>
    %900 = vector.shape_cast %899 : vector<1x32xf32> to vector<1x32xf32>
    %901 = vector.broadcast %900 : vector<1x32xf32> to vector<2x32xf32>
    %902 = vector.extract_strided_slice %874 {offsets = [2, 0], sizes = [1, 32], strides = [1, 1]} : vector<8x32xf32> to vector<1x32xf32>
    %903 = vector.shape_cast %902 : vector<1x32xf32> to vector<1x32xf32>
    %904 = vector.broadcast %903 : vector<1x32xf32> to vector<2x32xf32>
    %905 = vector.extract_strided_slice %874 {offsets = [3, 0], sizes = [1, 32], strides = [1, 1]} : vector<8x32xf32> to vector<1x32xf32>
    %906 = vector.shape_cast %905 : vector<1x32xf32> to vector<1x32xf32>
    %907 = vector.broadcast %906 : vector<1x32xf32> to vector<2x32xf32>
    %908 = vector.extract_strided_slice %874 {offsets = [4, 0], sizes = [1, 32], strides = [1, 1]} : vector<8x32xf32> to vector<1x32xf32>
    %909 = vector.shape_cast %908 : vector<1x32xf32> to vector<1x32xf32>
    %910 = vector.broadcast %909 : vector<1x32xf32> to vector<2x32xf32>
    %911 = vector.extract_strided_slice %874 {offsets = [5, 0], sizes = [1, 32], strides = [1, 1]} : vector<8x32xf32> to vector<1x32xf32>
    %912 = vector.shape_cast %911 : vector<1x32xf32> to vector<1x32xf32>
    %913 = vector.broadcast %912 : vector<1x32xf32> to vector<2x32xf32>
    %914 = vector.extract_strided_slice %874 {offsets = [6, 0], sizes = [1, 32], strides = [1, 1]} : vector<8x32xf32> to vector<1x32xf32>
    %915 = vector.shape_cast %914 : vector<1x32xf32> to vector<1x32xf32>
    %916 = vector.broadcast %915 : vector<1x32xf32> to vector<2x32xf32>
    %917 = vector.extract_strided_slice %874 {offsets = [7, 0], sizes = [1, 32], strides = [1, 1]} : vector<8x32xf32> to vector<1x32xf32>
    %918 = vector.shape_cast %917 : vector<1x32xf32> to vector<1x32xf32>
    %919 = vector.broadcast %918 : vector<1x32xf32> to vector<2x32xf32>
    %cst_70 = arith.constant 0.000000e+00 : f32
    %920 = vector.broadcast %cst_70 : f32 to vector<2x8xf32>
    %cst_71 = arith.constant 0.000000e+00 : f32
    %921 = vector.broadcast %cst_71 : f32 to vector<2x8xf32>
    %922 = vector.extract_strided_slice %920 {offsets = [0, 0], sizes = [2, 1], strides = [1, 1]} : vector<2x8xf32> to vector<2x1xf32>
    %923 = vector.broadcast %922 : vector<2x1xf32> to vector<2x32xf32>
    %924 = arith.mulf %923, %898 : vector<2x32xf32>
    %925 = vector.extract_strided_slice %920 {offsets = [0, 1], sizes = [2, 1], strides = [1, 1]} : vector<2x8xf32> to vector<2x1xf32>
    %926 = vector.broadcast %925 : vector<2x1xf32> to vector<2x32xf32>
    %927 = arith.mulf %926, %901 : vector<2x32xf32>
    %928 = vector.extract_strided_slice %920 {offsets = [0, 2], sizes = [2, 1], strides = [1, 1]} : vector<2x8xf32> to vector<2x1xf32>
    %929 = vector.broadcast %928 : vector<2x1xf32> to vector<2x32xf32>
    %930 = arith.mulf %929, %904 : vector<2x32xf32>
    %931 = vector.extract_strided_slice %920 {offsets = [0, 3], sizes = [2, 1], strides = [1, 1]} : vector<2x8xf32> to vector<2x1xf32>
    %932 = vector.broadcast %931 : vector<2x1xf32> to vector<2x32xf32>
    %933 = arith.mulf %932, %907 : vector<2x32xf32>
    %934 = vector.extract_strided_slice %920 {offsets = [0, 4], sizes = [2, 1], strides = [1, 1]} : vector<2x8xf32> to vector<2x1xf32>
    %935 = vector.broadcast %934 : vector<2x1xf32> to vector<2x32xf32>
    %936 = arith.mulf %935, %910 : vector<2x32xf32>
    %937 = vector.extract_strided_slice %920 {offsets = [0, 5], sizes = [2, 1], strides = [1, 1]} : vector<2x8xf32> to vector<2x1xf32>
    %938 = vector.broadcast %937 : vector<2x1xf32> to vector<2x32xf32>
    %939 = arith.mulf %938, %913 : vector<2x32xf32>
    %940 = vector.extract_strided_slice %920 {offsets = [0, 6], sizes = [2, 1], strides = [1, 1]} : vector<2x8xf32> to vector<2x1xf32>
    %941 = vector.broadcast %940 : vector<2x1xf32> to vector<2x32xf32>
    %942 = arith.mulf %941, %916 : vector<2x32xf32>
    %943 = vector.extract_strided_slice %920 {offsets = [0, 7], sizes = [2, 1], strides = [1, 1]} : vector<2x8xf32> to vector<2x1xf32>
    %944 = vector.broadcast %943 : vector<2x1xf32> to vector<2x32xf32>
    %945 = arith.mulf %944, %919 : vector<2x32xf32>
    %946 = arith.addf %924, %927 : vector<2x32xf32>
    %947 = arith.addf %930, %933 : vector<2x32xf32>
    %948 = arith.addf %936, %939 : vector<2x32xf32>
    %949 = arith.addf %942, %945 : vector<2x32xf32>
    %950 = arith.addf %946, %947 : vector<2x32xf32>
    %951 = arith.addf %948, %949 : vector<2x32xf32>
    %952 = arith.addf %950, %951 : vector<2x32xf32>
    %953 = arith.addf %880, %952 : vector<2x32xf32>
    %954 = arith.negf %953 : vector<2x32xf32>
    %955 = math.exp %954 : vector<2x32xf32>
    %cst_72 = arith.constant 1.000000e+00 : f32
    %956 = vector.broadcast %cst_72 : f32 to vector<2x32xf32>
    %957 = arith.addf %956, %955 : vector<2x32xf32>
    %958 = arith.divf %956, %957 : vector<2x32xf32>
    %959 = vector.extract_strided_slice %958 {offsets = [0, 0], sizes = [2, 8], strides = [1, 1]} : vector<2x32xf32> to vector<2x8xf32>
    %960 = vector.extract_strided_slice %958 {offsets = [0, 8], sizes = [2, 8], strides = [1, 1]} : vector<2x32xf32> to vector<2x8xf32>
    %961 = vector.extract_strided_slice %958 {offsets = [0, 16], sizes = [2, 8], strides = [1, 1]} : vector<2x32xf32> to vector<2x8xf32>
    %cst_73 = arith.constant 2.000000e+00 : f32
    %962 = vector.broadcast %cst_73 : f32 to vector<2x8xf32>
    %963 = arith.mulf %962, %961 : vector<2x8xf32>
    %cst_74 = arith.constant 1.000000e+00 : f32
    %964 = vector.broadcast %cst_74 : f32 to vector<2x8xf32>
    %965 = arith.subf %963, %964 : vector<2x8xf32>
    %966 = vector.extract_strided_slice %958 {offsets = [0, 24], sizes = [2, 8], strides = [1, 1]} : vector<2x32xf32> to vector<2x8xf32>
    %967 = arith.mulf %960, %921 : vector<2x8xf32>
    %968 = arith.mulf %959, %965 : vector<2x8xf32>
    %969 = arith.addf %967, %968 : vector<2x8xf32>
    %970 = math.tanh %969 : vector<2x8xf32>
    %971 = arith.mulf %966, %970 : vector<2x8xf32>
    %972 = vector.extract_strided_slice %971 {offsets = [0, 0], sizes = [2, 1], strides = [1, 1]} : vector<2x8xf32> to vector<2x1xf32>
    %973 = vector.broadcast %972 : vector<2x1xf32> to vector<2x32xf32>
    %974 = arith.mulf %973, %898 : vector<2x32xf32>
    %975 = vector.extract_strided_slice %971 {offsets = [0, 1], sizes = [2, 1], strides = [1, 1]} : vector<2x8xf32> to vector<2x1xf32>
    %976 = vector.broadcast %975 : vector<2x1xf32> to vector<2x32xf32>
    %977 = arith.mulf %976, %901 : vector<2x32xf32>
    %978 = vector.extract_strided_slice %971 {offsets = [0, 2], sizes = [2, 1], strides = [1, 1]} : vector<2x8xf32> to vector<2x1xf32>
    %979 = vector.broadcast %978 : vector<2x1xf32> to vector<2x32xf32>
    %980 = arith.mulf %979, %904 : vector<2x32xf32>
    %981 = vector.extract_strided_slice %971 {offsets = [0, 3], sizes = [2, 1], strides = [1, 1]} : vector<2x8xf32> to vector<2x1xf32>
    %982 = vector.broadcast %981 : vector<2x1xf32> to vector<2x32xf32>
    %983 = arith.mulf %982, %907 : vector<2x32xf32>
    %984 = vector.extract_strided_slice %971 {offsets = [0, 4], sizes = [2, 1], strides = [1, 1]} : vector<2x8xf32> to vector<2x1xf32>
    %985 = vector.broadcast %984 : vector<2x1xf32> to vector<2x32xf32>
    %986 = arith.mulf %985, %910 : vector<2x32xf32>
    %987 = vector.extract_strided_slice %971 {offsets = [0, 5], sizes = [2, 1], strides = [1, 1]} : vector<2x8xf32> to vector<2x1xf32>
    %988 = vector.broadcast %987 : vector<2x1xf32> to vector<2x32xf32>
    %989 = arith.mulf %988, %913 : vector<2x32xf32>
    %990 = vector.extract_strided_slice %971 {offsets = [0, 6], sizes = [2, 1], strides = [1, 1]} : vector<2x8xf32> to vector<2x1xf32>
    %991 = vector.broadcast %990 : vector<2x1xf32> to vector<2x32xf32>
    %992 = arith.mulf %991, %916 : vector<2x32xf32>
    %993 = vector.extract_strided_slice %971 {offsets = [0, 7], sizes = [2, 1], strides = [1, 1]} : vector<2x8xf32> to vector<2x1xf32>
    %994 = vector.broadcast %993 : vector<2x1xf32> to vector<2x32xf32>
    %995 = arith.mulf %994, %919 : vector<2x32xf32>
    %996 = arith.addf %974, %977 : vector<2x32xf32>
    %997 = arith.addf %980, %983 : vector<2x32xf32>
    %998 = arith.addf %986, %989 : vector<2x32xf32>
    %999 = arith.addf %992, %995 : vector<2x32xf32>
    %1000 = arith.addf %996, %997 : vector<2x32xf32>
    %1001 = arith.addf %998, %999 : vector<2x32xf32>
    %1002 = arith.addf %1000, %1001 : vector<2x32xf32>
    %1003 = arith.addf %881, %1002 : vector<2x32xf32>
    %1004 = arith.negf %1003 : vector<2x32xf32>
    %1005 = math.exp %1004 : vector<2x32xf32>
    %cst_75 = arith.constant 1.000000e+00 : f32
    %1006 = vector.broadcast %cst_75 : f32 to vector<2x32xf32>
    %1007 = arith.addf %1006, %1005 : vector<2x32xf32>
    %1008 = arith.divf %1006, %1007 : vector<2x32xf32>
    %1009 = vector.extract_strided_slice %1008 {offsets = [0, 0], sizes = [2, 8], strides = [1, 1]} : vector<2x32xf32> to vector<2x8xf32>
    %1010 = vector.extract_strided_slice %1008 {offsets = [0, 8], sizes = [2, 8], strides = [1, 1]} : vector<2x32xf32> to vector<2x8xf32>
    %1011 = vector.extract_strided_slice %1008 {offsets = [0, 16], sizes = [2, 8], strides = [1, 1]} : vector<2x32xf32> to vector<2x8xf32>
    %cst_76 = arith.constant 2.000000e+00 : f32
    %1012 = vector.broadcast %cst_76 : f32 to vector<2x8xf32>
    %1013 = arith.mulf %1012, %1011 : vector<2x8xf32>
    %cst_77 = arith.constant 1.000000e+00 : f32
    %1014 = vector.broadcast %cst_77 : f32 to vector<2x8xf32>
    %1015 = arith.subf %1013, %1014 : vector<2x8xf32>
    %1016 = vector.extract_strided_slice %1008 {offsets = [0, 24], sizes = [2, 8], strides = [1, 1]} : vector<2x32xf32> to vector<2x8xf32>
    %1017 = arith.mulf %1010, %969 : vector<2x8xf32>
    %1018 = arith.mulf %1009, %1015 : vector<2x8xf32>
    %1019 = arith.addf %1017, %1018 : vector<2x8xf32>
    %1020 = math.tanh %1019 : vector<2x8xf32>
    %1021 = arith.mulf %1016, %1020 : vector<2x8xf32>
    %1022 = vector.extract_strided_slice %1021 {offsets = [0, 0], sizes = [2, 1], strides = [1, 1]} : vector<2x8xf32> to vector<2x1xf32>
    %1023 = vector.broadcast %1022 : vector<2x1xf32> to vector<2x32xf32>
    %1024 = arith.mulf %1023, %898 : vector<2x32xf32>
    %1025 = vector.extract_strided_slice %1021 {offsets = [0, 1], sizes = [2, 1], strides = [1, 1]} : vector<2x8xf32> to vector<2x1xf32>
    %1026 = vector.broadcast %1025 : vector<2x1xf32> to vector<2x32xf32>
    %1027 = arith.mulf %1026, %901 : vector<2x32xf32>
    %1028 = vector.extract_strided_slice %1021 {offsets = [0, 2], sizes = [2, 1], strides = [1, 1]} : vector<2x8xf32> to vector<2x1xf32>
    %1029 = vector.broadcast %1028 : vector<2x1xf32> to vector<2x32xf32>
    %1030 = arith.mulf %1029, %904 : vector<2x32xf32>
    %1031 = vector.extract_strided_slice %1021 {offsets = [0, 3], sizes = [2, 1], strides = [1, 1]} : vector<2x8xf32> to vector<2x1xf32>
    %1032 = vector.broadcast %1031 : vector<2x1xf32> to vector<2x32xf32>
    %1033 = arith.mulf %1032, %907 : vector<2x32xf32>
    %1034 = vector.extract_strided_slice %1021 {offsets = [0, 4], sizes = [2, 1], strides = [1, 1]} : vector<2x8xf32> to vector<2x1xf32>
    %1035 = vector.broadcast %1034 : vector<2x1xf32> to vector<2x32xf32>
    %1036 = arith.mulf %1035, %910 : vector<2x32xf32>
    %1037 = vector.extract_strided_slice %1021 {offsets = [0, 5], sizes = [2, 1], strides = [1, 1]} : vector<2x8xf32> to vector<2x1xf32>
    %1038 = vector.broadcast %1037 : vector<2x1xf32> to vector<2x32xf32>
    %1039 = arith.mulf %1038, %913 : vector<2x32xf32>
    %1040 = vector.extract_strided_slice %1021 {offsets = [0, 6], sizes = [2, 1], strides = [1, 1]} : vector<2x8xf32> to vector<2x1xf32>
    %1041 = vector.broadcast %1040 : vector<2x1xf32> to vector<2x32xf32>
    %1042 = arith.mulf %1041, %916 : vector<2x32xf32>
    %1043 = vector.extract_strided_slice %1021 {offsets = [0, 7], sizes = [2, 1], strides = [1, 1]} : vector<2x8xf32> to vector<2x1xf32>
    %1044 = vector.broadcast %1043 : vector<2x1xf32> to vector<2x32xf32>
    %1045 = arith.mulf %1044, %919 : vector<2x32xf32>
    %1046 = arith.addf %1024, %1027 : vector<2x32xf32>
    %1047 = arith.addf %1030, %1033 : vector<2x32xf32>
    %1048 = arith.addf %1036, %1039 : vector<2x32xf32>
    %1049 = arith.addf %1042, %1045 : vector<2x32xf32>
    %1050 = arith.addf %1046, %1047 : vector<2x32xf32>
    %1051 = arith.addf %1048, %1049 : vector<2x32xf32>
    %1052 = arith.addf %1050, %1051 : vector<2x32xf32>
    %1053 = arith.addf %882, %1052 : vector<2x32xf32>
    %1054 = arith.negf %1053 : vector<2x32xf32>
    %1055 = math.exp %1054 : vector<2x32xf32>
    %cst_78 = arith.constant 1.000000e+00 : f32
    %1056 = vector.broadcast %cst_78 : f32 to vector<2x32xf32>
    %1057 = arith.addf %1056, %1055 : vector<2x32xf32>
    %1058 = arith.divf %1056, %1057 : vector<2x32xf32>
    %1059 = vector.extract_strided_slice %1058 {offsets = [0, 0], sizes = [2, 8], strides = [1, 1]} : vector<2x32xf32> to vector<2x8xf32>
    %1060 = vector.extract_strided_slice %1058 {offsets = [0, 8], sizes = [2, 8], strides = [1, 1]} : vector<2x32xf32> to vector<2x8xf32>
    %1061 = vector.extract_strided_slice %1058 {offsets = [0, 16], sizes = [2, 8], strides = [1, 1]} : vector<2x32xf32> to vector<2x8xf32>
    %cst_79 = arith.constant 2.000000e+00 : f32
    %1062 = vector.broadcast %cst_79 : f32 to vector<2x8xf32>
    %1063 = arith.mulf %1062, %1061 : vector<2x8xf32>
    %cst_80 = arith.constant 1.000000e+00 : f32
    %1064 = vector.broadcast %cst_80 : f32 to vector<2x8xf32>
    %1065 = arith.subf %1063, %1064 : vector<2x8xf32>
    %1066 = vector.extract_strided_slice %1058 {offsets = [0, 24], sizes = [2, 8], strides = [1, 1]} : vector<2x32xf32> to vector<2x8xf32>
    %1067 = arith.mulf %1060, %1019 : vector<2x8xf32>
    %1068 = arith.mulf %1059, %1065 : vector<2x8xf32>
    %1069 = arith.addf %1067, %1068 : vector<2x8xf32>
    %1070 = math.tanh %1069 : vector<2x8xf32>
    %1071 = arith.mulf %1066, %1070 : vector<2x8xf32>
    %1072 = vector.extract_strided_slice %1071 {offsets = [0, 0], sizes = [2, 1], strides = [1, 1]} : vector<2x8xf32> to vector<2x1xf32>
    %1073 = vector.broadcast %1072 : vector<2x1xf32> to vector<2x32xf32>
    %1074 = arith.mulf %1073, %898 : vector<2x32xf32>
    %1075 = vector.extract_strided_slice %1071 {offsets = [0, 1], sizes = [2, 1], strides = [1, 1]} : vector<2x8xf32> to vector<2x1xf32>
    %1076 = vector.broadcast %1075 : vector<2x1xf32> to vector<2x32xf32>
    %1077 = arith.mulf %1076, %901 : vector<2x32xf32>
    %1078 = vector.extract_strided_slice %1071 {offsets = [0, 2], sizes = [2, 1], strides = [1, 1]} : vector<2x8xf32> to vector<2x1xf32>
    %1079 = vector.broadcast %1078 : vector<2x1xf32> to vector<2x32xf32>
    %1080 = arith.mulf %1079, %904 : vector<2x32xf32>
    %1081 = vector.extract_strided_slice %1071 {offsets = [0, 3], sizes = [2, 1], strides = [1, 1]} : vector<2x8xf32> to vector<2x1xf32>
    %1082 = vector.broadcast %1081 : vector<2x1xf32> to vector<2x32xf32>
    %1083 = arith.mulf %1082, %907 : vector<2x32xf32>
    %1084 = vector.extract_strided_slice %1071 {offsets = [0, 4], sizes = [2, 1], strides = [1, 1]} : vector<2x8xf32> to vector<2x1xf32>
    %1085 = vector.broadcast %1084 : vector<2x1xf32> to vector<2x32xf32>
    %1086 = arith.mulf %1085, %910 : vector<2x32xf32>
    %1087 = vector.extract_strided_slice %1071 {offsets = [0, 5], sizes = [2, 1], strides = [1, 1]} : vector<2x8xf32> to vector<2x1xf32>
    %1088 = vector.broadcast %1087 : vector<2x1xf32> to vector<2x32xf32>
    %1089 = arith.mulf %1088, %913 : vector<2x32xf32>
    %1090 = vector.extract_strided_slice %1071 {offsets = [0, 6], sizes = [2, 1], strides = [1, 1]} : vector<2x8xf32> to vector<2x1xf32>
    %1091 = vector.broadcast %1090 : vector<2x1xf32> to vector<2x32xf32>
    %1092 = arith.mulf %1091, %916 : vector<2x32xf32>
    %1093 = vector.extract_strided_slice %1071 {offsets = [0, 7], sizes = [2, 1], strides = [1, 1]} : vector<2x8xf32> to vector<2x1xf32>
    %1094 = vector.broadcast %1093 : vector<2x1xf32> to vector<2x32xf32>
    %1095 = arith.mulf %1094, %919 : vector<2x32xf32>
    %1096 = arith.addf %1074, %1077 : vector<2x32xf32>
    %1097 = arith.addf %1080, %1083 : vector<2x32xf32>
    %1098 = arith.addf %1086, %1089 : vector<2x32xf32>
    %1099 = arith.addf %1092, %1095 : vector<2x32xf32>
    %1100 = arith.addf %1096, %1097 : vector<2x32xf32>
    %1101 = arith.addf %1098, %1099 : vector<2x32xf32>
    %1102 = arith.addf %1100, %1101 : vector<2x32xf32>
    %1103 = arith.addf %883, %1102 : vector<2x32xf32>
    %1104 = arith.negf %1103 : vector<2x32xf32>
    %1105 = math.exp %1104 : vector<2x32xf32>
    %cst_81 = arith.constant 1.000000e+00 : f32
    %1106 = vector.broadcast %cst_81 : f32 to vector<2x32xf32>
    %1107 = arith.addf %1106, %1105 : vector<2x32xf32>
    %1108 = arith.divf %1106, %1107 : vector<2x32xf32>
    %1109 = vector.extract_strided_slice %1108 {offsets = [0, 0], sizes = [2, 8], strides = [1, 1]} : vector<2x32xf32> to vector<2x8xf32>
    %1110 = vector.extract_strided_slice %1108 {offsets = [0, 8], sizes = [2, 8], strides = [1, 1]} : vector<2x32xf32> to vector<2x8xf32>
    %1111 = vector.extract_strided_slice %1108 {offsets = [0, 16], sizes = [2, 8], strides = [1, 1]} : vector<2x32xf32> to vector<2x8xf32>
    %cst_82 = arith.constant 2.000000e+00 : f32
    %1112 = vector.broadcast %cst_82 : f32 to vector<2x8xf32>
    %1113 = arith.mulf %1112, %1111 : vector<2x8xf32>
    %cst_83 = arith.constant 1.000000e+00 : f32
    %1114 = vector.broadcast %cst_83 : f32 to vector<2x8xf32>
    %1115 = arith.subf %1113, %1114 : vector<2x8xf32>
    %1116 = vector.extract_strided_slice %1108 {offsets = [0, 24], sizes = [2, 8], strides = [1, 1]} : vector<2x32xf32> to vector<2x8xf32>
    %1117 = arith.mulf %1110, %1069 : vector<2x8xf32>
    %1118 = arith.mulf %1109, %1115 : vector<2x8xf32>
    %1119 = arith.addf %1117, %1118 : vector<2x8xf32>
    %1120 = math.tanh %1119 : vector<2x8xf32>
    %1121 = arith.mulf %1116, %1120 : vector<2x8xf32>
    %1122 = vector.extract_strided_slice %1121 {offsets = [0, 0], sizes = [2, 1], strides = [1, 1]} : vector<2x8xf32> to vector<2x1xf32>
    %1123 = vector.broadcast %1122 : vector<2x1xf32> to vector<2x32xf32>
    %1124 = arith.mulf %1123, %898 : vector<2x32xf32>
    %1125 = vector.extract_strided_slice %1121 {offsets = [0, 1], sizes = [2, 1], strides = [1, 1]} : vector<2x8xf32> to vector<2x1xf32>
    %1126 = vector.broadcast %1125 : vector<2x1xf32> to vector<2x32xf32>
    %1127 = arith.mulf %1126, %901 : vector<2x32xf32>
    %1128 = vector.extract_strided_slice %1121 {offsets = [0, 2], sizes = [2, 1], strides = [1, 1]} : vector<2x8xf32> to vector<2x1xf32>
    %1129 = vector.broadcast %1128 : vector<2x1xf32> to vector<2x32xf32>
    %1130 = arith.mulf %1129, %904 : vector<2x32xf32>
    %1131 = vector.extract_strided_slice %1121 {offsets = [0, 3], sizes = [2, 1], strides = [1, 1]} : vector<2x8xf32> to vector<2x1xf32>
    %1132 = vector.broadcast %1131 : vector<2x1xf32> to vector<2x32xf32>
    %1133 = arith.mulf %1132, %907 : vector<2x32xf32>
    %1134 = vector.extract_strided_slice %1121 {offsets = [0, 4], sizes = [2, 1], strides = [1, 1]} : vector<2x8xf32> to vector<2x1xf32>
    %1135 = vector.broadcast %1134 : vector<2x1xf32> to vector<2x32xf32>
    %1136 = arith.mulf %1135, %910 : vector<2x32xf32>
    %1137 = vector.extract_strided_slice %1121 {offsets = [0, 5], sizes = [2, 1], strides = [1, 1]} : vector<2x8xf32> to vector<2x1xf32>
    %1138 = vector.broadcast %1137 : vector<2x1xf32> to vector<2x32xf32>
    %1139 = arith.mulf %1138, %913 : vector<2x32xf32>
    %1140 = vector.extract_strided_slice %1121 {offsets = [0, 6], sizes = [2, 1], strides = [1, 1]} : vector<2x8xf32> to vector<2x1xf32>
    %1141 = vector.broadcast %1140 : vector<2x1xf32> to vector<2x32xf32>
    %1142 = arith.mulf %1141, %916 : vector<2x32xf32>
    %1143 = vector.extract_strided_slice %1121 {offsets = [0, 7], sizes = [2, 1], strides = [1, 1]} : vector<2x8xf32> to vector<2x1xf32>
    %1144 = vector.broadcast %1143 : vector<2x1xf32> to vector<2x32xf32>
    %1145 = arith.mulf %1144, %919 : vector<2x32xf32>
    %1146 = arith.addf %1124, %1127 : vector<2x32xf32>
    %1147 = arith.addf %1130, %1133 : vector<2x32xf32>
    %1148 = arith.addf %1136, %1139 : vector<2x32xf32>
    %1149 = arith.addf %1142, %1145 : vector<2x32xf32>
    %1150 = arith.addf %1146, %1147 : vector<2x32xf32>
    %1151 = arith.addf %1148, %1149 : vector<2x32xf32>
    %1152 = arith.addf %1150, %1151 : vector<2x32xf32>
    %1153 = arith.addf %884, %1152 : vector<2x32xf32>
    %1154 = arith.negf %1153 : vector<2x32xf32>
    %1155 = math.exp %1154 : vector<2x32xf32>
    %cst_84 = arith.constant 1.000000e+00 : f32
    %1156 = vector.broadcast %cst_84 : f32 to vector<2x32xf32>
    %1157 = arith.addf %1156, %1155 : vector<2x32xf32>
    %1158 = arith.divf %1156, %1157 : vector<2x32xf32>
    %1159 = vector.extract_strided_slice %1158 {offsets = [0, 0], sizes = [2, 8], strides = [1, 1]} : vector<2x32xf32> to vector<2x8xf32>
    %1160 = vector.extract_strided_slice %1158 {offsets = [0, 8], sizes = [2, 8], strides = [1, 1]} : vector<2x32xf32> to vector<2x8xf32>
    %1161 = vector.extract_strided_slice %1158 {offsets = [0, 16], sizes = [2, 8], strides = [1, 1]} : vector<2x32xf32> to vector<2x8xf32>
    %cst_85 = arith.constant 2.000000e+00 : f32
    %1162 = vector.broadcast %cst_85 : f32 to vector<2x8xf32>
    %1163 = arith.mulf %1162, %1161 : vector<2x8xf32>
    %cst_86 = arith.constant 1.000000e+00 : f32
    %1164 = vector.broadcast %cst_86 : f32 to vector<2x8xf32>
    %1165 = arith.subf %1163, %1164 : vector<2x8xf32>
    %1166 = vector.extract_strided_slice %1158 {offsets = [0, 24], sizes = [2, 8], strides = [1, 1]} : vector<2x32xf32> to vector<2x8xf32>
    %1167 = arith.mulf %1160, %1119 : vector<2x8xf32>
    %1168 = arith.mulf %1159, %1165 : vector<2x8xf32>
    %1169 = arith.addf %1167, %1168 : vector<2x8xf32>
    %1170 = math.tanh %1169 : vector<2x8xf32>
    %1171 = arith.mulf %1166, %1170 : vector<2x8xf32>
    %1172 = vector.extract_strided_slice %1171 {offsets = [0, 0], sizes = [2, 1], strides = [1, 1]} : vector<2x8xf32> to vector<2x1xf32>
    %1173 = vector.broadcast %1172 : vector<2x1xf32> to vector<2x32xf32>
    %1174 = arith.mulf %1173, %898 : vector<2x32xf32>
    %1175 = vector.extract_strided_slice %1171 {offsets = [0, 1], sizes = [2, 1], strides = [1, 1]} : vector<2x8xf32> to vector<2x1xf32>
    %1176 = vector.broadcast %1175 : vector<2x1xf32> to vector<2x32xf32>
    %1177 = arith.mulf %1176, %901 : vector<2x32xf32>
    %1178 = vector.extract_strided_slice %1171 {offsets = [0, 2], sizes = [2, 1], strides = [1, 1]} : vector<2x8xf32> to vector<2x1xf32>
    %1179 = vector.broadcast %1178 : vector<2x1xf32> to vector<2x32xf32>
    %1180 = arith.mulf %1179, %904 : vector<2x32xf32>
    %1181 = vector.extract_strided_slice %1171 {offsets = [0, 3], sizes = [2, 1], strides = [1, 1]} : vector<2x8xf32> to vector<2x1xf32>
    %1182 = vector.broadcast %1181 : vector<2x1xf32> to vector<2x32xf32>
    %1183 = arith.mulf %1182, %907 : vector<2x32xf32>
    %1184 = vector.extract_strided_slice %1171 {offsets = [0, 4], sizes = [2, 1], strides = [1, 1]} : vector<2x8xf32> to vector<2x1xf32>
    %1185 = vector.broadcast %1184 : vector<2x1xf32> to vector<2x32xf32>
    %1186 = arith.mulf %1185, %910 : vector<2x32xf32>
    %1187 = vector.extract_strided_slice %1171 {offsets = [0, 5], sizes = [2, 1], strides = [1, 1]} : vector<2x8xf32> to vector<2x1xf32>
    %1188 = vector.broadcast %1187 : vector<2x1xf32> to vector<2x32xf32>
    %1189 = arith.mulf %1188, %913 : vector<2x32xf32>
    %1190 = vector.extract_strided_slice %1171 {offsets = [0, 6], sizes = [2, 1], strides = [1, 1]} : vector<2x8xf32> to vector<2x1xf32>
    %1191 = vector.broadcast %1190 : vector<2x1xf32> to vector<2x32xf32>
    %1192 = arith.mulf %1191, %916 : vector<2x32xf32>
    %1193 = vector.extract_strided_slice %1171 {offsets = [0, 7], sizes = [2, 1], strides = [1, 1]} : vector<2x8xf32> to vector<2x1xf32>
    %1194 = vector.broadcast %1193 : vector<2x1xf32> to vector<2x32xf32>
    %1195 = arith.mulf %1194, %919 : vector<2x32xf32>
    %1196 = arith.addf %1174, %1177 : vector<2x32xf32>
    %1197 = arith.addf %1180, %1183 : vector<2x32xf32>
    %1198 = arith.addf %1186, %1189 : vector<2x32xf32>
    %1199 = arith.addf %1192, %1195 : vector<2x32xf32>
    %1200 = arith.addf %1196, %1197 : vector<2x32xf32>
    %1201 = arith.addf %1198, %1199 : vector<2x32xf32>
    %1202 = arith.addf %1200, %1201 : vector<2x32xf32>
    %1203 = arith.addf %885, %1202 : vector<2x32xf32>
    %1204 = arith.negf %1203 : vector<2x32xf32>
    %1205 = math.exp %1204 : vector<2x32xf32>
    %cst_87 = arith.constant 1.000000e+00 : f32
    %1206 = vector.broadcast %cst_87 : f32 to vector<2x32xf32>
    %1207 = arith.addf %1206, %1205 : vector<2x32xf32>
    %1208 = arith.divf %1206, %1207 : vector<2x32xf32>
    %1209 = vector.extract_strided_slice %1208 {offsets = [0, 0], sizes = [2, 8], strides = [1, 1]} : vector<2x32xf32> to vector<2x8xf32>
    %1210 = vector.extract_strided_slice %1208 {offsets = [0, 8], sizes = [2, 8], strides = [1, 1]} : vector<2x32xf32> to vector<2x8xf32>
    %1211 = vector.extract_strided_slice %1208 {offsets = [0, 16], sizes = [2, 8], strides = [1, 1]} : vector<2x32xf32> to vector<2x8xf32>
    %cst_88 = arith.constant 2.000000e+00 : f32
    %1212 = vector.broadcast %cst_88 : f32 to vector<2x8xf32>
    %1213 = arith.mulf %1212, %1211 : vector<2x8xf32>
    %cst_89 = arith.constant 1.000000e+00 : f32
    %1214 = vector.broadcast %cst_89 : f32 to vector<2x8xf32>
    %1215 = arith.subf %1213, %1214 : vector<2x8xf32>
    %1216 = vector.extract_strided_slice %1208 {offsets = [0, 24], sizes = [2, 8], strides = [1, 1]} : vector<2x32xf32> to vector<2x8xf32>
    %1217 = arith.mulf %1210, %1169 : vector<2x8xf32>
    %1218 = arith.mulf %1209, %1215 : vector<2x8xf32>
    %1219 = arith.addf %1217, %1218 : vector<2x8xf32>
    %1220 = math.tanh %1219 : vector<2x8xf32>
    %1221 = arith.mulf %1216, %1220 : vector<2x8xf32>
    %1222 = vector.extract_strided_slice %1221 {offsets = [0, 0], sizes = [2, 1], strides = [1, 1]} : vector<2x8xf32> to vector<2x1xf32>
    %1223 = vector.broadcast %1222 : vector<2x1xf32> to vector<2x32xf32>
    %1224 = arith.mulf %1223, %898 : vector<2x32xf32>
    %1225 = vector.extract_strided_slice %1221 {offsets = [0, 1], sizes = [2, 1], strides = [1, 1]} : vector<2x8xf32> to vector<2x1xf32>
    %1226 = vector.broadcast %1225 : vector<2x1xf32> to vector<2x32xf32>
    %1227 = arith.mulf %1226, %901 : vector<2x32xf32>
    %1228 = vector.extract_strided_slice %1221 {offsets = [0, 2], sizes = [2, 1], strides = [1, 1]} : vector<2x8xf32> to vector<2x1xf32>
    %1229 = vector.broadcast %1228 : vector<2x1xf32> to vector<2x32xf32>
    %1230 = arith.mulf %1229, %904 : vector<2x32xf32>
    %1231 = vector.extract_strided_slice %1221 {offsets = [0, 3], sizes = [2, 1], strides = [1, 1]} : vector<2x8xf32> to vector<2x1xf32>
    %1232 = vector.broadcast %1231 : vector<2x1xf32> to vector<2x32xf32>
    %1233 = arith.mulf %1232, %907 : vector<2x32xf32>
    %1234 = vector.extract_strided_slice %1221 {offsets = [0, 4], sizes = [2, 1], strides = [1, 1]} : vector<2x8xf32> to vector<2x1xf32>
    %1235 = vector.broadcast %1234 : vector<2x1xf32> to vector<2x32xf32>
    %1236 = arith.mulf %1235, %910 : vector<2x32xf32>
    %1237 = vector.extract_strided_slice %1221 {offsets = [0, 5], sizes = [2, 1], strides = [1, 1]} : vector<2x8xf32> to vector<2x1xf32>
    %1238 = vector.broadcast %1237 : vector<2x1xf32> to vector<2x32xf32>
    %1239 = arith.mulf %1238, %913 : vector<2x32xf32>
    %1240 = vector.extract_strided_slice %1221 {offsets = [0, 6], sizes = [2, 1], strides = [1, 1]} : vector<2x8xf32> to vector<2x1xf32>
    %1241 = vector.broadcast %1240 : vector<2x1xf32> to vector<2x32xf32>
    %1242 = arith.mulf %1241, %916 : vector<2x32xf32>
    %1243 = vector.extract_strided_slice %1221 {offsets = [0, 7], sizes = [2, 1], strides = [1, 1]} : vector<2x8xf32> to vector<2x1xf32>
    %1244 = vector.broadcast %1243 : vector<2x1xf32> to vector<2x32xf32>
    %1245 = arith.mulf %1244, %919 : vector<2x32xf32>
    %1246 = arith.addf %1224, %1227 : vector<2x32xf32>
    %1247 = arith.addf %1230, %1233 : vector<2x32xf32>
    %1248 = arith.addf %1236, %1239 : vector<2x32xf32>
    %1249 = arith.addf %1242, %1245 : vector<2x32xf32>
    %1250 = arith.addf %1246, %1247 : vector<2x32xf32>
    %1251 = arith.addf %1248, %1249 : vector<2x32xf32>
    %1252 = arith.addf %1250, %1251 : vector<2x32xf32>
    %1253 = arith.addf %886, %1252 : vector<2x32xf32>
    %1254 = arith.negf %1253 : vector<2x32xf32>
    %1255 = math.exp %1254 : vector<2x32xf32>
    %cst_90 = arith.constant 1.000000e+00 : f32
    %1256 = vector.broadcast %cst_90 : f32 to vector<2x32xf32>
    %1257 = arith.addf %1256, %1255 : vector<2x32xf32>
    %1258 = arith.divf %1256, %1257 : vector<2x32xf32>
    %1259 = vector.extract_strided_slice %1258 {offsets = [0, 0], sizes = [2, 8], strides = [1, 1]} : vector<2x32xf32> to vector<2x8xf32>
    %1260 = vector.extract_strided_slice %1258 {offsets = [0, 8], sizes = [2, 8], strides = [1, 1]} : vector<2x32xf32> to vector<2x8xf32>
    %1261 = vector.extract_strided_slice %1258 {offsets = [0, 16], sizes = [2, 8], strides = [1, 1]} : vector<2x32xf32> to vector<2x8xf32>
    %cst_91 = arith.constant 2.000000e+00 : f32
    %1262 = vector.broadcast %cst_91 : f32 to vector<2x8xf32>
    %1263 = arith.mulf %1262, %1261 : vector<2x8xf32>
    %cst_92 = arith.constant 1.000000e+00 : f32
    %1264 = vector.broadcast %cst_92 : f32 to vector<2x8xf32>
    %1265 = arith.subf %1263, %1264 : vector<2x8xf32>
    %1266 = vector.extract_strided_slice %1258 {offsets = [0, 24], sizes = [2, 8], strides = [1, 1]} : vector<2x32xf32> to vector<2x8xf32>
    %1267 = arith.mulf %1260, %1219 : vector<2x8xf32>
    %1268 = arith.mulf %1259, %1265 : vector<2x8xf32>
    %1269 = arith.addf %1267, %1268 : vector<2x8xf32>
    %1270 = math.tanh %1269 : vector<2x8xf32>
    %1271 = arith.mulf %1266, %1270 : vector<2x8xf32>
    %1272 = vector.extract_strided_slice %1271 {offsets = [0, 0], sizes = [2, 1], strides = [1, 1]} : vector<2x8xf32> to vector<2x1xf32>
    %1273 = vector.broadcast %1272 : vector<2x1xf32> to vector<2x32xf32>
    %1274 = arith.mulf %1273, %898 : vector<2x32xf32>
    %1275 = vector.extract_strided_slice %1271 {offsets = [0, 1], sizes = [2, 1], strides = [1, 1]} : vector<2x8xf32> to vector<2x1xf32>
    %1276 = vector.broadcast %1275 : vector<2x1xf32> to vector<2x32xf32>
    %1277 = arith.mulf %1276, %901 : vector<2x32xf32>
    %1278 = vector.extract_strided_slice %1271 {offsets = [0, 2], sizes = [2, 1], strides = [1, 1]} : vector<2x8xf32> to vector<2x1xf32>
    %1279 = vector.broadcast %1278 : vector<2x1xf32> to vector<2x32xf32>
    %1280 = arith.mulf %1279, %904 : vector<2x32xf32>
    %1281 = vector.extract_strided_slice %1271 {offsets = [0, 3], sizes = [2, 1], strides = [1, 1]} : vector<2x8xf32> to vector<2x1xf32>
    %1282 = vector.broadcast %1281 : vector<2x1xf32> to vector<2x32xf32>
    %1283 = arith.mulf %1282, %907 : vector<2x32xf32>
    %1284 = vector.extract_strided_slice %1271 {offsets = [0, 4], sizes = [2, 1], strides = [1, 1]} : vector<2x8xf32> to vector<2x1xf32>
    %1285 = vector.broadcast %1284 : vector<2x1xf32> to vector<2x32xf32>
    %1286 = arith.mulf %1285, %910 : vector<2x32xf32>
    %1287 = vector.extract_strided_slice %1271 {offsets = [0, 5], sizes = [2, 1], strides = [1, 1]} : vector<2x8xf32> to vector<2x1xf32>
    %1288 = vector.broadcast %1287 : vector<2x1xf32> to vector<2x32xf32>
    %1289 = arith.mulf %1288, %913 : vector<2x32xf32>
    %1290 = vector.extract_strided_slice %1271 {offsets = [0, 6], sizes = [2, 1], strides = [1, 1]} : vector<2x8xf32> to vector<2x1xf32>
    %1291 = vector.broadcast %1290 : vector<2x1xf32> to vector<2x32xf32>
    %1292 = arith.mulf %1291, %916 : vector<2x32xf32>
    %1293 = vector.extract_strided_slice %1271 {offsets = [0, 7], sizes = [2, 1], strides = [1, 1]} : vector<2x8xf32> to vector<2x1xf32>
    %1294 = vector.broadcast %1293 : vector<2x1xf32> to vector<2x32xf32>
    %1295 = arith.mulf %1294, %919 : vector<2x32xf32>
    %1296 = arith.addf %1274, %1277 : vector<2x32xf32>
    %1297 = arith.addf %1280, %1283 : vector<2x32xf32>
    %1298 = arith.addf %1286, %1289 : vector<2x32xf32>
    %1299 = arith.addf %1292, %1295 : vector<2x32xf32>
    %1300 = arith.addf %1296, %1297 : vector<2x32xf32>
    %1301 = arith.addf %1298, %1299 : vector<2x32xf32>
    %1302 = arith.addf %1300, %1301 : vector<2x32xf32>
    %1303 = arith.addf %887, %1302 : vector<2x32xf32>
    %1304 = arith.negf %1303 : vector<2x32xf32>
    %1305 = math.exp %1304 : vector<2x32xf32>
    %cst_93 = arith.constant 1.000000e+00 : f32
    %1306 = vector.broadcast %cst_93 : f32 to vector<2x32xf32>
    %1307 = arith.addf %1306, %1305 : vector<2x32xf32>
    %1308 = arith.divf %1306, %1307 : vector<2x32xf32>
    %1309 = vector.extract_strided_slice %1308 {offsets = [0, 0], sizes = [2, 8], strides = [1, 1]} : vector<2x32xf32> to vector<2x8xf32>
    %1310 = vector.extract_strided_slice %1308 {offsets = [0, 8], sizes = [2, 8], strides = [1, 1]} : vector<2x32xf32> to vector<2x8xf32>
    %1311 = vector.extract_strided_slice %1308 {offsets = [0, 16], sizes = [2, 8], strides = [1, 1]} : vector<2x32xf32> to vector<2x8xf32>
    %cst_94 = arith.constant 2.000000e+00 : f32
    %1312 = vector.broadcast %cst_94 : f32 to vector<2x8xf32>
    %1313 = arith.mulf %1312, %1311 : vector<2x8xf32>
    %cst_95 = arith.constant 1.000000e+00 : f32
    %1314 = vector.broadcast %cst_95 : f32 to vector<2x8xf32>
    %1315 = arith.subf %1313, %1314 : vector<2x8xf32>
    %1316 = vector.extract_strided_slice %1308 {offsets = [0, 24], sizes = [2, 8], strides = [1, 1]} : vector<2x32xf32> to vector<2x8xf32>
    %1317 = arith.mulf %1310, %1269 : vector<2x8xf32>
    %1318 = arith.mulf %1309, %1315 : vector<2x8xf32>
    %1319 = arith.addf %1317, %1318 : vector<2x8xf32>
    %1320 = math.tanh %1319 : vector<2x8xf32>
    %1321 = arith.mulf %1316, %1320 : vector<2x8xf32>
    %1322 = vector.extract_strided_slice %1321 {offsets = [0, 0], sizes = [2, 1], strides = [1, 1]} : vector<2x8xf32> to vector<2x1xf32>
    %1323 = vector.broadcast %1322 : vector<2x1xf32> to vector<2x32xf32>
    %1324 = arith.mulf %1323, %898 : vector<2x32xf32>
    %1325 = vector.extract_strided_slice %1321 {offsets = [0, 1], sizes = [2, 1], strides = [1, 1]} : vector<2x8xf32> to vector<2x1xf32>
    %1326 = vector.broadcast %1325 : vector<2x1xf32> to vector<2x32xf32>
    %1327 = arith.mulf %1326, %901 : vector<2x32xf32>
    %1328 = vector.extract_strided_slice %1321 {offsets = [0, 2], sizes = [2, 1], strides = [1, 1]} : vector<2x8xf32> to vector<2x1xf32>
    %1329 = vector.broadcast %1328 : vector<2x1xf32> to vector<2x32xf32>
    %1330 = arith.mulf %1329, %904 : vector<2x32xf32>
    %1331 = vector.extract_strided_slice %1321 {offsets = [0, 3], sizes = [2, 1], strides = [1, 1]} : vector<2x8xf32> to vector<2x1xf32>
    %1332 = vector.broadcast %1331 : vector<2x1xf32> to vector<2x32xf32>
    %1333 = arith.mulf %1332, %907 : vector<2x32xf32>
    %1334 = vector.extract_strided_slice %1321 {offsets = [0, 4], sizes = [2, 1], strides = [1, 1]} : vector<2x8xf32> to vector<2x1xf32>
    %1335 = vector.broadcast %1334 : vector<2x1xf32> to vector<2x32xf32>
    %1336 = arith.mulf %1335, %910 : vector<2x32xf32>
    %1337 = vector.extract_strided_slice %1321 {offsets = [0, 5], sizes = [2, 1], strides = [1, 1]} : vector<2x8xf32> to vector<2x1xf32>
    %1338 = vector.broadcast %1337 : vector<2x1xf32> to vector<2x32xf32>
    %1339 = arith.mulf %1338, %913 : vector<2x32xf32>
    %1340 = vector.extract_strided_slice %1321 {offsets = [0, 6], sizes = [2, 1], strides = [1, 1]} : vector<2x8xf32> to vector<2x1xf32>
    %1341 = vector.broadcast %1340 : vector<2x1xf32> to vector<2x32xf32>
    %1342 = arith.mulf %1341, %916 : vector<2x32xf32>
    %1343 = vector.extract_strided_slice %1321 {offsets = [0, 7], sizes = [2, 1], strides = [1, 1]} : vector<2x8xf32> to vector<2x1xf32>
    %1344 = vector.broadcast %1343 : vector<2x1xf32> to vector<2x32xf32>
    %1345 = arith.mulf %1344, %919 : vector<2x32xf32>
    %1346 = arith.addf %1324, %1327 : vector<2x32xf32>
    %1347 = arith.addf %1330, %1333 : vector<2x32xf32>
    %1348 = arith.addf %1336, %1339 : vector<2x32xf32>
    %1349 = arith.addf %1342, %1345 : vector<2x32xf32>
    %1350 = arith.addf %1346, %1347 : vector<2x32xf32>
    %1351 = arith.addf %1348, %1349 : vector<2x32xf32>
    %1352 = arith.addf %1350, %1351 : vector<2x32xf32>
    %1353 = arith.addf %888, %1352 : vector<2x32xf32>
    %1354 = arith.negf %1353 : vector<2x32xf32>
    %1355 = math.exp %1354 : vector<2x32xf32>
    %cst_96 = arith.constant 1.000000e+00 : f32
    %1356 = vector.broadcast %cst_96 : f32 to vector<2x32xf32>
    %1357 = arith.addf %1356, %1355 : vector<2x32xf32>
    %1358 = arith.divf %1356, %1357 : vector<2x32xf32>
    %1359 = vector.extract_strided_slice %1358 {offsets = [0, 0], sizes = [2, 8], strides = [1, 1]} : vector<2x32xf32> to vector<2x8xf32>
    %1360 = vector.extract_strided_slice %1358 {offsets = [0, 8], sizes = [2, 8], strides = [1, 1]} : vector<2x32xf32> to vector<2x8xf32>
    %1361 = vector.extract_strided_slice %1358 {offsets = [0, 16], sizes = [2, 8], strides = [1, 1]} : vector<2x32xf32> to vector<2x8xf32>
    %cst_97 = arith.constant 2.000000e+00 : f32
    %1362 = vector.broadcast %cst_97 : f32 to vector<2x8xf32>
    %1363 = arith.mulf %1362, %1361 : vector<2x8xf32>
    %cst_98 = arith.constant 1.000000e+00 : f32
    %1364 = vector.broadcast %cst_98 : f32 to vector<2x8xf32>
    %1365 = arith.subf %1363, %1364 : vector<2x8xf32>
    %1366 = vector.extract_strided_slice %1358 {offsets = [0, 24], sizes = [2, 8], strides = [1, 1]} : vector<2x32xf32> to vector<2x8xf32>
    %1367 = arith.mulf %1360, %1319 : vector<2x8xf32>
    %1368 = arith.mulf %1359, %1365 : vector<2x8xf32>
    %1369 = arith.addf %1367, %1368 : vector<2x8xf32>
    %1370 = math.tanh %1369 : vector<2x8xf32>
    %1371 = arith.mulf %1366, %1370 : vector<2x8xf32>
    %1372 = vector.extract_strided_slice %1371 {offsets = [0, 0], sizes = [2, 1], strides = [1, 1]} : vector<2x8xf32> to vector<2x1xf32>
    %1373 = vector.broadcast %1372 : vector<2x1xf32> to vector<2x32xf32>
    %1374 = arith.mulf %1373, %898 : vector<2x32xf32>
    %1375 = vector.extract_strided_slice %1371 {offsets = [0, 1], sizes = [2, 1], strides = [1, 1]} : vector<2x8xf32> to vector<2x1xf32>
    %1376 = vector.broadcast %1375 : vector<2x1xf32> to vector<2x32xf32>
    %1377 = arith.mulf %1376, %901 : vector<2x32xf32>
    %1378 = vector.extract_strided_slice %1371 {offsets = [0, 2], sizes = [2, 1], strides = [1, 1]} : vector<2x8xf32> to vector<2x1xf32>
    %1379 = vector.broadcast %1378 : vector<2x1xf32> to vector<2x32xf32>
    %1380 = arith.mulf %1379, %904 : vector<2x32xf32>
    %1381 = vector.extract_strided_slice %1371 {offsets = [0, 3], sizes = [2, 1], strides = [1, 1]} : vector<2x8xf32> to vector<2x1xf32>
    %1382 = vector.broadcast %1381 : vector<2x1xf32> to vector<2x32xf32>
    %1383 = arith.mulf %1382, %907 : vector<2x32xf32>
    %1384 = vector.extract_strided_slice %1371 {offsets = [0, 4], sizes = [2, 1], strides = [1, 1]} : vector<2x8xf32> to vector<2x1xf32>
    %1385 = vector.broadcast %1384 : vector<2x1xf32> to vector<2x32xf32>
    %1386 = arith.mulf %1385, %910 : vector<2x32xf32>
    %1387 = vector.extract_strided_slice %1371 {offsets = [0, 5], sizes = [2, 1], strides = [1, 1]} : vector<2x8xf32> to vector<2x1xf32>
    %1388 = vector.broadcast %1387 : vector<2x1xf32> to vector<2x32xf32>
    %1389 = arith.mulf %1388, %913 : vector<2x32xf32>
    %1390 = vector.extract_strided_slice %1371 {offsets = [0, 6], sizes = [2, 1], strides = [1, 1]} : vector<2x8xf32> to vector<2x1xf32>
    %1391 = vector.broadcast %1390 : vector<2x1xf32> to vector<2x32xf32>
    %1392 = arith.mulf %1391, %916 : vector<2x32xf32>
    %1393 = vector.extract_strided_slice %1371 {offsets = [0, 7], sizes = [2, 1], strides = [1, 1]} : vector<2x8xf32> to vector<2x1xf32>
    %1394 = vector.broadcast %1393 : vector<2x1xf32> to vector<2x32xf32>
    %1395 = arith.mulf %1394, %919 : vector<2x32xf32>
    %1396 = arith.addf %1374, %1377 : vector<2x32xf32>
    %1397 = arith.addf %1380, %1383 : vector<2x32xf32>
    %1398 = arith.addf %1386, %1389 : vector<2x32xf32>
    %1399 = arith.addf %1392, %1395 : vector<2x32xf32>
    %1400 = arith.addf %1396, %1397 : vector<2x32xf32>
    %1401 = arith.addf %1398, %1399 : vector<2x32xf32>
    %1402 = arith.addf %1400, %1401 : vector<2x32xf32>
    %1403 = arith.addf %889, %1402 : vector<2x32xf32>
    %1404 = arith.negf %1403 : vector<2x32xf32>
    %1405 = math.exp %1404 : vector<2x32xf32>
    %cst_99 = arith.constant 1.000000e+00 : f32
    %1406 = vector.broadcast %cst_99 : f32 to vector<2x32xf32>
    %1407 = arith.addf %1406, %1405 : vector<2x32xf32>
    %1408 = arith.divf %1406, %1407 : vector<2x32xf32>
    %1409 = vector.extract_strided_slice %1408 {offsets = [0, 0], sizes = [2, 8], strides = [1, 1]} : vector<2x32xf32> to vector<2x8xf32>
    %1410 = vector.extract_strided_slice %1408 {offsets = [0, 8], sizes = [2, 8], strides = [1, 1]} : vector<2x32xf32> to vector<2x8xf32>
    %1411 = vector.extract_strided_slice %1408 {offsets = [0, 16], sizes = [2, 8], strides = [1, 1]} : vector<2x32xf32> to vector<2x8xf32>
    %cst_100 = arith.constant 2.000000e+00 : f32
    %1412 = vector.broadcast %cst_100 : f32 to vector<2x8xf32>
    %1413 = arith.mulf %1412, %1411 : vector<2x8xf32>
    %cst_101 = arith.constant 1.000000e+00 : f32
    %1414 = vector.broadcast %cst_101 : f32 to vector<2x8xf32>
    %1415 = arith.subf %1413, %1414 : vector<2x8xf32>
    %1416 = vector.extract_strided_slice %1408 {offsets = [0, 24], sizes = [2, 8], strides = [1, 1]} : vector<2x32xf32> to vector<2x8xf32>
    %1417 = arith.mulf %1410, %1369 : vector<2x8xf32>
    %1418 = arith.mulf %1409, %1415 : vector<2x8xf32>
    %1419 = arith.addf %1417, %1418 : vector<2x8xf32>
    %1420 = math.tanh %1419 : vector<2x8xf32>
    %1421 = arith.mulf %1416, %1420 : vector<2x8xf32>
    %1422 = vector.extract_strided_slice %1421 {offsets = [0, 0], sizes = [2, 1], strides = [1, 1]} : vector<2x8xf32> to vector<2x1xf32>
    %1423 = vector.broadcast %1422 : vector<2x1xf32> to vector<2x32xf32>
    %1424 = arith.mulf %1423, %898 : vector<2x32xf32>
    %1425 = vector.extract_strided_slice %1421 {offsets = [0, 1], sizes = [2, 1], strides = [1, 1]} : vector<2x8xf32> to vector<2x1xf32>
    %1426 = vector.broadcast %1425 : vector<2x1xf32> to vector<2x32xf32>
    %1427 = arith.mulf %1426, %901 : vector<2x32xf32>
    %1428 = vector.extract_strided_slice %1421 {offsets = [0, 2], sizes = [2, 1], strides = [1, 1]} : vector<2x8xf32> to vector<2x1xf32>
    %1429 = vector.broadcast %1428 : vector<2x1xf32> to vector<2x32xf32>
    %1430 = arith.mulf %1429, %904 : vector<2x32xf32>
    %1431 = vector.extract_strided_slice %1421 {offsets = [0, 3], sizes = [2, 1], strides = [1, 1]} : vector<2x8xf32> to vector<2x1xf32>
    %1432 = vector.broadcast %1431 : vector<2x1xf32> to vector<2x32xf32>
    %1433 = arith.mulf %1432, %907 : vector<2x32xf32>
    %1434 = vector.extract_strided_slice %1421 {offsets = [0, 4], sizes = [2, 1], strides = [1, 1]} : vector<2x8xf32> to vector<2x1xf32>
    %1435 = vector.broadcast %1434 : vector<2x1xf32> to vector<2x32xf32>
    %1436 = arith.mulf %1435, %910 : vector<2x32xf32>
    %1437 = vector.extract_strided_slice %1421 {offsets = [0, 5], sizes = [2, 1], strides = [1, 1]} : vector<2x8xf32> to vector<2x1xf32>
    %1438 = vector.broadcast %1437 : vector<2x1xf32> to vector<2x32xf32>
    %1439 = arith.mulf %1438, %913 : vector<2x32xf32>
    %1440 = vector.extract_strided_slice %1421 {offsets = [0, 6], sizes = [2, 1], strides = [1, 1]} : vector<2x8xf32> to vector<2x1xf32>
    %1441 = vector.broadcast %1440 : vector<2x1xf32> to vector<2x32xf32>
    %1442 = arith.mulf %1441, %916 : vector<2x32xf32>
    %1443 = vector.extract_strided_slice %1421 {offsets = [0, 7], sizes = [2, 1], strides = [1, 1]} : vector<2x8xf32> to vector<2x1xf32>
    %1444 = vector.broadcast %1443 : vector<2x1xf32> to vector<2x32xf32>
    %1445 = arith.mulf %1444, %919 : vector<2x32xf32>
    %1446 = arith.addf %1424, %1427 : vector<2x32xf32>
    %1447 = arith.addf %1430, %1433 : vector<2x32xf32>
    %1448 = arith.addf %1436, %1439 : vector<2x32xf32>
    %1449 = arith.addf %1442, %1445 : vector<2x32xf32>
    %1450 = arith.addf %1446, %1447 : vector<2x32xf32>
    %1451 = arith.addf %1448, %1449 : vector<2x32xf32>
    %1452 = arith.addf %1450, %1451 : vector<2x32xf32>
    %1453 = arith.addf %890, %1452 : vector<2x32xf32>
    %1454 = arith.negf %1453 : vector<2x32xf32>
    %1455 = math.exp %1454 : vector<2x32xf32>
    %cst_102 = arith.constant 1.000000e+00 : f32
    %1456 = vector.broadcast %cst_102 : f32 to vector<2x32xf32>
    %1457 = arith.addf %1456, %1455 : vector<2x32xf32>
    %1458 = arith.divf %1456, %1457 : vector<2x32xf32>
    %1459 = vector.extract_strided_slice %1458 {offsets = [0, 0], sizes = [2, 8], strides = [1, 1]} : vector<2x32xf32> to vector<2x8xf32>
    %1460 = vector.extract_strided_slice %1458 {offsets = [0, 8], sizes = [2, 8], strides = [1, 1]} : vector<2x32xf32> to vector<2x8xf32>
    %1461 = vector.extract_strided_slice %1458 {offsets = [0, 16], sizes = [2, 8], strides = [1, 1]} : vector<2x32xf32> to vector<2x8xf32>
    %cst_103 = arith.constant 2.000000e+00 : f32
    %1462 = vector.broadcast %cst_103 : f32 to vector<2x8xf32>
    %1463 = arith.mulf %1462, %1461 : vector<2x8xf32>
    %cst_104 = arith.constant 1.000000e+00 : f32
    %1464 = vector.broadcast %cst_104 : f32 to vector<2x8xf32>
    %1465 = arith.subf %1463, %1464 : vector<2x8xf32>
    %1466 = vector.extract_strided_slice %1458 {offsets = [0, 24], sizes = [2, 8], strides = [1, 1]} : vector<2x32xf32> to vector<2x8xf32>
    %1467 = arith.mulf %1460, %1419 : vector<2x8xf32>
    %1468 = arith.mulf %1459, %1465 : vector<2x8xf32>
    %1469 = arith.addf %1467, %1468 : vector<2x8xf32>
    %1470 = math.tanh %1469 : vector<2x8xf32>
    %1471 = arith.mulf %1466, %1470 : vector<2x8xf32>
    %1472 = vector.extract_strided_slice %1471 {offsets = [0, 0], sizes = [2, 1], strides = [1, 1]} : vector<2x8xf32> to vector<2x1xf32>
    %1473 = vector.broadcast %1472 : vector<2x1xf32> to vector<2x32xf32>
    %1474 = arith.mulf %1473, %898 : vector<2x32xf32>
    %1475 = vector.extract_strided_slice %1471 {offsets = [0, 1], sizes = [2, 1], strides = [1, 1]} : vector<2x8xf32> to vector<2x1xf32>
    %1476 = vector.broadcast %1475 : vector<2x1xf32> to vector<2x32xf32>
    %1477 = arith.mulf %1476, %901 : vector<2x32xf32>
    %1478 = vector.extract_strided_slice %1471 {offsets = [0, 2], sizes = [2, 1], strides = [1, 1]} : vector<2x8xf32> to vector<2x1xf32>
    %1479 = vector.broadcast %1478 : vector<2x1xf32> to vector<2x32xf32>
    %1480 = arith.mulf %1479, %904 : vector<2x32xf32>
    %1481 = vector.extract_strided_slice %1471 {offsets = [0, 3], sizes = [2, 1], strides = [1, 1]} : vector<2x8xf32> to vector<2x1xf32>
    %1482 = vector.broadcast %1481 : vector<2x1xf32> to vector<2x32xf32>
    %1483 = arith.mulf %1482, %907 : vector<2x32xf32>
    %1484 = vector.extract_strided_slice %1471 {offsets = [0, 4], sizes = [2, 1], strides = [1, 1]} : vector<2x8xf32> to vector<2x1xf32>
    %1485 = vector.broadcast %1484 : vector<2x1xf32> to vector<2x32xf32>
    %1486 = arith.mulf %1485, %910 : vector<2x32xf32>
    %1487 = vector.extract_strided_slice %1471 {offsets = [0, 5], sizes = [2, 1], strides = [1, 1]} : vector<2x8xf32> to vector<2x1xf32>
    %1488 = vector.broadcast %1487 : vector<2x1xf32> to vector<2x32xf32>
    %1489 = arith.mulf %1488, %913 : vector<2x32xf32>
    %1490 = vector.extract_strided_slice %1471 {offsets = [0, 6], sizes = [2, 1], strides = [1, 1]} : vector<2x8xf32> to vector<2x1xf32>
    %1491 = vector.broadcast %1490 : vector<2x1xf32> to vector<2x32xf32>
    %1492 = arith.mulf %1491, %916 : vector<2x32xf32>
    %1493 = vector.extract_strided_slice %1471 {offsets = [0, 7], sizes = [2, 1], strides = [1, 1]} : vector<2x8xf32> to vector<2x1xf32>
    %1494 = vector.broadcast %1493 : vector<2x1xf32> to vector<2x32xf32>
    %1495 = arith.mulf %1494, %919 : vector<2x32xf32>
    %1496 = arith.addf %1474, %1477 : vector<2x32xf32>
    %1497 = arith.addf %1480, %1483 : vector<2x32xf32>
    %1498 = arith.addf %1486, %1489 : vector<2x32xf32>
    %1499 = arith.addf %1492, %1495 : vector<2x32xf32>
    %1500 = arith.addf %1496, %1497 : vector<2x32xf32>
    %1501 = arith.addf %1498, %1499 : vector<2x32xf32>
    %1502 = arith.addf %1500, %1501 : vector<2x32xf32>
    %1503 = arith.addf %891, %1502 : vector<2x32xf32>
    %1504 = arith.negf %1503 : vector<2x32xf32>
    %1505 = math.exp %1504 : vector<2x32xf32>
    %cst_105 = arith.constant 1.000000e+00 : f32
    %1506 = vector.broadcast %cst_105 : f32 to vector<2x32xf32>
    %1507 = arith.addf %1506, %1505 : vector<2x32xf32>
    %1508 = arith.divf %1506, %1507 : vector<2x32xf32>
    %1509 = vector.extract_strided_slice %1508 {offsets = [0, 0], sizes = [2, 8], strides = [1, 1]} : vector<2x32xf32> to vector<2x8xf32>
    %1510 = vector.extract_strided_slice %1508 {offsets = [0, 8], sizes = [2, 8], strides = [1, 1]} : vector<2x32xf32> to vector<2x8xf32>
    %1511 = vector.extract_strided_slice %1508 {offsets = [0, 16], sizes = [2, 8], strides = [1, 1]} : vector<2x32xf32> to vector<2x8xf32>
    %cst_106 = arith.constant 2.000000e+00 : f32
    %1512 = vector.broadcast %cst_106 : f32 to vector<2x8xf32>
    %1513 = arith.mulf %1512, %1511 : vector<2x8xf32>
    %cst_107 = arith.constant 1.000000e+00 : f32
    %1514 = vector.broadcast %cst_107 : f32 to vector<2x8xf32>
    %1515 = arith.subf %1513, %1514 : vector<2x8xf32>
    %1516 = vector.extract_strided_slice %1508 {offsets = [0, 24], sizes = [2, 8], strides = [1, 1]} : vector<2x32xf32> to vector<2x8xf32>
    %1517 = arith.mulf %1510, %1469 : vector<2x8xf32>
    %1518 = arith.mulf %1509, %1515 : vector<2x8xf32>
    %1519 = arith.addf %1517, %1518 : vector<2x8xf32>
    %1520 = math.tanh %1519 : vector<2x8xf32>
    %1521 = arith.mulf %1516, %1520 : vector<2x8xf32>
    %1522 = vector.extract_strided_slice %1521 {offsets = [0, 0], sizes = [2, 1], strides = [1, 1]} : vector<2x8xf32> to vector<2x1xf32>
    %1523 = vector.broadcast %1522 : vector<2x1xf32> to vector<2x32xf32>
    %1524 = arith.mulf %1523, %898 : vector<2x32xf32>
    %1525 = vector.extract_strided_slice %1521 {offsets = [0, 1], sizes = [2, 1], strides = [1, 1]} : vector<2x8xf32> to vector<2x1xf32>
    %1526 = vector.broadcast %1525 : vector<2x1xf32> to vector<2x32xf32>
    %1527 = arith.mulf %1526, %901 : vector<2x32xf32>
    %1528 = vector.extract_strided_slice %1521 {offsets = [0, 2], sizes = [2, 1], strides = [1, 1]} : vector<2x8xf32> to vector<2x1xf32>
    %1529 = vector.broadcast %1528 : vector<2x1xf32> to vector<2x32xf32>
    %1530 = arith.mulf %1529, %904 : vector<2x32xf32>
    %1531 = vector.extract_strided_slice %1521 {offsets = [0, 3], sizes = [2, 1], strides = [1, 1]} : vector<2x8xf32> to vector<2x1xf32>
    %1532 = vector.broadcast %1531 : vector<2x1xf32> to vector<2x32xf32>
    %1533 = arith.mulf %1532, %907 : vector<2x32xf32>
    %1534 = vector.extract_strided_slice %1521 {offsets = [0, 4], sizes = [2, 1], strides = [1, 1]} : vector<2x8xf32> to vector<2x1xf32>
    %1535 = vector.broadcast %1534 : vector<2x1xf32> to vector<2x32xf32>
    %1536 = arith.mulf %1535, %910 : vector<2x32xf32>
    %1537 = vector.extract_strided_slice %1521 {offsets = [0, 5], sizes = [2, 1], strides = [1, 1]} : vector<2x8xf32> to vector<2x1xf32>
    %1538 = vector.broadcast %1537 : vector<2x1xf32> to vector<2x32xf32>
    %1539 = arith.mulf %1538, %913 : vector<2x32xf32>
    %1540 = vector.extract_strided_slice %1521 {offsets = [0, 6], sizes = [2, 1], strides = [1, 1]} : vector<2x8xf32> to vector<2x1xf32>
    %1541 = vector.broadcast %1540 : vector<2x1xf32> to vector<2x32xf32>
    %1542 = arith.mulf %1541, %916 : vector<2x32xf32>
    %1543 = vector.extract_strided_slice %1521 {offsets = [0, 7], sizes = [2, 1], strides = [1, 1]} : vector<2x8xf32> to vector<2x1xf32>
    %1544 = vector.broadcast %1543 : vector<2x1xf32> to vector<2x32xf32>
    %1545 = arith.mulf %1544, %919 : vector<2x32xf32>
    %1546 = arith.addf %1524, %1527 : vector<2x32xf32>
    %1547 = arith.addf %1530, %1533 : vector<2x32xf32>
    %1548 = arith.addf %1536, %1539 : vector<2x32xf32>
    %1549 = arith.addf %1542, %1545 : vector<2x32xf32>
    %1550 = arith.addf %1546, %1547 : vector<2x32xf32>
    %1551 = arith.addf %1548, %1549 : vector<2x32xf32>
    %1552 = arith.addf %1550, %1551 : vector<2x32xf32>
    %1553 = arith.addf %892, %1552 : vector<2x32xf32>
    %1554 = arith.negf %1553 : vector<2x32xf32>
    %1555 = math.exp %1554 : vector<2x32xf32>
    %cst_108 = arith.constant 1.000000e+00 : f32
    %1556 = vector.broadcast %cst_108 : f32 to vector<2x32xf32>
    %1557 = arith.addf %1556, %1555 : vector<2x32xf32>
    %1558 = arith.divf %1556, %1557 : vector<2x32xf32>
    %1559 = vector.extract_strided_slice %1558 {offsets = [0, 0], sizes = [2, 8], strides = [1, 1]} : vector<2x32xf32> to vector<2x8xf32>
    %1560 = vector.extract_strided_slice %1558 {offsets = [0, 8], sizes = [2, 8], strides = [1, 1]} : vector<2x32xf32> to vector<2x8xf32>
    %1561 = vector.extract_strided_slice %1558 {offsets = [0, 16], sizes = [2, 8], strides = [1, 1]} : vector<2x32xf32> to vector<2x8xf32>
    %cst_109 = arith.constant 2.000000e+00 : f32
    %1562 = vector.broadcast %cst_109 : f32 to vector<2x8xf32>
    %1563 = arith.mulf %1562, %1561 : vector<2x8xf32>
    %cst_110 = arith.constant 1.000000e+00 : f32
    %1564 = vector.broadcast %cst_110 : f32 to vector<2x8xf32>
    %1565 = arith.subf %1563, %1564 : vector<2x8xf32>
    %1566 = vector.extract_strided_slice %1558 {offsets = [0, 24], sizes = [2, 8], strides = [1, 1]} : vector<2x32xf32> to vector<2x8xf32>
    %1567 = arith.mulf %1560, %1519 : vector<2x8xf32>
    %1568 = arith.mulf %1559, %1565 : vector<2x8xf32>
    %1569 = arith.addf %1567, %1568 : vector<2x8xf32>
    %1570 = math.tanh %1569 : vector<2x8xf32>
    %1571 = arith.mulf %1566, %1570 : vector<2x8xf32>
    %1572 = vector.extract_strided_slice %1571 {offsets = [0, 0], sizes = [2, 1], strides = [1, 1]} : vector<2x8xf32> to vector<2x1xf32>
    %1573 = vector.broadcast %1572 : vector<2x1xf32> to vector<2x32xf32>
    %1574 = arith.mulf %1573, %898 : vector<2x32xf32>
    %1575 = vector.extract_strided_slice %1571 {offsets = [0, 1], sizes = [2, 1], strides = [1, 1]} : vector<2x8xf32> to vector<2x1xf32>
    %1576 = vector.broadcast %1575 : vector<2x1xf32> to vector<2x32xf32>
    %1577 = arith.mulf %1576, %901 : vector<2x32xf32>
    %1578 = vector.extract_strided_slice %1571 {offsets = [0, 2], sizes = [2, 1], strides = [1, 1]} : vector<2x8xf32> to vector<2x1xf32>
    %1579 = vector.broadcast %1578 : vector<2x1xf32> to vector<2x32xf32>
    %1580 = arith.mulf %1579, %904 : vector<2x32xf32>
    %1581 = vector.extract_strided_slice %1571 {offsets = [0, 3], sizes = [2, 1], strides = [1, 1]} : vector<2x8xf32> to vector<2x1xf32>
    %1582 = vector.broadcast %1581 : vector<2x1xf32> to vector<2x32xf32>
    %1583 = arith.mulf %1582, %907 : vector<2x32xf32>
    %1584 = vector.extract_strided_slice %1571 {offsets = [0, 4], sizes = [2, 1], strides = [1, 1]} : vector<2x8xf32> to vector<2x1xf32>
    %1585 = vector.broadcast %1584 : vector<2x1xf32> to vector<2x32xf32>
    %1586 = arith.mulf %1585, %910 : vector<2x32xf32>
    %1587 = vector.extract_strided_slice %1571 {offsets = [0, 5], sizes = [2, 1], strides = [1, 1]} : vector<2x8xf32> to vector<2x1xf32>
    %1588 = vector.broadcast %1587 : vector<2x1xf32> to vector<2x32xf32>
    %1589 = arith.mulf %1588, %913 : vector<2x32xf32>
    %1590 = vector.extract_strided_slice %1571 {offsets = [0, 6], sizes = [2, 1], strides = [1, 1]} : vector<2x8xf32> to vector<2x1xf32>
    %1591 = vector.broadcast %1590 : vector<2x1xf32> to vector<2x32xf32>
    %1592 = arith.mulf %1591, %916 : vector<2x32xf32>
    %1593 = vector.extract_strided_slice %1571 {offsets = [0, 7], sizes = [2, 1], strides = [1, 1]} : vector<2x8xf32> to vector<2x1xf32>
    %1594 = vector.broadcast %1593 : vector<2x1xf32> to vector<2x32xf32>
    %1595 = arith.mulf %1594, %919 : vector<2x32xf32>
    %1596 = arith.addf %1574, %1577 : vector<2x32xf32>
    %1597 = arith.addf %1580, %1583 : vector<2x32xf32>
    %1598 = arith.addf %1586, %1589 : vector<2x32xf32>
    %1599 = arith.addf %1592, %1595 : vector<2x32xf32>
    %1600 = arith.addf %1596, %1597 : vector<2x32xf32>
    %1601 = arith.addf %1598, %1599 : vector<2x32xf32>
    %1602 = arith.addf %1600, %1601 : vector<2x32xf32>
    %1603 = arith.addf %893, %1602 : vector<2x32xf32>
    %1604 = arith.negf %1603 : vector<2x32xf32>
    %1605 = math.exp %1604 : vector<2x32xf32>
    %cst_111 = arith.constant 1.000000e+00 : f32
    %1606 = vector.broadcast %cst_111 : f32 to vector<2x32xf32>
    %1607 = arith.addf %1606, %1605 : vector<2x32xf32>
    %1608 = arith.divf %1606, %1607 : vector<2x32xf32>
    %1609 = vector.extract_strided_slice %1608 {offsets = [0, 0], sizes = [2, 8], strides = [1, 1]} : vector<2x32xf32> to vector<2x8xf32>
    %1610 = vector.extract_strided_slice %1608 {offsets = [0, 8], sizes = [2, 8], strides = [1, 1]} : vector<2x32xf32> to vector<2x8xf32>
    %1611 = vector.extract_strided_slice %1608 {offsets = [0, 16], sizes = [2, 8], strides = [1, 1]} : vector<2x32xf32> to vector<2x8xf32>
    %cst_112 = arith.constant 2.000000e+00 : f32
    %1612 = vector.broadcast %cst_112 : f32 to vector<2x8xf32>
    %1613 = arith.mulf %1612, %1611 : vector<2x8xf32>
    %cst_113 = arith.constant 1.000000e+00 : f32
    %1614 = vector.broadcast %cst_113 : f32 to vector<2x8xf32>
    %1615 = arith.subf %1613, %1614 : vector<2x8xf32>
    %1616 = vector.extract_strided_slice %1608 {offsets = [0, 24], sizes = [2, 8], strides = [1, 1]} : vector<2x32xf32> to vector<2x8xf32>
    %1617 = arith.mulf %1610, %1569 : vector<2x8xf32>
    %1618 = arith.mulf %1609, %1615 : vector<2x8xf32>
    %1619 = arith.addf %1617, %1618 : vector<2x8xf32>
    %1620 = math.tanh %1619 : vector<2x8xf32>
    %1621 = arith.mulf %1616, %1620 : vector<2x8xf32>
    %1622 = vector.extract_strided_slice %1621 {offsets = [0, 0], sizes = [2, 1], strides = [1, 1]} : vector<2x8xf32> to vector<2x1xf32>
    %1623 = vector.broadcast %1622 : vector<2x1xf32> to vector<2x32xf32>
    %1624 = arith.mulf %1623, %898 : vector<2x32xf32>
    %1625 = vector.extract_strided_slice %1621 {offsets = [0, 1], sizes = [2, 1], strides = [1, 1]} : vector<2x8xf32> to vector<2x1xf32>
    %1626 = vector.broadcast %1625 : vector<2x1xf32> to vector<2x32xf32>
    %1627 = arith.mulf %1626, %901 : vector<2x32xf32>
    %1628 = vector.extract_strided_slice %1621 {offsets = [0, 2], sizes = [2, 1], strides = [1, 1]} : vector<2x8xf32> to vector<2x1xf32>
    %1629 = vector.broadcast %1628 : vector<2x1xf32> to vector<2x32xf32>
    %1630 = arith.mulf %1629, %904 : vector<2x32xf32>
    %1631 = vector.extract_strided_slice %1621 {offsets = [0, 3], sizes = [2, 1], strides = [1, 1]} : vector<2x8xf32> to vector<2x1xf32>
    %1632 = vector.broadcast %1631 : vector<2x1xf32> to vector<2x32xf32>
    %1633 = arith.mulf %1632, %907 : vector<2x32xf32>
    %1634 = vector.extract_strided_slice %1621 {offsets = [0, 4], sizes = [2, 1], strides = [1, 1]} : vector<2x8xf32> to vector<2x1xf32>
    %1635 = vector.broadcast %1634 : vector<2x1xf32> to vector<2x32xf32>
    %1636 = arith.mulf %1635, %910 : vector<2x32xf32>
    %1637 = vector.extract_strided_slice %1621 {offsets = [0, 5], sizes = [2, 1], strides = [1, 1]} : vector<2x8xf32> to vector<2x1xf32>
    %1638 = vector.broadcast %1637 : vector<2x1xf32> to vector<2x32xf32>
    %1639 = arith.mulf %1638, %913 : vector<2x32xf32>
    %1640 = vector.extract_strided_slice %1621 {offsets = [0, 6], sizes = [2, 1], strides = [1, 1]} : vector<2x8xf32> to vector<2x1xf32>
    %1641 = vector.broadcast %1640 : vector<2x1xf32> to vector<2x32xf32>
    %1642 = arith.mulf %1641, %916 : vector<2x32xf32>
    %1643 = vector.extract_strided_slice %1621 {offsets = [0, 7], sizes = [2, 1], strides = [1, 1]} : vector<2x8xf32> to vector<2x1xf32>
    %1644 = vector.broadcast %1643 : vector<2x1xf32> to vector<2x32xf32>
    %1645 = arith.mulf %1644, %919 : vector<2x32xf32>
    %1646 = arith.addf %1624, %1627 : vector<2x32xf32>
    %1647 = arith.addf %1630, %1633 : vector<2x32xf32>
    %1648 = arith.addf %1636, %1639 : vector<2x32xf32>
    %1649 = arith.addf %1642, %1645 : vector<2x32xf32>
    %1650 = arith.addf %1646, %1647 : vector<2x32xf32>
    %1651 = arith.addf %1648, %1649 : vector<2x32xf32>
    %1652 = arith.addf %1650, %1651 : vector<2x32xf32>
    %1653 = arith.addf %894, %1652 : vector<2x32xf32>
    %1654 = arith.negf %1653 : vector<2x32xf32>
    %1655 = math.exp %1654 : vector<2x32xf32>
    %cst_114 = arith.constant 1.000000e+00 : f32
    %1656 = vector.broadcast %cst_114 : f32 to vector<2x32xf32>
    %1657 = arith.addf %1656, %1655 : vector<2x32xf32>
    %1658 = arith.divf %1656, %1657 : vector<2x32xf32>
    %1659 = vector.extract_strided_slice %1658 {offsets = [0, 0], sizes = [2, 8], strides = [1, 1]} : vector<2x32xf32> to vector<2x8xf32>
    %1660 = vector.extract_strided_slice %1658 {offsets = [0, 8], sizes = [2, 8], strides = [1, 1]} : vector<2x32xf32> to vector<2x8xf32>
    %1661 = vector.extract_strided_slice %1658 {offsets = [0, 16], sizes = [2, 8], strides = [1, 1]} : vector<2x32xf32> to vector<2x8xf32>
    %cst_115 = arith.constant 2.000000e+00 : f32
    %1662 = vector.broadcast %cst_115 : f32 to vector<2x8xf32>
    %1663 = arith.mulf %1662, %1661 : vector<2x8xf32>
    %cst_116 = arith.constant 1.000000e+00 : f32
    %1664 = vector.broadcast %cst_116 : f32 to vector<2x8xf32>
    %1665 = arith.subf %1663, %1664 : vector<2x8xf32>
    %1666 = vector.extract_strided_slice %1658 {offsets = [0, 24], sizes = [2, 8], strides = [1, 1]} : vector<2x32xf32> to vector<2x8xf32>
    %1667 = arith.mulf %1660, %1619 : vector<2x8xf32>
    %1668 = arith.mulf %1659, %1665 : vector<2x8xf32>
    %1669 = arith.addf %1667, %1668 : vector<2x8xf32>
    %1670 = math.tanh %1669 : vector<2x8xf32>
    %1671 = arith.mulf %1666, %1670 : vector<2x8xf32>
    %1672 = vector.extract_strided_slice %1671 {offsets = [0, 0], sizes = [2, 1], strides = [1, 1]} : vector<2x8xf32> to vector<2x1xf32>
    %1673 = vector.broadcast %1672 : vector<2x1xf32> to vector<2x32xf32>
    %1674 = arith.mulf %1673, %898 : vector<2x32xf32>
    %1675 = vector.extract_strided_slice %1671 {offsets = [0, 1], sizes = [2, 1], strides = [1, 1]} : vector<2x8xf32> to vector<2x1xf32>
    %1676 = vector.broadcast %1675 : vector<2x1xf32> to vector<2x32xf32>
    %1677 = arith.mulf %1676, %901 : vector<2x32xf32>
    %1678 = vector.extract_strided_slice %1671 {offsets = [0, 2], sizes = [2, 1], strides = [1, 1]} : vector<2x8xf32> to vector<2x1xf32>
    %1679 = vector.broadcast %1678 : vector<2x1xf32> to vector<2x32xf32>
    %1680 = arith.mulf %1679, %904 : vector<2x32xf32>
    %1681 = vector.extract_strided_slice %1671 {offsets = [0, 3], sizes = [2, 1], strides = [1, 1]} : vector<2x8xf32> to vector<2x1xf32>
    %1682 = vector.broadcast %1681 : vector<2x1xf32> to vector<2x32xf32>
    %1683 = arith.mulf %1682, %907 : vector<2x32xf32>
    %1684 = vector.extract_strided_slice %1671 {offsets = [0, 4], sizes = [2, 1], strides = [1, 1]} : vector<2x8xf32> to vector<2x1xf32>
    %1685 = vector.broadcast %1684 : vector<2x1xf32> to vector<2x32xf32>
    %1686 = arith.mulf %1685, %910 : vector<2x32xf32>
    %1687 = vector.extract_strided_slice %1671 {offsets = [0, 5], sizes = [2, 1], strides = [1, 1]} : vector<2x8xf32> to vector<2x1xf32>
    %1688 = vector.broadcast %1687 : vector<2x1xf32> to vector<2x32xf32>
    %1689 = arith.mulf %1688, %913 : vector<2x32xf32>
    %1690 = vector.extract_strided_slice %1671 {offsets = [0, 6], sizes = [2, 1], strides = [1, 1]} : vector<2x8xf32> to vector<2x1xf32>
    %1691 = vector.broadcast %1690 : vector<2x1xf32> to vector<2x32xf32>
    %1692 = arith.mulf %1691, %916 : vector<2x32xf32>
    %1693 = vector.extract_strided_slice %1671 {offsets = [0, 7], sizes = [2, 1], strides = [1, 1]} : vector<2x8xf32> to vector<2x1xf32>
    %1694 = vector.broadcast %1693 : vector<2x1xf32> to vector<2x32xf32>
    %1695 = arith.mulf %1694, %919 : vector<2x32xf32>
    %1696 = arith.addf %1674, %1677 : vector<2x32xf32>
    %1697 = arith.addf %1680, %1683 : vector<2x32xf32>
    %1698 = arith.addf %1686, %1689 : vector<2x32xf32>
    %1699 = arith.addf %1692, %1695 : vector<2x32xf32>
    %1700 = arith.addf %1696, %1697 : vector<2x32xf32>
    %1701 = arith.addf %1698, %1699 : vector<2x32xf32>
    %1702 = arith.addf %1700, %1701 : vector<2x32xf32>
    %1703 = arith.addf %895, %1702 : vector<2x32xf32>
    %1704 = arith.negf %1703 : vector<2x32xf32>
    %1705 = math.exp %1704 : vector<2x32xf32>
    %cst_117 = arith.constant 1.000000e+00 : f32
    %1706 = vector.broadcast %cst_117 : f32 to vector<2x32xf32>
    %1707 = arith.addf %1706, %1705 : vector<2x32xf32>
    %1708 = arith.divf %1706, %1707 : vector<2x32xf32>
    %1709 = vector.extract_strided_slice %1708 {offsets = [0, 0], sizes = [2, 8], strides = [1, 1]} : vector<2x32xf32> to vector<2x8xf32>
    %1710 = vector.extract_strided_slice %1708 {offsets = [0, 8], sizes = [2, 8], strides = [1, 1]} : vector<2x32xf32> to vector<2x8xf32>
    %1711 = vector.extract_strided_slice %1708 {offsets = [0, 16], sizes = [2, 8], strides = [1, 1]} : vector<2x32xf32> to vector<2x8xf32>
    %cst_118 = arith.constant 2.000000e+00 : f32
    %1712 = vector.broadcast %cst_118 : f32 to vector<2x8xf32>
    %1713 = arith.mulf %1712, %1711 : vector<2x8xf32>
    %cst_119 = arith.constant 1.000000e+00 : f32
    %1714 = vector.broadcast %cst_119 : f32 to vector<2x8xf32>
    %1715 = arith.subf %1713, %1714 : vector<2x8xf32>
    %1716 = vector.extract_strided_slice %1708 {offsets = [0, 24], sizes = [2, 8], strides = [1, 1]} : vector<2x32xf32> to vector<2x8xf32>
    %1717 = arith.mulf %1710, %1669 : vector<2x8xf32>
    %1718 = arith.mulf %1709, %1715 : vector<2x8xf32>
    %1719 = arith.addf %1717, %1718 : vector<2x8xf32>
    %1720 = math.tanh %1719 : vector<2x8xf32>
    %1721 = arith.mulf %1716, %1720 : vector<2x8xf32>
    %1722 = vector.shape_cast %971 : vector<2x8xf32> to vector<1x2x8xf32>
    %1723 = vector.shape_cast %1021 : vector<2x8xf32> to vector<1x2x8xf32>
    %1724 = vector.shape_cast %1071 : vector<2x8xf32> to vector<1x2x8xf32>
    %1725 = vector.shape_cast %1121 : vector<2x8xf32> to vector<1x2x8xf32>
    %1726 = vector.shape_cast %1171 : vector<2x8xf32> to vector<1x2x8xf32>
    %1727 = vector.shape_cast %1221 : vector<2x8xf32> to vector<1x2x8xf32>
    %1728 = vector.shape_cast %1271 : vector<2x8xf32> to vector<1x2x8xf32>
    %1729 = vector.shape_cast %1321 : vector<2x8xf32> to vector<1x2x8xf32>
    %1730 = vector.shape_cast %1371 : vector<2x8xf32> to vector<1x2x8xf32>
    %1731 = vector.shape_cast %1421 : vector<2x8xf32> to vector<1x2x8xf32>
    %1732 = vector.shape_cast %1471 : vector<2x8xf32> to vector<1x2x8xf32>
    %1733 = vector.shape_cast %1521 : vector<2x8xf32> to vector<1x2x8xf32>
    %1734 = vector.shape_cast %1571 : vector<2x8xf32> to vector<1x2x8xf32>
    %1735 = vector.shape_cast %1621 : vector<2x8xf32> to vector<1x2x8xf32>
    %1736 = vector.shape_cast %1671 : vector<2x8xf32> to vector<1x2x8xf32>
    %1737 = vector.shape_cast %1721 : vector<2x8xf32> to vector<1x2x8xf32>
    %1738 = tpu.concatenate %1722, %1723, %1724, %1725, %1726, %1727, %1728, %1729, %1730, %1731, %1732, %1733, %1734, %1735, %1736, %1737 in 0 : vector<1x2x8xf32>, vector<1x2x8xf32>, vector<1x2x8xf32>, vector<1x2x8xf32>, vector<1x2x8xf32>, vector<1x2x8xf32>, vector<1x2x8xf32>, vector<1x2x8xf32>, vector<1x2x8xf32>, vector<1x2x8xf32>, vector<1x2x8xf32>, vector<1x2x8xf32>, vector<1x2x8xf32>, vector<1x2x8xf32>, vector<1x2x8xf32>, vector<1x2x8xf32> -> vector<16x2x8xf32>
    %1739 = vector.shape_cast %1738 : vector<16x2x8xf32> to vector<32x8xf32>
    %c2 = arith.constant 2 : index
    %c0_120 = arith.constant 0 : index
    %c0_121 = arith.constant 0 : index
    %1740 = vector.load %arg2[%c2, %c0_120, %c0_121] : memref<3x8x32xf32, #tpu.memory_space<vmem>>, vector<1x8x32xf32>
    %1741 = vector.shape_cast %1740 : vector<1x8x32xf32> to vector<8x32xf32>
    %c2_122 = arith.constant 2 : index
    %c0_123 = arith.constant 0 : index
    %c0_124 = arith.constant 0 : index
    %1742 = vector.load %arg3[%c2_122, %c0_123, %c0_124] : memref<3x8x32xf32, #tpu.memory_space<vmem>>, vector<1x8x32xf32>
    %1743 = vector.shape_cast %1742 : vector<1x8x32xf32> to vector<8x32xf32>
    %c2_125 = arith.constant 2 : index
    %c0_126 = arith.constant 0 : index
    %c0_127 = arith.constant 0 : index
    %1744 = vector.load %arg4[%c2_125, %c0_126, %c0_127] : memref<3x1x32xf32, #tpu.memory_space<vmem>>, vector<1x1x32xf32>
    %1745 = vector.shape_cast %1744 : vector<1x1x32xf32> to vector<1x32xf32>
    %cst_128 = arith.constant dense<0.000000e+00> : vector<32x32xf32>
    %1746 = tpu.matmul %1739, %1741, %cst_128 {dimension_numbers = #tpu.dot_dimension_numbers<[1], [0], [0], [1], [0, 0, 1, 1], [], []>} : vector<32x8xf32>, vector<8x32xf32>, vector<32x32xf32> -> vector<32x32xf32>
    %1747 = vector.broadcast %1745 : vector<1x32xf32> to vector<32x32xf32>
    %1748 = arith.addf %1746, %1747 : vector<32x32xf32>
    %1749 = vector.extract_strided_slice %1748 {offsets = [0, 0], sizes = [2, 32], strides = [1, 1]} : vector<32x32xf32> to vector<2x32xf32>
    %1750 = vector.extract_strided_slice %1748 {offsets = [2, 0], sizes = [2, 32], strides = [1, 1]} : vector<32x32xf32> to vector<2x32xf32>
    %1751 = vector.extract_strided_slice %1748 {offsets = [4, 0], sizes = [2, 32], strides = [1, 1]} : vector<32x32xf32> to vector<2x32xf32>
    %1752 = vector.extract_strided_slice %1748 {offsets = [6, 0], sizes = [2, 32], strides = [1, 1]} : vector<32x32xf32> to vector<2x32xf32>
    %1753 = vector.extract_strided_slice %1748 {offsets = [8, 0], sizes = [2, 32], strides = [1, 1]} : vector<32x32xf32> to vector<2x32xf32>
    %1754 = vector.extract_strided_slice %1748 {offsets = [10, 0], sizes = [2, 32], strides = [1, 1]} : vector<32x32xf32> to vector<2x32xf32>
    %1755 = vector.extract_strided_slice %1748 {offsets = [12, 0], sizes = [2, 32], strides = [1, 1]} : vector<32x32xf32> to vector<2x32xf32>
    %1756 = vector.extract_strided_slice %1748 {offsets = [14, 0], sizes = [2, 32], strides = [1, 1]} : vector<32x32xf32> to vector<2x32xf32>
    %1757 = vector.extract_strided_slice %1748 {offsets = [16, 0], sizes = [2, 32], strides = [1, 1]} : vector<32x32xf32> to vector<2x32xf32>
    %1758 = vector.extract_strided_slice %1748 {offsets = [18, 0], sizes = [2, 32], strides = [1, 1]} : vector<32x32xf32> to vector<2x32xf32>
    %1759 = vector.extract_strided_slice %1748 {offsets = [20, 0], sizes = [2, 32], strides = [1, 1]} : vector<32x32xf32> to vector<2x32xf32>
    %1760 = vector.extract_strided_slice %1748 {offsets = [22, 0], sizes = [2, 32], strides = [1, 1]} : vector<32x32xf32> to vector<2x32xf32>
    %1761 = vector.extract_strided_slice %1748 {offsets = [24, 0], sizes = [2, 32], strides = [1, 1]} : vector<32x32xf32> to vector<2x32xf32>
    %1762 = vector.extract_strided_slice %1748 {offsets = [26, 0], sizes = [2, 32], strides = [1, 1]} : vector<32x32xf32> to vector<2x32xf32>
    %1763 = vector.extract_strided_slice %1748 {offsets = [28, 0], sizes = [2, 32], strides = [1, 1]} : vector<32x32xf32> to vector<2x32xf32>
    %1764 = vector.extract_strided_slice %1748 {offsets = [30, 0], sizes = [2, 32], strides = [1, 1]} : vector<32x32xf32> to vector<2x32xf32>
    %1765 = vector.extract_strided_slice %1743 {offsets = [0, 0], sizes = [1, 32], strides = [1, 1]} : vector<8x32xf32> to vector<1x32xf32>
    %1766 = vector.shape_cast %1765 : vector<1x32xf32> to vector<1x32xf32>
    %1767 = vector.broadcast %1766 : vector<1x32xf32> to vector<2x32xf32>
    %1768 = vector.extract_strided_slice %1743 {offsets = [1, 0], sizes = [1, 32], strides = [1, 1]} : vector<8x32xf32> to vector<1x32xf32>
    %1769 = vector.shape_cast %1768 : vector<1x32xf32> to vector<1x32xf32>
    %1770 = vector.broadcast %1769 : vector<1x32xf32> to vector<2x32xf32>
    %1771 = vector.extract_strided_slice %1743 {offsets = [2, 0], sizes = [1, 32], strides = [1, 1]} : vector<8x32xf32> to vector<1x32xf32>
    %1772 = vector.shape_cast %1771 : vector<1x32xf32> to vector<1x32xf32>
    %1773 = vector.broadcast %1772 : vector<1x32xf32> to vector<2x32xf32>
    %1774 = vector.extract_strided_slice %1743 {offsets = [3, 0], sizes = [1, 32], strides = [1, 1]} : vector<8x32xf32> to vector<1x32xf32>
    %1775 = vector.shape_cast %1774 : vector<1x32xf32> to vector<1x32xf32>
    %1776 = vector.broadcast %1775 : vector<1x32xf32> to vector<2x32xf32>
    %1777 = vector.extract_strided_slice %1743 {offsets = [4, 0], sizes = [1, 32], strides = [1, 1]} : vector<8x32xf32> to vector<1x32xf32>
    %1778 = vector.shape_cast %1777 : vector<1x32xf32> to vector<1x32xf32>
    %1779 = vector.broadcast %1778 : vector<1x32xf32> to vector<2x32xf32>
    %1780 = vector.extract_strided_slice %1743 {offsets = [5, 0], sizes = [1, 32], strides = [1, 1]} : vector<8x32xf32> to vector<1x32xf32>
    %1781 = vector.shape_cast %1780 : vector<1x32xf32> to vector<1x32xf32>
    %1782 = vector.broadcast %1781 : vector<1x32xf32> to vector<2x32xf32>
    %1783 = vector.extract_strided_slice %1743 {offsets = [6, 0], sizes = [1, 32], strides = [1, 1]} : vector<8x32xf32> to vector<1x32xf32>
    %1784 = vector.shape_cast %1783 : vector<1x32xf32> to vector<1x32xf32>
    %1785 = vector.broadcast %1784 : vector<1x32xf32> to vector<2x32xf32>
    %1786 = vector.extract_strided_slice %1743 {offsets = [7, 0], sizes = [1, 32], strides = [1, 1]} : vector<8x32xf32> to vector<1x32xf32>
    %1787 = vector.shape_cast %1786 : vector<1x32xf32> to vector<1x32xf32>
    %1788 = vector.broadcast %1787 : vector<1x32xf32> to vector<2x32xf32>
    %cst_129 = arith.constant 0.000000e+00 : f32
    %1789 = vector.broadcast %cst_129 : f32 to vector<2x8xf32>
    %cst_130 = arith.constant 0.000000e+00 : f32
    %1790 = vector.broadcast %cst_130 : f32 to vector<2x8xf32>
    %1791 = vector.extract_strided_slice %1789 {offsets = [0, 0], sizes = [2, 1], strides = [1, 1]} : vector<2x8xf32> to vector<2x1xf32>
    %1792 = vector.broadcast %1791 : vector<2x1xf32> to vector<2x32xf32>
    %1793 = arith.mulf %1792, %1767 : vector<2x32xf32>
    %1794 = vector.extract_strided_slice %1789 {offsets = [0, 1], sizes = [2, 1], strides = [1, 1]} : vector<2x8xf32> to vector<2x1xf32>
    %1795 = vector.broadcast %1794 : vector<2x1xf32> to vector<2x32xf32>
    %1796 = arith.mulf %1795, %1770 : vector<2x32xf32>
    %1797 = vector.extract_strided_slice %1789 {offsets = [0, 2], sizes = [2, 1], strides = [1, 1]} : vector<2x8xf32> to vector<2x1xf32>
    %1798 = vector.broadcast %1797 : vector<2x1xf32> to vector<2x32xf32>
    %1799 = arith.mulf %1798, %1773 : vector<2x32xf32>
    %1800 = vector.extract_strided_slice %1789 {offsets = [0, 3], sizes = [2, 1], strides = [1, 1]} : vector<2x8xf32> to vector<2x1xf32>
    %1801 = vector.broadcast %1800 : vector<2x1xf32> to vector<2x32xf32>
    %1802 = arith.mulf %1801, %1776 : vector<2x32xf32>
    %1803 = vector.extract_strided_slice %1789 {offsets = [0, 4], sizes = [2, 1], strides = [1, 1]} : vector<2x8xf32> to vector<2x1xf32>
    %1804 = vector.broadcast %1803 : vector<2x1xf32> to vector<2x32xf32>
    %1805 = arith.mulf %1804, %1779 : vector<2x32xf32>
    %1806 = vector.extract_strided_slice %1789 {offsets = [0, 5], sizes = [2, 1], strides = [1, 1]} : vector<2x8xf32> to vector<2x1xf32>
    %1807 = vector.broadcast %1806 : vector<2x1xf32> to vector<2x32xf32>
    %1808 = arith.mulf %1807, %1782 : vector<2x32xf32>
    %1809 = vector.extract_strided_slice %1789 {offsets = [0, 6], sizes = [2, 1], strides = [1, 1]} : vector<2x8xf32> to vector<2x1xf32>
    %1810 = vector.broadcast %1809 : vector<2x1xf32> to vector<2x32xf32>
    %1811 = arith.mulf %1810, %1785 : vector<2x32xf32>
    %1812 = vector.extract_strided_slice %1789 {offsets = [0, 7], sizes = [2, 1], strides = [1, 1]} : vector<2x8xf32> to vector<2x1xf32>
    %1813 = vector.broadcast %1812 : vector<2x1xf32> to vector<2x32xf32>
    %1814 = arith.mulf %1813, %1788 : vector<2x32xf32>
    %1815 = arith.addf %1793, %1796 : vector<2x32xf32>
    %1816 = arith.addf %1799, %1802 : vector<2x32xf32>
    %1817 = arith.addf %1805, %1808 : vector<2x32xf32>
    %1818 = arith.addf %1811, %1814 : vector<2x32xf32>
    %1819 = arith.addf %1815, %1816 : vector<2x32xf32>
    %1820 = arith.addf %1817, %1818 : vector<2x32xf32>
    %1821 = arith.addf %1819, %1820 : vector<2x32xf32>
    %1822 = arith.addf %1749, %1821 : vector<2x32xf32>
    %1823 = arith.negf %1822 : vector<2x32xf32>
    %1824 = math.exp %1823 : vector<2x32xf32>
    %cst_131 = arith.constant 1.000000e+00 : f32
    %1825 = vector.broadcast %cst_131 : f32 to vector<2x32xf32>
    %1826 = arith.addf %1825, %1824 : vector<2x32xf32>
    %1827 = arith.divf %1825, %1826 : vector<2x32xf32>
    %1828 = vector.extract_strided_slice %1827 {offsets = [0, 0], sizes = [2, 8], strides = [1, 1]} : vector<2x32xf32> to vector<2x8xf32>
    %1829 = vector.extract_strided_slice %1827 {offsets = [0, 8], sizes = [2, 8], strides = [1, 1]} : vector<2x32xf32> to vector<2x8xf32>
    %1830 = vector.extract_strided_slice %1827 {offsets = [0, 16], sizes = [2, 8], strides = [1, 1]} : vector<2x32xf32> to vector<2x8xf32>
    %cst_132 = arith.constant 2.000000e+00 : f32
    %1831 = vector.broadcast %cst_132 : f32 to vector<2x8xf32>
    %1832 = arith.mulf %1831, %1830 : vector<2x8xf32>
    %cst_133 = arith.constant 1.000000e+00 : f32
    %1833 = vector.broadcast %cst_133 : f32 to vector<2x8xf32>
    %1834 = arith.subf %1832, %1833 : vector<2x8xf32>
    %1835 = vector.extract_strided_slice %1827 {offsets = [0, 24], sizes = [2, 8], strides = [1, 1]} : vector<2x32xf32> to vector<2x8xf32>
    %1836 = arith.mulf %1829, %1790 : vector<2x8xf32>
    %1837 = arith.mulf %1828, %1834 : vector<2x8xf32>
    %1838 = arith.addf %1836, %1837 : vector<2x8xf32>
    %1839 = math.tanh %1838 : vector<2x8xf32>
    %1840 = arith.mulf %1835, %1839 : vector<2x8xf32>
    %1841 = vector.extract_strided_slice %1840 {offsets = [0, 0], sizes = [2, 1], strides = [1, 1]} : vector<2x8xf32> to vector<2x1xf32>
    %1842 = vector.broadcast %1841 : vector<2x1xf32> to vector<2x32xf32>
    %1843 = arith.mulf %1842, %1767 : vector<2x32xf32>
    %1844 = vector.extract_strided_slice %1840 {offsets = [0, 1], sizes = [2, 1], strides = [1, 1]} : vector<2x8xf32> to vector<2x1xf32>
    %1845 = vector.broadcast %1844 : vector<2x1xf32> to vector<2x32xf32>
    %1846 = arith.mulf %1845, %1770 : vector<2x32xf32>
    %1847 = vector.extract_strided_slice %1840 {offsets = [0, 2], sizes = [2, 1], strides = [1, 1]} : vector<2x8xf32> to vector<2x1xf32>
    %1848 = vector.broadcast %1847 : vector<2x1xf32> to vector<2x32xf32>
    %1849 = arith.mulf %1848, %1773 : vector<2x32xf32>
    %1850 = vector.extract_strided_slice %1840 {offsets = [0, 3], sizes = [2, 1], strides = [1, 1]} : vector<2x8xf32> to vector<2x1xf32>
    %1851 = vector.broadcast %1850 : vector<2x1xf32> to vector<2x32xf32>
    %1852 = arith.mulf %1851, %1776 : vector<2x32xf32>
    %1853 = vector.extract_strided_slice %1840 {offsets = [0, 4], sizes = [2, 1], strides = [1, 1]} : vector<2x8xf32> to vector<2x1xf32>
    %1854 = vector.broadcast %1853 : vector<2x1xf32> to vector<2x32xf32>
    %1855 = arith.mulf %1854, %1779 : vector<2x32xf32>
    %1856 = vector.extract_strided_slice %1840 {offsets = [0, 5], sizes = [2, 1], strides = [1, 1]} : vector<2x8xf32> to vector<2x1xf32>
    %1857 = vector.broadcast %1856 : vector<2x1xf32> to vector<2x32xf32>
    %1858 = arith.mulf %1857, %1782 : vector<2x32xf32>
    %1859 = vector.extract_strided_slice %1840 {offsets = [0, 6], sizes = [2, 1], strides = [1, 1]} : vector<2x8xf32> to vector<2x1xf32>
    %1860 = vector.broadcast %1859 : vector<2x1xf32> to vector<2x32xf32>
    %1861 = arith.mulf %1860, %1785 : vector<2x32xf32>
    %1862 = vector.extract_strided_slice %1840 {offsets = [0, 7], sizes = [2, 1], strides = [1, 1]} : vector<2x8xf32> to vector<2x1xf32>
    %1863 = vector.broadcast %1862 : vector<2x1xf32> to vector<2x32xf32>
    %1864 = arith.mulf %1863, %1788 : vector<2x32xf32>
    %1865 = arith.addf %1843, %1846 : vector<2x32xf32>
    %1866 = arith.addf %1849, %1852 : vector<2x32xf32>
    %1867 = arith.addf %1855, %1858 : vector<2x32xf32>
    %1868 = arith.addf %1861, %1864 : vector<2x32xf32>
    %1869 = arith.addf %1865, %1866 : vector<2x32xf32>
    %1870 = arith.addf %1867, %1868 : vector<2x32xf32>
    %1871 = arith.addf %1869, %1870 : vector<2x32xf32>
    %1872 = arith.addf %1750, %1871 : vector<2x32xf32>
    %1873 = arith.negf %1872 : vector<2x32xf32>
    %1874 = math.exp %1873 : vector<2x32xf32>
    %cst_134 = arith.constant 1.000000e+00 : f32
    %1875 = vector.broadcast %cst_134 : f32 to vector<2x32xf32>
    %1876 = arith.addf %1875, %1874 : vector<2x32xf32>
    %1877 = arith.divf %1875, %1876 : vector<2x32xf32>
    %1878 = vector.extract_strided_slice %1877 {offsets = [0, 0], sizes = [2, 8], strides = [1, 1]} : vector<2x32xf32> to vector<2x8xf32>
    %1879 = vector.extract_strided_slice %1877 {offsets = [0, 8], sizes = [2, 8], strides = [1, 1]} : vector<2x32xf32> to vector<2x8xf32>
    %1880 = vector.extract_strided_slice %1877 {offsets = [0, 16], sizes = [2, 8], strides = [1, 1]} : vector<2x32xf32> to vector<2x8xf32>
    %cst_135 = arith.constant 2.000000e+00 : f32
    %1881 = vector.broadcast %cst_135 : f32 to vector<2x8xf32>
    %1882 = arith.mulf %1881, %1880 : vector<2x8xf32>
    %cst_136 = arith.constant 1.000000e+00 : f32
    %1883 = vector.broadcast %cst_136 : f32 to vector<2x8xf32>
    %1884 = arith.subf %1882, %1883 : vector<2x8xf32>
    %1885 = vector.extract_strided_slice %1877 {offsets = [0, 24], sizes = [2, 8], strides = [1, 1]} : vector<2x32xf32> to vector<2x8xf32>
    %1886 = arith.mulf %1879, %1838 : vector<2x8xf32>
    %1887 = arith.mulf %1878, %1884 : vector<2x8xf32>
    %1888 = arith.addf %1886, %1887 : vector<2x8xf32>
    %1889 = math.tanh %1888 : vector<2x8xf32>
    %1890 = arith.mulf %1885, %1889 : vector<2x8xf32>
    %1891 = vector.extract_strided_slice %1890 {offsets = [0, 0], sizes = [2, 1], strides = [1, 1]} : vector<2x8xf32> to vector<2x1xf32>
    %1892 = vector.broadcast %1891 : vector<2x1xf32> to vector<2x32xf32>
    %1893 = arith.mulf %1892, %1767 : vector<2x32xf32>
    %1894 = vector.extract_strided_slice %1890 {offsets = [0, 1], sizes = [2, 1], strides = [1, 1]} : vector<2x8xf32> to vector<2x1xf32>
    %1895 = vector.broadcast %1894 : vector<2x1xf32> to vector<2x32xf32>
    %1896 = arith.mulf %1895, %1770 : vector<2x32xf32>
    %1897 = vector.extract_strided_slice %1890 {offsets = [0, 2], sizes = [2, 1], strides = [1, 1]} : vector<2x8xf32> to vector<2x1xf32>
    %1898 = vector.broadcast %1897 : vector<2x1xf32> to vector<2x32xf32>
    %1899 = arith.mulf %1898, %1773 : vector<2x32xf32>
    %1900 = vector.extract_strided_slice %1890 {offsets = [0, 3], sizes = [2, 1], strides = [1, 1]} : vector<2x8xf32> to vector<2x1xf32>
    %1901 = vector.broadcast %1900 : vector<2x1xf32> to vector<2x32xf32>
    %1902 = arith.mulf %1901, %1776 : vector<2x32xf32>
    %1903 = vector.extract_strided_slice %1890 {offsets = [0, 4], sizes = [2, 1], strides = [1, 1]} : vector<2x8xf32> to vector<2x1xf32>
    %1904 = vector.broadcast %1903 : vector<2x1xf32> to vector<2x32xf32>
    %1905 = arith.mulf %1904, %1779 : vector<2x32xf32>
    %1906 = vector.extract_strided_slice %1890 {offsets = [0, 5], sizes = [2, 1], strides = [1, 1]} : vector<2x8xf32> to vector<2x1xf32>
    %1907 = vector.broadcast %1906 : vector<2x1xf32> to vector<2x32xf32>
    %1908 = arith.mulf %1907, %1782 : vector<2x32xf32>
    %1909 = vector.extract_strided_slice %1890 {offsets = [0, 6], sizes = [2, 1], strides = [1, 1]} : vector<2x8xf32> to vector<2x1xf32>
    %1910 = vector.broadcast %1909 : vector<2x1xf32> to vector<2x32xf32>
    %1911 = arith.mulf %1910, %1785 : vector<2x32xf32>
    %1912 = vector.extract_strided_slice %1890 {offsets = [0, 7], sizes = [2, 1], strides = [1, 1]} : vector<2x8xf32> to vector<2x1xf32>
    %1913 = vector.broadcast %1912 : vector<2x1xf32> to vector<2x32xf32>
    %1914 = arith.mulf %1913, %1788 : vector<2x32xf32>
    %1915 = arith.addf %1893, %1896 : vector<2x32xf32>
    %1916 = arith.addf %1899, %1902 : vector<2x32xf32>
    %1917 = arith.addf %1905, %1908 : vector<2x32xf32>
    %1918 = arith.addf %1911, %1914 : vector<2x32xf32>
    %1919 = arith.addf %1915, %1916 : vector<2x32xf32>
    %1920 = arith.addf %1917, %1918 : vector<2x32xf32>
    %1921 = arith.addf %1919, %1920 : vector<2x32xf32>
    %1922 = arith.addf %1751, %1921 : vector<2x32xf32>
    %1923 = arith.negf %1922 : vector<2x32xf32>
    %1924 = math.exp %1923 : vector<2x32xf32>
    %cst_137 = arith.constant 1.000000e+00 : f32
    %1925 = vector.broadcast %cst_137 : f32 to vector<2x32xf32>
    %1926 = arith.addf %1925, %1924 : vector<2x32xf32>
    %1927 = arith.divf %1925, %1926 : vector<2x32xf32>
    %1928 = vector.extract_strided_slice %1927 {offsets = [0, 0], sizes = [2, 8], strides = [1, 1]} : vector<2x32xf32> to vector<2x8xf32>
    %1929 = vector.extract_strided_slice %1927 {offsets = [0, 8], sizes = [2, 8], strides = [1, 1]} : vector<2x32xf32> to vector<2x8xf32>
    %1930 = vector.extract_strided_slice %1927 {offsets = [0, 16], sizes = [2, 8], strides = [1, 1]} : vector<2x32xf32> to vector<2x8xf32>
    %cst_138 = arith.constant 2.000000e+00 : f32
    %1931 = vector.broadcast %cst_138 : f32 to vector<2x8xf32>
    %1932 = arith.mulf %1931, %1930 : vector<2x8xf32>
    %cst_139 = arith.constant 1.000000e+00 : f32
    %1933 = vector.broadcast %cst_139 : f32 to vector<2x8xf32>
    %1934 = arith.subf %1932, %1933 : vector<2x8xf32>
    %1935 = vector.extract_strided_slice %1927 {offsets = [0, 24], sizes = [2, 8], strides = [1, 1]} : vector<2x32xf32> to vector<2x8xf32>
    %1936 = arith.mulf %1929, %1888 : vector<2x8xf32>
    %1937 = arith.mulf %1928, %1934 : vector<2x8xf32>
    %1938 = arith.addf %1936, %1937 : vector<2x8xf32>
    %1939 = math.tanh %1938 : vector<2x8xf32>
    %1940 = arith.mulf %1935, %1939 : vector<2x8xf32>
    %1941 = vector.extract_strided_slice %1940 {offsets = [0, 0], sizes = [2, 1], strides = [1, 1]} : vector<2x8xf32> to vector<2x1xf32>
    %1942 = vector.broadcast %1941 : vector<2x1xf32> to vector<2x32xf32>
    %1943 = arith.mulf %1942, %1767 : vector<2x32xf32>
    %1944 = vector.extract_strided_slice %1940 {offsets = [0, 1], sizes = [2, 1], strides = [1, 1]} : vector<2x8xf32> to vector<2x1xf32>
    %1945 = vector.broadcast %1944 : vector<2x1xf32> to vector<2x32xf32>
    %1946 = arith.mulf %1945, %1770 : vector<2x32xf32>
    %1947 = vector.extract_strided_slice %1940 {offsets = [0, 2], sizes = [2, 1], strides = [1, 1]} : vector<2x8xf32> to vector<2x1xf32>
    %1948 = vector.broadcast %1947 : vector<2x1xf32> to vector<2x32xf32>
    %1949 = arith.mulf %1948, %1773 : vector<2x32xf32>
    %1950 = vector.extract_strided_slice %1940 {offsets = [0, 3], sizes = [2, 1], strides = [1, 1]} : vector<2x8xf32> to vector<2x1xf32>
    %1951 = vector.broadcast %1950 : vector<2x1xf32> to vector<2x32xf32>
    %1952 = arith.mulf %1951, %1776 : vector<2x32xf32>
    %1953 = vector.extract_strided_slice %1940 {offsets = [0, 4], sizes = [2, 1], strides = [1, 1]} : vector<2x8xf32> to vector<2x1xf32>
    %1954 = vector.broadcast %1953 : vector<2x1xf32> to vector<2x32xf32>
    %1955 = arith.mulf %1954, %1779 : vector<2x32xf32>
    %1956 = vector.extract_strided_slice %1940 {offsets = [0, 5], sizes = [2, 1], strides = [1, 1]} : vector<2x8xf32> to vector<2x1xf32>
    %1957 = vector.broadcast %1956 : vector<2x1xf32> to vector<2x32xf32>
    %1958 = arith.mulf %1957, %1782 : vector<2x32xf32>
    %1959 = vector.extract_strided_slice %1940 {offsets = [0, 6], sizes = [2, 1], strides = [1, 1]} : vector<2x8xf32> to vector<2x1xf32>
    %1960 = vector.broadcast %1959 : vector<2x1xf32> to vector<2x32xf32>
    %1961 = arith.mulf %1960, %1785 : vector<2x32xf32>
    %1962 = vector.extract_strided_slice %1940 {offsets = [0, 7], sizes = [2, 1], strides = [1, 1]} : vector<2x8xf32> to vector<2x1xf32>
    %1963 = vector.broadcast %1962 : vector<2x1xf32> to vector<2x32xf32>
    %1964 = arith.mulf %1963, %1788 : vector<2x32xf32>
    %1965 = arith.addf %1943, %1946 : vector<2x32xf32>
    %1966 = arith.addf %1949, %1952 : vector<2x32xf32>
    %1967 = arith.addf %1955, %1958 : vector<2x32xf32>
    %1968 = arith.addf %1961, %1964 : vector<2x32xf32>
    %1969 = arith.addf %1965, %1966 : vector<2x32xf32>
    %1970 = arith.addf %1967, %1968 : vector<2x32xf32>
    %1971 = arith.addf %1969, %1970 : vector<2x32xf32>
    %1972 = arith.addf %1752, %1971 : vector<2x32xf32>
    %1973 = arith.negf %1972 : vector<2x32xf32>
    %1974 = math.exp %1973 : vector<2x32xf32>
    %cst_140 = arith.constant 1.000000e+00 : f32
    %1975 = vector.broadcast %cst_140 : f32 to vector<2x32xf32>
    %1976 = arith.addf %1975, %1974 : vector<2x32xf32>
    %1977 = arith.divf %1975, %1976 : vector<2x32xf32>
    %1978 = vector.extract_strided_slice %1977 {offsets = [0, 0], sizes = [2, 8], strides = [1, 1]} : vector<2x32xf32> to vector<2x8xf32>
    %1979 = vector.extract_strided_slice %1977 {offsets = [0, 8], sizes = [2, 8], strides = [1, 1]} : vector<2x32xf32> to vector<2x8xf32>
    %1980 = vector.extract_strided_slice %1977 {offsets = [0, 16], sizes = [2, 8], strides = [1, 1]} : vector<2x32xf32> to vector<2x8xf32>
    %cst_141 = arith.constant 2.000000e+00 : f32
    %1981 = vector.broadcast %cst_141 : f32 to vector<2x8xf32>
    %1982 = arith.mulf %1981, %1980 : vector<2x8xf32>
    %cst_142 = arith.constant 1.000000e+00 : f32
    %1983 = vector.broadcast %cst_142 : f32 to vector<2x8xf32>
    %1984 = arith.subf %1982, %1983 : vector<2x8xf32>
    %1985 = vector.extract_strided_slice %1977 {offsets = [0, 24], sizes = [2, 8], strides = [1, 1]} : vector<2x32xf32> to vector<2x8xf32>
    %1986 = arith.mulf %1979, %1938 : vector<2x8xf32>
    %1987 = arith.mulf %1978, %1984 : vector<2x8xf32>
    %1988 = arith.addf %1986, %1987 : vector<2x8xf32>
    %1989 = math.tanh %1988 : vector<2x8xf32>
    %1990 = arith.mulf %1985, %1989 : vector<2x8xf32>
    %1991 = vector.extract_strided_slice %1990 {offsets = [0, 0], sizes = [2, 1], strides = [1, 1]} : vector<2x8xf32> to vector<2x1xf32>
    %1992 = vector.broadcast %1991 : vector<2x1xf32> to vector<2x32xf32>
    %1993 = arith.mulf %1992, %1767 : vector<2x32xf32>
    %1994 = vector.extract_strided_slice %1990 {offsets = [0, 1], sizes = [2, 1], strides = [1, 1]} : vector<2x8xf32> to vector<2x1xf32>
    %1995 = vector.broadcast %1994 : vector<2x1xf32> to vector<2x32xf32>
    %1996 = arith.mulf %1995, %1770 : vector<2x32xf32>
    %1997 = vector.extract_strided_slice %1990 {offsets = [0, 2], sizes = [2, 1], strides = [1, 1]} : vector<2x8xf32> to vector<2x1xf32>
    %1998 = vector.broadcast %1997 : vector<2x1xf32> to vector<2x32xf32>
    %1999 = arith.mulf %1998, %1773 : vector<2x32xf32>
    %2000 = vector.extract_strided_slice %1990 {offsets = [0, 3], sizes = [2, 1], strides = [1, 1]} : vector<2x8xf32> to vector<2x1xf32>
    %2001 = vector.broadcast %2000 : vector<2x1xf32> to vector<2x32xf32>
    %2002 = arith.mulf %2001, %1776 : vector<2x32xf32>
    %2003 = vector.extract_strided_slice %1990 {offsets = [0, 4], sizes = [2, 1], strides = [1, 1]} : vector<2x8xf32> to vector<2x1xf32>
    %2004 = vector.broadcast %2003 : vector<2x1xf32> to vector<2x32xf32>
    %2005 = arith.mulf %2004, %1779 : vector<2x32xf32>
    %2006 = vector.extract_strided_slice %1990 {offsets = [0, 5], sizes = [2, 1], strides = [1, 1]} : vector<2x8xf32> to vector<2x1xf32>
    %2007 = vector.broadcast %2006 : vector<2x1xf32> to vector<2x32xf32>
    %2008 = arith.mulf %2007, %1782 : vector<2x32xf32>
    %2009 = vector.extract_strided_slice %1990 {offsets = [0, 6], sizes = [2, 1], strides = [1, 1]} : vector<2x8xf32> to vector<2x1xf32>
    %2010 = vector.broadcast %2009 : vector<2x1xf32> to vector<2x32xf32>
    %2011 = arith.mulf %2010, %1785 : vector<2x32xf32>
    %2012 = vector.extract_strided_slice %1990 {offsets = [0, 7], sizes = [2, 1], strides = [1, 1]} : vector<2x8xf32> to vector<2x1xf32>
    %2013 = vector.broadcast %2012 : vector<2x1xf32> to vector<2x32xf32>
    %2014 = arith.mulf %2013, %1788 : vector<2x32xf32>
    %2015 = arith.addf %1993, %1996 : vector<2x32xf32>
    %2016 = arith.addf %1999, %2002 : vector<2x32xf32>
    %2017 = arith.addf %2005, %2008 : vector<2x32xf32>
    %2018 = arith.addf %2011, %2014 : vector<2x32xf32>
    %2019 = arith.addf %2015, %2016 : vector<2x32xf32>
    %2020 = arith.addf %2017, %2018 : vector<2x32xf32>
    %2021 = arith.addf %2019, %2020 : vector<2x32xf32>
    %2022 = arith.addf %1753, %2021 : vector<2x32xf32>
    %2023 = arith.negf %2022 : vector<2x32xf32>
    %2024 = math.exp %2023 : vector<2x32xf32>
    %cst_143 = arith.constant 1.000000e+00 : f32
    %2025 = vector.broadcast %cst_143 : f32 to vector<2x32xf32>
    %2026 = arith.addf %2025, %2024 : vector<2x32xf32>
    %2027 = arith.divf %2025, %2026 : vector<2x32xf32>
    %2028 = vector.extract_strided_slice %2027 {offsets = [0, 0], sizes = [2, 8], strides = [1, 1]} : vector<2x32xf32> to vector<2x8xf32>
    %2029 = vector.extract_strided_slice %2027 {offsets = [0, 8], sizes = [2, 8], strides = [1, 1]} : vector<2x32xf32> to vector<2x8xf32>
    %2030 = vector.extract_strided_slice %2027 {offsets = [0, 16], sizes = [2, 8], strides = [1, 1]} : vector<2x32xf32> to vector<2x8xf32>
    %cst_144 = arith.constant 2.000000e+00 : f32
    %2031 = vector.broadcast %cst_144 : f32 to vector<2x8xf32>
    %2032 = arith.mulf %2031, %2030 : vector<2x8xf32>
    %cst_145 = arith.constant 1.000000e+00 : f32
    %2033 = vector.broadcast %cst_145 : f32 to vector<2x8xf32>
    %2034 = arith.subf %2032, %2033 : vector<2x8xf32>
    %2035 = vector.extract_strided_slice %2027 {offsets = [0, 24], sizes = [2, 8], strides = [1, 1]} : vector<2x32xf32> to vector<2x8xf32>
    %2036 = arith.mulf %2029, %1988 : vector<2x8xf32>
    %2037 = arith.mulf %2028, %2034 : vector<2x8xf32>
    %2038 = arith.addf %2036, %2037 : vector<2x8xf32>
    %2039 = math.tanh %2038 : vector<2x8xf32>
    %2040 = arith.mulf %2035, %2039 : vector<2x8xf32>
    %2041 = vector.extract_strided_slice %2040 {offsets = [0, 0], sizes = [2, 1], strides = [1, 1]} : vector<2x8xf32> to vector<2x1xf32>
    %2042 = vector.broadcast %2041 : vector<2x1xf32> to vector<2x32xf32>
    %2043 = arith.mulf %2042, %1767 : vector<2x32xf32>
    %2044 = vector.extract_strided_slice %2040 {offsets = [0, 1], sizes = [2, 1], strides = [1, 1]} : vector<2x8xf32> to vector<2x1xf32>
    %2045 = vector.broadcast %2044 : vector<2x1xf32> to vector<2x32xf32>
    %2046 = arith.mulf %2045, %1770 : vector<2x32xf32>
    %2047 = vector.extract_strided_slice %2040 {offsets = [0, 2], sizes = [2, 1], strides = [1, 1]} : vector<2x8xf32> to vector<2x1xf32>
    %2048 = vector.broadcast %2047 : vector<2x1xf32> to vector<2x32xf32>
    %2049 = arith.mulf %2048, %1773 : vector<2x32xf32>
    %2050 = vector.extract_strided_slice %2040 {offsets = [0, 3], sizes = [2, 1], strides = [1, 1]} : vector<2x8xf32> to vector<2x1xf32>
    %2051 = vector.broadcast %2050 : vector<2x1xf32> to vector<2x32xf32>
    %2052 = arith.mulf %2051, %1776 : vector<2x32xf32>
    %2053 = vector.extract_strided_slice %2040 {offsets = [0, 4], sizes = [2, 1], strides = [1, 1]} : vector<2x8xf32> to vector<2x1xf32>
    %2054 = vector.broadcast %2053 : vector<2x1xf32> to vector<2x32xf32>
    %2055 = arith.mulf %2054, %1779 : vector<2x32xf32>
    %2056 = vector.extract_strided_slice %2040 {offsets = [0, 5], sizes = [2, 1], strides = [1, 1]} : vector<2x8xf32> to vector<2x1xf32>
    %2057 = vector.broadcast %2056 : vector<2x1xf32> to vector<2x32xf32>
    %2058 = arith.mulf %2057, %1782 : vector<2x32xf32>
    %2059 = vector.extract_strided_slice %2040 {offsets = [0, 6], sizes = [2, 1], strides = [1, 1]} : vector<2x8xf32> to vector<2x1xf32>
    %2060 = vector.broadcast %2059 : vector<2x1xf32> to vector<2x32xf32>
    %2061 = arith.mulf %2060, %1785 : vector<2x32xf32>
    %2062 = vector.extract_strided_slice %2040 {offsets = [0, 7], sizes = [2, 1], strides = [1, 1]} : vector<2x8xf32> to vector<2x1xf32>
    %2063 = vector.broadcast %2062 : vector<2x1xf32> to vector<2x32xf32>
    %2064 = arith.mulf %2063, %1788 : vector<2x32xf32>
    %2065 = arith.addf %2043, %2046 : vector<2x32xf32>
    %2066 = arith.addf %2049, %2052 : vector<2x32xf32>
    %2067 = arith.addf %2055, %2058 : vector<2x32xf32>
    %2068 = arith.addf %2061, %2064 : vector<2x32xf32>
    %2069 = arith.addf %2065, %2066 : vector<2x32xf32>
    %2070 = arith.addf %2067, %2068 : vector<2x32xf32>
    %2071 = arith.addf %2069, %2070 : vector<2x32xf32>
    %2072 = arith.addf %1754, %2071 : vector<2x32xf32>
    %2073 = arith.negf %2072 : vector<2x32xf32>
    %2074 = math.exp %2073 : vector<2x32xf32>
    %cst_146 = arith.constant 1.000000e+00 : f32
    %2075 = vector.broadcast %cst_146 : f32 to vector<2x32xf32>
    %2076 = arith.addf %2075, %2074 : vector<2x32xf32>
    %2077 = arith.divf %2075, %2076 : vector<2x32xf32>
    %2078 = vector.extract_strided_slice %2077 {offsets = [0, 0], sizes = [2, 8], strides = [1, 1]} : vector<2x32xf32> to vector<2x8xf32>
    %2079 = vector.extract_strided_slice %2077 {offsets = [0, 8], sizes = [2, 8], strides = [1, 1]} : vector<2x32xf32> to vector<2x8xf32>
    %2080 = vector.extract_strided_slice %2077 {offsets = [0, 16], sizes = [2, 8], strides = [1, 1]} : vector<2x32xf32> to vector<2x8xf32>
    %cst_147 = arith.constant 2.000000e+00 : f32
    %2081 = vector.broadcast %cst_147 : f32 to vector<2x8xf32>
    %2082 = arith.mulf %2081, %2080 : vector<2x8xf32>
    %cst_148 = arith.constant 1.000000e+00 : f32
    %2083 = vector.broadcast %cst_148 : f32 to vector<2x8xf32>
    %2084 = arith.subf %2082, %2083 : vector<2x8xf32>
    %2085 = vector.extract_strided_slice %2077 {offsets = [0, 24], sizes = [2, 8], strides = [1, 1]} : vector<2x32xf32> to vector<2x8xf32>
    %2086 = arith.mulf %2079, %2038 : vector<2x8xf32>
    %2087 = arith.mulf %2078, %2084 : vector<2x8xf32>
    %2088 = arith.addf %2086, %2087 : vector<2x8xf32>
    %2089 = math.tanh %2088 : vector<2x8xf32>
    %2090 = arith.mulf %2085, %2089 : vector<2x8xf32>
    %2091 = vector.extract_strided_slice %2090 {offsets = [0, 0], sizes = [2, 1], strides = [1, 1]} : vector<2x8xf32> to vector<2x1xf32>
    %2092 = vector.broadcast %2091 : vector<2x1xf32> to vector<2x32xf32>
    %2093 = arith.mulf %2092, %1767 : vector<2x32xf32>
    %2094 = vector.extract_strided_slice %2090 {offsets = [0, 1], sizes = [2, 1], strides = [1, 1]} : vector<2x8xf32> to vector<2x1xf32>
    %2095 = vector.broadcast %2094 : vector<2x1xf32> to vector<2x32xf32>
    %2096 = arith.mulf %2095, %1770 : vector<2x32xf32>
    %2097 = vector.extract_strided_slice %2090 {offsets = [0, 2], sizes = [2, 1], strides = [1, 1]} : vector<2x8xf32> to vector<2x1xf32>
    %2098 = vector.broadcast %2097 : vector<2x1xf32> to vector<2x32xf32>
    %2099 = arith.mulf %2098, %1773 : vector<2x32xf32>
    %2100 = vector.extract_strided_slice %2090 {offsets = [0, 3], sizes = [2, 1], strides = [1, 1]} : vector<2x8xf32> to vector<2x1xf32>
    %2101 = vector.broadcast %2100 : vector<2x1xf32> to vector<2x32xf32>
    %2102 = arith.mulf %2101, %1776 : vector<2x32xf32>
    %2103 = vector.extract_strided_slice %2090 {offsets = [0, 4], sizes = [2, 1], strides = [1, 1]} : vector<2x8xf32> to vector<2x1xf32>
    %2104 = vector.broadcast %2103 : vector<2x1xf32> to vector<2x32xf32>
    %2105 = arith.mulf %2104, %1779 : vector<2x32xf32>
    %2106 = vector.extract_strided_slice %2090 {offsets = [0, 5], sizes = [2, 1], strides = [1, 1]} : vector<2x8xf32> to vector<2x1xf32>
    %2107 = vector.broadcast %2106 : vector<2x1xf32> to vector<2x32xf32>
    %2108 = arith.mulf %2107, %1782 : vector<2x32xf32>
    %2109 = vector.extract_strided_slice %2090 {offsets = [0, 6], sizes = [2, 1], strides = [1, 1]} : vector<2x8xf32> to vector<2x1xf32>
    %2110 = vector.broadcast %2109 : vector<2x1xf32> to vector<2x32xf32>
    %2111 = arith.mulf %2110, %1785 : vector<2x32xf32>
    %2112 = vector.extract_strided_slice %2090 {offsets = [0, 7], sizes = [2, 1], strides = [1, 1]} : vector<2x8xf32> to vector<2x1xf32>
    %2113 = vector.broadcast %2112 : vector<2x1xf32> to vector<2x32xf32>
    %2114 = arith.mulf %2113, %1788 : vector<2x32xf32>
    %2115 = arith.addf %2093, %2096 : vector<2x32xf32>
    %2116 = arith.addf %2099, %2102 : vector<2x32xf32>
    %2117 = arith.addf %2105, %2108 : vector<2x32xf32>
    %2118 = arith.addf %2111, %2114 : vector<2x32xf32>
    %2119 = arith.addf %2115, %2116 : vector<2x32xf32>
    %2120 = arith.addf %2117, %2118 : vector<2x32xf32>
    %2121 = arith.addf %2119, %2120 : vector<2x32xf32>
    %2122 = arith.addf %1755, %2121 : vector<2x32xf32>
    %2123 = arith.negf %2122 : vector<2x32xf32>
    %2124 = math.exp %2123 : vector<2x32xf32>
    %cst_149 = arith.constant 1.000000e+00 : f32
    %2125 = vector.broadcast %cst_149 : f32 to vector<2x32xf32>
    %2126 = arith.addf %2125, %2124 : vector<2x32xf32>
    %2127 = arith.divf %2125, %2126 : vector<2x32xf32>
    %2128 = vector.extract_strided_slice %2127 {offsets = [0, 0], sizes = [2, 8], strides = [1, 1]} : vector<2x32xf32> to vector<2x8xf32>
    %2129 = vector.extract_strided_slice %2127 {offsets = [0, 8], sizes = [2, 8], strides = [1, 1]} : vector<2x32xf32> to vector<2x8xf32>
    %2130 = vector.extract_strided_slice %2127 {offsets = [0, 16], sizes = [2, 8], strides = [1, 1]} : vector<2x32xf32> to vector<2x8xf32>
    %cst_150 = arith.constant 2.000000e+00 : f32
    %2131 = vector.broadcast %cst_150 : f32 to vector<2x8xf32>
    %2132 = arith.mulf %2131, %2130 : vector<2x8xf32>
    %cst_151 = arith.constant 1.000000e+00 : f32
    %2133 = vector.broadcast %cst_151 : f32 to vector<2x8xf32>
    %2134 = arith.subf %2132, %2133 : vector<2x8xf32>
    %2135 = vector.extract_strided_slice %2127 {offsets = [0, 24], sizes = [2, 8], strides = [1, 1]} : vector<2x32xf32> to vector<2x8xf32>
    %2136 = arith.mulf %2129, %2088 : vector<2x8xf32>
    %2137 = arith.mulf %2128, %2134 : vector<2x8xf32>
    %2138 = arith.addf %2136, %2137 : vector<2x8xf32>
    %2139 = math.tanh %2138 : vector<2x8xf32>
    %2140 = arith.mulf %2135, %2139 : vector<2x8xf32>
    %2141 = vector.extract_strided_slice %2140 {offsets = [0, 0], sizes = [2, 1], strides = [1, 1]} : vector<2x8xf32> to vector<2x1xf32>
    %2142 = vector.broadcast %2141 : vector<2x1xf32> to vector<2x32xf32>
    %2143 = arith.mulf %2142, %1767 : vector<2x32xf32>
    %2144 = vector.extract_strided_slice %2140 {offsets = [0, 1], sizes = [2, 1], strides = [1, 1]} : vector<2x8xf32> to vector<2x1xf32>
    %2145 = vector.broadcast %2144 : vector<2x1xf32> to vector<2x32xf32>
    %2146 = arith.mulf %2145, %1770 : vector<2x32xf32>
    %2147 = vector.extract_strided_slice %2140 {offsets = [0, 2], sizes = [2, 1], strides = [1, 1]} : vector<2x8xf32> to vector<2x1xf32>
    %2148 = vector.broadcast %2147 : vector<2x1xf32> to vector<2x32xf32>
    %2149 = arith.mulf %2148, %1773 : vector<2x32xf32>
    %2150 = vector.extract_strided_slice %2140 {offsets = [0, 3], sizes = [2, 1], strides = [1, 1]} : vector<2x8xf32> to vector<2x1xf32>
    %2151 = vector.broadcast %2150 : vector<2x1xf32> to vector<2x32xf32>
    %2152 = arith.mulf %2151, %1776 : vector<2x32xf32>
    %2153 = vector.extract_strided_slice %2140 {offsets = [0, 4], sizes = [2, 1], strides = [1, 1]} : vector<2x8xf32> to vector<2x1xf32>
    %2154 = vector.broadcast %2153 : vector<2x1xf32> to vector<2x32xf32>
    %2155 = arith.mulf %2154, %1779 : vector<2x32xf32>
    %2156 = vector.extract_strided_slice %2140 {offsets = [0, 5], sizes = [2, 1], strides = [1, 1]} : vector<2x8xf32> to vector<2x1xf32>
    %2157 = vector.broadcast %2156 : vector<2x1xf32> to vector<2x32xf32>
    %2158 = arith.mulf %2157, %1782 : vector<2x32xf32>
    %2159 = vector.extract_strided_slice %2140 {offsets = [0, 6], sizes = [2, 1], strides = [1, 1]} : vector<2x8xf32> to vector<2x1xf32>
    %2160 = vector.broadcast %2159 : vector<2x1xf32> to vector<2x32xf32>
    %2161 = arith.mulf %2160, %1785 : vector<2x32xf32>
    %2162 = vector.extract_strided_slice %2140 {offsets = [0, 7], sizes = [2, 1], strides = [1, 1]} : vector<2x8xf32> to vector<2x1xf32>
    %2163 = vector.broadcast %2162 : vector<2x1xf32> to vector<2x32xf32>
    %2164 = arith.mulf %2163, %1788 : vector<2x32xf32>
    %2165 = arith.addf %2143, %2146 : vector<2x32xf32>
    %2166 = arith.addf %2149, %2152 : vector<2x32xf32>
    %2167 = arith.addf %2155, %2158 : vector<2x32xf32>
    %2168 = arith.addf %2161, %2164 : vector<2x32xf32>
    %2169 = arith.addf %2165, %2166 : vector<2x32xf32>
    %2170 = arith.addf %2167, %2168 : vector<2x32xf32>
    %2171 = arith.addf %2169, %2170 : vector<2x32xf32>
    %2172 = arith.addf %1756, %2171 : vector<2x32xf32>
    %2173 = arith.negf %2172 : vector<2x32xf32>
    %2174 = math.exp %2173 : vector<2x32xf32>
    %cst_152 = arith.constant 1.000000e+00 : f32
    %2175 = vector.broadcast %cst_152 : f32 to vector<2x32xf32>
    %2176 = arith.addf %2175, %2174 : vector<2x32xf32>
    %2177 = arith.divf %2175, %2176 : vector<2x32xf32>
    %2178 = vector.extract_strided_slice %2177 {offsets = [0, 0], sizes = [2, 8], strides = [1, 1]} : vector<2x32xf32> to vector<2x8xf32>
    %2179 = vector.extract_strided_slice %2177 {offsets = [0, 8], sizes = [2, 8], strides = [1, 1]} : vector<2x32xf32> to vector<2x8xf32>
    %2180 = vector.extract_strided_slice %2177 {offsets = [0, 16], sizes = [2, 8], strides = [1, 1]} : vector<2x32xf32> to vector<2x8xf32>
    %cst_153 = arith.constant 2.000000e+00 : f32
    %2181 = vector.broadcast %cst_153 : f32 to vector<2x8xf32>
    %2182 = arith.mulf %2181, %2180 : vector<2x8xf32>
    %cst_154 = arith.constant 1.000000e+00 : f32
    %2183 = vector.broadcast %cst_154 : f32 to vector<2x8xf32>
    %2184 = arith.subf %2182, %2183 : vector<2x8xf32>
    %2185 = vector.extract_strided_slice %2177 {offsets = [0, 24], sizes = [2, 8], strides = [1, 1]} : vector<2x32xf32> to vector<2x8xf32>
    %2186 = arith.mulf %2179, %2138 : vector<2x8xf32>
    %2187 = arith.mulf %2178, %2184 : vector<2x8xf32>
    %2188 = arith.addf %2186, %2187 : vector<2x8xf32>
    %2189 = math.tanh %2188 : vector<2x8xf32>
    %2190 = arith.mulf %2185, %2189 : vector<2x8xf32>
    %2191 = vector.extract_strided_slice %2190 {offsets = [0, 0], sizes = [2, 1], strides = [1, 1]} : vector<2x8xf32> to vector<2x1xf32>
    %2192 = vector.broadcast %2191 : vector<2x1xf32> to vector<2x32xf32>
    %2193 = arith.mulf %2192, %1767 : vector<2x32xf32>
    %2194 = vector.extract_strided_slice %2190 {offsets = [0, 1], sizes = [2, 1], strides = [1, 1]} : vector<2x8xf32> to vector<2x1xf32>
    %2195 = vector.broadcast %2194 : vector<2x1xf32> to vector<2x32xf32>
    %2196 = arith.mulf %2195, %1770 : vector<2x32xf32>
    %2197 = vector.extract_strided_slice %2190 {offsets = [0, 2], sizes = [2, 1], strides = [1, 1]} : vector<2x8xf32> to vector<2x1xf32>
    %2198 = vector.broadcast %2197 : vector<2x1xf32> to vector<2x32xf32>
    %2199 = arith.mulf %2198, %1773 : vector<2x32xf32>
    %2200 = vector.extract_strided_slice %2190 {offsets = [0, 3], sizes = [2, 1], strides = [1, 1]} : vector<2x8xf32> to vector<2x1xf32>
    %2201 = vector.broadcast %2200 : vector<2x1xf32> to vector<2x32xf32>
    %2202 = arith.mulf %2201, %1776 : vector<2x32xf32>
    %2203 = vector.extract_strided_slice %2190 {offsets = [0, 4], sizes = [2, 1], strides = [1, 1]} : vector<2x8xf32> to vector<2x1xf32>
    %2204 = vector.broadcast %2203 : vector<2x1xf32> to vector<2x32xf32>
    %2205 = arith.mulf %2204, %1779 : vector<2x32xf32>
    %2206 = vector.extract_strided_slice %2190 {offsets = [0, 5], sizes = [2, 1], strides = [1, 1]} : vector<2x8xf32> to vector<2x1xf32>
    %2207 = vector.broadcast %2206 : vector<2x1xf32> to vector<2x32xf32>
    %2208 = arith.mulf %2207, %1782 : vector<2x32xf32>
    %2209 = vector.extract_strided_slice %2190 {offsets = [0, 6], sizes = [2, 1], strides = [1, 1]} : vector<2x8xf32> to vector<2x1xf32>
    %2210 = vector.broadcast %2209 : vector<2x1xf32> to vector<2x32xf32>
    %2211 = arith.mulf %2210, %1785 : vector<2x32xf32>
    %2212 = vector.extract_strided_slice %2190 {offsets = [0, 7], sizes = [2, 1], strides = [1, 1]} : vector<2x8xf32> to vector<2x1xf32>
    %2213 = vector.broadcast %2212 : vector<2x1xf32> to vector<2x32xf32>
    %2214 = arith.mulf %2213, %1788 : vector<2x32xf32>
    %2215 = arith.addf %2193, %2196 : vector<2x32xf32>
    %2216 = arith.addf %2199, %2202 : vector<2x32xf32>
    %2217 = arith.addf %2205, %2208 : vector<2x32xf32>
    %2218 = arith.addf %2211, %2214 : vector<2x32xf32>
    %2219 = arith.addf %2215, %2216 : vector<2x32xf32>
    %2220 = arith.addf %2217, %2218 : vector<2x32xf32>
    %2221 = arith.addf %2219, %2220 : vector<2x32xf32>
    %2222 = arith.addf %1757, %2221 : vector<2x32xf32>
    %2223 = arith.negf %2222 : vector<2x32xf32>
    %2224 = math.exp %2223 : vector<2x32xf32>
    %cst_155 = arith.constant 1.000000e+00 : f32
    %2225 = vector.broadcast %cst_155 : f32 to vector<2x32xf32>
    %2226 = arith.addf %2225, %2224 : vector<2x32xf32>
    %2227 = arith.divf %2225, %2226 : vector<2x32xf32>
    %2228 = vector.extract_strided_slice %2227 {offsets = [0, 0], sizes = [2, 8], strides = [1, 1]} : vector<2x32xf32> to vector<2x8xf32>
    %2229 = vector.extract_strided_slice %2227 {offsets = [0, 8], sizes = [2, 8], strides = [1, 1]} : vector<2x32xf32> to vector<2x8xf32>
    %2230 = vector.extract_strided_slice %2227 {offsets = [0, 16], sizes = [2, 8], strides = [1, 1]} : vector<2x32xf32> to vector<2x8xf32>
    %cst_156 = arith.constant 2.000000e+00 : f32
    %2231 = vector.broadcast %cst_156 : f32 to vector<2x8xf32>
    %2232 = arith.mulf %2231, %2230 : vector<2x8xf32>
    %cst_157 = arith.constant 1.000000e+00 : f32
    %2233 = vector.broadcast %cst_157 : f32 to vector<2x8xf32>
    %2234 = arith.subf %2232, %2233 : vector<2x8xf32>
    %2235 = vector.extract_strided_slice %2227 {offsets = [0, 24], sizes = [2, 8], strides = [1, 1]} : vector<2x32xf32> to vector<2x8xf32>
    %2236 = arith.mulf %2229, %2188 : vector<2x8xf32>
    %2237 = arith.mulf %2228, %2234 : vector<2x8xf32>
    %2238 = arith.addf %2236, %2237 : vector<2x8xf32>
    %2239 = math.tanh %2238 : vector<2x8xf32>
    %2240 = arith.mulf %2235, %2239 : vector<2x8xf32>
    %2241 = vector.extract_strided_slice %2240 {offsets = [0, 0], sizes = [2, 1], strides = [1, 1]} : vector<2x8xf32> to vector<2x1xf32>
    %2242 = vector.broadcast %2241 : vector<2x1xf32> to vector<2x32xf32>
    %2243 = arith.mulf %2242, %1767 : vector<2x32xf32>
    %2244 = vector.extract_strided_slice %2240 {offsets = [0, 1], sizes = [2, 1], strides = [1, 1]} : vector<2x8xf32> to vector<2x1xf32>
    %2245 = vector.broadcast %2244 : vector<2x1xf32> to vector<2x32xf32>
    %2246 = arith.mulf %2245, %1770 : vector<2x32xf32>
    %2247 = vector.extract_strided_slice %2240 {offsets = [0, 2], sizes = [2, 1], strides = [1, 1]} : vector<2x8xf32> to vector<2x1xf32>
    %2248 = vector.broadcast %2247 : vector<2x1xf32> to vector<2x32xf32>
    %2249 = arith.mulf %2248, %1773 : vector<2x32xf32>
    %2250 = vector.extract_strided_slice %2240 {offsets = [0, 3], sizes = [2, 1], strides = [1, 1]} : vector<2x8xf32> to vector<2x1xf32>
    %2251 = vector.broadcast %2250 : vector<2x1xf32> to vector<2x32xf32>
    %2252 = arith.mulf %2251, %1776 : vector<2x32xf32>
    %2253 = vector.extract_strided_slice %2240 {offsets = [0, 4], sizes = [2, 1], strides = [1, 1]} : vector<2x8xf32> to vector<2x1xf32>
    %2254 = vector.broadcast %2253 : vector<2x1xf32> to vector<2x32xf32>
    %2255 = arith.mulf %2254, %1779 : vector<2x32xf32>
    %2256 = vector.extract_strided_slice %2240 {offsets = [0, 5], sizes = [2, 1], strides = [1, 1]} : vector<2x8xf32> to vector<2x1xf32>
    %2257 = vector.broadcast %2256 : vector<2x1xf32> to vector<2x32xf32>
    %2258 = arith.mulf %2257, %1782 : vector<2x32xf32>
    %2259 = vector.extract_strided_slice %2240 {offsets = [0, 6], sizes = [2, 1], strides = [1, 1]} : vector<2x8xf32> to vector<2x1xf32>
    %2260 = vector.broadcast %2259 : vector<2x1xf32> to vector<2x32xf32>
    %2261 = arith.mulf %2260, %1785 : vector<2x32xf32>
    %2262 = vector.extract_strided_slice %2240 {offsets = [0, 7], sizes = [2, 1], strides = [1, 1]} : vector<2x8xf32> to vector<2x1xf32>
    %2263 = vector.broadcast %2262 : vector<2x1xf32> to vector<2x32xf32>
    %2264 = arith.mulf %2263, %1788 : vector<2x32xf32>
    %2265 = arith.addf %2243, %2246 : vector<2x32xf32>
    %2266 = arith.addf %2249, %2252 : vector<2x32xf32>
    %2267 = arith.addf %2255, %2258 : vector<2x32xf32>
    %2268 = arith.addf %2261, %2264 : vector<2x32xf32>
    %2269 = arith.addf %2265, %2266 : vector<2x32xf32>
    %2270 = arith.addf %2267, %2268 : vector<2x32xf32>
    %2271 = arith.addf %2269, %2270 : vector<2x32xf32>
    %2272 = arith.addf %1758, %2271 : vector<2x32xf32>
    %2273 = arith.negf %2272 : vector<2x32xf32>
    %2274 = math.exp %2273 : vector<2x32xf32>
    %cst_158 = arith.constant 1.000000e+00 : f32
    %2275 = vector.broadcast %cst_158 : f32 to vector<2x32xf32>
    %2276 = arith.addf %2275, %2274 : vector<2x32xf32>
    %2277 = arith.divf %2275, %2276 : vector<2x32xf32>
    %2278 = vector.extract_strided_slice %2277 {offsets = [0, 0], sizes = [2, 8], strides = [1, 1]} : vector<2x32xf32> to vector<2x8xf32>
    %2279 = vector.extract_strided_slice %2277 {offsets = [0, 8], sizes = [2, 8], strides = [1, 1]} : vector<2x32xf32> to vector<2x8xf32>
    %2280 = vector.extract_strided_slice %2277 {offsets = [0, 16], sizes = [2, 8], strides = [1, 1]} : vector<2x32xf32> to vector<2x8xf32>
    %cst_159 = arith.constant 2.000000e+00 : f32
    %2281 = vector.broadcast %cst_159 : f32 to vector<2x8xf32>
    %2282 = arith.mulf %2281, %2280 : vector<2x8xf32>
    %cst_160 = arith.constant 1.000000e+00 : f32
    %2283 = vector.broadcast %cst_160 : f32 to vector<2x8xf32>
    %2284 = arith.subf %2282, %2283 : vector<2x8xf32>
    %2285 = vector.extract_strided_slice %2277 {offsets = [0, 24], sizes = [2, 8], strides = [1, 1]} : vector<2x32xf32> to vector<2x8xf32>
    %2286 = arith.mulf %2279, %2238 : vector<2x8xf32>
    %2287 = arith.mulf %2278, %2284 : vector<2x8xf32>
    %2288 = arith.addf %2286, %2287 : vector<2x8xf32>
    %2289 = math.tanh %2288 : vector<2x8xf32>
    %2290 = arith.mulf %2285, %2289 : vector<2x8xf32>
    %2291 = vector.extract_strided_slice %2290 {offsets = [0, 0], sizes = [2, 1], strides = [1, 1]} : vector<2x8xf32> to vector<2x1xf32>
    %2292 = vector.broadcast %2291 : vector<2x1xf32> to vector<2x32xf32>
    %2293 = arith.mulf %2292, %1767 : vector<2x32xf32>
    %2294 = vector.extract_strided_slice %2290 {offsets = [0, 1], sizes = [2, 1], strides = [1, 1]} : vector<2x8xf32> to vector<2x1xf32>
    %2295 = vector.broadcast %2294 : vector<2x1xf32> to vector<2x32xf32>
    %2296 = arith.mulf %2295, %1770 : vector<2x32xf32>
    %2297 = vector.extract_strided_slice %2290 {offsets = [0, 2], sizes = [2, 1], strides = [1, 1]} : vector<2x8xf32> to vector<2x1xf32>
    %2298 = vector.broadcast %2297 : vector<2x1xf32> to vector<2x32xf32>
    %2299 = arith.mulf %2298, %1773 : vector<2x32xf32>
    %2300 = vector.extract_strided_slice %2290 {offsets = [0, 3], sizes = [2, 1], strides = [1, 1]} : vector<2x8xf32> to vector<2x1xf32>
    %2301 = vector.broadcast %2300 : vector<2x1xf32> to vector<2x32xf32>
    %2302 = arith.mulf %2301, %1776 : vector<2x32xf32>
    %2303 = vector.extract_strided_slice %2290 {offsets = [0, 4], sizes = [2, 1], strides = [1, 1]} : vector<2x8xf32> to vector<2x1xf32>
    %2304 = vector.broadcast %2303 : vector<2x1xf32> to vector<2x32xf32>
    %2305 = arith.mulf %2304, %1779 : vector<2x32xf32>
    %2306 = vector.extract_strided_slice %2290 {offsets = [0, 5], sizes = [2, 1], strides = [1, 1]} : vector<2x8xf32> to vector<2x1xf32>
    %2307 = vector.broadcast %2306 : vector<2x1xf32> to vector<2x32xf32>
    %2308 = arith.mulf %2307, %1782 : vector<2x32xf32>
    %2309 = vector.extract_strided_slice %2290 {offsets = [0, 6], sizes = [2, 1], strides = [1, 1]} : vector<2x8xf32> to vector<2x1xf32>
    %2310 = vector.broadcast %2309 : vector<2x1xf32> to vector<2x32xf32>
    %2311 = arith.mulf %2310, %1785 : vector<2x32xf32>
    %2312 = vector.extract_strided_slice %2290 {offsets = [0, 7], sizes = [2, 1], strides = [1, 1]} : vector<2x8xf32> to vector<2x1xf32>
    %2313 = vector.broadcast %2312 : vector<2x1xf32> to vector<2x32xf32>
    %2314 = arith.mulf %2313, %1788 : vector<2x32xf32>
    %2315 = arith.addf %2293, %2296 : vector<2x32xf32>
    %2316 = arith.addf %2299, %2302 : vector<2x32xf32>
    %2317 = arith.addf %2305, %2308 : vector<2x32xf32>
    %2318 = arith.addf %2311, %2314 : vector<2x32xf32>
    %2319 = arith.addf %2315, %2316 : vector<2x32xf32>
    %2320 = arith.addf %2317, %2318 : vector<2x32xf32>
    %2321 = arith.addf %2319, %2320 : vector<2x32xf32>
    %2322 = arith.addf %1759, %2321 : vector<2x32xf32>
    %2323 = arith.negf %2322 : vector<2x32xf32>
    %2324 = math.exp %2323 : vector<2x32xf32>
    %cst_161 = arith.constant 1.000000e+00 : f32
    %2325 = vector.broadcast %cst_161 : f32 to vector<2x32xf32>
    %2326 = arith.addf %2325, %2324 : vector<2x32xf32>
    %2327 = arith.divf %2325, %2326 : vector<2x32xf32>
    %2328 = vector.extract_strided_slice %2327 {offsets = [0, 0], sizes = [2, 8], strides = [1, 1]} : vector<2x32xf32> to vector<2x8xf32>
    %2329 = vector.extract_strided_slice %2327 {offsets = [0, 8], sizes = [2, 8], strides = [1, 1]} : vector<2x32xf32> to vector<2x8xf32>
    %2330 = vector.extract_strided_slice %2327 {offsets = [0, 16], sizes = [2, 8], strides = [1, 1]} : vector<2x32xf32> to vector<2x8xf32>
    %cst_162 = arith.constant 2.000000e+00 : f32
    %2331 = vector.broadcast %cst_162 : f32 to vector<2x8xf32>
    %2332 = arith.mulf %2331, %2330 : vector<2x8xf32>
    %cst_163 = arith.constant 1.000000e+00 : f32
    %2333 = vector.broadcast %cst_163 : f32 to vector<2x8xf32>
    %2334 = arith.subf %2332, %2333 : vector<2x8xf32>
    %2335 = vector.extract_strided_slice %2327 {offsets = [0, 24], sizes = [2, 8], strides = [1, 1]} : vector<2x32xf32> to vector<2x8xf32>
    %2336 = arith.mulf %2329, %2288 : vector<2x8xf32>
    %2337 = arith.mulf %2328, %2334 : vector<2x8xf32>
    %2338 = arith.addf %2336, %2337 : vector<2x8xf32>
    %2339 = math.tanh %2338 : vector<2x8xf32>
    %2340 = arith.mulf %2335, %2339 : vector<2x8xf32>
    %2341 = vector.extract_strided_slice %2340 {offsets = [0, 0], sizes = [2, 1], strides = [1, 1]} : vector<2x8xf32> to vector<2x1xf32>
    %2342 = vector.broadcast %2341 : vector<2x1xf32> to vector<2x32xf32>
    %2343 = arith.mulf %2342, %1767 : vector<2x32xf32>
    %2344 = vector.extract_strided_slice %2340 {offsets = [0, 1], sizes = [2, 1], strides = [1, 1]} : vector<2x8xf32> to vector<2x1xf32>
    %2345 = vector.broadcast %2344 : vector<2x1xf32> to vector<2x32xf32>
    %2346 = arith.mulf %2345, %1770 : vector<2x32xf32>
    %2347 = vector.extract_strided_slice %2340 {offsets = [0, 2], sizes = [2, 1], strides = [1, 1]} : vector<2x8xf32> to vector<2x1xf32>
    %2348 = vector.broadcast %2347 : vector<2x1xf32> to vector<2x32xf32>
    %2349 = arith.mulf %2348, %1773 : vector<2x32xf32>
    %2350 = vector.extract_strided_slice %2340 {offsets = [0, 3], sizes = [2, 1], strides = [1, 1]} : vector<2x8xf32> to vector<2x1xf32>
    %2351 = vector.broadcast %2350 : vector<2x1xf32> to vector<2x32xf32>
    %2352 = arith.mulf %2351, %1776 : vector<2x32xf32>
    %2353 = vector.extract_strided_slice %2340 {offsets = [0, 4], sizes = [2, 1], strides = [1, 1]} : vector<2x8xf32> to vector<2x1xf32>
    %2354 = vector.broadcast %2353 : vector<2x1xf32> to vector<2x32xf32>
    %2355 = arith.mulf %2354, %1779 : vector<2x32xf32>
    %2356 = vector.extract_strided_slice %2340 {offsets = [0, 5], sizes = [2, 1], strides = [1, 1]} : vector<2x8xf32> to vector<2x1xf32>
    %2357 = vector.broadcast %2356 : vector<2x1xf32> to vector<2x32xf32>
    %2358 = arith.mulf %2357, %1782 : vector<2x32xf32>
    %2359 = vector.extract_strided_slice %2340 {offsets = [0, 6], sizes = [2, 1], strides = [1, 1]} : vector<2x8xf32> to vector<2x1xf32>
    %2360 = vector.broadcast %2359 : vector<2x1xf32> to vector<2x32xf32>
    %2361 = arith.mulf %2360, %1785 : vector<2x32xf32>
    %2362 = vector.extract_strided_slice %2340 {offsets = [0, 7], sizes = [2, 1], strides = [1, 1]} : vector<2x8xf32> to vector<2x1xf32>
    %2363 = vector.broadcast %2362 : vector<2x1xf32> to vector<2x32xf32>
    %2364 = arith.mulf %2363, %1788 : vector<2x32xf32>
    %2365 = arith.addf %2343, %2346 : vector<2x32xf32>
    %2366 = arith.addf %2349, %2352 : vector<2x32xf32>
    %2367 = arith.addf %2355, %2358 : vector<2x32xf32>
    %2368 = arith.addf %2361, %2364 : vector<2x32xf32>
    %2369 = arith.addf %2365, %2366 : vector<2x32xf32>
    %2370 = arith.addf %2367, %2368 : vector<2x32xf32>
    %2371 = arith.addf %2369, %2370 : vector<2x32xf32>
    %2372 = arith.addf %1760, %2371 : vector<2x32xf32>
    %2373 = arith.negf %2372 : vector<2x32xf32>
    %2374 = math.exp %2373 : vector<2x32xf32>
    %cst_164 = arith.constant 1.000000e+00 : f32
    %2375 = vector.broadcast %cst_164 : f32 to vector<2x32xf32>
    %2376 = arith.addf %2375, %2374 : vector<2x32xf32>
    %2377 = arith.divf %2375, %2376 : vector<2x32xf32>
    %2378 = vector.extract_strided_slice %2377 {offsets = [0, 0], sizes = [2, 8], strides = [1, 1]} : vector<2x32xf32> to vector<2x8xf32>
    %2379 = vector.extract_strided_slice %2377 {offsets = [0, 8], sizes = [2, 8], strides = [1, 1]} : vector<2x32xf32> to vector<2x8xf32>
    %2380 = vector.extract_strided_slice %2377 {offsets = [0, 16], sizes = [2, 8], strides = [1, 1]} : vector<2x32xf32> to vector<2x8xf32>
    %cst_165 = arith.constant 2.000000e+00 : f32
    %2381 = vector.broadcast %cst_165 : f32 to vector<2x8xf32>
    %2382 = arith.mulf %2381, %2380 : vector<2x8xf32>
    %cst_166 = arith.constant 1.000000e+00 : f32
    %2383 = vector.broadcast %cst_166 : f32 to vector<2x8xf32>
    %2384 = arith.subf %2382, %2383 : vector<2x8xf32>
    %2385 = vector.extract_strided_slice %2377 {offsets = [0, 24], sizes = [2, 8], strides = [1, 1]} : vector<2x32xf32> to vector<2x8xf32>
    %2386 = arith.mulf %2379, %2338 : vector<2x8xf32>
    %2387 = arith.mulf %2378, %2384 : vector<2x8xf32>
    %2388 = arith.addf %2386, %2387 : vector<2x8xf32>
    %2389 = math.tanh %2388 : vector<2x8xf32>
    %2390 = arith.mulf %2385, %2389 : vector<2x8xf32>
    %2391 = vector.extract_strided_slice %2390 {offsets = [0, 0], sizes = [2, 1], strides = [1, 1]} : vector<2x8xf32> to vector<2x1xf32>
    %2392 = vector.broadcast %2391 : vector<2x1xf32> to vector<2x32xf32>
    %2393 = arith.mulf %2392, %1767 : vector<2x32xf32>
    %2394 = vector.extract_strided_slice %2390 {offsets = [0, 1], sizes = [2, 1], strides = [1, 1]} : vector<2x8xf32> to vector<2x1xf32>
    %2395 = vector.broadcast %2394 : vector<2x1xf32> to vector<2x32xf32>
    %2396 = arith.mulf %2395, %1770 : vector<2x32xf32>
    %2397 = vector.extract_strided_slice %2390 {offsets = [0, 2], sizes = [2, 1], strides = [1, 1]} : vector<2x8xf32> to vector<2x1xf32>
    %2398 = vector.broadcast %2397 : vector<2x1xf32> to vector<2x32xf32>
    %2399 = arith.mulf %2398, %1773 : vector<2x32xf32>
    %2400 = vector.extract_strided_slice %2390 {offsets = [0, 3], sizes = [2, 1], strides = [1, 1]} : vector<2x8xf32> to vector<2x1xf32>
    %2401 = vector.broadcast %2400 : vector<2x1xf32> to vector<2x32xf32>
    %2402 = arith.mulf %2401, %1776 : vector<2x32xf32>
    %2403 = vector.extract_strided_slice %2390 {offsets = [0, 4], sizes = [2, 1], strides = [1, 1]} : vector<2x8xf32> to vector<2x1xf32>
    %2404 = vector.broadcast %2403 : vector<2x1xf32> to vector<2x32xf32>
    %2405 = arith.mulf %2404, %1779 : vector<2x32xf32>
    %2406 = vector.extract_strided_slice %2390 {offsets = [0, 5], sizes = [2, 1], strides = [1, 1]} : vector<2x8xf32> to vector<2x1xf32>
    %2407 = vector.broadcast %2406 : vector<2x1xf32> to vector<2x32xf32>
    %2408 = arith.mulf %2407, %1782 : vector<2x32xf32>
    %2409 = vector.extract_strided_slice %2390 {offsets = [0, 6], sizes = [2, 1], strides = [1, 1]} : vector<2x8xf32> to vector<2x1xf32>
    %2410 = vector.broadcast %2409 : vector<2x1xf32> to vector<2x32xf32>
    %2411 = arith.mulf %2410, %1785 : vector<2x32xf32>
    %2412 = vector.extract_strided_slice %2390 {offsets = [0, 7], sizes = [2, 1], strides = [1, 1]} : vector<2x8xf32> to vector<2x1xf32>
    %2413 = vector.broadcast %2412 : vector<2x1xf32> to vector<2x32xf32>
    %2414 = arith.mulf %2413, %1788 : vector<2x32xf32>
    %2415 = arith.addf %2393, %2396 : vector<2x32xf32>
    %2416 = arith.addf %2399, %2402 : vector<2x32xf32>
    %2417 = arith.addf %2405, %2408 : vector<2x32xf32>
    %2418 = arith.addf %2411, %2414 : vector<2x32xf32>
    %2419 = arith.addf %2415, %2416 : vector<2x32xf32>
    %2420 = arith.addf %2417, %2418 : vector<2x32xf32>
    %2421 = arith.addf %2419, %2420 : vector<2x32xf32>
    %2422 = arith.addf %1761, %2421 : vector<2x32xf32>
    %2423 = arith.negf %2422 : vector<2x32xf32>
    %2424 = math.exp %2423 : vector<2x32xf32>
    %cst_167 = arith.constant 1.000000e+00 : f32
    %2425 = vector.broadcast %cst_167 : f32 to vector<2x32xf32>
    %2426 = arith.addf %2425, %2424 : vector<2x32xf32>
    %2427 = arith.divf %2425, %2426 : vector<2x32xf32>
    %2428 = vector.extract_strided_slice %2427 {offsets = [0, 0], sizes = [2, 8], strides = [1, 1]} : vector<2x32xf32> to vector<2x8xf32>
    %2429 = vector.extract_strided_slice %2427 {offsets = [0, 8], sizes = [2, 8], strides = [1, 1]} : vector<2x32xf32> to vector<2x8xf32>
    %2430 = vector.extract_strided_slice %2427 {offsets = [0, 16], sizes = [2, 8], strides = [1, 1]} : vector<2x32xf32> to vector<2x8xf32>
    %cst_168 = arith.constant 2.000000e+00 : f32
    %2431 = vector.broadcast %cst_168 : f32 to vector<2x8xf32>
    %2432 = arith.mulf %2431, %2430 : vector<2x8xf32>
    %cst_169 = arith.constant 1.000000e+00 : f32
    %2433 = vector.broadcast %cst_169 : f32 to vector<2x8xf32>
    %2434 = arith.subf %2432, %2433 : vector<2x8xf32>
    %2435 = vector.extract_strided_slice %2427 {offsets = [0, 24], sizes = [2, 8], strides = [1, 1]} : vector<2x32xf32> to vector<2x8xf32>
    %2436 = arith.mulf %2429, %2388 : vector<2x8xf32>
    %2437 = arith.mulf %2428, %2434 : vector<2x8xf32>
    %2438 = arith.addf %2436, %2437 : vector<2x8xf32>
    %2439 = math.tanh %2438 : vector<2x8xf32>
    %2440 = arith.mulf %2435, %2439 : vector<2x8xf32>
    %2441 = vector.extract_strided_slice %2440 {offsets = [0, 0], sizes = [2, 1], strides = [1, 1]} : vector<2x8xf32> to vector<2x1xf32>
    %2442 = vector.broadcast %2441 : vector<2x1xf32> to vector<2x32xf32>
    %2443 = arith.mulf %2442, %1767 : vector<2x32xf32>
    %2444 = vector.extract_strided_slice %2440 {offsets = [0, 1], sizes = [2, 1], strides = [1, 1]} : vector<2x8xf32> to vector<2x1xf32>
    %2445 = vector.broadcast %2444 : vector<2x1xf32> to vector<2x32xf32>
    %2446 = arith.mulf %2445, %1770 : vector<2x32xf32>
    %2447 = vector.extract_strided_slice %2440 {offsets = [0, 2], sizes = [2, 1], strides = [1, 1]} : vector<2x8xf32> to vector<2x1xf32>
    %2448 = vector.broadcast %2447 : vector<2x1xf32> to vector<2x32xf32>
    %2449 = arith.mulf %2448, %1773 : vector<2x32xf32>
    %2450 = vector.extract_strided_slice %2440 {offsets = [0, 3], sizes = [2, 1], strides = [1, 1]} : vector<2x8xf32> to vector<2x1xf32>
    %2451 = vector.broadcast %2450 : vector<2x1xf32> to vector<2x32xf32>
    %2452 = arith.mulf %2451, %1776 : vector<2x32xf32>
    %2453 = vector.extract_strided_slice %2440 {offsets = [0, 4], sizes = [2, 1], strides = [1, 1]} : vector<2x8xf32> to vector<2x1xf32>
    %2454 = vector.broadcast %2453 : vector<2x1xf32> to vector<2x32xf32>
    %2455 = arith.mulf %2454, %1779 : vector<2x32xf32>
    %2456 = vector.extract_strided_slice %2440 {offsets = [0, 5], sizes = [2, 1], strides = [1, 1]} : vector<2x8xf32> to vector<2x1xf32>
    %2457 = vector.broadcast %2456 : vector<2x1xf32> to vector<2x32xf32>
    %2458 = arith.mulf %2457, %1782 : vector<2x32xf32>
    %2459 = vector.extract_strided_slice %2440 {offsets = [0, 6], sizes = [2, 1], strides = [1, 1]} : vector<2x8xf32> to vector<2x1xf32>
    %2460 = vector.broadcast %2459 : vector<2x1xf32> to vector<2x32xf32>
    %2461 = arith.mulf %2460, %1785 : vector<2x32xf32>
    %2462 = vector.extract_strided_slice %2440 {offsets = [0, 7], sizes = [2, 1], strides = [1, 1]} : vector<2x8xf32> to vector<2x1xf32>
    %2463 = vector.broadcast %2462 : vector<2x1xf32> to vector<2x32xf32>
    %2464 = arith.mulf %2463, %1788 : vector<2x32xf32>
    %2465 = arith.addf %2443, %2446 : vector<2x32xf32>
    %2466 = arith.addf %2449, %2452 : vector<2x32xf32>
    %2467 = arith.addf %2455, %2458 : vector<2x32xf32>
    %2468 = arith.addf %2461, %2464 : vector<2x32xf32>
    %2469 = arith.addf %2465, %2466 : vector<2x32xf32>
    %2470 = arith.addf %2467, %2468 : vector<2x32xf32>
    %2471 = arith.addf %2469, %2470 : vector<2x32xf32>
    %2472 = arith.addf %1762, %2471 : vector<2x32xf32>
    %2473 = arith.negf %2472 : vector<2x32xf32>
    %2474 = math.exp %2473 : vector<2x32xf32>
    %cst_170 = arith.constant 1.000000e+00 : f32
    %2475 = vector.broadcast %cst_170 : f32 to vector<2x32xf32>
    %2476 = arith.addf %2475, %2474 : vector<2x32xf32>
    %2477 = arith.divf %2475, %2476 : vector<2x32xf32>
    %2478 = vector.extract_strided_slice %2477 {offsets = [0, 0], sizes = [2, 8], strides = [1, 1]} : vector<2x32xf32> to vector<2x8xf32>
    %2479 = vector.extract_strided_slice %2477 {offsets = [0, 8], sizes = [2, 8], strides = [1, 1]} : vector<2x32xf32> to vector<2x8xf32>
    %2480 = vector.extract_strided_slice %2477 {offsets = [0, 16], sizes = [2, 8], strides = [1, 1]} : vector<2x32xf32> to vector<2x8xf32>
    %cst_171 = arith.constant 2.000000e+00 : f32
    %2481 = vector.broadcast %cst_171 : f32 to vector<2x8xf32>
    %2482 = arith.mulf %2481, %2480 : vector<2x8xf32>
    %cst_172 = arith.constant 1.000000e+00 : f32
    %2483 = vector.broadcast %cst_172 : f32 to vector<2x8xf32>
    %2484 = arith.subf %2482, %2483 : vector<2x8xf32>
    %2485 = vector.extract_strided_slice %2477 {offsets = [0, 24], sizes = [2, 8], strides = [1, 1]} : vector<2x32xf32> to vector<2x8xf32>
    %2486 = arith.mulf %2479, %2438 : vector<2x8xf32>
    %2487 = arith.mulf %2478, %2484 : vector<2x8xf32>
    %2488 = arith.addf %2486, %2487 : vector<2x8xf32>
    %2489 = math.tanh %2488 : vector<2x8xf32>
    %2490 = arith.mulf %2485, %2489 : vector<2x8xf32>
    %2491 = vector.extract_strided_slice %2490 {offsets = [0, 0], sizes = [2, 1], strides = [1, 1]} : vector<2x8xf32> to vector<2x1xf32>
    %2492 = vector.broadcast %2491 : vector<2x1xf32> to vector<2x32xf32>
    %2493 = arith.mulf %2492, %1767 : vector<2x32xf32>
    %2494 = vector.extract_strided_slice %2490 {offsets = [0, 1], sizes = [2, 1], strides = [1, 1]} : vector<2x8xf32> to vector<2x1xf32>
    %2495 = vector.broadcast %2494 : vector<2x1xf32> to vector<2x32xf32>
    %2496 = arith.mulf %2495, %1770 : vector<2x32xf32>
    %2497 = vector.extract_strided_slice %2490 {offsets = [0, 2], sizes = [2, 1], strides = [1, 1]} : vector<2x8xf32> to vector<2x1xf32>
    %2498 = vector.broadcast %2497 : vector<2x1xf32> to vector<2x32xf32>
    %2499 = arith.mulf %2498, %1773 : vector<2x32xf32>
    %2500 = vector.extract_strided_slice %2490 {offsets = [0, 3], sizes = [2, 1], strides = [1, 1]} : vector<2x8xf32> to vector<2x1xf32>
    %2501 = vector.broadcast %2500 : vector<2x1xf32> to vector<2x32xf32>
    %2502 = arith.mulf %2501, %1776 : vector<2x32xf32>
    %2503 = vector.extract_strided_slice %2490 {offsets = [0, 4], sizes = [2, 1], strides = [1, 1]} : vector<2x8xf32> to vector<2x1xf32>
    %2504 = vector.broadcast %2503 : vector<2x1xf32> to vector<2x32xf32>
    %2505 = arith.mulf %2504, %1779 : vector<2x32xf32>
    %2506 = vector.extract_strided_slice %2490 {offsets = [0, 5], sizes = [2, 1], strides = [1, 1]} : vector<2x8xf32> to vector<2x1xf32>
    %2507 = vector.broadcast %2506 : vector<2x1xf32> to vector<2x32xf32>
    %2508 = arith.mulf %2507, %1782 : vector<2x32xf32>
    %2509 = vector.extract_strided_slice %2490 {offsets = [0, 6], sizes = [2, 1], strides = [1, 1]} : vector<2x8xf32> to vector<2x1xf32>
    %2510 = vector.broadcast %2509 : vector<2x1xf32> to vector<2x32xf32>
    %2511 = arith.mulf %2510, %1785 : vector<2x32xf32>
    %2512 = vector.extract_strided_slice %2490 {offsets = [0, 7], sizes = [2, 1], strides = [1, 1]} : vector<2x8xf32> to vector<2x1xf32>
    %2513 = vector.broadcast %2512 : vector<2x1xf32> to vector<2x32xf32>
    %2514 = arith.mulf %2513, %1788 : vector<2x32xf32>
    %2515 = arith.addf %2493, %2496 : vector<2x32xf32>
    %2516 = arith.addf %2499, %2502 : vector<2x32xf32>
    %2517 = arith.addf %2505, %2508 : vector<2x32xf32>
    %2518 = arith.addf %2511, %2514 : vector<2x32xf32>
    %2519 = arith.addf %2515, %2516 : vector<2x32xf32>
    %2520 = arith.addf %2517, %2518 : vector<2x32xf32>
    %2521 = arith.addf %2519, %2520 : vector<2x32xf32>
    %2522 = arith.addf %1763, %2521 : vector<2x32xf32>
    %2523 = arith.negf %2522 : vector<2x32xf32>
    %2524 = math.exp %2523 : vector<2x32xf32>
    %cst_173 = arith.constant 1.000000e+00 : f32
    %2525 = vector.broadcast %cst_173 : f32 to vector<2x32xf32>
    %2526 = arith.addf %2525, %2524 : vector<2x32xf32>
    %2527 = arith.divf %2525, %2526 : vector<2x32xf32>
    %2528 = vector.extract_strided_slice %2527 {offsets = [0, 0], sizes = [2, 8], strides = [1, 1]} : vector<2x32xf32> to vector<2x8xf32>
    %2529 = vector.extract_strided_slice %2527 {offsets = [0, 8], sizes = [2, 8], strides = [1, 1]} : vector<2x32xf32> to vector<2x8xf32>
    %2530 = vector.extract_strided_slice %2527 {offsets = [0, 16], sizes = [2, 8], strides = [1, 1]} : vector<2x32xf32> to vector<2x8xf32>
    %cst_174 = arith.constant 2.000000e+00 : f32
    %2531 = vector.broadcast %cst_174 : f32 to vector<2x8xf32>
    %2532 = arith.mulf %2531, %2530 : vector<2x8xf32>
    %cst_175 = arith.constant 1.000000e+00 : f32
    %2533 = vector.broadcast %cst_175 : f32 to vector<2x8xf32>
    %2534 = arith.subf %2532, %2533 : vector<2x8xf32>
    %2535 = vector.extract_strided_slice %2527 {offsets = [0, 24], sizes = [2, 8], strides = [1, 1]} : vector<2x32xf32> to vector<2x8xf32>
    %2536 = arith.mulf %2529, %2488 : vector<2x8xf32>
    %2537 = arith.mulf %2528, %2534 : vector<2x8xf32>
    %2538 = arith.addf %2536, %2537 : vector<2x8xf32>
    %2539 = math.tanh %2538 : vector<2x8xf32>
    %2540 = arith.mulf %2535, %2539 : vector<2x8xf32>
    %2541 = vector.extract_strided_slice %2540 {offsets = [0, 0], sizes = [2, 1], strides = [1, 1]} : vector<2x8xf32> to vector<2x1xf32>
    %2542 = vector.broadcast %2541 : vector<2x1xf32> to vector<2x32xf32>
    %2543 = arith.mulf %2542, %1767 : vector<2x32xf32>
    %2544 = vector.extract_strided_slice %2540 {offsets = [0, 1], sizes = [2, 1], strides = [1, 1]} : vector<2x8xf32> to vector<2x1xf32>
    %2545 = vector.broadcast %2544 : vector<2x1xf32> to vector<2x32xf32>
    %2546 = arith.mulf %2545, %1770 : vector<2x32xf32>
    %2547 = vector.extract_strided_slice %2540 {offsets = [0, 2], sizes = [2, 1], strides = [1, 1]} : vector<2x8xf32> to vector<2x1xf32>
    %2548 = vector.broadcast %2547 : vector<2x1xf32> to vector<2x32xf32>
    %2549 = arith.mulf %2548, %1773 : vector<2x32xf32>
    %2550 = vector.extract_strided_slice %2540 {offsets = [0, 3], sizes = [2, 1], strides = [1, 1]} : vector<2x8xf32> to vector<2x1xf32>
    %2551 = vector.broadcast %2550 : vector<2x1xf32> to vector<2x32xf32>
    %2552 = arith.mulf %2551, %1776 : vector<2x32xf32>
    %2553 = vector.extract_strided_slice %2540 {offsets = [0, 4], sizes = [2, 1], strides = [1, 1]} : vector<2x8xf32> to vector<2x1xf32>
    %2554 = vector.broadcast %2553 : vector<2x1xf32> to vector<2x32xf32>
    %2555 = arith.mulf %2554, %1779 : vector<2x32xf32>
    %2556 = vector.extract_strided_slice %2540 {offsets = [0, 5], sizes = [2, 1], strides = [1, 1]} : vector<2x8xf32> to vector<2x1xf32>
    %2557 = vector.broadcast %2556 : vector<2x1xf32> to vector<2x32xf32>
    %2558 = arith.mulf %2557, %1782 : vector<2x32xf32>
    %2559 = vector.extract_strided_slice %2540 {offsets = [0, 6], sizes = [2, 1], strides = [1, 1]} : vector<2x8xf32> to vector<2x1xf32>
    %2560 = vector.broadcast %2559 : vector<2x1xf32> to vector<2x32xf32>
    %2561 = arith.mulf %2560, %1785 : vector<2x32xf32>
    %2562 = vector.extract_strided_slice %2540 {offsets = [0, 7], sizes = [2, 1], strides = [1, 1]} : vector<2x8xf32> to vector<2x1xf32>
    %2563 = vector.broadcast %2562 : vector<2x1xf32> to vector<2x32xf32>
    %2564 = arith.mulf %2563, %1788 : vector<2x32xf32>
    %2565 = arith.addf %2543, %2546 : vector<2x32xf32>
    %2566 = arith.addf %2549, %2552 : vector<2x32xf32>
    %2567 = arith.addf %2555, %2558 : vector<2x32xf32>
    %2568 = arith.addf %2561, %2564 : vector<2x32xf32>
    %2569 = arith.addf %2565, %2566 : vector<2x32xf32>
    %2570 = arith.addf %2567, %2568 : vector<2x32xf32>
    %2571 = arith.addf %2569, %2570 : vector<2x32xf32>
    %2572 = arith.addf %1764, %2571 : vector<2x32xf32>
    %2573 = arith.negf %2572 : vector<2x32xf32>
    %2574 = math.exp %2573 : vector<2x32xf32>
    %cst_176 = arith.constant 1.000000e+00 : f32
    %2575 = vector.broadcast %cst_176 : f32 to vector<2x32xf32>
    %2576 = arith.addf %2575, %2574 : vector<2x32xf32>
    %2577 = arith.divf %2575, %2576 : vector<2x32xf32>
    %2578 = vector.extract_strided_slice %2577 {offsets = [0, 0], sizes = [2, 8], strides = [1, 1]} : vector<2x32xf32> to vector<2x8xf32>
    %2579 = vector.extract_strided_slice %2577 {offsets = [0, 8], sizes = [2, 8], strides = [1, 1]} : vector<2x32xf32> to vector<2x8xf32>
    %2580 = vector.extract_strided_slice %2577 {offsets = [0, 16], sizes = [2, 8], strides = [1, 1]} : vector<2x32xf32> to vector<2x8xf32>
    %cst_177 = arith.constant 2.000000e+00 : f32
    %2581 = vector.broadcast %cst_177 : f32 to vector<2x8xf32>
    %2582 = arith.mulf %2581, %2580 : vector<2x8xf32>
    %cst_178 = arith.constant 1.000000e+00 : f32
    %2583 = vector.broadcast %cst_178 : f32 to vector<2x8xf32>
    %2584 = arith.subf %2582, %2583 : vector<2x8xf32>
    %2585 = vector.extract_strided_slice %2577 {offsets = [0, 24], sizes = [2, 8], strides = [1, 1]} : vector<2x32xf32> to vector<2x8xf32>
    %2586 = arith.mulf %2579, %2538 : vector<2x8xf32>
    %2587 = arith.mulf %2578, %2584 : vector<2x8xf32>
    %2588 = arith.addf %2586, %2587 : vector<2x8xf32>
    %2589 = math.tanh %2588 : vector<2x8xf32>
    %2590 = arith.mulf %2585, %2589 : vector<2x8xf32>
    %c0_179 = arith.constant 0 : index
    %c0_180 = arith.constant 0 : index
    %2591 = vector.load %arg5[%c0_179, %c0_180] : memref<8x128xf32, #tpu.memory_space<vmem>>, vector<8x128xf32>
    %cst_181 = arith.constant dense<0.000000e+00> : vector<2x128xf32>
    %2592 = tpu.matmul %2590, %2591, %cst_181 {dimension_numbers = #tpu.dot_dimension_numbers<[1], [0], [0], [1], [0, 0, 1, 1], [], []>} : vector<2x8xf32>, vector<8x128xf32>, vector<2x128xf32> -> vector<2x128xf32>
    %c0_182 = arith.constant 0 : index
    %c0_183 = arith.constant 0 : index
    %2593 = vector.load %arg6[%c0_182, %c0_183] : memref<1x128xf32, #tpu.memory_space<vmem>>, vector<1x128xf32>
    %2594 = vector.broadcast %2593 : vector<1x128xf32> to vector<2x128xf32>
    %2595 = arith.addf %2592, %2594 : vector<2x128xf32>
    %cst_184 = arith.constant 0.000000e+00 : f32
    %2596 = vector.broadcast %cst_184 : f32 to vector<2x128xf32>
    %2597 = arith.maximumf %2595, %2596 : vector<2x128xf32>
    %c0_185 = arith.constant 0 : index
    %c0_186 = arith.constant 0 : index
    %2598 = vector.load %arg7[%c0_185, %c0_186] : memref<128x5xf32, #tpu.memory_space<vmem>>, vector<128x5xf32>
    %cst_187 = arith.constant dense<0.000000e+00> : vector<2x5xf32>
    %2599 = tpu.matmul %2597, %2598, %cst_187 {dimension_numbers = #tpu.dot_dimension_numbers<[1], [0], [0], [1], [0, 0, 1, 1], [], []>} : vector<2x128xf32>, vector<128x5xf32>, vector<2x5xf32> -> vector<2x5xf32>
    %c0_188 = arith.constant 0 : index
    %c0_189 = arith.constant 0 : index
    %2600 = vector.load %arg8[%c0_188, %c0_189] : memref<1x5xf32, #tpu.memory_space<vmem>>, vector<1x5xf32>
    %2601 = vector.broadcast %2600 : vector<1x5xf32> to vector<2x5xf32>
    %2602 = arith.addf %2599, %2601 : vector<2x5xf32>
    %cst_190 = arith.constant dense<0xFF800000> : vector<2xf32>
    %2603 = vector.multi_reduction <maximumf>, %2602, %cst_190 [1] : vector<2x5xf32> to vector<2xf32>
    %2604 = vector.shape_cast %2603 : vector<2xf32> to vector<2x1xf32>
    %2605 = vector.broadcast %2604 : vector<2x1xf32> to vector<2x5xf32>
    %2606 = arith.subf %2602, %2605 : vector<2x5xf32>
    %2607 = math.exp %2606 : vector<2x5xf32>
    %cst_191 = arith.constant dense<0.000000e+00> : vector<2xf32>
    %2608 = vector.multi_reduction <add>, %2607, %cst_191 [1] : vector<2x5xf32> to vector<2xf32>
    %2609 = vector.shape_cast %2608 : vector<2xf32> to vector<2x1xf32>
    %2610 = math.log %2609 : vector<2x1xf32>
    %2611 = vector.broadcast %2610 : vector<2x1xf32> to vector<2x5xf32>
    %2612 = arith.subf %2606, %2611 : vector<2x5xf32>
    %c0_192 = arith.constant 0 : index
    %c0_193 = arith.constant 0 : index
    %2613 = vector.load %arg9[%c0_192, %c0_193] : memref<2x5xf32, #tpu.memory_space<vmem>>, vector<2x5xf32>
    tpu.vector_store %arg9[%c0_192, %c0_193], %2612 {strides = array<i32>} : memref<2x5xf32, #tpu.memory_space<vmem>>, vector<2x5xf32>,
    return
  }
  func.func @transform_0(%arg0: i32) -> (i32, i32, i32) {
    %c0_i32 = arith.constant 0 : i32
    %c0_i32_0 = arith.constant 0 : i32
    %c0_i32_1 = arith.constant 0 : i32
    return %c0_i32, %arg0, %c0_i32_0 : i32, i32, i32
  }
  func.func @transform_1(%arg0: i32) -> (i32, i32, i32) {
    %c0_i32 = arith.constant 0 : i32
    %c0_i32_0 = arith.constant 0 : i32
    %c0_i32_1 = arith.constant 0 : i32
    %c0_i32_2 = arith.constant 0 : i32
    return %c0_i32, %c0_i32_0, %c0_i32_1 : i32, i32, i32
  }
  func.func @transform_2(%arg0: i32) -> (i32, i32, i32) {
    %c0_i32 = arith.constant 0 : i32
    %c0_i32_0 = arith.constant 0 : i32
    %c0_i32_1 = arith.constant 0 : i32
    %c0_i32_2 = arith.constant 0 : i32
    return %c0_i32, %c0_i32_0, %c0_i32_1 : i32, i32, i32
  }
  func.func @transform_3(%arg0: i32) -> (i32, i32, i32) {
    %c0_i32 = arith.constant 0 : i32
    %c0_i32_0 = arith.constant 0 : i32
    %c0_i32_1 = arith.constant 0 : i32
    %c0_i32_2 = arith.constant 0 : i32
    return %c0_i32, %c0_i32_0, %c0_i32_1 : i32, i32, i32
  }
  func.func @transform_4(%arg0: i32) -> (i32, i32) {
    %c0_i32 = arith.constant 0 : i32
    %c0_i32_0 = arith.constant 0 : i32
    %c0_i32_1 = arith.constant 0 : i32
    return %c0_i32, %c0_i32_0 : i32, i32
  }
  func.func @transform_5(%arg0: i32) -> (i32, i32) {
    %c0_i32 = arith.constant 0 : i32
    %c0_i32_0 = arith.constant 0 : i32
    %c0_i32_1 = arith.constant 0 : i32
    return %c0_i32, %c0_i32_0 : i32, i32
  }
  func.func @transform_6(%arg0: i32) -> (i32, i32) {
    %c0_i32 = arith.constant 0 : i32
    %c0_i32_0 = arith.constant 0 : i32
    %c0_i32_1 = arith.constant 0 : i32
    return %c0_i32, %c0_i32_0 : i32, i32
  }
  func.func @transform_7(%arg0: i32) -> (i32, i32) {
    %c0_i32 = arith.constant 0 : i32
    %c0_i32_0 = arith.constant 0 : i32
    %c0_i32_1 = arith.constant 0 : i32
    return %c0_i32, %c0_i32_0 : i32, i32
  }
  func.func @transform_8(%arg0: i32) -> (i32, i32) {
    %c0_i32 = arith.constant 0 : i32
    %c0_i32_0 = arith.constant 0 : i32
    return %arg0, %c0_i32 : i32, i32
  }
}

</mosaic_0001>

<llo_original>
// kernel: tpu_custom_call.1
$region0: #{tpu_custom_call.1}
  #allocation0 [shape = 'u32[]', space=smem, size = 0x4, offset = 0x4, fixed_abs, tag = 'smem constant byte address 0x4 - core index']
  #allocation1 [shape = 'u32[144,128]{1,0:T(1,128)}', space=vmem, size = 0x12000, scoped, tag = 'internal scratch']
  %s0 = inlined_call_operand.vmem [shape: f32[16,2,8], index: 0, kind: input, shape index: {}]
  %s1 = inlined_call_operand.vmem [shape: f32[3,8,32], index: 1, kind: input, shape index: {}]
  %s2 = inlined_call_operand.vmem [shape: f32[3,8,32], index: 2, kind: input, shape index: {}]
  %s3 = inlined_call_operand.vmem [shape: f32[3,1,32], index: 3, kind: input, shape index: {}]
  %s4 = inlined_call_operand.vmem [shape: f32[8,128], index: 4, kind: input, shape index: {}]
  %s5 = inlined_call_operand.vmem [shape: f32[1,128], index: 5, kind: input, shape index: {}]
  %s6 = inlined_call_operand.vmem [shape: f32[128,5], index: 6, kind: input, shape index: {}]
  %s7 = inlined_call_operand.vmem [shape: f32[1,5], index: 7, kind: input, shape index: {}]
  %s8 = inlined_call_operand.hbm [shape: f32[2,5], index: 8, kind: output, shape index: {}]
  %s9 = sld [smem:[#allocation0]]
  $region42: #{tpu_custom_call.1} parent=0
    _
  %s11 = ssub.s32 1, %s9
  %s12 = scalar_select 0, %s11, %s9
  $region1: #{tpu_custom_call.1} parent=0
    #allocation2 [shape = 'u8[1024]{0}', space=vmem, size = 0x400, scoped, tag = 'output window, operand 0, single buffered']
    #allocation3 [shape = 's32[1]{0}', space=sflag, size = 0x4, scoped, tag = 'scoped memory for tpu_custom_call.1']
    %13 = vsyncpa [#allocation3], 0
    // Predicated region
    $region2: #{tpu_custom_call.1} parent=1 // pred_check
      _
    $region3: #{tpu_custom_call.1} parent=1 // pred_check_branch
      %15 = sbr.rel (0) target = $region5
    $region4: #{tpu_custom_call.1} parent=1 // pred_region
      _
    $region5: #{tpu_custom_call.1} parent=1 // pred_fallthru
      _
    // Predicated region
    $region6: #{tpu_custom_call.1} parent=1 // pred_check
      _
    $region7: #{tpu_custom_call.1} parent=1 // pred_check_branch
      %17 = sbr.rel (0) target = $region9
    $region8: #{tpu_custom_call.1} parent=1 // pred_region
      _
    $region9: #{tpu_custom_call.1} parent=1 // pred_fallthru
      _
    // Predicated region
    $region10: #{tpu_custom_call.1} parent=1 // pred_check
      _
    $region11: #{tpu_custom_call.1} parent=1 // pred_check_branch
      %19 = sbr.rel (0) target = $region13
    $region12: #{tpu_custom_call.1} parent=1 // pred_region
      _
    $region13: #{tpu_custom_call.1} parent=1 // pred_fallthru
      _
    // Predicated region
    $region14: #{tpu_custom_call.1} parent=1 // pred_check
      _
    $region15: #{tpu_custom_call.1} parent=1 // pred_check_branch
      %21 = sbr.rel (0) target = $region17
    $region16: #{tpu_custom_call.1} parent=1 // pred_region
      _
    $region17: #{tpu_custom_call.1} parent=1 // pred_fallthru
      _
    // Predicated region
    $region18: #{tpu_custom_call.1} parent=1 // pred_check
      _
    $region19: #{tpu_custom_call.1} parent=1 // pred_check_branch
      %23 = sbr.rel (0) target = $region21
    $region20: #{tpu_custom_call.1} parent=1 // pred_region
      _
    $region21: #{tpu_custom_call.1} parent=1 // pred_fallthru
      _
    // Predicated region
    $region22: #{tpu_custom_call.1} parent=1 // pred_check
      _
    $region23: #{tpu_custom_call.1} parent=1 // pred_check_branch
      %25 = sbr.rel (0) target = $region25
    $region24: #{tpu_custom_call.1} parent=1 // pred_region
      _
    $region25: #{tpu_custom_call.1} parent=1 // pred_fallthru
      _
    // Predicated region
    $region26: #{tpu_custom_call.1} parent=1 // pred_check
      _
    $region27: #{tpu_custom_call.1} parent=1 // pred_check_branch
      %27 = sbr.rel (0) target = $region29
    $region28: #{tpu_custom_call.1} parent=1 // pred_region
      _
    $region29: #{tpu_custom_call.1} parent=1 // pred_fallthru
      _
    // Predicated region
    $region30: #{tpu_custom_call.1} parent=1 // pred_check
      _
    $region31: #{tpu_custom_call.1} parent=1 // pred_check_branch
      %29 = sbr.rel (0) target = $region33
    $region32: #{tpu_custom_call.1} parent=1 // pred_region
      _
    $region33: #{tpu_custom_call.1} parent=1 // pred_fallthru
      _
    %v30 = vld [vmem:[%s0] sm:$0x3]
    %v31 = vld [vmem:[%s0 + $0x2] sm:$0x3]
    %v32 = vld [vmem:[%s0 + $0x4] sm:$0x3]
    %v33 = vld [vmem:[%s0 + $0x6] sm:$0x3]
    %v34 = vld [vmem:[%s0 + $0x8] sm:$0x3]
    %v35 = vld [vmem:[%s0 + $0xa] sm:$0x3]
    %v36 = vld [vmem:[%s0 + $0xc] sm:$0x3]
    %v37 = vld [vmem:[%s0 + $0xe] sm:$0x3]
    %v38 = vld [vmem:[%s0 + $0x10] sm:$0x3]
    %v39 = vld [vmem:[%s0 + $0x12] sm:$0x3]
    %v40 = vld [vmem:[%s0 + $0x14] sm:$0x3]
    %v41 = vld [vmem:[%s0 + $0x16] sm:$0x3]
    %v42 = vld [vmem:[%s0 + $0x18] sm:$0x3]
    %v43 = vld [vmem:[%s0 + $0x1a] sm:$0x3]
    %v44 = vld [vmem:[%s0 + $0x1c] sm:$0x3]
    %v45 = vld [vmem:[%s0 + $0x1e] sm:$0x3]
    %v46 = vld [vmem:[%s1] sm:$0xff]
    %v47 = vld [vmem:[%s2] sm:$0xff]
    %v48 = vld [vmem:[%s3] sm:$0x1]
    %v50 = vlaneseq
    %v51 = vshrl.u32 %v50, 7
    %v52 = vsub.s32 0, %v51
    %v53 = vrot.slane %v48, %v52
    %v71 = vcombine.low %v30, %v31
    %v72 = vcombine.low %v32, %v33
    %v74 = vunpack.c.l.s4 1983009808
    %v75 = vunpack.c.0.s8 %v74
    %v76 = vlaneseq
    %v77 = vshrl.u32 %v76, 7
    %v78 = vsub.s32 %v75, %v77
    %v79 = vrot.slane %v71, %v78
    %v81 = vunpack.c.l.s4 1983009808
    %v82 = vunpack.c.0.s8 %v81
    %v83 = vlaneseq
    %v84 = vshrl.u32 %v83, 7
    %v85 = vsub.s32 %v82, %v84
    %v86 = vrot.slane %v72, %v85
    %v87 = vcombine.low %v79, %v86
    %v88 = vcombine.low %v34, %v35
    %v89 = vcombine.low %v36, %v37
    %v91 = vunpack.c.l.s4 1983009808
    %v92 = vunpack.c.0.s8 %v91
    %v93 = vlaneseq
    %v94 = vshrl.u32 %v93, 7
    %v95 = vsub.s32 %v92, %v94
    %v96 = vrot.slane %v88, %v95
    %v98 = vunpack.c.l.s4 1983009808
    %v99 = vunpack.c.0.s8 %v98
    %v100 = vlaneseq
    %v101 = vshrl.u32 %v100, 7
    %v102 = vsub.s32 %v99, %v101
    %v103 = vrot.slane %v89, %v102
    %v104 = vcombine.low %v96, %v103
    %v105 = vcombine.low %v38, %v39
    %v106 = vcombine.low %v40, %v41
    %v108 = vunpack.c.l.s4 1983009808
    %v109 = vunpack.c.0.s8 %v108
    %v110 = vlaneseq
    %v111 = vshrl.u32 %v110, 7
    %v112 = vsub.s32 %v109, %v111
    %v113 = vrot.slane %v105, %v112
    %v115 = vunpack.c.l.s4 1983009808
    %v116 = vunpack.c.0.s8 %v115
    %v117 = vlaneseq
    %v118 = vshrl.u32 %v117, 7
    %v119 = vsub.s32 %v116, %v118
    %v120 = vrot.slane %v106, %v119
    %v121 = vcombine.low %v113, %v120
    %v122 = vcombine.low %v42, %v43
    %v123 = vcombine.low %v44, %v45
    %v125 = vunpack.c.l.s4 1983009808
    %v126 = vunpack.c.0.s8 %v125
    %v127 = vlaneseq
    %v128 = vshrl.u32 %v127, 7
    %v129 = vsub.s32 %v126, %v128
    %v130 = vrot.slane %v122, %v129
    %v132 = vunpack.c.l.s4 1983009808
    %v133 = vunpack.c.0.s8 %v132
    %v134 = vlaneseq
    %v135 = vshrl.u32 %v134, 7
    %v136 = vsub.s32 %v133, %v135
    %v137 = vrot.slane %v123, %v136
    %v138 = vcombine.low %v130, %v137
    %vm139 = vcmask 64512
    %v140 = vsel %vm139, %v87, 0
    %v142 = vsel %vm139, %v104, 0
    %v144 = vsel %vm139, %v121, 0
    %v146 = vsel %vm139, %v138, 0
    %148 = vmatprep.subr.mxu0 0.0
    %149 = vmatpush1.msra.mxu0 0.0
    %150 = vmatprep.subr.mxu0 0.0
    %151 = vmatpush1.msra.mxu0 0.0
    %152 = vmatprep.subr.mxu0 0.0
    %153 = vmatpush1.msra.mxu0 0.0
    %154 = vmatprep.subr.mxu0 0.0
    %155 = vmatpush1.msra.mxu0 0.0
    %156 = vmatprep.subr.mxu0 0.0
    %157 = vmatpush1.msra.mxu0 0.0
    %158 = vmatprep.subr.mxu0 0.0
    %159 = vmatpush1.msra.mxu0 0.0
    %160 = vmatprep.subr.mxu0 0.0
    %161 = vmatpush1.msra.mxu0 0.0
    %162 = vmatprep.subr.mxu0 0.0
    %163 = vmatpush1.msra.mxu0 0.0
    %164 = vmatprep.subr.mxu0 0.0
    %165 = vmatpush1.msra.mxu0 0.0
    %166 = vmatprep.subr.mxu0 0.0
    %167 = vmatpush1.msra.mxu0 0.0
    %168 = vmatprep.subr.mxu0 0.0
    %169 = vmatpush1.msra.mxu0 0.0
    %170 = vmatprep.subr.mxu0 0.0
    %171 = vmatpush1.msra.mxu0 0.0
    %172 = vmatprep.subr.mxu0 0.0
    %173 = vmatpush1.msra.mxu0 0.0
    %174 = vmatprep.subr.mxu0 0.0
    %175 = vmatpush1.msra.mxu0 0.0
    %176 = vmatprep.subr.mxu0 0.0
    %177 = vmatpush1.msra.mxu0 0.0
    %178 = vmatprep.subr.mxu0 0.0
    %179 = vmatpush1.msra.mxu0 %v46
    %180 = vmatprep.subr.mxu0 0.0
    %181 = vmatpush2.msra.mxu0 0.0
    %182 = vmatprep.subr.mxu0 0.0
    %183 = vmatpush2.msra.mxu0 0.0
    %184 = vmatprep.subr.mxu0 0.0
    %185 = vmatpush2.msra.mxu0 0.0
    %186 = vmatprep.subr.mxu0 0.0
    %187 = vmatpush2.msra.mxu0 0.0
    %188 = vmatprep.subr.mxu0 0.0
    %189 = vmatpush2.msra.mxu0 0.0
    %190 = vmatprep.subr.mxu0 0.0
    %191 = vmatpush2.msra.mxu0 0.0
    %192 = vmatprep.subr.mxu0 0.0
    %193 = vmatpush2.msra.mxu0 0.0
    %194 = vmatprep.subr.mxu0 0.0
    %195 = vmatpush2.msra.mxu0 0.0
    %196 = vmatprep.subr.mxu0 0.0
    %197 = vmatpush2.msra.mxu0 0.0
    %198 = vmatprep.subr.mxu0 0.0
    %199 = vmatpush2.msra.mxu0 0.0
    %200 = vmatprep.subr.mxu0 0.0
    %201 = vmatpush2.msra.mxu0 0.0
    %202 = vmatprep.subr.mxu0 0.0
    %203 = vmatpush2.msra.mxu0 0.0
    %204 = vmatprep.subr.mxu0 0.0
    %205 = vmatpush2.msra.mxu0 0.0
    %206 = vmatprep.subr.mxu0 0.0
    %207 = vmatpush2.msra.mxu0 0.0
    %208 = vmatprep.subr.mxu0 0.0
    %209 = vmatpush2.msra.mxu0 0.0
    %210 = vmatprep.subr.mxu0 0.0
    %211 = vmatpush2.msra.mxu0 0.0
    %212 = vmatprep.mubr.f32.mxu0 0.0
    %213 = vmatmul.mubr.f32.gmra.mxu0 %v140
    %v214 = vpop.f32.mrf.mxu0
    %v215 = vadd.f32 %v53, %v214
    %v216 = vpop.f32.mrf.mxu0
    %217 = vmatprep.mubr.f32.mxu0 0.0
    %218 = vmatmul.mubr.f32.gmra.mxu0 %v142
    %v219 = vpop.f32.mrf.mxu0
    %v220 = vadd.f32 %v53, %v219
    %v221 = vpop.f32.mrf.mxu0
    %222 = vmatprep.mubr.f32.mxu0 0.0
    %223 = vmatmul.mubr.f32.gmra.mxu0 %v144
    %v224 = vpop.f32.mrf.mxu0
    %v225 = vadd.f32 %v53, %v224
    %v226 = vpop.f32.mrf.mxu0
    %227 = vmatprep.mubr.f32.mxu0 0.0
    %228 = vmatmul.mubr.f32.gmra.mxu0 %v146
    %v229 = vpop.f32.mrf.mxu0
    %v230 = vadd.f32 %v53, %v229
    %v231 = vpop.f32.mrf.mxu0
    %232 = vdwg.mxu0
    %v233 = vlaneseq
    %v234 = vshrl.u32 %v233, 7
    %v235 = vsub.s32 0, %v234
    %v236 = vrot.slane %v47, %v235
    %v237 = vlaneseq
    %v238 = vshrl.u32 %v237, 7
    %v239 = vsub.s32 1, %v238
    %v240 = vrot.slane %v47, %v239
    %v241 = vlaneseq
    %v242 = vshrl.u32 %v241, 7
    %v243 = vsub.s32 2, %v242
    %v244 = vrot.slane %v47, %v243
    %v245 = vlaneseq
    %v246 = vshrl.u32 %v245, 7
    %v247 = vsub.s32 3, %v246
    %v248 = vrot.slane %v47, %v247
    %v249 = vlaneseq
    %v250 = vshrl.u32 %v249, 7
    %v251 = vsub.s32 4, %v250
    %v252 = vrot.slane %v47, %v251
    %v253 = vlaneseq
    %v254 = vshrl.u32 %v253, 7
    %v255 = vsub.s32 5, %v254
    %v256 = vrot.slane %v47, %v255
    %v257 = vlaneseq
    %v258 = vshrl.u32 %v257, 7
    %v259 = vsub.s32 6, %v258
    %v260 = vrot.slane %v47, %v259
    %v261 = vlaneseq
    %v262 = vshrl.u32 %v261, 7
    %v263 = vsub.s32 7, %v262
    %v264 = vrot.slane %v47, %v263
    %v265 = vmul.f32 %v236, 0.0
    %v266 = vmul.f32 %v240, 0.0
    %v267 = vmul.f32 %v244, 0.0
    %v268 = vmul.f32 %v248, 0.0
    %v269 = vmul.f32 %v252, 0.0
    %v270 = vmul.f32 %v256, 0.0
    %v271 = vmul.f32 %v260, 0.0
    %v272 = vmul.f32 %v264, 0.0
    %v273 = vadd.f32 %v265, %v266
    %v274 = vadd.f32 %v267, %v268
    %v275 = vadd.f32 %v269, %v270
    %v276 = vadd.f32 %v271, %v272
    %v277 = vadd.f32 %v273, %v274
    %v278 = vadd.f32 %v275, %v276
    %v279 = vadd.f32 %v277, %v278
    %v280 = vadd.f32 %v215, %v279
    %v281 = vxor.u32 %v280, 2147483648
    %v282 = vmul.f32 %v281, 1.442695
    %v283 = vpow.pop %v282
    %v284 = vadd.f32 %v283, 1.0
    %v285 = vrcp.pop %v284
    %v286 = vmul.f32 1.0, %v285
    %v287 = vmul.f32 %v286, 2.0
    %v288 = vsub.f32 %v287, 1.0
    %v289 = vmul.f32 %v286, 0.0
    %291 = vrot.lane.b32.xlu0 %v288, 112
    %v292 = vpop.permute.xlu0 %291
    %v294 = vmul.f32 %v286, %v292
    %296 = vrot.lane.b32.xlu0 %v294, 8
    %v297 = vpop.permute.xlu0 %296
    %v299 = vadd.f32 %v289, %v297
    %v300 = vtanh.pop %v299
    %302 = vrot.lane.b32.xlu0 %v300, 16
    %v303 = vpop.permute.xlu0 %302
    %v305 = vmul.f32 %v286, %v303
    %307 = vset.pattern.permute.xlu0 24
    %308 = vperm.xlu0 %307, %v305
    %v309 = vpop.permute.xlu0 %308
    %v311 = vmul.f32 %v309, %v236
    %312 = vset.pattern.permute.xlu0 25
    %313 = vperm.xlu0 %312, %v305
    %v314 = vpop.permute.xlu0 %313
    %v316 = vmul.f32 %v314, %v240
    %317 = vset.pattern.permute.xlu0 26
    %318 = vperm.xlu0 %317, %v305
    %v319 = vpop.permute.xlu0 %318
    %v321 = vmul.f32 %v319, %v244
    %322 = vset.pattern.permute.xlu0 27
    %323 = vperm.xlu0 %322, %v305
    %v324 = vpop.permute.xlu0 %323
    %v326 = vmul.f32 %v324, %v248
    %327 = vset.pattern.permute.xlu0 28
    %328 = vperm.xlu0 %327, %v305
    %v329 = vpop.permute.xlu0 %328
    %v331 = vmul.f32 %v329, %v252
    %332 = vset.pattern.permute.xlu0 29
    %333 = vperm.xlu0 %332, %v305
    %v334 = vpop.permute.xlu0 %333
    %v336 = vmul.f32 %v334, %v256
    %337 = vset.pattern.permute.xlu0 30
    %338 = vperm.xlu0 %337, %v305
    %v339 = vpop.permute.xlu0 %338
    %v341 = vmul.f32 %v339, %v260
    %342 = vset.pattern.permute.xlu0 31
    %343 = vperm.xlu0 %342, %v305
    %v344 = vpop.permute.xlu0 %343
    %v346 = vmul.f32 %v344, %v264
    %v347 = vadd.f32 %v311, %v316
    %v348 = vadd.f32 %v321, %v326
    %v349 = vadd.f32 %v331, %v336
    %v350 = vadd.f32 %v341, %v346
    %v351 = vadd.f32 %v347, %v348
    %v352 = vadd.f32 %v349, %v350
    %v353 = vadd.f32 %v351, %v352
    %v355 = vrot.slane %v353, 6
    %v357 = vadd.f32 %v215, %v355
    %v358 = vxor.u32 %v357, 2147483648
    %v359 = vmul.f32 %v358, 1.442695
    %v360 = vpow.pop %v359
    %v361 = vadd.f32 %v360, 1.0
    %v362 = vrcp.pop %v361
    %v363 = vmul.f32 1.0, %v362
    %v364 = vmul.f32 %v363, 2.0
    %v365 = vsub.f32 %v364, 1.0
    %v367 = vrot.slane %v299, 6
    %v369 = vmul.f32 %v363, %v367
    %371 = vrot.lane.b32.xlu0 %v365, 112
    %v372 = vpop.permute.xlu0 %371
    %v374 = vmul.f32 %v363, %v372
    %376 = vrot.lane.b32.xlu0 %v374, 8
    %v377 = vpop.permute.xlu0 %376
    %v379 = vadd.f32 %v369, %v377
    %v380 = vtanh.pop %v379
    %382 = vrot.lane.b32.xlu0 %v380, 16
    %v383 = vpop.permute.xlu0 %382
    %v385 = vmul.f32 %v363, %v383
    %387 = vset.pattern.permute.xlu0 24
    %388 = vperm.xlu0 %387, %v385
    %v389 = vpop.permute.xlu0 %388
    %v391 = vmul.f32 %v389, %v236
    %392 = vset.pattern.permute.xlu0 25
    %393 = vperm.xlu0 %392, %v385
    %v394 = vpop.permute.xlu0 %393
    %v396 = vmul.f32 %v394, %v240
    %397 = vset.pattern.permute.xlu0 26
    %398 = vperm.xlu0 %397, %v385
    %v399 = vpop.permute.xlu0 %398
    %v401 = vmul.f32 %v399, %v244
    %402 = vset.pattern.permute.xlu0 27
    %403 = vperm.xlu0 %402, %v385
    %v404 = vpop.permute.xlu0 %403
    %v406 = vmul.f32 %v404, %v248
    %407 = vset.pattern.permute.xlu0 28
    %408 = vperm.xlu0 %407, %v385
    %v409 = vpop.permute.xlu0 %408
    %v411 = vmul.f32 %v409, %v252
    %412 = vset.pattern.permute.xlu0 29
    %413 = vperm.xlu0 %412, %v385
    %v414 = vpop.permute.xlu0 %413
    %v416 = vmul.f32 %v414, %v256
    %417 = vset.pattern.permute.xlu0 30
    %418 = vperm.xlu0 %417, %v385
    %v419 = vpop.permute.xlu0 %418
    %v421 = vmul.f32 %v419, %v260
    %422 = vset.pattern.permute.xlu0 31
    %423 = vperm.xlu0 %422, %v385
    %v424 = vpop.permute.xlu0 %423
    %v426 = vmul.f32 %v424, %v264
    %v427 = vadd.f32 %v391, %v396
    %v428 = vadd.f32 %v401, %v406
    %v429 = vadd.f32 %v411, %v416
    %v430 = vadd.f32 %v421, %v426
    %v431 = vadd.f32 %v427, %v428
    %v432 = vadd.f32 %v429, %v430
    %v433 = vadd.f32 %v431, %v432
    %v435 = vrot.slane %v433, 6
    %v437 = vadd.f32 %v215, %v435
    %v438 = vxor.u32 %v437, 2147483648
    %v439 = vmul.f32 %v438, 1.442695
    %v440 = vpow.pop %v439
    %v441 = vadd.f32 %v440, 1.0
    %v442 = vrcp.pop %v441
    %v443 = vmul.f32 1.0, %v442
    %v444 = vmul.f32 %v443, 2.0
    %v445 = vsub.f32 %v444, 1.0
    %v447 = vrot.slane %v379, 6
    %v449 = vmul.f32 %v443, %v447
    %451 = vrot.lane.b32.xlu0 %v445, 112
    %v452 = vpop.permute.xlu0 %451
    %v454 = vmul.f32 %v443, %v452
    %456 = vrot.lane.b32.xlu0 %v454, 8
    %v457 = vpop.permute.xlu0 %456
    %v459 = vadd.f32 %v449, %v457
    %v460 = vtanh.pop %v459
    %462 = vrot.lane.b32.xlu0 %v460, 16
    %v463 = vpop.permute.xlu0 %462
    %v465 = vmul.f32 %v443, %v463
    %467 = vset.pattern.permute.xlu0 24
    %468 = vperm.xlu0 %467, %v465
    %v469 = vpop.permute.xlu0 %468
    %v471 = vmul.f32 %v469, %v236
    %472 = vset.pattern.permute.xlu0 25
    %473 = vperm.xlu0 %472, %v465
    %v474 = vpop.permute.xlu0 %473
    %v476 = vmul.f32 %v474, %v240
    %477 = vset.pattern.permute.xlu0 26
    %478 = vperm.xlu0 %477, %v465
    %v479 = vpop.permute.xlu0 %478
    %v481 = vmul.f32 %v479, %v244
    %482 = vset.pattern.permute.xlu0 27
    %483 = vperm.xlu0 %482, %v465
    %v484 = vpop.permute.xlu0 %483
    %v486 = vmul.f32 %v484, %v248
    %487 = vset.pattern.permute.xlu0 28
    %488 = vperm.xlu0 %487, %v465
    %v489 = vpop.permute.xlu0 %488
    %v491 = vmul.f32 %v489, %v252
    %492 = vset.pattern.permute.xlu0 29
    %493 = vperm.xlu0 %492, %v465
    %v494 = vpop.permute.xlu0 %493
    %v496 = vmul.f32 %v494, %v256
    %497 = vset.pattern.permute.xlu0 30
    %498 = vperm.xlu0 %497, %v465
    %v499 = vpop.permute.xlu0 %498
    %v501 = vmul.f32 %v499, %v260
    %502 = vset.pattern.permute.xlu0 31
    %503 = vperm.xlu0 %502, %v465
    %v504 = vpop.permute.xlu0 %503
    %v506 = vmul.f32 %v504, %v264
    %v507 = vadd.f32 %v471, %v476
    %v508 = vadd.f32 %v481, %v486
    %v509 = vadd.f32 %v491, %v496
    %v510 = vadd.f32 %v501, %v506
    %v511 = vadd.f32 %v507, %v508
    %v512 = vadd.f32 %v509, %v510
    %v513 = vadd.f32 %v511, %v512
    %v515 = vrot.slane %v513, 6
    %v517 = vadd.f32 %v215, %v515
    %v518 = vxor.u32 %v517, 2147483648
    %v519 = vmul.f32 %v518, 1.442695
    %v520 = vpow.pop %v519
    %v521 = vadd.f32 %v520, 1.0
    %v522 = vrcp.pop %v521
    %v523 = vmul.f32 1.0, %v522
    %v524 = vmul.f32 %v523, 2.0
    %v525 = vsub.f32 %v524, 1.0
    %v527 = vrot.slane %v459, 6
    %v529 = vmul.f32 %v523, %v527
    %531 = vrot.lane.b32.xlu0 %v525, 112
    %v532 = vpop.permute.xlu0 %531
    %v534 = vmul.f32 %v523, %v532
    %536 = vrot.lane.b32.xlu0 %v534, 8
    %v537 = vpop.permute.xlu0 %536
    %v539 = vadd.f32 %v529, %v537
    %v540 = vtanh.pop %v539
    %542 = vrot.lane.b32.xlu0 %v540, 16
    %v543 = vpop.permute.xlu0 %542
    %v545 = vmul.f32 %v523, %v543
    %547 = vset.pattern.permute.xlu0 24
    %548 = vperm.xlu0 %547, %v545
    %v549 = vpop.permute.xlu0 %548
    %v551 = vmul.f32 %v549, %v236
    %552 = vset.pattern.permute.xlu0 25
    %553 = vperm.xlu0 %552, %v545
    %v554 = vpop.permute.xlu0 %553
    %v556 = vmul.f32 %v554, %v240
    %557 = vset.pattern.permute.xlu0 26
    %558 = vperm.xlu0 %557, %v545
    %v559 = vpop.permute.xlu0 %558
    %v561 = vmul.f32 %v559, %v244
    %562 = vset.pattern.permute.xlu0 27
    %563 = vperm.xlu0 %562, %v545
    %v564 = vpop.permute.xlu0 %563
    %v566 = vmul.f32 %v564, %v248
    %567 = vset.pattern.permute.xlu0 28
    %568 = vperm.xlu0 %567, %v545
    %v569 = vpop.permute.xlu0 %568
    %v571 = vmul.f32 %v569, %v252
    %572 = vset.pattern.permute.xlu0 29
    %573 = vperm.xlu0 %572, %v545
    %v574 = vpop.permute.xlu0 %573
    %v576 = vmul.f32 %v574, %v256
    %577 = vset.pattern.permute.xlu0 30
    %578 = vperm.xlu0 %577, %v545
    %v579 = vpop.permute.xlu0 %578
    %v581 = vmul.f32 %v579, %v260
    %582 = vset.pattern.permute.xlu0 31
    %583 = vperm.xlu0 %582, %v545
    %v584 = vpop.permute.xlu0 %583
    %v586 = vmul.f32 %v584, %v264
    %v587 = vadd.f32 %v551, %v556
    %v588 = vadd.f32 %v561, %v566
    %v589 = vadd.f32 %v571, %v576
    %v590 = vadd.f32 %v581, %v586
    %v591 = vadd.f32 %v587, %v588
    %v592 = vadd.f32 %v589, %v590
    %v593 = vadd.f32 %v591, %v592
    %v595 = vrot.slane %v593, 6
    %v597 = vadd.f32 %v220, %v595
    %v598 = vxor.u32 %v597, 2147483648
    %v599 = vmul.f32 %v598, 1.442695
    %v600 = vpow.pop %v599
    %v601 = vadd.f32 %v600, 1.0
    %v602 = vrcp.pop %v601
    %v603 = vmul.f32 1.0, %v602
    %v604 = vmul.f32 %v603, 2.0
    %v605 = vsub.f32 %v604, 1.0
    %v607 = vrot.slane %v539, 6
    %v609 = vmul.f32 %v603, %v607
    %611 = vrot.lane.b32.xlu0 %v605, 112
    %v612 = vpop.permute.xlu0 %611
    %v614 = vmul.f32 %v603, %v612
    %616 = vrot.lane.b32.xlu0 %v614, 8
    %v617 = vpop.permute.xlu0 %616
    %v619 = vadd.f32 %v609, %v617
    %v620 = vtanh.pop %v619
    %622 = vrot.lane.b32.xlu0 %v620, 16
    %v623 = vpop.permute.xlu0 %622
    %v625 = vmul.f32 %v603, %v623
    %627 = vset.pattern.permute.xlu0 24
    %628 = vperm.xlu0 %627, %v625
    %v629 = vpop.permute.xlu0 %628
    %v631 = vmul.f32 %v629, %v236
    %632 = vset.pattern.permute.xlu0 25
    %633 = vperm.xlu0 %632, %v625
    %v634 = vpop.permute.xlu0 %633
    %v636 = vmul.f32 %v634, %v240
    %637 = vset.pattern.permute.xlu0 26
    %638 = vperm.xlu0 %637, %v625
    %v639 = vpop.permute.xlu0 %638
    %v641 = vmul.f32 %v639, %v244
    %642 = vset.pattern.permute.xlu0 27
    %643 = vperm.xlu0 %642, %v625
    %v644 = vpop.permute.xlu0 %643
    %v646 = vmul.f32 %v644, %v248
    %647 = vset.pattern.permute.xlu0 28
    %648 = vperm.xlu0 %647, %v625
    %v649 = vpop.permute.xlu0 %648
    %v651 = vmul.f32 %v649, %v252
    %652 = vset.pattern.permute.xlu0 29
    %653 = vperm.xlu0 %652, %v625
    %v654 = vpop.permute.xlu0 %653
    %v656 = vmul.f32 %v654, %v256
    %657 = vset.pattern.permute.xlu0 30
    %658 = vperm.xlu0 %657, %v625
    %v659 = vpop.permute.xlu0 %658
    %v661 = vmul.f32 %v659, %v260
    %662 = vset.pattern.permute.xlu0 31
    %663 = vperm.xlu0 %662, %v625
    %v664 = vpop.permute.xlu0 %663
    %v666 = vmul.f32 %v664, %v264
    %v667 = vadd.f32 %v631, %v636
    %v668 = vadd.f32 %v641, %v646
    %v669 = vadd.f32 %v651, %v656
    %v670 = vadd.f32 %v661, %v666
    %v671 = vadd.f32 %v667, %v668
    %v672 = vadd.f32 %v669, %v670
    %v673 = vadd.f32 %v671, %v672
    %v675 = vrot.slane %v673, 6
    %v677 = vadd.f32 %v220, %v675
    %v678 = vxor.u32 %v677, 2147483648
    %v679 = vmul.f32 %v678, 1.442695
    %v680 = vpow.pop %v679
    %v681 = vadd.f32 %v680, 1.0
    %v682 = vrcp.pop %v681
    %v683 = vmul.f32 1.0, %v682
    %v684 = vmul.f32 %v683, 2.0
    %v685 = vsub.f32 %v684, 1.0
    %v687 = vrot.slane %v619, 6
    %v689 = vmul.f32 %v683, %v687
    %691 = vrot.lane.b32.xlu0 %v685, 112
    %v692 = vpop.permute.xlu0 %691
    %v694 = vmul.f32 %v683, %v692
    %696 = vrot.lane.b32.xlu0 %v694, 8
    %v697 = vpop.permute.xlu0 %696
    %v699 = vadd.f32 %v689, %v697
    %v700 = vtanh.pop %v699
    %702 = vrot.lane.b32.xlu0 %v700, 16
    %v703 = vpop.permute.xlu0 %702
    %v705 = vmul.f32 %v683, %v703
    %707 = vset.pattern.permute.xlu0 24
    %708 = vperm.xlu0 %707, %v705
    %v709 = vpop.permute.xlu0 %708
    %v711 = vmul.f32 %v709, %v236
    %712 = vset.pattern.permute.xlu0 25
    %713 = vperm.xlu0 %712, %v705
    %v714 = vpop.permute.xlu0 %713
    %v716 = vmul.f32 %v714, %v240
    %717 = vset.pattern.permute.xlu0 26
    %718 = vperm.xlu0 %717, %v705
    %v719 = vpop.permute.xlu0 %718
    %v721 = vmul.f32 %v719, %v244
    %722 = vset.pattern.permute.xlu0 27
    %723 = vperm.xlu0 %722, %v705
    %v724 = vpop.permute.xlu0 %723
    %v726 = vmul.f32 %v724, %v248
    %727 = vset.pattern.permute.xlu0 28
    %728 = vperm.xlu0 %727, %v705
    %v729 = vpop.permute.xlu0 %728
    %v731 = vmul.f32 %v729, %v252
    %732 = vset.pattern.permute.xlu0 29
    %733 = vperm.xlu0 %732, %v705
    %v734 = vpop.permute.xlu0 %733
    %v736 = vmul.f32 %v734, %v256
    %737 = vset.pattern.permute.xlu0 30
    %738 = vperm.xlu0 %737, %v705
    %v739 = vpop.permute.xlu0 %738
    %v741 = vmul.f32 %v739, %v260
    %742 = vset.pattern.permute.xlu0 31
    %743 = vperm.xlu0 %742, %v705
    %v744 = vpop.permute.xlu0 %743
    %v746 = vmul.f32 %v744, %v264
    %v747 = vadd.f32 %v711, %v716
    %v748 = vadd.f32 %v721, %v726
    %v749 = vadd.f32 %v731, %v736
    %v750 = vadd.f32 %v741, %v746
    %v751 = vadd.f32 %v747, %v748
    %v752 = vadd.f32 %v749, %v750
    %v753 = vadd.f32 %v751, %v752
    %v755 = vrot.slane %v753, 6
    %v757 = vadd.f32 %v220, %v755
    %v758 = vxor.u32 %v757, 2147483648
    %v759 = vmul.f32 %v758, 1.442695
    %v760 = vpow.pop %v759
    %v761 = vadd.f32 %v760, 1.0
    %v762 = vrcp.pop %v761
    %v763 = vmul.f32 1.0, %v762
    %v764 = vmul.f32 %v763, 2.0
    %v765 = vsub.f32 %v764, 1.0
    %v767 = vrot.slane %v699, 6
    %v769 = vmul.f32 %v763, %v767
    %771 = vrot.lane.b32.xlu0 %v765, 112
    %v772 = vpop.permute.xlu0 %771
    %v774 = vmul.f32 %v763, %v772
    %776 = vrot.lane.b32.xlu0 %v774, 8
    %v777 = vpop.permute.xlu0 %776
    %v779 = vadd.f32 %v769, %v777
    %v780 = vtanh.pop %v779
    %782 = vrot.lane.b32.xlu0 %v780, 16
    %v783 = vpop.permute.xlu0 %782
    %v785 = vmul.f32 %v763, %v783
    %787 = vset.pattern.permute.xlu0 24
    %788 = vperm.xlu0 %787, %v785
    %v789 = vpop.permute.xlu0 %788
    %v791 = vmul.f32 %v789, %v236
    %792 = vset.pattern.permute.xlu0 25
    %793 = vperm.xlu0 %792, %v785
    %v794 = vpop.permute.xlu0 %793
    %v796 = vmul.f32 %v794, %v240
    %797 = vset.pattern.permute.xlu0 26
    %798 = vperm.xlu0 %797, %v785
    %v799 = vpop.permute.xlu0 %798
    %v801 = vmul.f32 %v799, %v244
    %802 = vset.pattern.permute.xlu0 27
    %803 = vperm.xlu0 %802, %v785
    %v804 = vpop.permute.xlu0 %803
    %v806 = vmul.f32 %v804, %v248
    %807 = vset.pattern.permute.xlu0 28
    %808 = vperm.xlu0 %807, %v785
    %v809 = vpop.permute.xlu0 %808
    %v811 = vmul.f32 %v809, %v252
    %812 = vset.pattern.permute.xlu0 29
    %813 = vperm.xlu0 %812, %v785
    %v814 = vpop.permute.xlu0 %813
    %v816 = vmul.f32 %v814, %v256
    %817 = vset.pattern.permute.xlu0 30
    %818 = vperm.xlu0 %817, %v785
    %v819 = vpop.permute.xlu0 %818
    %v821 = vmul.f32 %v819, %v260
    %822 = vset.pattern.permute.xlu0 31
    %823 = vperm.xlu0 %822, %v785
    %v824 = vpop.permute.xlu0 %823
    %v826 = vmul.f32 %v824, %v264
    %v827 = vadd.f32 %v791, %v796
    %v828 = vadd.f32 %v801, %v806
    %v829 = vadd.f32 %v811, %v816
    %v830 = vadd.f32 %v821, %v826
    %v831 = vadd.f32 %v827, %v828
    %v832 = vadd.f32 %v829, %v830
    %v833 = vadd.f32 %v831, %v832
    %v835 = vrot.slane %v833, 6
    %v837 = vadd.f32 %v220, %v835
    %v838 = vxor.u32 %v837, 2147483648
    %v839 = vmul.f32 %v838, 1.442695
    %v840 = vpow.pop %v839
    %v841 = vadd.f32 %v840, 1.0
    %v842 = vrcp.pop %v841
    %v843 = vmul.f32 1.0, %v842
    %v844 = vmul.f32 %v843, 2.0
    %v845 = vsub.f32 %v844, 1.0
    %v847 = vrot.slane %v779, 6
    %v849 = vmul.f32 %v843, %v847
    %851 = vrot.lane.b32.xlu0 %v845, 112
    %v852 = vpop.permute.xlu0 %851
    %v854 = vmul.f32 %v843, %v852
    %856 = vrot.lane.b32.xlu0 %v854, 8
    %v857 = vpop.permute.xlu0 %856
    %v859 = vadd.f32 %v849, %v857
    %v860 = vtanh.pop %v859
    %862 = vrot.lane.b32.xlu0 %v860, 16
    %v863 = vpop.permute.xlu0 %862
    %v865 = vmul.f32 %v843, %v863
    %867 = vset.pattern.permute.xlu0 24
    %868 = vperm.xlu0 %867, %v865
    %v869 = vpop.permute.xlu0 %868
    %v871 = vmul.f32 %v869, %v236
    %872 = vset.pattern.permute.xlu0 25
    %873 = vperm.xlu0 %872, %v865
    %v874 = vpop.permute.xlu0 %873
    %v876 = vmul.f32 %v874, %v240
    %877 = vset.pattern.permute.xlu0 26
    %878 = vperm.xlu0 %877, %v865
    %v879 = vpop.permute.xlu0 %878
    %v881 = vmul.f32 %v879, %v244
    %882 = vset.pattern.permute.xlu0 27
    %883 = vperm.xlu0 %882, %v865
    %v884 = vpop.permute.xlu0 %883
    %v886 = vmul.f32 %v884, %v248
    %887 = vset.pattern.permute.xlu0 28
    %888 = vperm.xlu0 %887, %v865
    %v889 = vpop.permute.xlu0 %888
    %v891 = vmul.f32 %v889, %v252
    %892 = vset.pattern.permute.xlu0 29
    %893 = vperm.xlu0 %892, %v865
    %v894 = vpop.permute.xlu0 %893
    %v896 = vmul.f32 %v894, %v256
    %897 = vset.pattern.permute.xlu0 30
    %898 = vperm.xlu0 %897, %v865
    %v899 = vpop.permute.xlu0 %898
    %v901 = vmul.f32 %v899, %v260
    %902 = vset.pattern.permute.xlu0 31
    %903 = vperm.xlu0 %902, %v865
    %v904 = vpop.permute.xlu0 %903
    %v906 = vmul.f32 %v904, %v264
    %v907 = vadd.f32 %v871, %v876
    %v908 = vadd.f32 %v881, %v886
    %v909 = vadd.f32 %v891, %v896
    %v910 = vadd.f32 %v901, %v906
    %v911 = vadd.f32 %v907, %v908
    %v912 = vadd.f32 %v909, %v910
    %v913 = vadd.f32 %v911, %v912
    %v915 = vrot.slane %v913, 6
    %v917 = vadd.f32 %v225, %v915
    %v918 = vxor.u32 %v917, 2147483648
    %v919 = vmul.f32 %v918, 1.442695
    %v920 = vpow.pop %v919
    %v921 = vadd.f32 %v920, 1.0
    %v922 = vrcp.pop %v921
    %v923 = vmul.f32 1.0, %v922
    %v924 = vmul.f32 %v923, 2.0
    %v925 = vsub.f32 %v924, 1.0
    %v927 = vrot.slane %v859, 6
    %v929 = vmul.f32 %v923, %v927
    %931 = vrot.lane.b32.xlu0 %v925, 112
    %v932 = vpop.permute.xlu0 %931
    %v934 = vmul.f32 %v923, %v932
    %936 = vrot.lane.b32.xlu0 %v934, 8
    %v937 = vpop.permute.xlu0 %936
    %v939 = vadd.f32 %v929, %v937
    %v940 = vtanh.pop %v939
    %942 = vrot.lane.b32.xlu0 %v940, 16
    %v943 = vpop.permute.xlu0 %942
    %v945 = vmul.f32 %v923, %v943
    %947 = vset.pattern.permute.xlu0 24
    %948 = vperm.xlu0 %947, %v945
    %v949 = vpop.permute.xlu0 %948
    %v951 = vmul.f32 %v949, %v236
    %952 = vset.pattern.permute.xlu0 25
    %953 = vperm.xlu0 %952, %v945
    %v954 = vpop.permute.xlu0 %953
    %v956 = vmul.f32 %v954, %v240
    %957 = vset.pattern.permute.xlu0 26
    %958 = vperm.xlu0 %957, %v945
    %v959 = vpop.permute.xlu0 %958
    %v961 = vmul.f32 %v959, %v244
    %962 = vset.pattern.permute.xlu0 27
    %963 = vperm.xlu0 %962, %v945
    %v964 = vpop.permute.xlu0 %963
    %v966 = vmul.f32 %v964, %v248
    %967 = vset.pattern.permute.xlu0 28
    %968 = vperm.xlu0 %967, %v945
    %v969 = vpop.permute.xlu0 %968
    %v971 = vmul.f32 %v969, %v252
    %972 = vset.pattern.permute.xlu0 29
    %973 = vperm.xlu0 %972, %v945
    %v974 = vpop.permute.xlu0 %973
    %v976 = vmul.f32 %v974, %v256
    %977 = vset.pattern.permute.xlu0 30
    %978 = vperm.xlu0 %977, %v945
    %v979 = vpop.permute.xlu0 %978
    %v981 = vmul.f32 %v979, %v260
    %982 = vset.pattern.permute.xlu0 31
    %983 = vperm.xlu0 %982, %v945
    %v984 = vpop.permute.xlu0 %983
    %v986 = vmul.f32 %v984, %v264
    %v987 = vadd.f32 %v951, %v956
    %v988 = vadd.f32 %v961, %v966
    %v989 = vadd.f32 %v971, %v976
    %v990 = vadd.f32 %v981, %v986
    %v991 = vadd.f32 %v987, %v988
    %v992 = vadd.f32 %v989, %v990
    %v993 = vadd.f32 %v991, %v992
    %v995 = vrot.slane %v993, 6
    %v997 = vadd.f32 %v225, %v995
    %v998 = vxor.u32 %v997, 2147483648
    %v999 = vmul.f32 %v998, 1.442695
    %v1000 = vpow.pop %v999
    %v1001 = vadd.f32 %v1000, 1.0
    %v1002 = vrcp.pop %v1001
    %v1003 = vmul.f32 1.0, %v1002
    %v1004 = vmul.f32 %v1003, 2.0
    %v1005 = vsub.f32 %v1004, 1.0
    %v1007 = vrot.slane %v939, 6
    %v1009 = vmul.f32 %v1003, %v1007
    %1011 = vrot.lane.b32.xlu0 %v1005, 112
    %v1012 = vpop.permute.xlu0 %1011
    %v1014 = vmul.f32 %v1003, %v1012
    %1016 = vrot.lane.b32.xlu0 %v1014, 8
    %v1017 = vpop.permute.xlu0 %1016
    %v1019 = vadd.f32 %v1009, %v1017
    %v1020 = vtanh.pop %v1019
    %1022 = vrot.lane.b32.xlu0 %v1020, 16
    %v1023 = vpop.permute.xlu0 %1022
    %v1025 = vmul.f32 %v1003, %v1023
    %1027 = vset.pattern.permute.xlu0 24
    %1028 = vperm.xlu0 %1027, %v1025
    %v1029 = vpop.permute.xlu0 %1028
    %v1031 = vmul.f32 %v1029, %v236
    %1032 = vset.pattern.permute.xlu0 25
    %1033 = vperm.xlu0 %1032, %v1025
    %v1034 = vpop.permute.xlu0 %1033
    %v1036 = vmul.f32 %v1034, %v240
    %1037 = vset.pattern.permute.xlu0 26
    %1038 = vperm.xlu0 %1037, %v1025
    %v1039 = vpop.permute.xlu0 %1038
    %v1041 = vmul.f32 %v1039, %v244
    %1042 = vset.pattern.permute.xlu0 27
    %1043 = vperm.xlu0 %1042, %v1025
    %v1044 = vpop.permute.xlu0 %1043
    %v1046 = vmul.f32 %v1044, %v248
    %1047 = vset.pattern.permute.xlu0 28
    %1048 = vperm.xlu0 %1047, %v1025
    %v1049 = vpop.permute.xlu0 %1048
    %v1051 = vmul.f32 %v1049, %v252
    %1052 = vset.pattern.permute.xlu0 29
    %1053 = vperm.xlu0 %1052, %v1025
    %v1054 = vpop.permute.xlu0 %1053
    %v1056 = vmul.f32 %v1054, %v256
    %1057 = vset.pattern.permute.xlu0 30
    %1058 = vperm.xlu0 %1057, %v1025
    %v1059 = vpop.permute.xlu0 %1058
    %v1061 = vmul.f32 %v1059, %v260
    %1062 = vset.pattern.permute.xlu0 31
    %1063 = vperm.xlu0 %1062, %v1025
    %v1064 = vpop.permute.xlu0 %1063
    %v1066 = vmul.f32 %v1064, %v264
    %v1067 = vadd.f32 %v1031, %v1036
    %v1068 = vadd.f32 %v1041, %v1046
    %v1069 = vadd.f32 %v1051, %v1056
    %v1070 = vadd.f32 %v1061, %v1066
    %v1071 = vadd.f32 %v1067, %v1068
    %v1072 = vadd.f32 %v1069, %v1070
    %v1073 = vadd.f32 %v1071, %v1072
    %v1075 = vrot.slane %v1073, 6
    %v1077 = vadd.f32 %v225, %v1075
    %v1078 = vxor.u32 %v1077, 2147483648
    %v1079 = vmul.f32 %v1078, 1.442695
    %v1080 = vpow.pop %v1079
    %v1081 = vadd.f32 %v1080, 1.0
    %v1082 = vrcp.pop %v1081
    %v1083 = vmul.f32 1.0, %v1082
    %v1084 = vmul.f32 %v1083, 2.0
    %v1085 = vsub.f32 %v1084, 1.0
    %v1087 = vrot.slane %v1019, 6
    %v1089 = vmul.f32 %v1083, %v1087
    %1091 = vrot.lane.b32.xlu0 %v1085, 112
    %v1092 = vpop.permute.xlu0 %1091
    %v1094 = vmul.f32 %v1083, %v1092
    %1096 = vrot.lane.b32.xlu0 %v1094, 8
    %v1097 = vpop.permute.xlu0 %1096
    %v1099 = vadd.f32 %v1089, %v1097
    %v1100 = vtanh.pop %v1099
    %1102 = vrot.lane.b32.xlu0 %v1100, 16
    %v1103 = vpop.permute.xlu0 %1102
    %v1105 = vmul.f32 %v1083, %v1103
    %1107 = vset.pattern.permute.xlu0 24
    %1108 = vperm.xlu0 %1107, %v1105
    %v1109 = vpop.permute.xlu0 %1108
    %v1111 = vmul.f32 %v1109, %v236
    %1112 = vset.pattern.permute.xlu0 25
    %1113 = vperm.xlu0 %1112, %v1105
    %v1114 = vpop.permute.xlu0 %1113
    %v1116 = vmul.f32 %v1114, %v240
    %1117 = vset.pattern.permute.xlu0 26
    %1118 = vperm.xlu0 %1117, %v1105
    %v1119 = vpop.permute.xlu0 %1118
    %v1121 = vmul.f32 %v1119, %v244
    %1122 = vset.pattern.permute.xlu0 27
    %1123 = vperm.xlu0 %1122, %v1105
    %v1124 = vpop.permute.xlu0 %1123
    %v1126 = vmul.f32 %v1124, %v248
    %1127 = vset.pattern.permute.xlu0 28
    %1128 = vperm.xlu0 %1127, %v1105
    %v1129 = vpop.permute.xlu0 %1128
    %v1131 = vmul.f32 %v1129, %v252
    %1132 = vset.pattern.permute.xlu0 29
    %1133 = vperm.xlu0 %1132, %v1105
    %v1134 = vpop.permute.xlu0 %1133
    %v1136 = vmul.f32 %v1134, %v256
    %1137 = vset.pattern.permute.xlu0 30
    %1138 = vperm.xlu0 %1137, %v1105
    %v1139 = vpop.permute.xlu0 %1138
    %v1141 = vmul.f32 %v1139, %v260
    %1142 = vset.pattern.permute.xlu0 31
    %1143 = vperm.xlu0 %1142, %v1105
    %v1144 = vpop.permute.xlu0 %1143
    %v1146 = vmul.f32 %v1144, %v264
    %v1147 = vadd.f32 %v1111, %v1116
    %v1148 = vadd.f32 %v1121, %v1126
    %v1149 = vadd.f32 %v1131, %v1136
    %v1150 = vadd.f32 %v1141, %v1146
    %v1151 = vadd.f32 %v1147, %v1148
    %v1152 = vadd.f32 %v1149, %v1150
    %v1153 = vadd.f32 %v1151, %v1152
    %v1155 = vrot.slane %v1153, 6
    %v1157 = vadd.f32 %v225, %v1155
    %v1158 = vxor.u32 %v1157, 2147483648
    %v1159 = vmul.f32 %v1158, 1.442695
    %v1160 = vpow.pop %v1159
    %v1161 = vadd.f32 %v1160, 1.0
    %v1162 = vrcp.pop %v1161
    %v1163 = vmul.f32 1.0, %v1162
    %v1164 = vmul.f32 %v1163, 2.0
    %v1165 = vsub.f32 %v1164, 1.0
    %v1167 = vrot.slane %v1099, 6
    %v1169 = vmul.f32 %v1163, %v1167
    %1171 = vrot.lane.b32.xlu0 %v1165, 112
    %v1172 = vpop.permute.xlu0 %1171
    %v1174 = vmul.f32 %v1163, %v1172
    %1176 = vrot.lane.b32.xlu0 %v1174, 8
    %v1177 = vpop.permute.xlu0 %1176
    %v1179 = vadd.f32 %v1169, %v1177
    %v1180 = vtanh.pop %v1179
    %1182 = vrot.lane.b32.xlu0 %v1180, 16
    %v1183 = vpop.permute.xlu0 %1182
    %v1185 = vmul.f32 %v1163, %v1183
    %1187 = vset.pattern.permute.xlu0 24
    %1188 = vperm.xlu0 %1187, %v1185
    %v1189 = vpop.permute.xlu0 %1188
    %v1191 = vmul.f32 %v1189, %v236
    %1192 = vset.pattern.permute.xlu0 25
    %1193 = vperm.xlu0 %1192, %v1185
    %v1194 = vpop.permute.xlu0 %1193
    %v1196 = vmul.f32 %v1194, %v240
    %1197 = vset.pattern.permute.xlu0 26
    %1198 = vperm.xlu0 %1197, %v1185
    %v1199 = vpop.permute.xlu0 %1198
    %v1201 = vmul.f32 %v1199, %v244
    %1202 = vset.pattern.permute.xlu0 27
    %1203 = vperm.xlu0 %1202, %v1185
    %v1204 = vpop.permute.xlu0 %1203
    %v1206 = vmul.f32 %v1204, %v248
    %1207 = vset.pattern.permute.xlu0 28
    %1208 = vperm.xlu0 %1207, %v1185
    %v1209 = vpop.permute.xlu0 %1208
    %v1211 = vmul.f32 %v1209, %v252
    %1212 = vset.pattern.permute.xlu0 29
    %1213 = vperm.xlu0 %1212, %v1185
    %v1214 = vpop.permute.xlu0 %1213
    %v1216 = vmul.f32 %v1214, %v256
    %1217 = vset.pattern.permute.xlu0 30
    %1218 = vperm.xlu0 %1217, %v1185
    %v1219 = vpop.permute.xlu0 %1218
    %v1221 = vmul.f32 %v1219, %v260
    %1222 = vset.pattern.permute.xlu0 31
    %1223 = vperm.xlu0 %1222, %v1185
    %v1224 = vpop.permute.xlu0 %1223
    %v1226 = vmul.f32 %v1224, %v264
    %v1227 = vadd.f32 %v1191, %v1196
    %v1228 = vadd.f32 %v1201, %v1206
    %v1229 = vadd.f32 %v1211, %v1216
    %v1230 = vadd.f32 %v1221, %v1226
    %v1231 = vadd.f32 %v1227, %v1228
    %v1232 = vadd.f32 %v1229, %v1230
    %v1233 = vadd.f32 %v1231, %v1232
    %v1235 = vrot.slane %v1233, 6
    %v1237 = vadd.f32 %v230, %v1235
    %v1238 = vxor.u32 %v1237, 2147483648
    %v1239 = vmul.f32 %v1238, 1.442695
    %v1240 = vpow.pop %v1239
    %v1241 = vadd.f32 %v1240, 1.0
    %v1242 = vrcp.pop %v1241
    %v1243 = vmul.f32 1.0, %v1242
    %v1244 = vmul.f32 %v1243, 2.0
    %v1245 = vsub.f32 %v1244, 1.0
    %v1247 = vrot.slane %v1179, 6
    %v1249 = vmul.f32 %v1243, %v1247
    %1251 = vrot.lane.b32.xlu0 %v1245, 112
    %v1252 = vpop.permute.xlu0 %1251
    %v1254 = vmul.f32 %v1243, %v1252
    %1256 = vrot.lane.b32.xlu0 %v1254, 8
    %v1257 = vpop.permute.xlu0 %1256
    %v1259 = vadd.f32 %v1249, %v1257
    %v1260 = vtanh.pop %v1259
    %1262 = vrot.lane.b32.xlu0 %v1260, 16
    %v1263 = vpop.permute.xlu0 %1262
    %v1265 = vmul.f32 %v1243, %v1263
    %1267 = vset.pattern.permute.xlu0 24
    %1268 = vperm.xlu0 %1267, %v1265
    %v1269 = vpop.permute.xlu0 %1268
    %v1271 = vmul.f32 %v1269, %v236
    %1272 = vset.pattern.permute.xlu0 25
    %1273 = vperm.xlu0 %1272, %v1265
    %v1274 = vpop.permute.xlu0 %1273
    %v1276 = vmul.f32 %v1274, %v240
    %1277 = vset.pattern.permute.xlu0 26
    %1278 = vperm.xlu0 %1277, %v1265
    %v1279 = vpop.permute.xlu0 %1278
    %v1281 = vmul.f32 %v1279, %v244
    %1282 = vset.pattern.permute.xlu0 27
    %1283 = vperm.xlu0 %1282, %v1265
    %v1284 = vpop.permute.xlu0 %1283
    %v1286 = vmul.f32 %v1284, %v248
    %1287 = vset.pattern.permute.xlu0 28
    %1288 = vperm.xlu0 %1287, %v1265
    %v1289 = vpop.permute.xlu0 %1288
    %v1291 = vmul.f32 %v1289, %v252
    %1292 = vset.pattern.permute.xlu0 29
    %1293 = vperm.xlu0 %1292, %v1265
    %v1294 = vpop.permute.xlu0 %1293
    %v1296 = vmul.f32 %v1294, %v256
    %1297 = vset.pattern.permute.xlu0 30
    %1298 = vperm.xlu0 %1297, %v1265
    %v1299 = vpop.permute.xlu0 %1298
    %v1301 = vmul.f32 %v1299, %v260
    %1302 = vset.pattern.permute.xlu0 31
    %1303 = vperm.xlu0 %1302, %v1265
    %v1304 = vpop.permute.xlu0 %1303
    %v1306 = vmul.f32 %v1304, %v264
    %v1307 = vadd.f32 %v1271, %v1276
    %v1308 = vadd.f32 %v1281, %v1286
    %v1309 = vadd.f32 %v1291, %v1296
    %v1310 = vadd.f32 %v1301, %v1306
    %v1311 = vadd.f32 %v1307, %v1308
    %v1312 = vadd.f32 %v1309, %v1310
    %v1313 = vadd.f32 %v1311, %v1312
    %v1315 = vrot.slane %v1313, 6
    %v1317 = vadd.f32 %v230, %v1315
    %v1318 = vxor.u32 %v1317, 2147483648
    %v1319 = vmul.f32 %v1318, 1.442695
    %v1320 = vpow.pop %v1319
    %v1321 = vadd.f32 %v1320, 1.0
    %v1322 = vrcp.pop %v1321
    %v1323 = vmul.f32 1.0, %v1322
    %v1324 = vmul.f32 %v1323, 2.0
    %v1325 = vsub.f32 %v1324, 1.0
    %v1327 = vrot.slane %v1259, 6
    %v1329 = vmul.f32 %v1323, %v1327
    %1331 = vrot.lane.b32.xlu0 %v1325, 112
    %v1332 = vpop.permute.xlu0 %1331
    %v1334 = vmul.f32 %v1323, %v1332
    %1336 = vrot.lane.b32.xlu0 %v1334, 8
    %v1337 = vpop.permute.xlu0 %1336
    %v1339 = vadd.f32 %v1329, %v1337
    %v1340 = vtanh.pop %v1339
    %1342 = vrot.lane.b32.xlu0 %v1340, 16
    %v1343 = vpop.permute.xlu0 %1342
    %v1345 = vmul.f32 %v1323, %v1343
    %1347 = vset.pattern.permute.xlu0 24
    %1348 = vperm.xlu0 %1347, %v1345
    %v1349 = vpop.permute.xlu0 %1348
    %v1351 = vmul.f32 %v1349, %v236
    %1352 = vset.pattern.permute.xlu0 25
    %1353 = vperm.xlu0 %1352, %v1345
    %v1354 = vpop.permute.xlu0 %1353
    %v1356 = vmul.f32 %v1354, %v240
    %1357 = vset.pattern.permute.xlu0 26
    %1358 = vperm.xlu0 %1357, %v1345
    %v1359 = vpop.permute.xlu0 %1358
    %v1361 = vmul.f32 %v1359, %v244
    %1362 = vset.pattern.permute.xlu0 27
    %1363 = vperm.xlu0 %1362, %v1345
    %v1364 = vpop.permute.xlu0 %1363
    %v1366 = vmul.f32 %v1364, %v248
    %1367 = vset.pattern.permute.xlu0 28
    %1368 = vperm.xlu0 %1367, %v1345
    %v1369 = vpop.permute.xlu0 %1368
    %v1371 = vmul.f32 %v1369, %v252
    %1372 = vset.pattern.permute.xlu0 29
    %1373 = vperm.xlu0 %1372, %v1345
    %v1374 = vpop.permute.xlu0 %1373
    %v1376 = vmul.f32 %v1374, %v256
    %1377 = vset.pattern.permute.xlu0 30
    %1378 = vperm.xlu0 %1377, %v1345
    %v1379 = vpop.permute.xlu0 %1378
    %v1381 = vmul.f32 %v1379, %v260
    %1382 = vset.pattern.permute.xlu0 31
    %1383 = vperm.xlu0 %1382, %v1345
    %v1384 = vpop.permute.xlu0 %1383
    %v1386 = vmul.f32 %v1384, %v264
    %v1387 = vadd.f32 %v1351, %v1356
    %v1388 = vadd.f32 %v1361, %v1366
    %v1389 = vadd.f32 %v1371, %v1376
    %v1390 = vadd.f32 %v1381, %v1386
    %v1391 = vadd.f32 %v1387, %v1388
    %v1392 = vadd.f32 %v1389, %v1390
    %v1393 = vadd.f32 %v1391, %v1392
    %v1395 = vrot.slane %v1393, 6
    %v1397 = vadd.f32 %v230, %v1395
    %v1398 = vxor.u32 %v1397, 2147483648
    %v1399 = vmul.f32 %v1398, 1.442695
    %v1400 = vpow.pop %v1399
    %v1401 = vadd.f32 %v1400, 1.0
    %v1402 = vrcp.pop %v1401
    %v1403 = vmul.f32 1.0, %v1402
    %v1404 = vmul.f32 %v1403, 2.0
    %v1405 = vsub.f32 %v1404, 1.0
    %v1407 = vrot.slane %v1339, 6
    %v1409 = vmul.f32 %v1403, %v1407
    %1411 = vrot.lane.b32.xlu0 %v1405, 112
    %v1412 = vpop.permute.xlu0 %1411
    %v1414 = vmul.f32 %v1403, %v1412
    %1416 = vrot.lane.b32.xlu0 %v1414, 8
    %v1417 = vpop.permute.xlu0 %1416
    %v1419 = vadd.f32 %v1409, %v1417
    %v1420 = vtanh.pop %v1419
    %1422 = vrot.lane.b32.xlu0 %v1420, 16
    %v1423 = vpop.permute.xlu0 %1422
    %v1425 = vmul.f32 %v1403, %v1423
    %1427 = vset.pattern.permute.xlu0 24
    %1428 = vperm.xlu0 %1427, %v1425
    %v1429 = vpop.permute.xlu0 %1428
    %v1431 = vmul.f32 %v1429, %v236
    %1432 = vset.pattern.permute.xlu0 25
    %1433 = vperm.xlu0 %1432, %v1425
    %v1434 = vpop.permute.xlu0 %1433
    %v1436 = vmul.f32 %v1434, %v240
    %1437 = vset.pattern.permute.xlu0 26
    %1438 = vperm.xlu0 %1437, %v1425
    %v1439 = vpop.permute.xlu0 %1438
    %v1441 = vmul.f32 %v1439, %v244
    %1442 = vset.pattern.permute.xlu0 27
    %1443 = vperm.xlu0 %1442, %v1425
    %v1444 = vpop.permute.xlu0 %1443
    %v1446 = vmul.f32 %v1444, %v248
    %1447 = vset.pattern.permute.xlu0 28
    %1448 = vperm.xlu0 %1447, %v1425
    %v1449 = vpop.permute.xlu0 %1448
    %v1451 = vmul.f32 %v1449, %v252
    %1452 = vset.pattern.permute.xlu0 29
    %1453 = vperm.xlu0 %1452, %v1425
    %v1454 = vpop.permute.xlu0 %1453
    %v1456 = vmul.f32 %v1454, %v256
    %1457 = vset.pattern.permute.xlu0 30
    %1458 = vperm.xlu0 %1457, %v1425
    %v1459 = vpop.permute.xlu0 %1458
    %v1461 = vmul.f32 %v1459, %v260
    %1462 = vset.pattern.permute.xlu0 31
    %1463 = vperm.xlu0 %1462, %v1425
    %v1464 = vpop.permute.xlu0 %1463
    %v1466 = vmul.f32 %v1464, %v264
    %v1467 = vadd.f32 %v1431, %v1436
    %v1468 = vadd.f32 %v1441, %v1446
    %v1469 = vadd.f32 %v1451, %v1456
    %v1470 = vadd.f32 %v1461, %v1466
    %v1471 = vadd.f32 %v1467, %v1468
    %v1472 = vadd.f32 %v1469, %v1470
    %v1473 = vadd.f32 %v1471, %v1472
    %v1475 = vrot.slane %v1473, 6
    %v1477 = vadd.f32 %v230, %v1475
    %v1478 = vxor.u32 %v1477, 2147483648
    %v1479 = vmul.f32 %v1478, 1.442695
    %v1480 = vpow.pop %v1479
    %v1481 = vadd.f32 %v1480, 1.0
    %v1482 = vrcp.pop %v1481
    %v1483 = vmul.f32 1.0, %v1482
    %v1484 = vmul.f32 %v1483, 2.0
    %v1485 = vsub.f32 %v1484, 1.0
    %v1487 = vrot.slane %v1419, 6
    %v1489 = vmul.f32 %v1483, %v1487
    %1491 = vrot.lane.b32.xlu0 %v1485, 112
    %v1492 = vpop.permute.xlu0 %1491
    %v1494 = vmul.f32 %v1483, %v1492
    %1496 = vrot.lane.b32.xlu0 %v1494, 8
    %v1497 = vpop.permute.xlu0 %1496
    %v1499 = vadd.f32 %v1489, %v1497
    %v1500 = vtanh.pop %v1499
    %1502 = vrot.lane.b32.xlu0 %v1500, 16
    %v1503 = vpop.permute.xlu0 %1502
    %v1505 = vmul.f32 %v1483, %v1503
    %v1506 = vrot.slane %v385, 2
    %v1507 = vrot.slane %v465, 4
    %v1508 = vrot.slane %v545, 6
    %v1509 = vrot.slane %v705, 2
    %v1510 = vrot.slane %v785, 4
    %v1511 = vrot.slane %v865, 6
    %v1512 = vrot.slane %v1025, 2
    %v1513 = vrot.slane %v1105, 4
    %v1514 = vrot.slane %v1185, 6
    %v1515 = vrot.slane %v1345, 2
    %v1516 = vrot.slane %v1425, 4
    %v1518 = vrot.slane %v1505, 6
    %s1519 = scalar_lea.vmem %s1, 8
    %v1520 = vld [vmem:[%s1519] sm:$0xff]
    %s1521 = scalar_lea.vmem %s2, 8
    %v1522 = vld [vmem:[%s1521] sm:$0xff]
    %s1523 = scalar_lea.vmem %s3, 1
    %v1524 = vld [vmem:[%s1523] sm:$0x1]
    %v1526 = vlaneseq
    %v1527 = vshrl.u32 %v1526, 7
    %v1528 = vsub.s32 0, %v1527
    %v1529 = vrot.slane %v1524, %v1528
    %v1531 = vcombine.low %v305, %v1506
    %v1532 = vcombine.low %v1507, %v1508
    %v1534 = vunpack.c.l.s4 1983009808
    %v1535 = vunpack.c.0.s8 %v1534
    %v1536 = vlaneseq
    %v1537 = vshrl.u32 %v1536, 7
    %v1538 = vsub.s32 %v1535, %v1537
    %v1539 = vrot.slane %v1531, %v1538
    %v1541 = vunpack.c.l.s4 1983009808
    %v1542 = vunpack.c.0.s8 %v1541
    %v1543 = vlaneseq
    %v1544 = vshrl.u32 %v1543, 7
    %v1545 = vsub.s32 %v1542, %v1544
    %v1546 = vrot.slane %v1532, %v1545
    %v1547 = vcombine.low %v1539, %v1546
    %v1548 = vcombine.low %v625, %v1509
    %v1549 = vcombine.low %v1510, %v1511
    %v1551 = vunpack.c.l.s4 1983009808
    %v1552 = vunpack.c.0.s8 %v1551
    %v1553 = vlaneseq
    %v1554 = vshrl.u32 %v1553, 7
    %v1555 = vsub.s32 %v1552, %v1554
    %v1556 = vrot.slane %v1548, %v1555
    %v1558 = vunpack.c.l.s4 1983009808
    %v1559 = vunpack.c.0.s8 %v1558
    %v1560 = vlaneseq
    %v1561 = vshrl.u32 %v1560, 7
    %v1562 = vsub.s32 %v1559, %v1561
    %v1563 = vrot.slane %v1549, %v1562
    %v1564 = vcombine.low %v1556, %v1563
    %v1565 = vcombine.low %v945, %v1512
    %v1566 = vcombine.low %v1513, %v1514
    %v1568 = vunpack.c.l.s4 1983009808
    %v1569 = vunpack.c.0.s8 %v1568
    %v1570 = vlaneseq
    %v1571 = vshrl.u32 %v1570, 7
    %v1572 = vsub.s32 %v1569, %v1571
    %v1573 = vrot.slane %v1565, %v1572
    %v1575 = vunpack.c.l.s4 1983009808
    %v1576 = vunpack.c.0.s8 %v1575
    %v1577 = vlaneseq
    %v1578 = vshrl.u32 %v1577, 7
    %v1579 = vsub.s32 %v1576, %v1578
    %v1580 = vrot.slane %v1566, %v1579
    %v1581 = vcombine.low %v1573, %v1580
    %v1582 = vcombine.low %v1265, %v1515
    %v1583 = vcombine.low %v1516, %v1518
    %v1585 = vunpack.c.l.s4 1983009808
    %v1586 = vunpack.c.0.s8 %v1585
    %v1587 = vlaneseq
    %v1588 = vshrl.u32 %v1587, 7
    %v1589 = vsub.s32 %v1586, %v1588
    %v1590 = vrot.slane %v1582, %v1589
    %v1592 = vunpack.c.l.s4 1983009808
    %v1593 = vunpack.c.0.s8 %v1592
    %v1594 = vlaneseq
    %v1595 = vshrl.u32 %v1594, 7
    %v1596 = vsub.s32 %v1593, %v1595
    %v1597 = vrot.slane %v1583, %v1596
    %v1598 = vcombine.low %v1590, %v1597
    %1599 = vrot.lane.b32.xlu0 %v1547, 104
    %v1600 = vpop.permute.xlu0 %1599
    %1601 = vrot.lane.b32.xlu0 %v1564, 104
    %v1602 = vpop.permute.xlu0 %1601
    %1603 = vrot.lane.b32.xlu0 %v1581, 104
    %v1604 = vpop.permute.xlu0 %1603
    %1605 = vrot.lane.b32.xlu0 %v1598, 104
    %v1606 = vpop.permute.xlu0 %1605
    %v1607 = vsel %vm139, %v1600, 0
    %v1609 = vsel %vm139, %v1602, 0
    %v1611 = vsel %vm139, %v1604, 0
    %v1613 = vsel %vm139, %v1606, 0
    %1615 = vmatprep.subr.mxu0 0.0
    %1616 = vmatpush1.msra.mxu0 0.0
    %1617 = vmatprep.subr.mxu0 0.0
    %1618 = vmatpush1.msra.mxu0 0.0
    %1619 = vmatprep.subr.mxu0 0.0
    %1620 = vmatpush1.msra.mxu0 0.0
    %1621 = vmatprep.subr.mxu0 0.0
    %1622 = vmatpush1.msra.mxu0 0.0
    %1623 = vmatprep.subr.mxu0 0.0
    %1624 = vmatpush1.msra.mxu0 0.0
    %1625 = vmatprep.subr.mxu0 0.0
    %1626 = vmatpush1.msra.mxu0 0.0
    %1627 = vmatprep.subr.mxu0 0.0
    %1628 = vmatpush1.msra.mxu0 0.0
    %1629 = vmatprep.subr.mxu0 0.0
    %1630 = vmatpush1.msra.mxu0 0.0
    %1631 = vmatprep.subr.mxu0 0.0
    %1632 = vmatpush1.msra.mxu0 0.0
    %1633 = vmatprep.subr.mxu0 0.0
    %1634 = vmatpush1.msra.mxu0 0.0
    %1635 = vmatprep.subr.mxu0 0.0
    %1636 = vmatpush1.msra.mxu0 0.0
    %1637 = vmatprep.subr.mxu0 0.0
    %1638 = vmatpush1.msra.mxu0 0.0
    %1639 = vmatprep.subr.mxu0 0.0
    %1640 = vmatpush1.msra.mxu0 0.0
    %1641 = vmatprep.subr.mxu0 0.0
    %1642 = vmatpush1.msra.mxu0 0.0
    %1643 = vmatprep.subr.mxu0 0.0
    %1644 = vmatpush1.msra.mxu0 0.0
    %1645 = vmatprep.subr.mxu0 0.0
    %1646 = vmatpush1.msra.mxu0 %v1520
    %1647 = vmatprep.subr.mxu0 0.0
    %1648 = vmatpush2.msra.mxu0 0.0
    %1649 = vmatprep.subr.mxu0 0.0
    %1650 = vmatpush2.msra.mxu0 0.0
    %1651 = vmatprep.subr.mxu0 0.0
    %1652 = vmatpush2.msra.mxu0 0.0
    %1653 = vmatprep.subr.mxu0 0.0
    %1654 = vmatpush2.msra.mxu0 0.0
    %1655 = vmatprep.subr.mxu0 0.0
    %1656 = vmatpush2.msra.mxu0 0.0
    %1657 = vmatprep.subr.mxu0 0.0
    %1658 = vmatpush2.msra.mxu0 0.0
    %1659 = vmatprep.subr.mxu0 0.0
    %1660 = vmatpush2.msra.mxu0 0.0
    %1661 = vmatprep.subr.mxu0 0.0
    %1662 = vmatpush2.msra.mxu0 0.0
    %1663 = vmatprep.subr.mxu0 0.0
    %1664 = vmatpush2.msra.mxu0 0.0
    %1665 = vmatprep.subr.mxu0 0.0
    %1666 = vmatpush2.msra.mxu0 0.0
    %1667 = vmatprep.subr.mxu0 0.0
    %1668 = vmatpush2.msra.mxu0 0.0
    %1669 = vmatprep.subr.mxu0 0.0
    %1670 = vmatpush2.msra.mxu0 0.0
    %1671 = vmatprep.subr.mxu0 0.0
    %1672 = vmatpush2.msra.mxu0 0.0
    %1673 = vmatprep.subr.mxu0 0.0
    %1674 = vmatpush2.msra.mxu0 0.0
    %1675 = vmatprep.subr.mxu0 0.0
    %1676 = vmatpush2.msra.mxu0 0.0
    %1677 = vmatprep.subr.mxu0 0.0
    %1678 = vmatpush2.msra.mxu0 0.0
    %1679 = vmatprep.mubr.f32.mxu0 0.0
    %1680 = vmatmul.mubr.f32.gmra.mxu0 %v1607
    %v1681 = vpop.f32.mrf.mxu0
    %v1682 = vadd.f32 %v1529, %v1681
    %v1683 = vpop.f32.mrf.mxu0
    %1684 = vmatprep.mubr.f32.mxu0 0.0
    %1685 = vmatmul.mubr.f32.gmra.mxu0 %v1609
    %v1686 = vpop.f32.mrf.mxu0
    %v1687 = vadd.f32 %v1529, %v1686
    %v1688 = vpop.f32.mrf.mxu0
    %1689 = vmatprep.mubr.f32.mxu0 0.0
    %1690 = vmatmul.mubr.f32.gmra.mxu0 %v1611
    %v1691 = vpop.f32.mrf.mxu0
    %v1692 = vadd.f32 %v1529, %v1691
    %v1693 = vpop.f32.mrf.mxu0
    %1694 = vmatprep.mubr.f32.mxu0 0.0
    %1695 = vmatmul.mubr.f32.gmra.mxu0 %v1613
    %v1696 = vpop.f32.mrf.mxu0
    %v1697 = vadd.f32 %v1529, %v1696
    %v1698 = vpop.f32.mrf.mxu0
    %1699 = vdwg.mxu0
    %v1700 = vlaneseq
    %v1701 = vshrl.u32 %v1700, 7
    %v1702 = vsub.s32 0, %v1701
    %v1703 = vrot.slane %v1522, %v1702
    %v1704 = vlaneseq
    %v1705 = vshrl.u32 %v1704, 7
    %v1706 = vsub.s32 1, %v1705
    %v1707 = vrot.slane %v1522, %v1706
    %v1708 = vlaneseq
    %v1709 = vshrl.u32 %v1708, 7
    %v1710 = vsub.s32 2, %v1709
    %v1711 = vrot.slane %v1522, %v1710
    %v1712 = vlaneseq
    %v1713 = vshrl.u32 %v1712, 7
    %v1714 = vsub.s32 3, %v1713
    %v1715 = vrot.slane %v1522, %v1714
    %v1716 = vlaneseq
    %v1717 = vshrl.u32 %v1716, 7
    %v1718 = vsub.s32 4, %v1717
    %v1719 = vrot.slane %v1522, %v1718
    %v1720 = vlaneseq
    %v1721 = vshrl.u32 %v1720, 7
    %v1722 = vsub.s32 5, %v1721
    %v1723 = vrot.slane %v1522, %v1722
    %v1724 = vlaneseq
    %v1725 = vshrl.u32 %v1724, 7
    %v1726 = vsub.s32 6, %v1725
    %v1727 = vrot.slane %v1522, %v1726
    %v1728 = vlaneseq
    %v1729 = vshrl.u32 %v1728, 7
    %v1730 = vsub.s32 7, %v1729
    %v1731 = vrot.slane %v1522, %v1730
    %v1732 = vmul.f32 %v1703, 0.0
    %v1733 = vmul.f32 %v1707, 0.0
    %v1734 = vmul.f32 %v1711, 0.0
    %v1735 = vmul.f32 %v1715, 0.0
    %v1736 = vmul.f32 %v1719, 0.0
    %v1737 = vmul.f32 %v1723, 0.0
    %v1738 = vmul.f32 %v1727, 0.0
    %v1739 = vmul.f32 %v1731, 0.0
    %v1740 = vadd.f32 %v1732, %v1733
    %v1741 = vadd.f32 %v1734, %v1735
    %v1742 = vadd.f32 %v1736, %v1737
    %v1743 = vadd.f32 %v1738, %v1739
    %v1744 = vadd.f32 %v1740, %v1741
    %v1745 = vadd.f32 %v1742, %v1743
    %v1746 = vadd.f32 %v1744, %v1745
    %v1747 = vadd.f32 %v1682, %v1746
    %v1748 = vxor.u32 %v1747, 2147483648
    %v1749 = vmul.f32 %v1748, 1.442695
    %v1750 = vpow.pop %v1749
    %v1751 = vadd.f32 %v1750, 1.0
    %v1752 = vrcp.pop %v1751
    %v1753 = vmul.f32 1.0, %v1752
    %v1754 = vmul.f32 %v1753, 2.0
    %v1755 = vsub.f32 %v1754, 1.0
    %v1756 = vmul.f32 %v1753, 0.0
    %1758 = vrot.lane.b32.xlu0 %v1755, 112
    %v1759 = vpop.permute.xlu0 %1758
    %v1761 = vmul.f32 %v1753, %v1759
    %1763 = vrot.lane.b32.xlu0 %v1761, 8
    %v1764 = vpop.permute.xlu0 %1763
    %v1766 = vadd.f32 %v1756, %v1764
    %v1767 = vtanh.pop %v1766
    %1769 = vrot.lane.b32.xlu0 %v1767, 16
    %v1770 = vpop.permute.xlu0 %1769
    %v1772 = vmul.f32 %v1753, %v1770
    %1774 = vset.pattern.permute.xlu0 24
    %1775 = vperm.xlu0 %1774, %v1772
    %v1776 = vpop.permute.xlu0 %1775
    %v1778 = vmul.f32 %v1776, %v1703
    %1779 = vset.pattern.permute.xlu0 25
    %1780 = vperm.xlu0 %1779, %v1772
    %v1781 = vpop.permute.xlu0 %1780
    %v1783 = vmul.f32 %v1781, %v1707
    %1784 = vset.pattern.permute.xlu0 26
    %1785 = vperm.xlu0 %1784, %v1772
    %v1786 = vpop.permute.xlu0 %1785
    %v1788 = vmul.f32 %v1786, %v1711
    %1789 = vset.pattern.permute.xlu0 27
    %1790 = vperm.xlu0 %1789, %v1772
    %v1791 = vpop.permute.xlu0 %1790
    %v1793 = vmul.f32 %v1791, %v1715
    %1794 = vset.pattern.permute.xlu0 28
    %1795 = vperm.xlu0 %1794, %v1772
    %v1796 = vpop.permute.xlu0 %1795
    %v1798 = vmul.f32 %v1796, %v1719
    %1799 = vset.pattern.permute.xlu0 29
    %1800 = vperm.xlu0 %1799, %v1772
    %v1801 = vpop.permute.xlu0 %1800
    %v1803 = vmul.f32 %v1801, %v1723
    %1804 = vset.pattern.permute.xlu0 30
    %1805 = vperm.xlu0 %1804, %v1772
    %v1806 = vpop.permute.xlu0 %1805
    %v1808 = vmul.f32 %v1806, %v1727
    %1809 = vset.pattern.permute.xlu0 31
    %1810 = vperm.xlu0 %1809, %v1772
    %v1811 = vpop.permute.xlu0 %1810
    %v1813 = vmul.f32 %v1811, %v1731
    %v1814 = vadd.f32 %v1778, %v1783
    %v1815 = vadd.f32 %v1788, %v1793
    %v1816 = vadd.f32 %v1798, %v1803
    %v1817 = vadd.f32 %v1808, %v1813
    %v1818 = vadd.f32 %v1814, %v1815
    %v1819 = vadd.f32 %v1816, %v1817
    %v1820 = vadd.f32 %v1818, %v1819
    %v1822 = vrot.slane %v1820, 6
    %v1824 = vadd.f32 %v1682, %v1822
    %v1825 = vxor.u32 %v1824, 2147483648
    %v1826 = vmul.f32 %v1825, 1.442695
    %v1827 = vpow.pop %v1826
    %v1828 = vadd.f32 %v1827, 1.0
    %v1829 = vrcp.pop %v1828
    %v1830 = vmul.f32 1.0, %v1829
    %v1831 = vmul.f32 %v1830, 2.0
    %v1832 = vsub.f32 %v1831, 1.0
    %v1834 = vrot.slane %v1766, 6
    %v1836 = vmul.f32 %v1830, %v1834
    %1838 = vrot.lane.b32.xlu0 %v1832, 112
    %v1839 = vpop.permute.xlu0 %1838
    %v1841 = vmul.f32 %v1830, %v1839
    %1843 = vrot.lane.b32.xlu0 %v1841, 8
    %v1844 = vpop.permute.xlu0 %1843
    %v1846 = vadd.f32 %v1836, %v1844
    %v1847 = vtanh.pop %v1846
    %1849 = vrot.lane.b32.xlu0 %v1847, 16
    %v1850 = vpop.permute.xlu0 %1849
    %v1852 = vmul.f32 %v1830, %v1850
    %1854 = vset.pattern.permute.xlu0 24
    %1855 = vperm.xlu0 %1854, %v1852
    %v1856 = vpop.permute.xlu0 %1855
    %v1858 = vmul.f32 %v1856, %v1703
    %1859 = vset.pattern.permute.xlu0 25
    %1860 = vperm.xlu0 %1859, %v1852
    %v1861 = vpop.permute.xlu0 %1860
    %v1863 = vmul.f32 %v1861, %v1707
    %1864 = vset.pattern.permute.xlu0 26
    %1865 = vperm.xlu0 %1864, %v1852
    %v1866 = vpop.permute.xlu0 %1865
    %v1868 = vmul.f32 %v1866, %v1711
    %1869 = vset.pattern.permute.xlu0 27
    %1870 = vperm.xlu0 %1869, %v1852
    %v1871 = vpop.permute.xlu0 %1870
    %v1873 = vmul.f32 %v1871, %v1715
    %1874 = vset.pattern.permute.xlu0 28
    %1875 = vperm.xlu0 %1874, %v1852
    %v1876 = vpop.permute.xlu0 %1875
    %v1878 = vmul.f32 %v1876, %v1719
    %1879 = vset.pattern.permute.xlu0 29
    %1880 = vperm.xlu0 %1879, %v1852
    %v1881 = vpop.permute.xlu0 %1880
    %v1883 = vmul.f32 %v1881, %v1723
    %1884 = vset.pattern.permute.xlu0 30
    %1885 = vperm.xlu0 %1884, %v1852
    %v1886 = vpop.permute.xlu0 %1885
    %v1888 = vmul.f32 %v1886, %v1727
    %1889 = vset.pattern.permute.xlu0 31
    %1890 = vperm.xlu0 %1889, %v1852
    %v1891 = vpop.permute.xlu0 %1890
    %v1893 = vmul.f32 %v1891, %v1731
    %v1894 = vadd.f32 %v1858, %v1863
    %v1895 = vadd.f32 %v1868, %v1873
    %v1896 = vadd.f32 %v1878, %v1883
    %v1897 = vadd.f32 %v1888, %v1893
    %v1898 = vadd.f32 %v1894, %v1895
    %v1899 = vadd.f32 %v1896, %v1897
    %v1900 = vadd.f32 %v1898, %v1899
    %v1902 = vrot.slane %v1900, 6
    %v1904 = vadd.f32 %v1682, %v1902
    %v1905 = vxor.u32 %v1904, 2147483648
    %v1906 = vmul.f32 %v1905, 1.442695
    %v1907 = vpow.pop %v1906
    %v1908 = vadd.f32 %v1907, 1.0
    %v1909 = vrcp.pop %v1908
    %v1910 = vmul.f32 1.0, %v1909
    %v1911 = vmul.f32 %v1910, 2.0
    %v1912 = vsub.f32 %v1911, 1.0
    %v1914 = vrot.slane %v1846, 6
    %v1916 = vmul.f32 %v1910, %v1914
    %1918 = vrot.lane.b32.xlu0 %v1912, 112
    %v1919 = vpop.permute.xlu0 %1918
    %v1921 = vmul.f32 %v1910, %v1919
    %1923 = vrot.lane.b32.xlu0 %v1921, 8
    %v1924 = vpop.permute.xlu0 %1923
    %v1926 = vadd.f32 %v1916, %v1924
    %v1927 = vtanh.pop %v1926
    %1929 = vrot.lane.b32.xlu0 %v1927, 16
    %v1930 = vpop.permute.xlu0 %1929
    %v1932 = vmul.f32 %v1910, %v1930
    %1934 = vset.pattern.permute.xlu0 24
    %1935 = vperm.xlu0 %1934, %v1932
    %v1936 = vpop.permute.xlu0 %1935
    %v1938 = vmul.f32 %v1936, %v1703
    %1939 = vset.pattern.permute.xlu0 25
    %1940 = vperm.xlu0 %1939, %v1932
    %v1941 = vpop.permute.xlu0 %1940
    %v1943 = vmul.f32 %v1941, %v1707
    %1944 = vset.pattern.permute.xlu0 26
    %1945 = vperm.xlu0 %1944, %v1932
    %v1946 = vpop.permute.xlu0 %1945
    %v1948 = vmul.f32 %v1946, %v1711
    %1949 = vset.pattern.permute.xlu0 27
    %1950 = vperm.xlu0 %1949, %v1932
    %v1951 = vpop.permute.xlu0 %1950
    %v1953 = vmul.f32 %v1951, %v1715
    %1954 = vset.pattern.permute.xlu0 28
    %1955 = vperm.xlu0 %1954, %v1932
    %v1956 = vpop.permute.xlu0 %1955
    %v1958 = vmul.f32 %v1956, %v1719
    %1959 = vset.pattern.permute.xlu0 29
    %1960 = vperm.xlu0 %1959, %v1932
    %v1961 = vpop.permute.xlu0 %1960
    %v1963 = vmul.f32 %v1961, %v1723
    %1964 = vset.pattern.permute.xlu0 30
    %1965 = vperm.xlu0 %1964, %v1932
    %v1966 = vpop.permute.xlu0 %1965
    %v1968 = vmul.f32 %v1966, %v1727
    %1969 = vset.pattern.permute.xlu0 31
    %1970 = vperm.xlu0 %1969, %v1932
    %v1971 = vpop.permute.xlu0 %1970
    %v1973 = vmul.f32 %v1971, %v1731
    %v1974 = vadd.f32 %v1938, %v1943
    %v1975 = vadd.f32 %v1948, %v1953
    %v1976 = vadd.f32 %v1958, %v1963
    %v1977 = vadd.f32 %v1968, %v1973
    %v1978 = vadd.f32 %v1974, %v1975
    %v1979 = vadd.f32 %v1976, %v1977
    %v1980 = vadd.f32 %v1978, %v1979
    %v1982 = vrot.slane %v1980, 6
    %v1984 = vadd.f32 %v1682, %v1982
    %v1985 = vxor.u32 %v1984, 2147483648
    %v1986 = vmul.f32 %v1985, 1.442695
    %v1987 = vpow.pop %v1986
    %v1988 = vadd.f32 %v1987, 1.0
    %v1989 = vrcp.pop %v1988
    %v1990 = vmul.f32 1.0, %v1989
    %v1991 = vmul.f32 %v1990, 2.0
    %v1992 = vsub.f32 %v1991, 1.0
    %v1994 = vrot.slane %v1926, 6
    %v1996 = vmul.f32 %v1990, %v1994
    %1998 = vrot.lane.b32.xlu0 %v1992, 112
    %v1999 = vpop.permute.xlu0 %1998
    %v2001 = vmul.f32 %v1990, %v1999
    %2003 = vrot.lane.b32.xlu0 %v2001, 8
    %v2004 = vpop.permute.xlu0 %2003
    %v2006 = vadd.f32 %v1996, %v2004
    %v2007 = vtanh.pop %v2006
    %2009 = vrot.lane.b32.xlu0 %v2007, 16
    %v2010 = vpop.permute.xlu0 %2009
    %v2012 = vmul.f32 %v1990, %v2010
    %2014 = vset.pattern.permute.xlu0 24
    %2015 = vperm.xlu0 %2014, %v2012
    %v2016 = vpop.permute.xlu0 %2015
    %v2018 = vmul.f32 %v2016, %v1703
    %2019 = vset.pattern.permute.xlu0 25
    %2020 = vperm.xlu0 %2019, %v2012
    %v2021 = vpop.permute.xlu0 %2020
    %v2023 = vmul.f32 %v2021, %v1707
    %2024 = vset.pattern.permute.xlu0 26
    %2025 = vperm.xlu0 %2024, %v2012
    %v2026 = vpop.permute.xlu0 %2025
    %v2028 = vmul.f32 %v2026, %v1711
    %2029 = vset.pattern.permute.xlu0 27
    %2030 = vperm.xlu0 %2029, %v2012
    %v2031 = vpop.permute.xlu0 %2030
    %v2033 = vmul.f32 %v2031, %v1715
    %2034 = vset.pattern.permute.xlu0 28
    %2035 = vperm.xlu0 %2034, %v2012
    %v2036 = vpop.permute.xlu0 %2035
    %v2038 = vmul.f32 %v2036, %v1719
    %2039 = vset.pattern.permute.xlu0 29
    %2040 = vperm.xlu0 %2039, %v2012
    %v2041 = vpop.permute.xlu0 %2040
    %v2043 = vmul.f32 %v2041, %v1723
    %2044 = vset.pattern.permute.xlu0 30
    %2045 = vperm.xlu0 %2044, %v2012
    %v2046 = vpop.permute.xlu0 %2045
    %v2048 = vmul.f32 %v2046, %v1727
    %2049 = vset.pattern.permute.xlu0 31
    %2050 = vperm.xlu0 %2049, %v2012
    %v2051 = vpop.permute.xlu0 %2050
    %v2053 = vmul.f32 %v2051, %v1731
    %v2054 = vadd.f32 %v2018, %v2023
    %v2055 = vadd.f32 %v2028, %v2033
    %v2056 = vadd.f32 %v2038, %v2043
    %v2057 = vadd.f32 %v2048, %v2053
    %v2058 = vadd.f32 %v2054, %v2055
    %v2059 = vadd.f32 %v2056, %v2057
    %v2060 = vadd.f32 %v2058, %v2059
    %v2062 = vrot.slane %v2060, 6
    %v2064 = vadd.f32 %v1687, %v2062
    %v2065 = vxor.u32 %v2064, 2147483648
    %v2066 = vmul.f32 %v2065, 1.442695
    %v2067 = vpow.pop %v2066
    %v2068 = vadd.f32 %v2067, 1.0
    %v2069 = vrcp.pop %v2068
    %v2070 = vmul.f32 1.0, %v2069
    %v2071 = vmul.f32 %v2070, 2.0
    %v2072 = vsub.f32 %v2071, 1.0
    %v2074 = vrot.slane %v2006, 6
    %v2076 = vmul.f32 %v2070, %v2074
    %2078 = vrot.lane.b32.xlu0 %v2072, 112
    %v2079 = vpop.permute.xlu0 %2078
    %v2081 = vmul.f32 %v2070, %v2079
    %2083 = vrot.lane.b32.xlu0 %v2081, 8
    %v2084 = vpop.permute.xlu0 %2083
    %v2086 = vadd.f32 %v2076, %v2084
    %v2087 = vtanh.pop %v2086
    %2089 = vrot.lane.b32.xlu0 %v2087, 16
    %v2090 = vpop.permute.xlu0 %2089
    %v2092 = vmul.f32 %v2070, %v2090
    %2094 = vset.pattern.permute.xlu0 24
    %2095 = vperm.xlu0 %2094, %v2092
    %v2096 = vpop.permute.xlu0 %2095
    %v2098 = vmul.f32 %v2096, %v1703
    %2099 = vset.pattern.permute.xlu0 25
    %2100 = vperm.xlu0 %2099, %v2092
    %v2101 = vpop.permute.xlu0 %2100
    %v2103 = vmul.f32 %v2101, %v1707
    %2104 = vset.pattern.permute.xlu0 26
    %2105 = vperm.xlu0 %2104, %v2092
    %v2106 = vpop.permute.xlu0 %2105
    %v2108 = vmul.f32 %v2106, %v1711
    %2109 = vset.pattern.permute.xlu0 27
    %2110 = vperm.xlu0 %2109, %v2092
    %v2111 = vpop.permute.xlu0 %2110
    %v2113 = vmul.f32 %v2111, %v1715
    %2114 = vset.pattern.permute.xlu0 28
    %2115 = vperm.xlu0 %2114, %v2092
    %v2116 = vpop.permute.xlu0 %2115
    %v2118 = vmul.f32 %v2116, %v1719
    %2119 = vset.pattern.permute.xlu0 29
    %2120 = vperm.xlu0 %2119, %v2092
    %v2121 = vpop.permute.xlu0 %2120
    %v2123 = vmul.f32 %v2121, %v1723
    %2124 = vset.pattern.permute.xlu0 30
    %2125 = vperm.xlu0 %2124, %v2092
    %v2126 = vpop.permute.xlu0 %2125
    %v2128 = vmul.f32 %v2126, %v1727
    %2129 = vset.pattern.permute.xlu0 31
    %2130 = vperm.xlu0 %2129, %v2092
    %v2131 = vpop.permute.xlu0 %2130
    %v2133 = vmul.f32 %v2131, %v1731
    %v2134 = vadd.f32 %v2098, %v2103
    %v2135 = vadd.f32 %v2108, %v2113
    %v2136 = vadd.f32 %v2118, %v2123
    %v2137 = vadd.f32 %v2128, %v2133
    %v2138 = vadd.f32 %v2134, %v2135
    %v2139 = vadd.f32 %v2136, %v2137
    %v2140 = vadd.f32 %v2138, %v2139
    %v2142 = vrot.slane %v2140, 6
    %v2144 = vadd.f32 %v1687, %v2142
    %v2145 = vxor.u32 %v2144, 2147483648
    %v2146 = vmul.f32 %v2145, 1.442695
    %v2147 = vpow.pop %v2146
    %v2148 = vadd.f32 %v2147, 1.0
    %v2149 = vrcp.pop %v2148
    %v2150 = vmul.f32 1.0, %v2149
    %v2151 = vmul.f32 %v2150, 2.0
    %v2152 = vsub.f32 %v2151, 1.0
    %v2154 = vrot.slane %v2086, 6
    %v2156 = vmul.f32 %v2150, %v2154
    %2158 = vrot.lane.b32.xlu0 %v2152, 112
    %v2159 = vpop.permute.xlu0 %2158
    %v2161 = vmul.f32 %v2150, %v2159
    %2163 = vrot.lane.b32.xlu0 %v2161, 8
    %v2164 = vpop.permute.xlu0 %2163
    %v2166 = vadd.f32 %v2156, %v2164
    %v2167 = vtanh.pop %v2166
    %2169 = vrot.lane.b32.xlu0 %v2167, 16
    %v2170 = vpop.permute.xlu0 %2169
    %v2172 = vmul.f32 %v2150, %v2170
    %2174 = vset.pattern.permute.xlu0 24
    %2175 = vperm.xlu0 %2174, %v2172
    %v2176 = vpop.permute.xlu0 %2175
    %v2178 = vmul.f32 %v2176, %v1703
    %2179 = vset.pattern.permute.xlu0 25
    %2180 = vperm.xlu0 %2179, %v2172
    %v2181 = vpop.permute.xlu0 %2180
    %v2183 = vmul.f32 %v2181, %v1707
    %2184 = vset.pattern.permute.xlu0 26
    %2185 = vperm.xlu0 %2184, %v2172
    %v2186 = vpop.permute.xlu0 %2185
    %v2188 = vmul.f32 %v2186, %v1711
    %2189 = vset.pattern.permute.xlu0 27
    %2190 = vperm.xlu0 %2189, %v2172
    %v2191 = vpop.permute.xlu0 %2190
    %v2193 = vmul.f32 %v2191, %v1715
    %2194 = vset.pattern.permute.xlu0 28
    %2195 = vperm.xlu0 %2194, %v2172
    %v2196 = vpop.permute.xlu0 %2195
    %v2198 = vmul.f32 %v2196, %v1719
    %2199 = vset.pattern.permute.xlu0 29
    %2200 = vperm.xlu0 %2199, %v2172
    %v2201 = vpop.permute.xlu0 %2200
    %v2203 = vmul.f32 %v2201, %v1723
    %2204 = vset.pattern.permute.xlu0 30
    %2205 = vperm.xlu0 %2204, %v2172
    %v2206 = vpop.permute.xlu0 %2205
    %v2208 = vmul.f32 %v2206, %v1727
    %2209 = vset.pattern.permute.xlu0 31
    %2210 = vperm.xlu0 %2209, %v2172
    %v2211 = vpop.permute.xlu0 %2210
    %v2213 = vmul.f32 %v2211, %v1731
    %v2214 = vadd.f32 %v2178, %v2183
    %v2215 = vadd.f32 %v2188, %v2193
    %v2216 = vadd.f32 %v2198, %v2203
    %v2217 = vadd.f32 %v2208, %v2213
    %v2218 = vadd.f32 %v2214, %v2215
    %v2219 = vadd.f32 %v2216, %v2217
    %v2220 = vadd.f32 %v2218, %v2219
    %v2222 = vrot.slane %v2220, 6
    %v2224 = vadd.f32 %v1687, %v2222
    %v2225 = vxor.u32 %v2224, 2147483648
    %v2226 = vmul.f32 %v2225, 1.442695
    %v2227 = vpow.pop %v2226
    %v2228 = vadd.f32 %v2227, 1.0
    %v2229 = vrcp.pop %v2228
    %v2230 = vmul.f32 1.0, %v2229
    %v2231 = vmul.f32 %v2230, 2.0
    %v2232 = vsub.f32 %v2231, 1.0
    %v2234 = vrot.slane %v2166, 6
    %v2236 = vmul.f32 %v2230, %v2234
    %2238 = vrot.lane.b32.xlu0 %v2232, 112
    %v2239 = vpop.permute.xlu0 %2238
    %v2241 = vmul.f32 %v2230, %v2239
    %2243 = vrot.lane.b32.xlu0 %v2241, 8
    %v2244 = vpop.permute.xlu0 %2243
    %v2246 = vadd.f32 %v2236, %v2244
    %v2247 = vtanh.pop %v2246
    %2249 = vrot.lane.b32.xlu0 %v2247, 16
    %v2250 = vpop.permute.xlu0 %2249
    %v2252 = vmul.f32 %v2230, %v2250
    %2254 = vset.pattern.permute.xlu0 24
    %2255 = vperm.xlu0 %2254, %v2252
    %v2256 = vpop.permute.xlu0 %2255
    %v2258 = vmul.f32 %v2256, %v1703
    %2259 = vset.pattern.permute.xlu0 25
    %2260 = vperm.xlu0 %2259, %v2252
    %v2261 = vpop.permute.xlu0 %2260
    %v2263 = vmul.f32 %v2261, %v1707
    %2264 = vset.pattern.permute.xlu0 26
    %2265 = vperm.xlu0 %2264, %v2252
    %v2266 = vpop.permute.xlu0 %2265
    %v2268 = vmul.f32 %v2266, %v1711
    %2269 = vset.pattern.permute.xlu0 27
    %2270 = vperm.xlu0 %2269, %v2252
    %v2271 = vpop.permute.xlu0 %2270
    %v2273 = vmul.f32 %v2271, %v1715
    %2274 = vset.pattern.permute.xlu0 28
    %2275 = vperm.xlu0 %2274, %v2252
    %v2276 = vpop.permute.xlu0 %2275
    %v2278 = vmul.f32 %v2276, %v1719
    %2279 = vset.pattern.permute.xlu0 29
    %2280 = vperm.xlu0 %2279, %v2252
    %v2281 = vpop.permute.xlu0 %2280
    %v2283 = vmul.f32 %v2281, %v1723
    %2284 = vset.pattern.permute.xlu0 30
    %2285 = vperm.xlu0 %2284, %v2252
    %v2286 = vpop.permute.xlu0 %2285
    %v2288 = vmul.f32 %v2286, %v1727
    %2289 = vset.pattern.permute.xlu0 31
    %2290 = vperm.xlu0 %2289, %v2252
    %v2291 = vpop.permute.xlu0 %2290
    %v2293 = vmul.f32 %v2291, %v1731
    %v2294 = vadd.f32 %v2258, %v2263
    %v2295 = vadd.f32 %v2268, %v2273
    %v2296 = vadd.f32 %v2278, %v2283
    %v2297 = vadd.f32 %v2288, %v2293
    %v2298 = vadd.f32 %v2294, %v2295
    %v2299 = vadd.f32 %v2296, %v2297
    %v2300 = vadd.f32 %v2298, %v2299
    %v2302 = vrot.slane %v2300, 6
    %v2304 = vadd.f32 %v1687, %v2302
    %v2305 = vxor.u32 %v2304, 2147483648
    %v2306 = vmul.f32 %v2305, 1.442695
    %v2307 = vpow.pop %v2306
    %v2308 = vadd.f32 %v2307, 1.0
    %v2309 = vrcp.pop %v2308
    %v2310 = vmul.f32 1.0, %v2309
    %v2311 = vmul.f32 %v2310, 2.0
    %v2312 = vsub.f32 %v2311, 1.0
    %v2314 = vrot.slane %v2246, 6
    %v2316 = vmul.f32 %v2310, %v2314
    %2318 = vrot.lane.b32.xlu0 %v2312, 112
    %v2319 = vpop.permute.xlu0 %2318
    %v2321 = vmul.f32 %v2310, %v2319
    %2323 = vrot.lane.b32.xlu0 %v2321, 8
    %v2324 = vpop.permute.xlu0 %2323
    %v2326 = vadd.f32 %v2316, %v2324
    %v2327 = vtanh.pop %v2326
    %2329 = vrot.lane.b32.xlu0 %v2327, 16
    %v2330 = vpop.permute.xlu0 %2329
    %v2332 = vmul.f32 %v2310, %v2330
    %2334 = vset.pattern.permute.xlu0 24
    %2335 = vperm.xlu0 %2334, %v2332
    %v2336 = vpop.permute.xlu0 %2335
    %v2338 = vmul.f32 %v2336, %v1703
    %2339 = vset.pattern.permute.xlu0 25
    %2340 = vperm.xlu0 %2339, %v2332
    %v2341 = vpop.permute.xlu0 %2340
    %v2343 = vmul.f32 %v2341, %v1707
    %2344 = vset.pattern.permute.xlu0 26
    %2345 = vperm.xlu0 %2344, %v2332
    %v2346 = vpop.permute.xlu0 %2345
    %v2348 = vmul.f32 %v2346, %v1711
    %2349 = vset.pattern.permute.xlu0 27
    %2350 = vperm.xlu0 %2349, %v2332
    %v2351 = vpop.permute.xlu0 %2350
    %v2353 = vmul.f32 %v2351, %v1715
    %2354 = vset.pattern.permute.xlu0 28
    %2355 = vperm.xlu0 %2354, %v2332
    %v2356 = vpop.permute.xlu0 %2355
    %v2358 = vmul.f32 %v2356, %v1719
    %2359 = vset.pattern.permute.xlu0 29
    %2360 = vperm.xlu0 %2359, %v2332
    %v2361 = vpop.permute.xlu0 %2360
    %v2363 = vmul.f32 %v2361, %v1723
    %2364 = vset.pattern.permute.xlu0 30
    %2365 = vperm.xlu0 %2364, %v2332
    %v2366 = vpop.permute.xlu0 %2365
    %v2368 = vmul.f32 %v2366, %v1727
    %2369 = vset.pattern.permute.xlu0 31
    %2370 = vperm.xlu0 %2369, %v2332
    %v2371 = vpop.permute.xlu0 %2370
    %v2373 = vmul.f32 %v2371, %v1731
    %v2374 = vadd.f32 %v2338, %v2343
    %v2375 = vadd.f32 %v2348, %v2353
    %v2376 = vadd.f32 %v2358, %v2363
    %v2377 = vadd.f32 %v2368, %v2373
    %v2378 = vadd.f32 %v2374, %v2375
    %v2379 = vadd.f32 %v2376, %v2377
    %v2380 = vadd.f32 %v2378, %v2379
    %v2382 = vrot.slane %v2380, 6
    %v2384 = vadd.f32 %v1692, %v2382
    %v2385 = vxor.u32 %v2384, 2147483648
    %v2386 = vmul.f32 %v2385, 1.442695
    %v2387 = vpow.pop %v2386
    %v2388 = vadd.f32 %v2387, 1.0
    %v2389 = vrcp.pop %v2388
    %v2390 = vmul.f32 1.0, %v2389
    %v2391 = vmul.f32 %v2390, 2.0
    %v2392 = vsub.f32 %v2391, 1.0
    %v2394 = vrot.slane %v2326, 6
    %v2396 = vmul.f32 %v2390, %v2394
    %2398 = vrot.lane.b32.xlu0 %v2392, 112
    %v2399 = vpop.permute.xlu0 %2398
    %v2401 = vmul.f32 %v2390, %v2399
    %2403 = vrot.lane.b32.xlu0 %v2401, 8
    %v2404 = vpop.permute.xlu0 %2403
    %v2406 = vadd.f32 %v2396, %v2404
    %v2407 = vtanh.pop %v2406
    %2409 = vrot.lane.b32.xlu0 %v2407, 16
    %v2410 = vpop.permute.xlu0 %2409
    %v2412 = vmul.f32 %v2390, %v2410
    %2414 = vset.pattern.permute.xlu0 24
    %2415 = vperm.xlu0 %2414, %v2412
    %v2416 = vpop.permute.xlu0 %2415
    %v2418 = vmul.f32 %v2416, %v1703
    %2419 = vset.pattern.permute.xlu0 25
    %2420 = vperm.xlu0 %2419, %v2412
    %v2421 = vpop.permute.xlu0 %2420
    %v2423 = vmul.f32 %v2421, %v1707
    %2424 = vset.pattern.permute.xlu0 26
    %2425 = vperm.xlu0 %2424, %v2412
    %v2426 = vpop.permute.xlu0 %2425
    %v2428 = vmul.f32 %v2426, %v1711
    %2429 = vset.pattern.permute.xlu0 27
    %2430 = vperm.xlu0 %2429, %v2412
    %v2431 = vpop.permute.xlu0 %2430
    %v2433 = vmul.f32 %v2431, %v1715
    %2434 = vset.pattern.permute.xlu0 28
    %2435 = vperm.xlu0 %2434, %v2412
    %v2436 = vpop.permute.xlu0 %2435
    %v2438 = vmul.f32 %v2436, %v1719
    %2439 = vset.pattern.permute.xlu0 29
    %2440 = vperm.xlu0 %2439, %v2412
    %v2441 = vpop.permute.xlu0 %2440
    %v2443 = vmul.f32 %v2441, %v1723
    %2444 = vset.pattern.permute.xlu0 30
    %2445 = vperm.xlu0 %2444, %v2412
    %v2446 = vpop.permute.xlu0 %2445
    %v2448 = vmul.f32 %v2446, %v1727
    %2449 = vset.pattern.permute.xlu0 31
    %2450 = vperm.xlu0 %2449, %v2412
    %v2451 = vpop.permute.xlu0 %2450
    %v2453 = vmul.f32 %v2451, %v1731
    %v2454 = vadd.f32 %v2418, %v2423
    %v2455 = vadd.f32 %v2428, %v2433
    %v2456 = vadd.f32 %v2438, %v2443
    %v2457 = vadd.f32 %v2448, %v2453
    %v2458 = vadd.f32 %v2454, %v2455
    %v2459 = vadd.f32 %v2456, %v2457
    %v2460 = vadd.f32 %v2458, %v2459
    %v2462 = vrot.slane %v2460, 6
    %v2464 = vadd.f32 %v1692, %v2462
    %v2465 = vxor.u32 %v2464, 2147483648
    %v2466 = vmul.f32 %v2465, 1.442695
    %v2467 = vpow.pop %v2466
    %v2468 = vadd.f32 %v2467, 1.0
    %v2469 = vrcp.pop %v2468
    %v2470 = vmul.f32 1.0, %v2469
    %v2471 = vmul.f32 %v2470, 2.0
    %v2472 = vsub.f32 %v2471, 1.0
    %v2474 = vrot.slane %v2406, 6
    %v2476 = vmul.f32 %v2470, %v2474
    %2478 = vrot.lane.b32.xlu0 %v2472, 112
    %v2479 = vpop.permute.xlu0 %2478
    %v2481 = vmul.f32 %v2470, %v2479
    %2483 = vrot.lane.b32.xlu0 %v2481, 8
    %v2484 = vpop.permute.xlu0 %2483
    %v2486 = vadd.f32 %v2476, %v2484
    %v2487 = vtanh.pop %v2486
    %2489 = vrot.lane.b32.xlu0 %v2487, 16
    %v2490 = vpop.permute.xlu0 %2489
    %v2492 = vmul.f32 %v2470, %v2490
    %2494 = vset.pattern.permute.xlu0 24
    %2495 = vperm.xlu0 %2494, %v2492
    %v2496 = vpop.permute.xlu0 %2495
    %v2498 = vmul.f32 %v2496, %v1703
    %2499 = vset.pattern.permute.xlu0 25
    %2500 = vperm.xlu0 %2499, %v2492
    %v2501 = vpop.permute.xlu0 %2500
    %v2503 = vmul.f32 %v2501, %v1707
    %2504 = vset.pattern.permute.xlu0 26
    %2505 = vperm.xlu0 %2504, %v2492
    %v2506 = vpop.permute.xlu0 %2505
    %v2508 = vmul.f32 %v2506, %v1711
    %2509 = vset.pattern.permute.xlu0 27
    %2510 = vperm.xlu0 %2509, %v2492
    %v2511 = vpop.permute.xlu0 %2510
    %v2513 = vmul.f32 %v2511, %v1715
    %2514 = vset.pattern.permute.xlu0 28
    %2515 = vperm.xlu0 %2514, %v2492
    %v2516 = vpop.permute.xlu0 %2515
    %v2518 = vmul.f32 %v2516, %v1719
    %2519 = vset.pattern.permute.xlu0 29
    %2520 = vperm.xlu0 %2519, %v2492
    %v2521 = vpop.permute.xlu0 %2520
    %v2523 = vmul.f32 %v2521, %v1723
    %2524 = vset.pattern.permute.xlu0 30
    %2525 = vperm.xlu0 %2524, %v2492
    %v2526 = vpop.permute.xlu0 %2525
    %v2528 = vmul.f32 %v2526, %v1727
    %2529 = vset.pattern.permute.xlu0 31
    %2530 = vperm.xlu0 %2529, %v2492
    %v2531 = vpop.permute.xlu0 %2530
    %v2533 = vmul.f32 %v2531, %v1731
    %v2534 = vadd.f32 %v2498, %v2503
    %v2535 = vadd.f32 %v2508, %v2513
    %v2536 = vadd.f32 %v2518, %v2523
    %v2537 = vadd.f32 %v2528, %v2533
    %v2538 = vadd.f32 %v2534, %v2535
    %v2539 = vadd.f32 %v2536, %v2537
    %v2540 = vadd.f32 %v2538, %v2539
    %v2542 = vrot.slane %v2540, 6
    %v2544 = vadd.f32 %v1692, %v2542
    %v2545 = vxor.u32 %v2544, 2147483648
    %v2546 = vmul.f32 %v2545, 1.442695
    %v2547 = vpow.pop %v2546
    %v2548 = vadd.f32 %v2547, 1.0
    %v2549 = vrcp.pop %v2548
    %v2550 = vmul.f32 1.0, %v2549
    %v2551 = vmul.f32 %v2550, 2.0
    %v2552 = vsub.f32 %v2551, 1.0
    %v2554 = vrot.slane %v2486, 6
    %v2556 = vmul.f32 %v2550, %v2554
    %2558 = vrot.lane.b32.xlu0 %v2552, 112
    %v2559 = vpop.permute.xlu0 %2558
    %v2561 = vmul.f32 %v2550, %v2559
    %2563 = vrot.lane.b32.xlu0 %v2561, 8
    %v2564 = vpop.permute.xlu0 %2563
    %v2566 = vadd.f32 %v2556, %v2564
    %v2567 = vtanh.pop %v2566
    %2569 = vrot.lane.b32.xlu0 %v2567, 16
    %v2570 = vpop.permute.xlu0 %2569
    %v2572 = vmul.f32 %v2550, %v2570
    %2574 = vset.pattern.permute.xlu0 24
    %2575 = vperm.xlu0 %2574, %v2572
    %v2576 = vpop.permute.xlu0 %2575
    %v2578 = vmul.f32 %v2576, %v1703
    %2579 = vset.pattern.permute.xlu0 25
    %2580 = vperm.xlu0 %2579, %v2572
    %v2581 = vpop.permute.xlu0 %2580
    %v2583 = vmul.f32 %v2581, %v1707
    %2584 = vset.pattern.permute.xlu0 26
    %2585 = vperm.xlu0 %2584, %v2572
    %v2586 = vpop.permute.xlu0 %2585
    %v2588 = vmul.f32 %v2586, %v1711
    %2589 = vset.pattern.permute.xlu0 27
    %2590 = vperm.xlu0 %2589, %v2572
    %v2591 = vpop.permute.xlu0 %2590
    %v2593 = vmul.f32 %v2591, %v1715
    %2594 = vset.pattern.permute.xlu0 28
    %2595 = vperm.xlu0 %2594, %v2572
    %v2596 = vpop.permute.xlu0 %2595
    %v2598 = vmul.f32 %v2596, %v1719
    %2599 = vset.pattern.permute.xlu0 29
    %2600 = vperm.xlu0 %2599, %v2572
    %v2601 = vpop.permute.xlu0 %2600
    %v2603 = vmul.f32 %v2601, %v1723
    %2604 = vset.pattern.permute.xlu0 30
    %2605 = vperm.xlu0 %2604, %v2572
    %v2606 = vpop.permute.xlu0 %2605
    %v2608 = vmul.f32 %v2606, %v1727
    %2609 = vset.pattern.permute.xlu0 31
    %2610 = vperm.xlu0 %2609, %v2572
    %v2611 = vpop.permute.xlu0 %2610
    %v2613 = vmul.f32 %v2611, %v1731
    %v2614 = vadd.f32 %v2578, %v2583
    %v2615 = vadd.f32 %v2588, %v2593
    %v2616 = vadd.f32 %v2598, %v2603
    %v2617 = vadd.f32 %v2608, %v2613
    %v2618 = vadd.f32 %v2614, %v2615
    %v2619 = vadd.f32 %v2616, %v2617
    %v2620 = vadd.f32 %v2618, %v2619
    %v2622 = vrot.slane %v2620, 6
    %v2624 = vadd.f32 %v1692, %v2622
    %v2625 = vxor.u32 %v2624, 2147483648
    %v2626 = vmul.f32 %v2625, 1.442695
    %v2627 = vpow.pop %v2626
    %v2628 = vadd.f32 %v2627, 1.0
    %v2629 = vrcp.pop %v2628
    %v2630 = vmul.f32 1.0, %v2629
    %v2631 = vmul.f32 %v2630, 2.0
    %v2632 = vsub.f32 %v2631, 1.0
    %v2634 = vrot.slane %v2566, 6
    %v2636 = vmul.f32 %v2630, %v2634
    %2638 = vrot.lane.b32.xlu0 %v2632, 112
    %v2639 = vpop.permute.xlu0 %2638
    %v2641 = vmul.f32 %v2630, %v2639
    %2643 = vrot.lane.b32.xlu0 %v2641, 8
    %v2644 = vpop.permute.xlu0 %2643
    %v2646 = vadd.f32 %v2636, %v2644
    %v2647 = vtanh.pop %v2646
    %2649 = vrot.lane.b32.xlu0 %v2647, 16
    %v2650 = vpop.permute.xlu0 %2649
    %v2652 = vmul.f32 %v2630, %v2650
    %2654 = vset.pattern.permute.xlu0 24
    %2655 = vperm.xlu0 %2654, %v2652
    %v2656 = vpop.permute.xlu0 %2655
    %v2658 = vmul.f32 %v2656, %v1703
    %2659 = vset.pattern.permute.xlu0 25
    %2660 = vperm.xlu0 %2659, %v2652
    %v2661 = vpop.permute.xlu0 %2660
    %v2663 = vmul.f32 %v2661, %v1707
    %2664 = vset.pattern.permute.xlu0 26
    %2665 = vperm.xlu0 %2664, %v2652
    %v2666 = vpop.permute.xlu0 %2665
    %v2668 = vmul.f32 %v2666, %v1711
    %2669 = vset.pattern.permute.xlu0 27
    %2670 = vperm.xlu0 %2669, %v2652
    %v2671 = vpop.permute.xlu0 %2670
    %v2673 = vmul.f32 %v2671, %v1715
    %2674 = vset.pattern.permute.xlu0 28
    %2675 = vperm.xlu0 %2674, %v2652
    %v2676 = vpop.permute.xlu0 %2675
    %v2678 = vmul.f32 %v2676, %v1719
    %2679 = vset.pattern.permute.xlu0 29
    %2680 = vperm.xlu0 %2679, %v2652
    %v2681 = vpop.permute.xlu0 %2680
    %v2683 = vmul.f32 %v2681, %v1723
    %2684 = vset.pattern.permute.xlu0 30
    %2685 = vperm.xlu0 %2684, %v2652
    %v2686 = vpop.permute.xlu0 %2685
    %v2688 = vmul.f32 %v2686, %v1727
    %2689 = vset.pattern.permute.xlu0 31
    %2690 = vperm.xlu0 %2689, %v2652
    %v2691 = vpop.permute.xlu0 %2690
    %v2693 = vmul.f32 %v2691, %v1731
    %v2694 = vadd.f32 %v2658, %v2663
    %v2695 = vadd.f32 %v2668, %v2673
    %v2696 = vadd.f32 %v2678, %v2683
    %v2697 = vadd.f32 %v2688, %v2693
    %v2698 = vadd.f32 %v2694, %v2695
    %v2699 = vadd.f32 %v2696, %v2697
    %v2700 = vadd.f32 %v2698, %v2699
    %v2702 = vrot.slane %v2700, 6
    %v2704 = vadd.f32 %v1697, %v2702
    %v2705 = vxor.u32 %v2704, 2147483648
    %v2706 = vmul.f32 %v2705, 1.442695
    %v2707 = vpow.pop %v2706
    %v2708 = vadd.f32 %v2707, 1.0
    %v2709 = vrcp.pop %v2708
    %v2710 = vmul.f32 1.0, %v2709
    %v2711 = vmul.f32 %v2710, 2.0
    %v2712 = vsub.f32 %v2711, 1.0
    %v2714 = vrot.slane %v2646, 6
    %v2716 = vmul.f32 %v2710, %v2714
    %2718 = vrot.lane.b32.xlu0 %v2712, 112
    %v2719 = vpop.permute.xlu0 %2718
    %v2721 = vmul.f32 %v2710, %v2719
    %2723 = vrot.lane.b32.xlu0 %v2721, 8
    %v2724 = vpop.permute.xlu0 %2723
    %v2726 = vadd.f32 %v2716, %v2724
    %v2727 = vtanh.pop %v2726
    %2729 = vrot.lane.b32.xlu0 %v2727, 16
    %v2730 = vpop.permute.xlu0 %2729
    %v2732 = vmul.f32 %v2710, %v2730
    %2734 = vset.pattern.permute.xlu0 24
    %2735 = vperm.xlu0 %2734, %v2732
    %v2736 = vpop.permute.xlu0 %2735
    %v2738 = vmul.f32 %v2736, %v1703
    %2739 = vset.pattern.permute.xlu0 25
    %2740 = vperm.xlu0 %2739, %v2732
    %v2741 = vpop.permute.xlu0 %2740
    %v2743 = vmul.f32 %v2741, %v1707
    %2744 = vset.pattern.permute.xlu0 26
    %2745 = vperm.xlu0 %2744, %v2732
    %v2746 = vpop.permute.xlu0 %2745
    %v2748 = vmul.f32 %v2746, %v1711
    %2749 = vset.pattern.permute.xlu0 27
    %2750 = vperm.xlu0 %2749, %v2732
    %v2751 = vpop.permute.xlu0 %2750
    %v2753 = vmul.f32 %v2751, %v1715
    %2754 = vset.pattern.permute.xlu0 28
    %2755 = vperm.xlu0 %2754, %v2732
    %v2756 = vpop.permute.xlu0 %2755
    %v2758 = vmul.f32 %v2756, %v1719
    %2759 = vset.pattern.permute.xlu0 29
    %2760 = vperm.xlu0 %2759, %v2732
    %v2761 = vpop.permute.xlu0 %2760
    %v2763 = vmul.f32 %v2761, %v1723
    %2764 = vset.pattern.permute.xlu0 30
    %2765 = vperm.xlu0 %2764, %v2732
    %v2766 = vpop.permute.xlu0 %2765
    %v2768 = vmul.f32 %v2766, %v1727
    %2769 = vset.pattern.permute.xlu0 31
    %2770 = vperm.xlu0 %2769, %v2732
    %v2771 = vpop.permute.xlu0 %2770
    %v2773 = vmul.f32 %v2771, %v1731
    %v2774 = vadd.f32 %v2738, %v2743
    %v2775 = vadd.f32 %v2748, %v2753
    %v2776 = vadd.f32 %v2758, %v2763
    %v2777 = vadd.f32 %v2768, %v2773
    %v2778 = vadd.f32 %v2774, %v2775
    %v2779 = vadd.f32 %v2776, %v2777
    %v2780 = vadd.f32 %v2778, %v2779
    %v2782 = vrot.slane %v2780, 6
    %v2784 = vadd.f32 %v1697, %v2782
    %v2785 = vxor.u32 %v2784, 2147483648
    %v2786 = vmul.f32 %v2785, 1.442695
    %v2787 = vpow.pop %v2786
    %v2788 = vadd.f32 %v2787, 1.0
    %v2789 = vrcp.pop %v2788
    %v2790 = vmul.f32 1.0, %v2789
    %v2791 = vmul.f32 %v2790, 2.0
    %v2792 = vsub.f32 %v2791, 1.0
    %v2794 = vrot.slane %v2726, 6
    %v2796 = vmul.f32 %v2790, %v2794
    %2798 = vrot.lane.b32.xlu0 %v2792, 112
    %v2799 = vpop.permute.xlu0 %2798
    %v2801 = vmul.f32 %v2790, %v2799
    %2803 = vrot.lane.b32.xlu0 %v2801, 8
    %v2804 = vpop.permute.xlu0 %2803
    %v2806 = vadd.f32 %v2796, %v2804
    %v2807 = vtanh.pop %v2806
    %2809 = vrot.lane.b32.xlu0 %v2807, 16
    %v2810 = vpop.permute.xlu0 %2809
    %v2812 = vmul.f32 %v2790, %v2810
    %2814 = vset.pattern.permute.xlu0 24
    %2815 = vperm.xlu0 %2814, %v2812
    %v2816 = vpop.permute.xlu0 %2815
    %v2818 = vmul.f32 %v2816, %v1703
    %2819 = vset.pattern.permute.xlu0 25
    %2820 = vperm.xlu0 %2819, %v2812
    %v2821 = vpop.permute.xlu0 %2820
    %v2823 = vmul.f32 %v2821, %v1707
    %2824 = vset.pattern.permute.xlu0 26
    %2825 = vperm.xlu0 %2824, %v2812
    %v2826 = vpop.permute.xlu0 %2825
    %v2828 = vmul.f32 %v2826, %v1711
    %2829 = vset.pattern.permute.xlu0 27
    %2830 = vperm.xlu0 %2829, %v2812
    %v2831 = vpop.permute.xlu0 %2830
    %v2833 = vmul.f32 %v2831, %v1715
    %2834 = vset.pattern.permute.xlu0 28
    %2835 = vperm.xlu0 %2834, %v2812
    %v2836 = vpop.permute.xlu0 %2835
    %v2838 = vmul.f32 %v2836, %v1719
    %2839 = vset.pattern.permute.xlu0 29
    %2840 = vperm.xlu0 %2839, %v2812
    %v2841 = vpop.permute.xlu0 %2840
    %v2843 = vmul.f32 %v2841, %v1723
    %2844 = vset.pattern.permute.xlu0 30
    %2845 = vperm.xlu0 %2844, %v2812
    %v2846 = vpop.permute.xlu0 %2845
    %v2848 = vmul.f32 %v2846, %v1727
    %2849 = vset.pattern.permute.xlu0 31
    %2850 = vperm.xlu0 %2849, %v2812
    %v2851 = vpop.permute.xlu0 %2850
    %v2853 = vmul.f32 %v2851, %v1731
    %v2854 = vadd.f32 %v2818, %v2823
    %v2855 = vadd.f32 %v2828, %v2833
    %v2856 = vadd.f32 %v2838, %v2843
    %v2857 = vadd.f32 %v2848, %v2853
    %v2858 = vadd.f32 %v2854, %v2855
    %v2859 = vadd.f32 %v2856, %v2857
    %v2860 = vadd.f32 %v2858, %v2859
    %v2862 = vrot.slane %v2860, 6
    %v2864 = vadd.f32 %v1697, %v2862
    %v2865 = vxor.u32 %v2864, 2147483648
    %v2866 = vmul.f32 %v2865, 1.442695
    %v2867 = vpow.pop %v2866
    %v2868 = vadd.f32 %v2867, 1.0
    %v2869 = vrcp.pop %v2868
    %v2870 = vmul.f32 1.0, %v2869
    %v2871 = vmul.f32 %v2870, 2.0
    %v2872 = vsub.f32 %v2871, 1.0
    %v2874 = vrot.slane %v2806, 6
    %v2876 = vmul.f32 %v2870, %v2874
    %2878 = vrot.lane.b32.xlu0 %v2872, 112
    %v2879 = vpop.permute.xlu0 %2878
    %v2881 = vmul.f32 %v2870, %v2879
    %2883 = vrot.lane.b32.xlu0 %v2881, 8
    %v2884 = vpop.permute.xlu0 %2883
    %v2886 = vadd.f32 %v2876, %v2884
    %v2887 = vtanh.pop %v2886
    %2889 = vrot.lane.b32.xlu0 %v2887, 16
    %v2890 = vpop.permute.xlu0 %2889
    %v2892 = vmul.f32 %v2870, %v2890
    %2894 = vset.pattern.permute.xlu0 24
    %2895 = vperm.xlu0 %2894, %v2892
    %v2896 = vpop.permute.xlu0 %2895
    %v2898 = vmul.f32 %v2896, %v1703
    %2899 = vset.pattern.permute.xlu0 25
    %2900 = vperm.xlu0 %2899, %v2892
    %v2901 = vpop.permute.xlu0 %2900
    %v2903 = vmul.f32 %v2901, %v1707
    %2904 = vset.pattern.permute.xlu0 26
    %2905 = vperm.xlu0 %2904, %v2892
    %v2906 = vpop.permute.xlu0 %2905
    %v2908 = vmul.f32 %v2906, %v1711
    %2909 = vset.pattern.permute.xlu0 27
    %2910 = vperm.xlu0 %2909, %v2892
    %v2911 = vpop.permute.xlu0 %2910
    %v2913 = vmul.f32 %v2911, %v1715
    %2914 = vset.pattern.permute.xlu0 28
    %2915 = vperm.xlu0 %2914, %v2892
    %v2916 = vpop.permute.xlu0 %2915
    %v2918 = vmul.f32 %v2916, %v1719
    %2919 = vset.pattern.permute.xlu0 29
    %2920 = vperm.xlu0 %2919, %v2892
    %v2921 = vpop.permute.xlu0 %2920
    %v2923 = vmul.f32 %v2921, %v1723
    %2924 = vset.pattern.permute.xlu0 30
    %2925 = vperm.xlu0 %2924, %v2892
    %v2926 = vpop.permute.xlu0 %2925
    %v2928 = vmul.f32 %v2926, %v1727
    %2929 = vset.pattern.permute.xlu0 31
    %2930 = vperm.xlu0 %2929, %v2892
    %v2931 = vpop.permute.xlu0 %2930
    %v2933 = vmul.f32 %v2931, %v1731
    %v2934 = vadd.f32 %v2898, %v2903
    %v2935 = vadd.f32 %v2908, %v2913
    %v2936 = vadd.f32 %v2918, %v2923
    %v2937 = vadd.f32 %v2928, %v2933
    %v2938 = vadd.f32 %v2934, %v2935
    %v2939 = vadd.f32 %v2936, %v2937
    %v2940 = vadd.f32 %v2938, %v2939
    %v2942 = vrot.slane %v2940, 6
    %v2944 = vadd.f32 %v1697, %v2942
    %v2945 = vxor.u32 %v2944, 2147483648
    %v2946 = vmul.f32 %v2945, 1.442695
    %v2947 = vpow.pop %v2946
    %v2948 = vadd.f32 %v2947, 1.0
    %v2949 = vrcp.pop %v2948
    %v2950 = vmul.f32 1.0, %v2949
    %v2951 = vmul.f32 %v2950, 2.0
    %v2952 = vsub.f32 %v2951, 1.0
    %v2954 = vrot.slane %v2886, 6
    %v2956 = vmul.f32 %v2950, %v2954
    %2958 = vrot.lane.b32.xlu0 %v2952, 112
    %v2959 = vpop.permute.xlu0 %2958
    %v2961 = vmul.f32 %v2950, %v2959
    %2963 = vrot.lane.b32.xlu0 %v2961, 8
    %v2964 = vpop.permute.xlu0 %2963
    %v2966 = vadd.f32 %v2956, %v2964
    %v2967 = vtanh.pop %v2966
    %2969 = vrot.lane.b32.xlu0 %v2967, 16
    %v2970 = vpop.permute.xlu0 %2969
    %v2972 = vmul.f32 %v2950, %v2970
    %v2973 = vrot.slane %v1852, 2
    %v2974 = vrot.slane %v1932, 4
    %v2975 = vrot.slane %v2012, 6
    %v2976 = vrot.slane %v2172, 2
    %v2977 = vrot.slane %v2252, 4
    %v2978 = vrot.slane %v2332, 6
    %v2979 = vrot.slane %v2492, 2
    %v2980 = vrot.slane %v2572, 4
    %v2981 = vrot.slane %v2652, 6
    %v2982 = vrot.slane %v2812, 2
    %v2983 = vrot.slane %v2892, 4
    %v2985 = vrot.slane %v2972, 6
    %s2986 = scalar_lea.vmem %s1, 16
    %v2987 = vld [vmem:[%s2986] sm:$0xff]
    %s2988 = scalar_lea.vmem %s2, 16
    %v2989 = vld [vmem:[%s2988] sm:$0xff]
    %s2990 = scalar_lea.vmem %s3, 2
    %v2991 = vld [vmem:[%s2990] sm:$0x1]
    %v2993 = vlaneseq
    %v2994 = vshrl.u32 %v2993, 7
    %v2995 = vsub.s32 0, %v2994
    %v2996 = vrot.slane %v2991, %v2995
    %v2998 = vcombine.low %v1772, %v2973
    %v2999 = vcombine.low %v2974, %v2975
    %v3001 = vunpack.c.l.s4 1983009808
    %v3002 = vunpack.c.0.s8 %v3001
    %v3003 = vlaneseq
    %v3004 = vshrl.u32 %v3003, 7
    %v3005 = vsub.s32 %v3002, %v3004
    %v3006 = vrot.slane %v2998, %v3005
    %v3008 = vunpack.c.l.s4 1983009808
    %v3009 = vunpack.c.0.s8 %v3008
    %v3010 = vlaneseq
    %v3011 = vshrl.u32 %v3010, 7
    %v3012 = vsub.s32 %v3009, %v3011
    %v3013 = vrot.slane %v2999, %v3012
    %v3014 = vcombine.low %v3006, %v3013
    %v3015 = vcombine.low %v2092, %v2976
    %v3016 = vcombine.low %v2977, %v2978
    %v3018 = vunpack.c.l.s4 1983009808
    %v3019 = vunpack.c.0.s8 %v3018
    %v3020 = vlaneseq
    %v3021 = vshrl.u32 %v3020, 7
    %v3022 = vsub.s32 %v3019, %v3021
    %v3023 = vrot.slane %v3015, %v3022
    %v3025 = vunpack.c.l.s4 1983009808
    %v3026 = vunpack.c.0.s8 %v3025
    %v3027 = vlaneseq
    %v3028 = vshrl.u32 %v3027, 7
    %v3029 = vsub.s32 %v3026, %v3028
    %v3030 = vrot.slane %v3016, %v3029
    %v3031 = vcombine.low %v3023, %v3030
    %v3032 = vcombine.low %v2412, %v2979
    %v3033 = vcombine.low %v2980, %v2981
    %v3035 = vunpack.c.l.s4 1983009808
    %v3036 = vunpack.c.0.s8 %v3035
    %v3037 = vlaneseq
    %v3038 = vshrl.u32 %v3037, 7
    %v3039 = vsub.s32 %v3036, %v3038
    %v3040 = vrot.slane %v3032, %v3039
    %v3042 = vunpack.c.l.s4 1983009808
    %v3043 = vunpack.c.0.s8 %v3042
    %v3044 = vlaneseq
    %v3045 = vshrl.u32 %v3044, 7
    %v3046 = vsub.s32 %v3043, %v3045
    %v3047 = vrot.slane %v3033, %v3046
    %v3048 = vcombine.low %v3040, %v3047
    %v3049 = vcombine.low %v2732, %v2982
    %v3050 = vcombine.low %v2983, %v2985
    %v3052 = vunpack.c.l.s4 1983009808
    %v3053 = vunpack.c.0.s8 %v3052
    %v3054 = vlaneseq
    %v3055 = vshrl.u32 %v3054, 7
    %v3056 = vsub.s32 %v3053, %v3055
    %v3057 = vrot.slane %v3049, %v3056
    %v3059 = vunpack.c.l.s4 1983009808
    %v3060 = vunpack.c.0.s8 %v3059
    %v3061 = vlaneseq
    %v3062 = vshrl.u32 %v3061, 7
    %v3063 = vsub.s32 %v3060, %v3062
    %v3064 = vrot.slane %v3050, %v3063
    %v3065 = vcombine.low %v3057, %v3064
    %3066 = vrot.lane.b32.xlu0 %v3014, 104
    %v3067 = vpop.permute.xlu0 %3066
    %3068 = vrot.lane.b32.xlu0 %v3031, 104
    %v3069 = vpop.permute.xlu0 %3068
    %3070 = vrot.lane.b32.xlu0 %v3048, 104
    %v3071 = vpop.permute.xlu0 %3070
    %3072 = vrot.lane.b32.xlu0 %v3065, 104
    %v3073 = vpop.permute.xlu0 %3072
    %v3074 = vsel %vm139, %v3067, 0
    %v3076 = vsel %vm139, %v3069, 0
    %v3078 = vsel %vm139, %v3071, 0
    %v3080 = vsel %vm139, %v3073, 0
    %3082 = vmatprep.subr.mxu0 0.0
    %3083 = vmatpush1.msra.mxu0 0.0
    %3084 = vmatprep.subr.mxu0 0.0
    %3085 = vmatpush1.msra.mxu0 0.0
    %3086 = vmatprep.subr.mxu0 0.0
    %3087 = vmatpush1.msra.mxu0 0.0
    %3088 = vmatprep.subr.mxu0 0.0
    %3089 = vmatpush1.msra.mxu0 0.0
    %3090 = vmatprep.subr.mxu0 0.0
    %3091 = vmatpush1.msra.mxu0 0.0
    %3092 = vmatprep.subr.mxu0 0.0
    %3093 = vmatpush1.msra.mxu0 0.0
    %3094 = vmatprep.subr.mxu0 0.0
    %3095 = vmatpush1.msra.mxu0 0.0
    %3096 = vmatprep.subr.mxu0 0.0
    %3097 = vmatpush1.msra.mxu0 0.0
    %3098 = vmatprep.subr.mxu0 0.0
    %3099 = vmatpush1.msra.mxu0 0.0
    %3100 = vmatprep.subr.mxu0 0.0
    %3101 = vmatpush1.msra.mxu0 0.0
    %3102 = vmatprep.subr.mxu0 0.0
    %3103 = vmatpush1.msra.mxu0 0.0
    %3104 = vmatprep.subr.mxu0 0.0
    %3105 = vmatpush1.msra.mxu0 0.0
    %3106 = vmatprep.subr.mxu0 0.0
    %3107 = vmatpush1.msra.mxu0 0.0
    %3108 = vmatprep.subr.mxu0 0.0
    %3109 = vmatpush1.msra.mxu0 0.0
    %3110 = vmatprep.subr.mxu0 0.0
    %3111 = vmatpush1.msra.mxu0 0.0
    %3112 = vmatprep.subr.mxu0 0.0
    %3113 = vmatpush1.msra.mxu0 %v2987
    %3114 = vmatprep.subr.mxu0 0.0
    %3115 = vmatpush2.msra.mxu0 0.0
    %3116 = vmatprep.subr.mxu0 0.0
    %3117 = vmatpush2.msra.mxu0 0.0
    %3118 = vmatprep.subr.mxu0 0.0
    %3119 = vmatpush2.msra.mxu0 0.0
    %3120 = vmatprep.subr.mxu0 0.0
    %3121 = vmatpush2.msra.mxu0 0.0
    %3122 = vmatprep.subr.mxu0 0.0
    %3123 = vmatpush2.msra.mxu0 0.0
    %3124 = vmatprep.subr.mxu0 0.0
    %3125 = vmatpush2.msra.mxu0 0.0
    %3126 = vmatprep.subr.mxu0 0.0
    %3127 = vmatpush2.msra.mxu0 0.0
    %3128 = vmatprep.subr.mxu0 0.0
    %3129 = vmatpush2.msra.mxu0 0.0
    %3130 = vmatprep.subr.mxu0 0.0
    %3131 = vmatpush2.msra.mxu0 0.0
    %3132 = vmatprep.subr.mxu0 0.0
    %3133 = vmatpush2.msra.mxu0 0.0
    %3134 = vmatprep.subr.mxu0 0.0
    %3135 = vmatpush2.msra.mxu0 0.0
    %3136 = vmatprep.subr.mxu0 0.0
    %3137 = vmatpush2.msra.mxu0 0.0
    %3138 = vmatprep.subr.mxu0 0.0
    %3139 = vmatpush2.msra.mxu0 0.0
    %3140 = vmatprep.subr.mxu0 0.0
    %3141 = vmatpush2.msra.mxu0 0.0
    %3142 = vmatprep.subr.mxu0 0.0
    %3143 = vmatpush2.msra.mxu0 0.0
    %3144 = vmatprep.subr.mxu0 0.0
    %3145 = vmatpush2.msra.mxu0 0.0
    %3146 = vmatprep.mubr.f32.mxu0 0.0
    %3147 = vmatmul.mubr.f32.gmra.mxu0 %v3074
    %v3148 = vpop.f32.mrf.mxu0
    %v3149 = vadd.f32 %v2996, %v3148
    %v3150 = vpop.f32.mrf.mxu0
    %3151 = vmatprep.mubr.f32.mxu0 0.0
    %3152 = vmatmul.mubr.f32.gmra.mxu0 %v3076
    %v3153 = vpop.f32.mrf.mxu0
    %v3154 = vadd.f32 %v2996, %v3153
    %v3155 = vpop.f32.mrf.mxu0
    %3156 = vmatprep.mubr.f32.mxu0 0.0
    %3157 = vmatmul.mubr.f32.gmra.mxu0 %v3078
    %v3158 = vpop.f32.mrf.mxu0
    %v3159 = vadd.f32 %v2996, %v3158
    %v3160 = vpop.f32.mrf.mxu0
    %3161 = vmatprep.mubr.f32.mxu0 0.0
    %3162 = vmatmul.mubr.f32.gmra.mxu0 %v3080
    %v3163 = vpop.f32.mrf.mxu0
    %v3164 = vadd.f32 %v2996, %v3163
    %v3165 = vpop.f32.mrf.mxu0
    %3166 = vdwg.mxu0
    %v3167 = vlaneseq
    %v3168 = vshrl.u32 %v3167, 7
    %v3169 = vsub.s32 0, %v3168
    %v3170 = vrot.slane %v2989, %v3169
    %v3171 = vlaneseq
    %v3172 = vshrl.u32 %v3171, 7
    %v3173 = vsub.s32 1, %v3172
    %v3174 = vrot.slane %v2989, %v3173
    %v3175 = vlaneseq
    %v3176 = vshrl.u32 %v3175, 7
    %v3177 = vsub.s32 2, %v3176
    %v3178 = vrot.slane %v2989, %v3177
    %v3179 = vlaneseq
    %v3180 = vshrl.u32 %v3179, 7
    %v3181 = vsub.s32 3, %v3180
    %v3182 = vrot.slane %v2989, %v3181
    %v3183 = vlaneseq
    %v3184 = vshrl.u32 %v3183, 7
    %v3185 = vsub.s32 4, %v3184
    %v3186 = vrot.slane %v2989, %v3185
    %v3187 = vlaneseq
    %v3188 = vshrl.u32 %v3187, 7
    %v3189 = vsub.s32 5, %v3188
    %v3190 = vrot.slane %v2989, %v3189
    %v3191 = vlaneseq
    %v3192 = vshrl.u32 %v3191, 7
    %v3193 = vsub.s32 6, %v3192
    %v3194 = vrot.slane %v2989, %v3193
    %v3195 = vlaneseq
    %v3196 = vshrl.u32 %v3195, 7
    %v3197 = vsub.s32 7, %v3196
    %v3198 = vrot.slane %v2989, %v3197
    %v3199 = vmul.f32 %v3170, 0.0
    %v3200 = vmul.f32 %v3174, 0.0
    %v3201 = vmul.f32 %v3178, 0.0
    %v3202 = vmul.f32 %v3182, 0.0
    %v3203 = vmul.f32 %v3186, 0.0
    %v3204 = vmul.f32 %v3190, 0.0
    %v3205 = vmul.f32 %v3194, 0.0
    %v3206 = vmul.f32 %v3198, 0.0
    %v3207 = vadd.f32 %v3199, %v3200
    %v3208 = vadd.f32 %v3201, %v3202
    %v3209 = vadd.f32 %v3203, %v3204
    %v3210 = vadd.f32 %v3205, %v3206
    %v3211 = vadd.f32 %v3207, %v3208
    %v3212 = vadd.f32 %v3209, %v3210
    %v3213 = vadd.f32 %v3211, %v3212
    %v3214 = vadd.f32 %v3149, %v3213
    %v3215 = vxor.u32 %v3214, 2147483648
    %v3216 = vmul.f32 %v3215, 1.442695
    %v3217 = vpow.pop %v3216
    %v3218 = vadd.f32 %v3217, 1.0
    %v3219 = vrcp.pop %v3218
    %v3220 = vmul.f32 1.0, %v3219
    %v3221 = vmul.f32 %v3220, 2.0
    %v3222 = vsub.f32 %v3221, 1.0
    %v3223 = vmul.f32 %v3220, 0.0
    %3225 = vrot.lane.b32.xlu0 %v3222, 112
    %v3226 = vpop.permute.xlu0 %3225
    %v3228 = vmul.f32 %v3220, %v3226
    %3230 = vrot.lane.b32.xlu0 %v3228, 8
    %v3231 = vpop.permute.xlu0 %3230
    %v3233 = vadd.f32 %v3223, %v3231
    %v3234 = vtanh.pop %v3233
    %3236 = vrot.lane.b32.xlu0 %v3234, 16
    %v3237 = vpop.permute.xlu0 %3236
    %v3239 = vmul.f32 %v3220, %v3237
    %3241 = vset.pattern.permute.xlu0 24
    %3242 = vperm.xlu0 %3241, %v3239
    %v3243 = vpop.permute.xlu0 %3242
    %v3245 = vmul.f32 %v3243, %v3170
    %3246 = vset.pattern.permute.xlu0 25
    %3247 = vperm.xlu0 %3246, %v3239
    %v3248 = vpop.permute.xlu0 %3247
    %v3250 = vmul.f32 %v3248, %v3174
    %3251 = vset.pattern.permute.xlu0 26
    %3252 = vperm.xlu0 %3251, %v3239
    %v3253 = vpop.permute.xlu0 %3252
    %v3255 = vmul.f32 %v3253, %v3178
    %3256 = vset.pattern.permute.xlu0 27
    %3257 = vperm.xlu0 %3256, %v3239
    %v3258 = vpop.permute.xlu0 %3257
    %v3260 = vmul.f32 %v3258, %v3182
    %3261 = vset.pattern.permute.xlu0 28
    %3262 = vperm.xlu0 %3261, %v3239
    %v3263 = vpop.permute.xlu0 %3262
    %v3265 = vmul.f32 %v3263, %v3186
    %3266 = vset.pattern.permute.xlu0 29
    %3267 = vperm.xlu0 %3266, %v3239
    %v3268 = vpop.permute.xlu0 %3267
    %v3270 = vmul.f32 %v3268, %v3190
    %3271 = vset.pattern.permute.xlu0 30
    %3272 = vperm.xlu0 %3271, %v3239
    %v3273 = vpop.permute.xlu0 %3272
    %v3275 = vmul.f32 %v3273, %v3194
    %3276 = vset.pattern.permute.xlu0 31
    %3277 = vperm.xlu0 %3276, %v3239
    %v3278 = vpop.permute.xlu0 %3277
    %v3280 = vmul.f32 %v3278, %v3198
    %v3281 = vadd.f32 %v3245, %v3250
    %v3282 = vadd.f32 %v3255, %v3260
    %v3283 = vadd.f32 %v3265, %v3270
    %v3284 = vadd.f32 %v3275, %v3280
    %v3285 = vadd.f32 %v3281, %v3282
    %v3286 = vadd.f32 %v3283, %v3284
    %v3287 = vadd.f32 %v3285, %v3286
    %v3289 = vrot.slane %v3287, 6
    %v3291 = vadd.f32 %v3149, %v3289
    %v3292 = vxor.u32 %v3291, 2147483648
    %v3293 = vmul.f32 %v3292, 1.442695
    %v3294 = vpow.pop %v3293
    %v3295 = vadd.f32 %v3294, 1.0
    %v3296 = vrcp.pop %v3295
    %v3297 = vmul.f32 1.0, %v3296
    %v3298 = vmul.f32 %v3297, 2.0
    %v3299 = vsub.f32 %v3298, 1.0
    %v3301 = vrot.slane %v3233, 6
    %v3303 = vmul.f32 %v3297, %v3301
    %3305 = vrot.lane.b32.xlu0 %v3299, 112
    %v3306 = vpop.permute.xlu0 %3305
    %v3308 = vmul.f32 %v3297, %v3306
    %3310 = vrot.lane.b32.xlu0 %v3308, 8
    %v3311 = vpop.permute.xlu0 %3310
    %v3313 = vadd.f32 %v3303, %v3311
    %v3314 = vtanh.pop %v3313
    %3316 = vrot.lane.b32.xlu0 %v3314, 16
    %v3317 = vpop.permute.xlu0 %3316
    %v3319 = vmul.f32 %v3297, %v3317
    %3321 = vset.pattern.permute.xlu0 24
    %3322 = vperm.xlu0 %3321, %v3319
    %v3323 = vpop.permute.xlu0 %3322
    %v3325 = vmul.f32 %v3323, %v3170
    %3326 = vset.pattern.permute.xlu0 25
    %3327 = vperm.xlu0 %3326, %v3319
    %v3328 = vpop.permute.xlu0 %3327
    %v3330 = vmul.f32 %v3328, %v3174
    %3331 = vset.pattern.permute.xlu0 26
    %3332 = vperm.xlu0 %3331, %v3319
    %v3333 = vpop.permute.xlu0 %3332
    %v3335 = vmul.f32 %v3333, %v3178
    %3336 = vset.pattern.permute.xlu0 27
    %3337 = vperm.xlu0 %3336, %v3319
    %v3338 = vpop.permute.xlu0 %3337
    %v3340 = vmul.f32 %v3338, %v3182
    %3341 = vset.pattern.permute.xlu0 28
    %3342 = vperm.xlu0 %3341, %v3319
    %v3343 = vpop.permute.xlu0 %3342
    %v3345 = vmul.f32 %v3343, %v3186
    %3346 = vset.pattern.permute.xlu0 29
    %3347 = vperm.xlu0 %3346, %v3319
    %v3348 = vpop.permute.xlu0 %3347
    %v3350 = vmul.f32 %v3348, %v3190
    %3351 = vset.pattern.permute.xlu0 30
    %3352 = vperm.xlu0 %3351, %v3319
    %v3353 = vpop.permute.xlu0 %3352
    %v3355 = vmul.f32 %v3353, %v3194
    %3356 = vset.pattern.permute.xlu0 31
    %3357 = vperm.xlu0 %3356, %v3319
    %v3358 = vpop.permute.xlu0 %3357
    %v3360 = vmul.f32 %v3358, %v3198
    %v3361 = vadd.f32 %v3325, %v3330
    %v3362 = vadd.f32 %v3335, %v3340
    %v3363 = vadd.f32 %v3345, %v3350
    %v3364 = vadd.f32 %v3355, %v3360
    %v3365 = vadd.f32 %v3361, %v3362
    %v3366 = vadd.f32 %v3363, %v3364
    %v3367 = vadd.f32 %v3365, %v3366
    %v3369 = vrot.slane %v3367, 6
    %v3371 = vadd.f32 %v3149, %v3369
    %v3372 = vxor.u32 %v3371, 2147483648
    %v3373 = vmul.f32 %v3372, 1.442695
    %v3374 = vpow.pop %v3373
    %v3375 = vadd.f32 %v3374, 1.0
    %v3376 = vrcp.pop %v3375
    %v3377 = vmul.f32 1.0, %v3376
    %v3378 = vmul.f32 %v3377, 2.0
    %v3379 = vsub.f32 %v3378, 1.0
    %v3381 = vrot.slane %v3313, 6
    %v3383 = vmul.f32 %v3377, %v3381
    %3385 = vrot.lane.b32.xlu0 %v3379, 112
    %v3386 = vpop.permute.xlu0 %3385
    %v3388 = vmul.f32 %v3377, %v3386
    %3390 = vrot.lane.b32.xlu0 %v3388, 8
    %v3391 = vpop.permute.xlu0 %3390
    %v3393 = vadd.f32 %v3383, %v3391
    %v3394 = vtanh.pop %v3393
    %3396 = vrot.lane.b32.xlu0 %v3394, 16
    %v3397 = vpop.permute.xlu0 %3396
    %v3399 = vmul.f32 %v3377, %v3397
    %3401 = vset.pattern.permute.xlu0 24
    %3402 = vperm.xlu0 %3401, %v3399
    %v3403 = vpop.permute.xlu0 %3402
    %v3405 = vmul.f32 %v3403, %v3170
    %3406 = vset.pattern.permute.xlu0 25
    %3407 = vperm.xlu0 %3406, %v3399
    %v3408 = vpop.permute.xlu0 %3407
    %v3410 = vmul.f32 %v3408, %v3174
    %3411 = vset.pattern.permute.xlu0 26
    %3412 = vperm.xlu0 %3411, %v3399
    %v3413 = vpop.permute.xlu0 %3412
    %v3415 = vmul.f32 %v3413, %v3178
    %3416 = vset.pattern.permute.xlu0 27
    %3417 = vperm.xlu0 %3416, %v3399
    %v3418 = vpop.permute.xlu0 %3417
    %v3420 = vmul.f32 %v3418, %v3182
    %3421 = vset.pattern.permute.xlu0 28
    %3422 = vperm.xlu0 %3421, %v3399
    %v3423 = vpop.permute.xlu0 %3422
    %v3425 = vmul.f32 %v3423, %v3186
    %3426 = vset.pattern.permute.xlu0 29
    %3427 = vperm.xlu0 %3426, %v3399
    %v3428 = vpop.permute.xlu0 %3427
    %v3430 = vmul.f32 %v3428, %v3190
    %3431 = vset.pattern.permute.xlu0 30
    %3432 = vperm.xlu0 %3431, %v3399
    %v3433 = vpop.permute.xlu0 %3432
    %v3435 = vmul.f32 %v3433, %v3194
    %3436 = vset.pattern.permute.xlu0 31
    %3437 = vperm.xlu0 %3436, %v3399
    %v3438 = vpop.permute.xlu0 %3437
    %v3440 = vmul.f32 %v3438, %v3198
    %v3441 = vadd.f32 %v3405, %v3410
    %v3442 = vadd.f32 %v3415, %v3420
    %v3443 = vadd.f32 %v3425, %v3430
    %v3444 = vadd.f32 %v3435, %v3440
    %v3445 = vadd.f32 %v3441, %v3442
    %v3446 = vadd.f32 %v3443, %v3444
    %v3447 = vadd.f32 %v3445, %v3446
    %v3449 = vrot.slane %v3447, 6
    %v3451 = vadd.f32 %v3149, %v3449
    %v3452 = vxor.u32 %v3451, 2147483648
    %v3453 = vmul.f32 %v3452, 1.442695
    %v3454 = vpow.pop %v3453
    %v3455 = vadd.f32 %v3454, 1.0
    %v3456 = vrcp.pop %v3455
    %v3457 = vmul.f32 1.0, %v3456
    %v3458 = vmul.f32 %v3457, 2.0
    %v3459 = vsub.f32 %v3458, 1.0
    %v3461 = vrot.slane %v3393, 6
    %v3463 = vmul.f32 %v3457, %v3461
    %3465 = vrot.lane.b32.xlu0 %v3459, 112
    %v3466 = vpop.permute.xlu0 %3465
    %v3468 = vmul.f32 %v3457, %v3466
    %3470 = vrot.lane.b32.xlu0 %v3468, 8
    %v3471 = vpop.permute.xlu0 %3470
    %v3473 = vadd.f32 %v3463, %v3471
    %v3474 = vtanh.pop %v3473
    %3476 = vrot.lane.b32.xlu0 %v3474, 16
    %v3477 = vpop.permute.xlu0 %3476
    %v3479 = vmul.f32 %v3457, %v3477
    %3481 = vset.pattern.permute.xlu0 24
    %3482 = vperm.xlu0 %3481, %v3479
    %v3483 = vpop.permute.xlu0 %3482
    %v3485 = vmul.f32 %v3483, %v3170
    %3486 = vset.pattern.permute.xlu0 25
    %3487 = vperm.xlu0 %3486, %v3479
    %v3488 = vpop.permute.xlu0 %3487
    %v3490 = vmul.f32 %v3488, %v3174
    %3491 = vset.pattern.permute.xlu0 26
    %3492 = vperm.xlu0 %3491, %v3479
    %v3493 = vpop.permute.xlu0 %3492
    %v3495 = vmul.f32 %v3493, %v3178
    %3496 = vset.pattern.permute.xlu0 27
    %3497 = vperm.xlu0 %3496, %v3479
    %v3498 = vpop.permute.xlu0 %3497
    %v3500 = vmul.f32 %v3498, %v3182
    %3501 = vset.pattern.permute.xlu0 28
    %3502 = vperm.xlu0 %3501, %v3479
    %v3503 = vpop.permute.xlu0 %3502
    %v3505 = vmul.f32 %v3503, %v3186
    %3506 = vset.pattern.permute.xlu0 29
    %3507 = vperm.xlu0 %3506, %v3479
    %v3508 = vpop.permute.xlu0 %3507
    %v3510 = vmul.f32 %v3508, %v3190
    %3511 = vset.pattern.permute.xlu0 30
    %3512 = vperm.xlu0 %3511, %v3479
    %v3513 = vpop.permute.xlu0 %3512
    %v3515 = vmul.f32 %v3513, %v3194
    %3516 = vset.pattern.permute.xlu0 31
    %3517 = vperm.xlu0 %3516, %v3479
    %v3518 = vpop.permute.xlu0 %3517
    %v3520 = vmul.f32 %v3518, %v3198
    %v3521 = vadd.f32 %v3485, %v3490
    %v3522 = vadd.f32 %v3495, %v3500
    %v3523 = vadd.f32 %v3505, %v3510
    %v3524 = vadd.f32 %v3515, %v3520
    %v3525 = vadd.f32 %v3521, %v3522
    %v3526 = vadd.f32 %v3523, %v3524
    %v3527 = vadd.f32 %v3525, %v3526
    %v3529 = vrot.slane %v3527, 6
    %v3531 = vadd.f32 %v3154, %v3529
    %v3532 = vxor.u32 %v3531, 2147483648
    %v3533 = vmul.f32 %v3532, 1.442695
    %v3534 = vpow.pop %v3533
    %v3535 = vadd.f32 %v3534, 1.0
    %v3536 = vrcp.pop %v3535
    %v3537 = vmul.f32 1.0, %v3536
    %v3538 = vmul.f32 %v3537, 2.0
    %v3539 = vsub.f32 %v3538, 1.0
    %v3541 = vrot.slane %v3473, 6
    %v3543 = vmul.f32 %v3537, %v3541
    %3545 = vrot.lane.b32.xlu0 %v3539, 112
    %v3546 = vpop.permute.xlu0 %3545
    %v3548 = vmul.f32 %v3537, %v3546
    %3550 = vrot.lane.b32.xlu0 %v3548, 8
    %v3551 = vpop.permute.xlu0 %3550
    %v3553 = vadd.f32 %v3543, %v3551
    %v3554 = vtanh.pop %v3553
    %3556 = vrot.lane.b32.xlu0 %v3554, 16
    %v3557 = vpop.permute.xlu0 %3556
    %v3559 = vmul.f32 %v3537, %v3557
    %3561 = vset.pattern.permute.xlu0 24
    %3562 = vperm.xlu0 %3561, %v3559
    %v3563 = vpop.permute.xlu0 %3562
    %v3565 = vmul.f32 %v3563, %v3170
    %3566 = vset.pattern.permute.xlu0 25
    %3567 = vperm.xlu0 %3566, %v3559
    %v3568 = vpop.permute.xlu0 %3567
    %v3570 = vmul.f32 %v3568, %v3174
    %3571 = vset.pattern.permute.xlu0 26
    %3572 = vperm.xlu0 %3571, %v3559
    %v3573 = vpop.permute.xlu0 %3572
    %v3575 = vmul.f32 %v3573, %v3178
    %3576 = vset.pattern.permute.xlu0 27
    %3577 = vperm.xlu0 %3576, %v3559
    %v3578 = vpop.permute.xlu0 %3577
    %v3580 = vmul.f32 %v3578, %v3182
    %3581 = vset.pattern.permute.xlu0 28
    %3582 = vperm.xlu0 %3581, %v3559
    %v3583 = vpop.permute.xlu0 %3582
    %v3585 = vmul.f32 %v3583, %v3186
    %3586 = vset.pattern.permute.xlu0 29
    %3587 = vperm.xlu0 %3586, %v3559
    %v3588 = vpop.permute.xlu0 %3587
    %v3590 = vmul.f32 %v3588, %v3190
    %3591 = vset.pattern.permute.xlu0 30
    %3592 = vperm.xlu0 %3591, %v3559
    %v3593 = vpop.permute.xlu0 %3592
    %v3595 = vmul.f32 %v3593, %v3194
    %3596 = vset.pattern.permute.xlu0 31
    %3597 = vperm.xlu0 %3596, %v3559
    %v3598 = vpop.permute.xlu0 %3597
    %v3600 = vmul.f32 %v3598, %v3198
    %v3601 = vadd.f32 %v3565, %v3570
    %v3602 = vadd.f32 %v3575, %v3580
    %v3603 = vadd.f32 %v3585, %v3590
    %v3604 = vadd.f32 %v3595, %v3600
    %v3605 = vadd.f32 %v3601, %v3602
    %v3606 = vadd.f32 %v3603, %v3604
    %v3607 = vadd.f32 %v3605, %v3606
    %v3609 = vrot.slane %v3607, 6
    %v3611 = vadd.f32 %v3154, %v3609
    %v3612 = vxor.u32 %v3611, 2147483648
    %v3613 = vmul.f32 %v3612, 1.442695
    %v3614 = vpow.pop %v3613
    %v3615 = vadd.f32 %v3614, 1.0
    %v3616 = vrcp.pop %v3615
    %v3617 = vmul.f32 1.0, %v3616
    %v3618 = vmul.f32 %v3617, 2.0
    %v3619 = vsub.f32 %v3618, 1.0
    %v3621 = vrot.slane %v3553, 6
    %v3623 = vmul.f32 %v3617, %v3621
    %3625 = vrot.lane.b32.xlu0 %v3619, 112
    %v3626 = vpop.permute.xlu0 %3625
    %v3628 = vmul.f32 %v3617, %v3626
    %3630 = vrot.lane.b32.xlu0 %v3628, 8
    %v3631 = vpop.permute.xlu0 %3630
    %v3633 = vadd.f32 %v3623, %v3631
    %v3634 = vtanh.pop %v3633
    %3636 = vrot.lane.b32.xlu0 %v3634, 16
    %v3637 = vpop.permute.xlu0 %3636
    %v3639 = vmul.f32 %v3617, %v3637
    %3641 = vset.pattern.permute.xlu0 24
    %3642 = vperm.xlu0 %3641, %v3639
    %v3643 = vpop.permute.xlu0 %3642
    %v3645 = vmul.f32 %v3643, %v3170
    %3646 = vset.pattern.permute.xlu0 25
    %3647 = vperm.xlu0 %3646, %v3639
    %v3648 = vpop.permute.xlu0 %3647
    %v3650 = vmul.f32 %v3648, %v3174
    %3651 = vset.pattern.permute.xlu0 26
    %3652 = vperm.xlu0 %3651, %v3639
    %v3653 = vpop.permute.xlu0 %3652
    %v3655 = vmul.f32 %v3653, %v3178
    %3656 = vset.pattern.permute.xlu0 27
    %3657 = vperm.xlu0 %3656, %v3639
    %v3658 = vpop.permute.xlu0 %3657
    %v3660 = vmul.f32 %v3658, %v3182
    %3661 = vset.pattern.permute.xlu0 28
    %3662 = vperm.xlu0 %3661, %v3639
    %v3663 = vpop.permute.xlu0 %3662
    %v3665 = vmul.f32 %v3663, %v3186
    %3666 = vset.pattern.permute.xlu0 29
    %3667 = vperm.xlu0 %3666, %v3639
    %v3668 = vpop.permute.xlu0 %3667
    %v3670 = vmul.f32 %v3668, %v3190
    %3671 = vset.pattern.permute.xlu0 30
    %3672 = vperm.xlu0 %3671, %v3639
    %v3673 = vpop.permute.xlu0 %3672
    %v3675 = vmul.f32 %v3673, %v3194
    %3676 = vset.pattern.permute.xlu0 31
    %3677 = vperm.xlu0 %3676, %v3639
    %v3678 = vpop.permute.xlu0 %3677
    %v3680 = vmul.f32 %v3678, %v3198
    %v3681 = vadd.f32 %v3645, %v3650
    %v3682 = vadd.f32 %v3655, %v3660
    %v3683 = vadd.f32 %v3665, %v3670
    %v3684 = vadd.f32 %v3675, %v3680
    %v3685 = vadd.f32 %v3681, %v3682
    %v3686 = vadd.f32 %v3683, %v3684
    %v3687 = vadd.f32 %v3685, %v3686
    %v3689 = vrot.slane %v3687, 6
    %v3691 = vadd.f32 %v3154, %v3689
    %v3692 = vxor.u32 %v3691, 2147483648
    %v3693 = vmul.f32 %v3692, 1.442695
    %v3694 = vpow.pop %v3693
    %v3695 = vadd.f32 %v3694, 1.0
    %v3696 = vrcp.pop %v3695
    %v3697 = vmul.f32 1.0, %v3696
    %v3698 = vmul.f32 %v3697, 2.0
    %v3699 = vsub.f32 %v3698, 1.0
    %v3701 = vrot.slane %v3633, 6
    %v3703 = vmul.f32 %v3697, %v3701
    %3705 = vrot.lane.b32.xlu0 %v3699, 112
    %v3706 = vpop.permute.xlu0 %3705
    %v3708 = vmul.f32 %v3697, %v3706
    %3710 = vrot.lane.b32.xlu0 %v3708, 8
    %v3711 = vpop.permute.xlu0 %3710
    %v3713 = vadd.f32 %v3703, %v3711
    %v3714 = vtanh.pop %v3713
    %3716 = vrot.lane.b32.xlu0 %v3714, 16
    %v3717 = vpop.permute.xlu0 %3716
    %v3719 = vmul.f32 %v3697, %v3717
    %3721 = vset.pattern.permute.xlu0 24
    %3722 = vperm.xlu0 %3721, %v3719
    %v3723 = vpop.permute.xlu0 %3722
    %v3725 = vmul.f32 %v3723, %v3170
    %3726 = vset.pattern.permute.xlu0 25
    %3727 = vperm.xlu0 %3726, %v3719
    %v3728 = vpop.permute.xlu0 %3727
    %v3730 = vmul.f32 %v3728, %v3174
    %3731 = vset.pattern.permute.xlu0 26
    %3732 = vperm.xlu0 %3731, %v3719
    %v3733 = vpop.permute.xlu0 %3732
    %v3735 = vmul.f32 %v3733, %v3178
    %3736 = vset.pattern.permute.xlu0 27
    %3737 = vperm.xlu0 %3736, %v3719
    %v3738 = vpop.permute.xlu0 %3737
    %v3740 = vmul.f32 %v3738, %v3182
    %3741 = vset.pattern.permute.xlu0 28
    %3742 = vperm.xlu0 %3741, %v3719
    %v3743 = vpop.permute.xlu0 %3742
    %v3745 = vmul.f32 %v3743, %v3186
    %3746 = vset.pattern.permute.xlu0 29
    %3747 = vperm.xlu0 %3746, %v3719
    %v3748 = vpop.permute.xlu0 %3747
    %v3750 = vmul.f32 %v3748, %v3190
    %3751 = vset.pattern.permute.xlu0 30
    %3752 = vperm.xlu0 %3751, %v3719
    %v3753 = vpop.permute.xlu0 %3752
    %v3755 = vmul.f32 %v3753, %v3194
    %3756 = vset.pattern.permute.xlu0 31
    %3757 = vperm.xlu0 %3756, %v3719
    %v3758 = vpop.permute.xlu0 %3757
    %v3760 = vmul.f32 %v3758, %v3198
    %v3761 = vadd.f32 %v3725, %v3730
    %v3762 = vadd.f32 %v3735, %v3740
    %v3763 = vadd.f32 %v3745, %v3750
    %v3764 = vadd.f32 %v3755, %v3760
    %v3765 = vadd.f32 %v3761, %v3762
    %v3766 = vadd.f32 %v3763, %v3764
    %v3767 = vadd.f32 %v3765, %v3766
    %v3769 = vrot.slane %v3767, 6
    %v3771 = vadd.f32 %v3154, %v3769
    %v3772 = vxor.u32 %v3771, 2147483648
    %v3773 = vmul.f32 %v3772, 1.442695
    %v3774 = vpow.pop %v3773
    %v3775 = vadd.f32 %v3774, 1.0
    %v3776 = vrcp.pop %v3775
    %v3777 = vmul.f32 1.0, %v3776
    %v3778 = vmul.f32 %v3777, 2.0
    %v3779 = vsub.f32 %v3778, 1.0
    %v3781 = vrot.slane %v3713, 6
    %v3783 = vmul.f32 %v3777, %v3781
    %3785 = vrot.lane.b32.xlu0 %v3779, 112
    %v3786 = vpop.permute.xlu0 %3785
    %v3788 = vmul.f32 %v3777, %v3786
    %3790 = vrot.lane.b32.xlu0 %v3788, 8
    %v3791 = vpop.permute.xlu0 %3790
    %v3793 = vadd.f32 %v3783, %v3791
    %v3794 = vtanh.pop %v3793
    %3796 = vrot.lane.b32.xlu0 %v3794, 16
    %v3797 = vpop.permute.xlu0 %3796
    %v3799 = vmul.f32 %v3777, %v3797
    %3801 = vset.pattern.permute.xlu0 24
    %3802 = vperm.xlu0 %3801, %v3799
    %v3803 = vpop.permute.xlu0 %3802
    %v3805 = vmul.f32 %v3803, %v3170
    %3806 = vset.pattern.permute.xlu0 25
    %3807 = vperm.xlu0 %3806, %v3799
    %v3808 = vpop.permute.xlu0 %3807
    %v3810 = vmul.f32 %v3808, %v3174
    %3811 = vset.pattern.permute.xlu0 26
    %3812 = vperm.xlu0 %3811, %v3799
    %v3813 = vpop.permute.xlu0 %3812
    %v3815 = vmul.f32 %v3813, %v3178
    %3816 = vset.pattern.permute.xlu0 27
    %3817 = vperm.xlu0 %3816, %v3799
    %v3818 = vpop.permute.xlu0 %3817
    %v3820 = vmul.f32 %v3818, %v3182
    %3821 = vset.pattern.permute.xlu0 28
    %3822 = vperm.xlu0 %3821, %v3799
    %v3823 = vpop.permute.xlu0 %3822
    %v3825 = vmul.f32 %v3823, %v3186
    %3826 = vset.pattern.permute.xlu0 29
    %3827 = vperm.xlu0 %3826, %v3799
    %v3828 = vpop.permute.xlu0 %3827
    %v3830 = vmul.f32 %v3828, %v3190
    %3831 = vset.pattern.permute.xlu0 30
    %3832 = vperm.xlu0 %3831, %v3799
    %v3833 = vpop.permute.xlu0 %3832
    %v3835 = vmul.f32 %v3833, %v3194
    %3836 = vset.pattern.permute.xlu0 31
    %3837 = vperm.xlu0 %3836, %v3799
    %v3838 = vpop.permute.xlu0 %3837
    %v3840 = vmul.f32 %v3838, %v3198
    %v3841 = vadd.f32 %v3805, %v3810
    %v3842 = vadd.f32 %v3815, %v3820
    %v3843 = vadd.f32 %v3825, %v3830
    %v3844 = vadd.f32 %v3835, %v3840
    %v3845 = vadd.f32 %v3841, %v3842
    %v3846 = vadd.f32 %v3843, %v3844
    %v3847 = vadd.f32 %v3845, %v3846
    %v3849 = vrot.slane %v3847, 6
    %v3851 = vadd.f32 %v3159, %v3849
    %v3852 = vxor.u32 %v3851, 2147483648
    %v3853 = vmul.f32 %v3852, 1.442695
    %v3854 = vpow.pop %v3853
    %v3855 = vadd.f32 %v3854, 1.0
    %v3856 = vrcp.pop %v3855
    %v3857 = vmul.f32 1.0, %v3856
    %v3858 = vmul.f32 %v3857, 2.0
    %v3859 = vsub.f32 %v3858, 1.0
    %v3861 = vrot.slane %v3793, 6
    %v3863 = vmul.f32 %v3857, %v3861
    %3865 = vrot.lane.b32.xlu0 %v3859, 112
    %v3866 = vpop.permute.xlu0 %3865
    %v3868 = vmul.f32 %v3857, %v3866
    %3870 = vrot.lane.b32.xlu0 %v3868, 8
    %v3871 = vpop.permute.xlu0 %3870
    %v3873 = vadd.f32 %v3863, %v3871
    %v3874 = vtanh.pop %v3873
    %3876 = vrot.lane.b32.xlu0 %v3874, 16
    %v3877 = vpop.permute.xlu0 %3876
    %v3879 = vmul.f32 %v3857, %v3877
    %3881 = vset.pattern.permute.xlu0 24
    %3882 = vperm.xlu0 %3881, %v3879
    %v3883 = vpop.permute.xlu0 %3882
    %v3885 = vmul.f32 %v3883, %v3170
    %3886 = vset.pattern.permute.xlu0 25
    %3887 = vperm.xlu0 %3886, %v3879
    %v3888 = vpop.permute.xlu0 %3887
    %v3890 = vmul.f32 %v3888, %v3174
    %3891 = vset.pattern.permute.xlu0 26
    %3892 = vperm.xlu0 %3891, %v3879
    %v3893 = vpop.permute.xlu0 %3892
    %v3895 = vmul.f32 %v3893, %v3178
    %3896 = vset.pattern.permute.xlu0 27
    %3897 = vperm.xlu0 %3896, %v3879
    %v3898 = vpop.permute.xlu0 %3897
    %v3900 = vmul.f32 %v3898, %v3182
    %3901 = vset.pattern.permute.xlu0 28
    %3902 = vperm.xlu0 %3901, %v3879
    %v3903 = vpop.permute.xlu0 %3902
    %v3905 = vmul.f32 %v3903, %v3186
    %3906 = vset.pattern.permute.xlu0 29
    %3907 = vperm.xlu0 %3906, %v3879
    %v3908 = vpop.permute.xlu0 %3907
    %v3910 = vmul.f32 %v3908, %v3190
    %3911 = vset.pattern.permute.xlu0 30
    %3912 = vperm.xlu0 %3911, %v3879
    %v3913 = vpop.permute.xlu0 %3912
    %v3915 = vmul.f32 %v3913, %v3194
    %3916 = vset.pattern.permute.xlu0 31
    %3917 = vperm.xlu0 %3916, %v3879
    %v3918 = vpop.permute.xlu0 %3917
    %v3920 = vmul.f32 %v3918, %v3198
    %v3921 = vadd.f32 %v3885, %v3890
    %v3922 = vadd.f32 %v3895, %v3900
    %v3923 = vadd.f32 %v3905, %v3910
    %v3924 = vadd.f32 %v3915, %v3920
    %v3925 = vadd.f32 %v3921, %v3922
    %v3926 = vadd.f32 %v3923, %v3924
    %v3927 = vadd.f32 %v3925, %v3926
    %v3929 = vrot.slane %v3927, 6
    %v3931 = vadd.f32 %v3159, %v3929
    %v3932 = vxor.u32 %v3931, 2147483648
    %v3933 = vmul.f32 %v3932, 1.442695
    %v3934 = vpow.pop %v3933
    %v3935 = vadd.f32 %v3934, 1.0
    %v3936 = vrcp.pop %v3935
    %v3937 = vmul.f32 1.0, %v3936
    %v3938 = vmul.f32 %v3937, 2.0
    %v3939 = vsub.f32 %v3938, 1.0
    %v3941 = vrot.slane %v3873, 6
    %v3943 = vmul.f32 %v3937, %v3941
    %3945 = vrot.lane.b32.xlu0 %v3939, 112
    %v3946 = vpop.permute.xlu0 %3945
    %v3948 = vmul.f32 %v3937, %v3946
    %3950 = vrot.lane.b32.xlu0 %v3948, 8
    %v3951 = vpop.permute.xlu0 %3950
    %v3953 = vadd.f32 %v3943, %v3951
    %v3954 = vtanh.pop %v3953
    %3956 = vrot.lane.b32.xlu0 %v3954, 16
    %v3957 = vpop.permute.xlu0 %3956
    %v3959 = vmul.f32 %v3937, %v3957
    %3961 = vset.pattern.permute.xlu0 24
    %3962 = vperm.xlu0 %3961, %v3959
    %v3963 = vpop.permute.xlu0 %3962
    %v3965 = vmul.f32 %v3963, %v3170
    %3966 = vset.pattern.permute.xlu0 25
    %3967 = vperm.xlu0 %3966, %v3959
    %v3968 = vpop.permute.xlu0 %3967
    %v3970 = vmul.f32 %v3968, %v3174
    %3971 = vset.pattern.permute.xlu0 26
    %3972 = vperm.xlu0 %3971, %v3959
    %v3973 = vpop.permute.xlu0 %3972
    %v3975 = vmul.f32 %v3973, %v3178
    %3976 = vset.pattern.permute.xlu0 27
    %3977 = vperm.xlu0 %3976, %v3959
    %v3978 = vpop.permute.xlu0 %3977
    %v3980 = vmul.f32 %v3978, %v3182
    %3981 = vset.pattern.permute.xlu0 28
    %3982 = vperm.xlu0 %3981, %v3959
    %v3983 = vpop.permute.xlu0 %3982
    %v3985 = vmul.f32 %v3983, %v3186
    %3986 = vset.pattern.permute.xlu0 29
    %3987 = vperm.xlu0 %3986, %v3959
    %v3988 = vpop.permute.xlu0 %3987
    %v3990 = vmul.f32 %v3988, %v3190
    %3991 = vset.pattern.permute.xlu0 30
    %3992 = vperm.xlu0 %3991, %v3959
    %v3993 = vpop.permute.xlu0 %3992
    %v3995 = vmul.f32 %v3993, %v3194
    %3996 = vset.pattern.permute.xlu0 31
    %3997 = vperm.xlu0 %3996, %v3959
    %v3998 = vpop.permute.xlu0 %3997
    %v4000 = vmul.f32 %v3998, %v3198
    %v4001 = vadd.f32 %v3965, %v3970
    %v4002 = vadd.f32 %v3975, %v3980
    %v4003 = vadd.f32 %v3985, %v3990
    %v4004 = vadd.f32 %v3995, %v4000
    %v4005 = vadd.f32 %v4001, %v4002
    %v4006 = vadd.f32 %v4003, %v4004
    %v4007 = vadd.f32 %v4005, %v4006
    %v4009 = vrot.slane %v4007, 6
    %v4011 = vadd.f32 %v3159, %v4009
    %v4012 = vxor.u32 %v4011, 2147483648
    %v4013 = vmul.f32 %v4012, 1.442695
    %v4014 = vpow.pop %v4013
    %v4015 = vadd.f32 %v4014, 1.0
    %v4016 = vrcp.pop %v4015
    %v4017 = vmul.f32 1.0, %v4016
    %v4018 = vmul.f32 %v4017, 2.0
    %v4019 = vsub.f32 %v4018, 1.0
    %v4021 = vrot.slane %v3953, 6
    %v4023 = vmul.f32 %v4017, %v4021
    %4025 = vrot.lane.b32.xlu0 %v4019, 112
    %v4026 = vpop.permute.xlu0 %4025
    %v4028 = vmul.f32 %v4017, %v4026
    %4030 = vrot.lane.b32.xlu0 %v4028, 8
    %v4031 = vpop.permute.xlu0 %4030
    %v4033 = vadd.f32 %v4023, %v4031
    %v4034 = vtanh.pop %v4033
    %4036 = vrot.lane.b32.xlu0 %v4034, 16
    %v4037 = vpop.permute.xlu0 %4036
    %v4039 = vmul.f32 %v4017, %v4037
    %4041 = vset.pattern.permute.xlu0 24
    %4042 = vperm.xlu0 %4041, %v4039
    %v4043 = vpop.permute.xlu0 %4042
    %v4045 = vmul.f32 %v4043, %v3170
    %4046 = vset.pattern.permute.xlu0 25
    %4047 = vperm.xlu0 %4046, %v4039
    %v4048 = vpop.permute.xlu0 %4047
    %v4050 = vmul.f32 %v4048, %v3174
    %4051 = vset.pattern.permute.xlu0 26
    %4052 = vperm.xlu0 %4051, %v4039
    %v4053 = vpop.permute.xlu0 %4052
    %v4055 = vmul.f32 %v4053, %v3178
    %4056 = vset.pattern.permute.xlu0 27
    %4057 = vperm.xlu0 %4056, %v4039
    %v4058 = vpop.permute.xlu0 %4057
    %v4060 = vmul.f32 %v4058, %v3182
    %4061 = vset.pattern.permute.xlu0 28
    %4062 = vperm.xlu0 %4061, %v4039
    %v4063 = vpop.permute.xlu0 %4062
    %v4065 = vmul.f32 %v4063, %v3186
    %4066 = vset.pattern.permute.xlu0 29
    %4067 = vperm.xlu0 %4066, %v4039
    %v4068 = vpop.permute.xlu0 %4067
    %v4070 = vmul.f32 %v4068, %v3190
    %4071 = vset.pattern.permute.xlu0 30
    %4072 = vperm.xlu0 %4071, %v4039
    %v4073 = vpop.permute.xlu0 %4072
    %v4075 = vmul.f32 %v4073, %v3194
    %4076 = vset.pattern.permute.xlu0 31
    %4077 = vperm.xlu0 %4076, %v4039
    %v4078 = vpop.permute.xlu0 %4077
    %v4080 = vmul.f32 %v4078, %v3198
    %v4081 = vadd.f32 %v4045, %v4050
    %v4082 = vadd.f32 %v4055, %v4060
    %v4083 = vadd.f32 %v4065, %v4070
    %v4084 = vadd.f32 %v4075, %v4080
    %v4085 = vadd.f32 %v4081, %v4082
    %v4086 = vadd.f32 %v4083, %v4084
    %v4087 = vadd.f32 %v4085, %v4086
    %v4089 = vrot.slane %v4087, 6
    %v4091 = vadd.f32 %v3159, %v4089
    %v4092 = vxor.u32 %v4091, 2147483648
    %v4093 = vmul.f32 %v4092, 1.442695
    %v4094 = vpow.pop %v4093
    %v4095 = vadd.f32 %v4094, 1.0
    %v4096 = vrcp.pop %v4095
    %v4097 = vmul.f32 1.0, %v4096
    %v4098 = vmul.f32 %v4097, 2.0
    %v4099 = vsub.f32 %v4098, 1.0
    %v4101 = vrot.slane %v4033, 6
    %v4103 = vmul.f32 %v4097, %v4101
    %4105 = vrot.lane.b32.xlu0 %v4099, 112
    %v4106 = vpop.permute.xlu0 %4105
    %v4108 = vmul.f32 %v4097, %v4106
    %4110 = vrot.lane.b32.xlu0 %v4108, 8
    %v4111 = vpop.permute.xlu0 %4110
    %v4113 = vadd.f32 %v4103, %v4111
    %v4114 = vtanh.pop %v4113
    %4116 = vrot.lane.b32.xlu0 %v4114, 16
    %v4117 = vpop.permute.xlu0 %4116
    %v4119 = vmul.f32 %v4097, %v4117
    %4121 = vset.pattern.permute.xlu0 24
    %4122 = vperm.xlu0 %4121, %v4119
    %v4123 = vpop.permute.xlu0 %4122
    %v4125 = vmul.f32 %v4123, %v3170
    %4126 = vset.pattern.permute.xlu0 25
    %4127 = vperm.xlu0 %4126, %v4119
    %v4128 = vpop.permute.xlu0 %4127
    %v4130 = vmul.f32 %v4128, %v3174
    %4131 = vset.pattern.permute.xlu0 26
    %4132 = vperm.xlu0 %4131, %v4119
    %v4133 = vpop.permute.xlu0 %4132
    %v4135 = vmul.f32 %v4133, %v3178
    %4136 = vset.pattern.permute.xlu0 27
    %4137 = vperm.xlu0 %4136, %v4119
    %v4138 = vpop.permute.xlu0 %4137
    %v4140 = vmul.f32 %v4138, %v3182
    %4141 = vset.pattern.permute.xlu0 28
    %4142 = vperm.xlu0 %4141, %v4119
    %v4143 = vpop.permute.xlu0 %4142
    %v4145 = vmul.f32 %v4143, %v3186
    %4146 = vset.pattern.permute.xlu0 29
    %4147 = vperm.xlu0 %4146, %v4119
    %v4148 = vpop.permute.xlu0 %4147
    %v4150 = vmul.f32 %v4148, %v3190
    %4151 = vset.pattern.permute.xlu0 30
    %4152 = vperm.xlu0 %4151, %v4119
    %v4153 = vpop.permute.xlu0 %4152
    %v4155 = vmul.f32 %v4153, %v3194
    %4156 = vset.pattern.permute.xlu0 31
    %4157 = vperm.xlu0 %4156, %v4119
    %v4158 = vpop.permute.xlu0 %4157
    %v4160 = vmul.f32 %v4158, %v3198
    %v4161 = vadd.f32 %v4125, %v4130
    %v4162 = vadd.f32 %v4135, %v4140
    %v4163 = vadd.f32 %v4145, %v4150
    %v4164 = vadd.f32 %v4155, %v4160
    %v4165 = vadd.f32 %v4161, %v4162
    %v4166 = vadd.f32 %v4163, %v4164
    %v4167 = vadd.f32 %v4165, %v4166
    %v4169 = vrot.slane %v4167, 6
    %v4171 = vadd.f32 %v3164, %v4169
    %v4172 = vxor.u32 %v4171, 2147483648
    %v4173 = vmul.f32 %v4172, 1.442695
    %v4174 = vpow.pop %v4173
    %v4175 = vadd.f32 %v4174, 1.0
    %v4176 = vrcp.pop %v4175
    %v4177 = vmul.f32 1.0, %v4176
    %v4178 = vmul.f32 %v4177, 2.0
    %v4179 = vsub.f32 %v4178, 1.0
    %v4181 = vrot.slane %v4113, 6
    %v4183 = vmul.f32 %v4177, %v4181
    %4185 = vrot.lane.b32.xlu0 %v4179, 112
    %v4186 = vpop.permute.xlu0 %4185
    %v4188 = vmul.f32 %v4177, %v4186
    %4190 = vrot.lane.b32.xlu0 %v4188, 8
    %v4191 = vpop.permute.xlu0 %4190
    %v4193 = vadd.f32 %v4183, %v4191
    %v4194 = vtanh.pop %v4193
    %4196 = vrot.lane.b32.xlu0 %v4194, 16
    %v4197 = vpop.permute.xlu0 %4196
    %v4199 = vmul.f32 %v4177, %v4197
    %4201 = vset.pattern.permute.xlu0 24
    %4202 = vperm.xlu0 %4201, %v4199
    %v4203 = vpop.permute.xlu0 %4202
    %v4205 = vmul.f32 %v4203, %v3170
    %4206 = vset.pattern.permute.xlu0 25
    %4207 = vperm.xlu0 %4206, %v4199
    %v4208 = vpop.permute.xlu0 %4207
    %v4210 = vmul.f32 %v4208, %v3174
    %4211 = vset.pattern.permute.xlu0 26
    %4212 = vperm.xlu0 %4211, %v4199
    %v4213 = vpop.permute.xlu0 %4212
    %v4215 = vmul.f32 %v4213, %v3178
    %4216 = vset.pattern.permute.xlu0 27
    %4217 = vperm.xlu0 %4216, %v4199
    %v4218 = vpop.permute.xlu0 %4217
    %v4220 = vmul.f32 %v4218, %v3182
    %4221 = vset.pattern.permute.xlu0 28
    %4222 = vperm.xlu0 %4221, %v4199
    %v4223 = vpop.permute.xlu0 %4222
    %v4225 = vmul.f32 %v4223, %v3186
    %4226 = vset.pattern.permute.xlu0 29
    %4227 = vperm.xlu0 %4226, %v4199
    %v4228 = vpop.permute.xlu0 %4227
    %v4230 = vmul.f32 %v4228, %v3190
    %4231 = vset.pattern.permute.xlu0 30
    %4232 = vperm.xlu0 %4231, %v4199
    %v4233 = vpop.permute.xlu0 %4232
    %v4235 = vmul.f32 %v4233, %v3194
    %4236 = vset.pattern.permute.xlu0 31
    %4237 = vperm.xlu0 %4236, %v4199
    %v4238 = vpop.permute.xlu0 %4237
    %v4240 = vmul.f32 %v4238, %v3198
    %v4241 = vadd.f32 %v4205, %v4210
    %v4242 = vadd.f32 %v4215, %v4220
    %v4243 = vadd.f32 %v4225, %v4230
    %v4244 = vadd.f32 %v4235, %v4240
    %v4245 = vadd.f32 %v4241, %v4242
    %v4246 = vadd.f32 %v4243, %v4244
    %v4247 = vadd.f32 %v4245, %v4246
    %v4249 = vrot.slane %v4247, 6
    %v4251 = vadd.f32 %v3164, %v4249
    %v4252 = vxor.u32 %v4251, 2147483648
    %v4253 = vmul.f32 %v4252, 1.442695
    %v4254 = vpow.pop %v4253
    %v4255 = vadd.f32 %v4254, 1.0
    %v4256 = vrcp.pop %v4255
    %v4257 = vmul.f32 1.0, %v4256
    %v4258 = vmul.f32 %v4257, 2.0
    %v4259 = vsub.f32 %v4258, 1.0
    %v4261 = vrot.slane %v4193, 6
    %v4263 = vmul.f32 %v4257, %v4261
    %4265 = vrot.lane.b32.xlu0 %v4259, 112
    %v4266 = vpop.permute.xlu0 %4265
    %v4268 = vmul.f32 %v4257, %v4266
    %4270 = vrot.lane.b32.xlu0 %v4268, 8
    %v4271 = vpop.permute.xlu0 %4270
    %v4273 = vadd.f32 %v4263, %v4271
    %v4274 = vtanh.pop %v4273
    %4276 = vrot.lane.b32.xlu0 %v4274, 16
    %v4277 = vpop.permute.xlu0 %4276
    %v4279 = vmul.f32 %v4257, %v4277
    %4281 = vset.pattern.permute.xlu0 24
    %4282 = vperm.xlu0 %4281, %v4279
    %v4283 = vpop.permute.xlu0 %4282
    %v4285 = vmul.f32 %v4283, %v3170
    %4286 = vset.pattern.permute.xlu0 25
    %4287 = vperm.xlu0 %4286, %v4279
    %v4288 = vpop.permute.xlu0 %4287
    %v4290 = vmul.f32 %v4288, %v3174
    %4291 = vset.pattern.permute.xlu0 26
    %4292 = vperm.xlu0 %4291, %v4279
    %v4293 = vpop.permute.xlu0 %4292
    %v4295 = vmul.f32 %v4293, %v3178
    %4296 = vset.pattern.permute.xlu0 27
    %4297 = vperm.xlu0 %4296, %v4279
    %v4298 = vpop.permute.xlu0 %4297
    %v4300 = vmul.f32 %v4298, %v3182
    %4301 = vset.pattern.permute.xlu0 28
    %4302 = vperm.xlu0 %4301, %v4279
    %v4303 = vpop.permute.xlu0 %4302
    %v4305 = vmul.f32 %v4303, %v3186
    %4306 = vset.pattern.permute.xlu0 29
    %4307 = vperm.xlu0 %4306, %v4279
    %v4308 = vpop.permute.xlu0 %4307
    %v4310 = vmul.f32 %v4308, %v3190
    %4311 = vset.pattern.permute.xlu0 30
    %4312 = vperm.xlu0 %4311, %v4279
    %v4313 = vpop.permute.xlu0 %4312
    %v4315 = vmul.f32 %v4313, %v3194
    %4316 = vset.pattern.permute.xlu0 31
    %4317 = vperm.xlu0 %4316, %v4279
    %v4318 = vpop.permute.xlu0 %4317
    %v4320 = vmul.f32 %v4318, %v3198
    %v4321 = vadd.f32 %v4285, %v4290
    %v4322 = vadd.f32 %v4295, %v4300
    %v4323 = vadd.f32 %v4305, %v4310
    %v4324 = vadd.f32 %v4315, %v4320
    %v4325 = vadd.f32 %v4321, %v4322
    %v4326 = vadd.f32 %v4323, %v4324
    %v4327 = vadd.f32 %v4325, %v4326
    %v4329 = vrot.slane %v4327, 6
    %v4331 = vadd.f32 %v3164, %v4329
    %v4332 = vxor.u32 %v4331, 2147483648
    %v4333 = vmul.f32 %v4332, 1.442695
    %v4334 = vpow.pop %v4333
    %v4335 = vadd.f32 %v4334, 1.0
    %v4336 = vrcp.pop %v4335
    %v4337 = vmul.f32 1.0, %v4336
    %v4338 = vmul.f32 %v4337, 2.0
    %v4339 = vsub.f32 %v4338, 1.0
    %v4341 = vrot.slane %v4273, 6
    %v4343 = vmul.f32 %v4337, %v4341
    %4345 = vrot.lane.b32.xlu0 %v4339, 112
    %v4346 = vpop.permute.xlu0 %4345
    %v4348 = vmul.f32 %v4337, %v4346
    %4350 = vrot.lane.b32.xlu0 %v4348, 8
    %v4351 = vpop.permute.xlu0 %4350
    %v4353 = vadd.f32 %v4343, %v4351
    %v4354 = vtanh.pop %v4353
    %4356 = vrot.lane.b32.xlu0 %v4354, 16
    %v4357 = vpop.permute.xlu0 %4356
    %v4359 = vmul.f32 %v4337, %v4357
    %4361 = vset.pattern.permute.xlu0 24
    %4362 = vperm.xlu0 %4361, %v4359
    %v4363 = vpop.permute.xlu0 %4362
    %v4365 = vmul.f32 %v4363, %v3170
    %4366 = vset.pattern.permute.xlu0 25
    %4367 = vperm.xlu0 %4366, %v4359
    %v4368 = vpop.permute.xlu0 %4367
    %v4370 = vmul.f32 %v4368, %v3174
    %4371 = vset.pattern.permute.xlu0 26
    %4372 = vperm.xlu0 %4371, %v4359
    %v4373 = vpop.permute.xlu0 %4372
    %v4375 = vmul.f32 %v4373, %v3178
    %4376 = vset.pattern.permute.xlu0 27
    %4377 = vperm.xlu0 %4376, %v4359
    %v4378 = vpop.permute.xlu0 %4377
    %v4380 = vmul.f32 %v4378, %v3182
    %4381 = vset.pattern.permute.xlu0 28
    %4382 = vperm.xlu0 %4381, %v4359
    %v4383 = vpop.permute.xlu0 %4382
    %v4385 = vmul.f32 %v4383, %v3186
    %4386 = vset.pattern.permute.xlu0 29
    %4387 = vperm.xlu0 %4386, %v4359
    %v4388 = vpop.permute.xlu0 %4387
    %v4390 = vmul.f32 %v4388, %v3190
    %4391 = vset.pattern.permute.xlu0 30
    %4392 = vperm.xlu0 %4391, %v4359
    %v4393 = vpop.permute.xlu0 %4392
    %v4395 = vmul.f32 %v4393, %v3194
    %4396 = vset.pattern.permute.xlu0 31
    %4397 = vperm.xlu0 %4396, %v4359
    %v4398 = vpop.permute.xlu0 %4397
    %v4400 = vmul.f32 %v4398, %v3198
    %v4401 = vadd.f32 %v4365, %v4370
    %v4402 = vadd.f32 %v4375, %v4380
    %v4403 = vadd.f32 %v4385, %v4390
    %v4404 = vadd.f32 %v4395, %v4400
    %v4405 = vadd.f32 %v4401, %v4402
    %v4406 = vadd.f32 %v4403, %v4404
    %v4407 = vadd.f32 %v4405, %v4406
    %v4409 = vrot.slane %v4407, 6
    %v4411 = vadd.f32 %v3164, %v4409
    %v4412 = vxor.u32 %v4411, 2147483648
    %v4413 = vmul.f32 %v4412, 1.442695
    %v4414 = vpow.pop %v4413
    %v4415 = vadd.f32 %v4414, 1.0
    %v4416 = vrcp.pop %v4415
    %v4417 = vmul.f32 1.0, %v4416
    %v4418 = vmul.f32 %v4417, 2.0
    %v4419 = vsub.f32 %v4418, 1.0
    %v4421 = vrot.slane %v4353, 6
    %v4423 = vmul.f32 %v4417, %v4421
    %4425 = vrot.lane.b32.xlu0 %v4419, 112
    %v4426 = vpop.permute.xlu0 %4425
    %v4428 = vmul.f32 %v4417, %v4426
    %4430 = vrot.lane.b32.xlu0 %v4428, 8
    %v4431 = vpop.permute.xlu0 %4430
    %v4433 = vadd.f32 %v4423, %v4431
    %v4434 = vtanh.pop %v4433
    %4436 = vrot.lane.b32.xlu0 %v4434, 16
    %v4437 = vpop.permute.xlu0 %4436
    %v4439 = vmul.f32 %v4417, %v4437
    %v4440 = vld [vmem:[%s4] sm:$0xff]
    %v4441 = vld [vmem:[%s5] sm:$0x1]
    %v4443 = vlaneseq
    %v4444 = vshrl.u32 %v4443, 7
    %v4445 = vsub.s32 0, %v4444
    %v4446 = vrot.slane %v4441, %v4445
    %v4449 = vrot.slane %v4439, 6
    %4450 = vrot.lane.b32.xlu0 %v4449, 104
    %v4451 = vpop.permute.xlu0 %4450
    %v4452 = vsel %vm139, %v4451, 0
    %4454 = vmatprep.subr.mxu0 0.0
    %4455 = vmatpush1.msra.mxu0 0.0
    %4456 = vmatprep.subr.mxu0 0.0
    %4457 = vmatpush1.msra.mxu0 0.0
    %4458 = vmatprep.subr.mxu0 0.0
    %4459 = vmatpush1.msra.mxu0 0.0
    %4460 = vmatprep.subr.mxu0 0.0
    %4461 = vmatpush1.msra.mxu0 0.0
    %4462 = vmatprep.subr.mxu0 0.0
    %4463 = vmatpush1.msra.mxu0 0.0
    %4464 = vmatprep.subr.mxu0 0.0
    %4465 = vmatpush1.msra.mxu0 0.0
    %4466 = vmatprep.subr.mxu0 0.0
    %4467 = vmatpush1.msra.mxu0 0.0
    %4468 = vmatprep.subr.mxu0 0.0
    %4469 = vmatpush1.msra.mxu0 0.0
    %4470 = vmatprep.subr.mxu0 0.0
    %4471 = vmatpush1.msra.mxu0 0.0
    %4472 = vmatprep.subr.mxu0 0.0
    %4473 = vmatpush1.msra.mxu0 0.0
    %4474 = vmatprep.subr.mxu0 0.0
    %4475 = vmatpush1.msra.mxu0 0.0
    %4476 = vmatprep.subr.mxu0 0.0
    %4477 = vmatpush1.msra.mxu0 0.0
    %4478 = vmatprep.subr.mxu0 0.0
    %4479 = vmatpush1.msra.mxu0 0.0
    %4480 = vmatprep.subr.mxu0 0.0
    %4481 = vmatpush1.msra.mxu0 0.0
    %4482 = vmatprep.subr.mxu0 0.0
    %4483 = vmatpush1.msra.mxu0 0.0
    %4484 = vmatprep.subr.mxu0 0.0
    %4485 = vmatpush1.msra.mxu0 %v4440
    %4486 = vmatprep.subr.mxu0 0.0
    %4487 = vmatpush2.msra.mxu0 0.0
    %4488 = vmatprep.subr.mxu0 0.0
    %4489 = vmatpush2.msra.mxu0 0.0
    %4490 = vmatprep.subr.mxu0 0.0
    %4491 = vmatpush2.msra.mxu0 0.0
    %4492 = vmatprep.subr.mxu0 0.0
    %4493 = vmatpush2.msra.mxu0 0.0
    %4494 = vmatprep.subr.mxu0 0.0
    %4495 = vmatpush2.msra.mxu0 0.0
    %4496 = vmatprep.subr.mxu0 0.0
    %4497 = vmatpush2.msra.mxu0 0.0
    %4498 = vmatprep.subr.mxu0 0.0
    %4499 = vmatpush2.msra.mxu0 0.0
    %4500 = vmatprep.subr.mxu0 0.0
    %4501 = vmatpush2.msra.mxu0 0.0
    %4502 = vmatprep.subr.mxu0 0.0
    %4503 = vmatpush2.msra.mxu0 0.0
    %4504 = vmatprep.subr.mxu0 0.0
    %4505 = vmatpush2.msra.mxu0 0.0
    %4506 = vmatprep.subr.mxu0 0.0
    %4507 = vmatpush2.msra.mxu0 0.0
    %4508 = vmatprep.subr.mxu0 0.0
    %4509 = vmatpush2.msra.mxu0 0.0
    %4510 = vmatprep.subr.mxu0 0.0
    %4511 = vmatpush2.msra.mxu0 0.0
    %4512 = vmatprep.subr.mxu0 0.0
    %4513 = vmatpush2.msra.mxu0 0.0
    %4514 = vmatprep.subr.mxu0 0.0
    %4515 = vmatpush2.msra.mxu0 0.0
    %4516 = vmatprep.subr.mxu0 0.0
    %4517 = vmatpush2.msra.mxu0 0.0
    %4518 = vmatprep.mubr.f32.mxu0 0.0
    %4519 = vmatmul.mubr.f32.gmra.mxu0 %v4452
    %v4520 = vpop.f32.mrf.mxu0
    %v4521 = vadd.f32 %v4446, %v4520
    %v4522 = vpop.f32.mrf.mxu0
    %4523 = vdwg.mxu0
    %v4524 = vmax.f32 %v4521, 0.0
    %v4525 = vld [vmem:[%s6] sm:$0xff]
    %v4526 = vld [vmem:[%s6 + $0x8] sm:$0xff]
    %v4527 = vld [vmem:[%s6 + $0x10] sm:$0xff]
    %v4528 = vld [vmem:[%s6 + $0x18] sm:$0xff]
    %v4529 = vld [vmem:[%s6 + $0x20] sm:$0xff]
    %v4530 = vld [vmem:[%s6 + $0x28] sm:$0xff]
    %v4531 = vld [vmem:[%s6 + $0x30] sm:$0xff]
    %v4532 = vld [vmem:[%s6 + $0x38] sm:$0xff]
    %v4533 = vld [vmem:[%s6 + $0x40] sm:$0xff]
    %v4534 = vld [vmem:[%s6 + $0x48] sm:$0xff]
    %v4535 = vld [vmem:[%s6 + $0x50] sm:$0xff]
    %v4536 = vld [vmem:[%s6 + $0x58] sm:$0xff]
    %v4537 = vld [vmem:[%s6 + $0x60] sm:$0xff]
    %v4538 = vld [vmem:[%s6 + $0x68] sm:$0xff]
    %v4539 = vld [vmem:[%s6 + $0x70] sm:$0xff]
    %v4540 = vld [vmem:[%s6 + $0x78] sm:$0xff]
    %v4541 = vld [vmem:[%s7] sm:$0x1]
    %v4543 = vlaneseq
    %v4544 = vshrl.u32 %v4543, 7
    %v4545 = vsub.s32 0, %v4544
    %v4546 = vrot.slane %v4541, %v4545
    %4548 = vmatprep.subr.mxu0 0.0
    %4549 = vmatpush1.msra.mxu0 %v4540
    %4550 = vmatprep.subr.mxu0 0.0
    %4551 = vmatpush1.msra.mxu0 %v4539
    %4552 = vmatprep.subr.mxu0 0.0
    %4553 = vmatpush1.msra.mxu0 %v4538
    %4554 = vmatprep.subr.mxu0 0.0
    %4555 = vmatpush1.msra.mxu0 %v4537
    %4556 = vmatprep.subr.mxu0 0.0
    %4557 = vmatpush1.msra.mxu0 %v4536
    %4558 = vmatprep.subr.mxu0 0.0
    %4559 = vmatpush1.msra.mxu0 %v4535
    %4560 = vmatprep.subr.mxu0 0.0
    %4561 = vmatpush1.msra.mxu0 %v4534
    %4562 = vmatprep.subr.mxu0 0.0
    %4563 = vmatpush1.msra.mxu0 %v4533
    %4564 = vmatprep.subr.mxu0 0.0
    %4565 = vmatpush1.msra.mxu0 %v4532
    %4566 = vmatprep.subr.mxu0 0.0
    %4567 = vmatpush1.msra.mxu0 %v4531
    %4568 = vmatprep.subr.mxu0 0.0
    %4569 = vmatpush1.msra.mxu0 %v4530
    %4570 = vmatprep.subr.mxu0 0.0
    %4571 = vmatpush1.msra.mxu0 %v4529
    %4572 = vmatprep.subr.mxu0 0.0
    %4573 = vmatpush1.msra.mxu0 %v4528
    %4574 = vmatprep.subr.mxu0 0.0
    %4575 = vmatpush1.msra.mxu0 %v4527
    %4576 = vmatprep.subr.mxu0 0.0
    %4577 = vmatpush1.msra.mxu0 %v4526
    %4578 = vmatprep.subr.mxu0 0.0
    %4579 = vmatpush1.msra.mxu0 %v4525
    %4580 = vmatprep.subr.mxu0 0.0
    %4581 = vmatpush2.msra.mxu0 0.0
    %4582 = vmatprep.subr.mxu0 0.0
    %4583 = vmatpush2.msra.mxu0 0.0
    %4584 = vmatprep.subr.mxu0 0.0
    %4585 = vmatpush2.msra.mxu0 0.0
    %4586 = vmatprep.subr.mxu0 0.0
    %4587 = vmatpush2.msra.mxu0 0.0
    %4588 = vmatprep.subr.mxu0 0.0
    %4589 = vmatpush2.msra.mxu0 0.0
    %4590 = vmatprep.subr.mxu0 0.0
    %4591 = vmatpush2.msra.mxu0 0.0
    %4592 = vmatprep.subr.mxu0 0.0
    %4593 = vmatpush2.msra.mxu0 0.0
    %4594 = vmatprep.subr.mxu0 0.0
    %4595 = vmatpush2.msra.mxu0 0.0
    %4596 = vmatprep.subr.mxu0 0.0
    %4597 = vmatpush2.msra.mxu0 0.0
    %4598 = vmatprep.subr.mxu0 0.0
    %4599 = vmatpush2.msra.mxu0 0.0
    %4600 = vmatprep.subr.mxu0 0.0
    %4601 = vmatpush2.msra.mxu0 0.0
    %4602 = vmatprep.subr.mxu0 0.0
    %4603 = vmatpush2.msra.mxu0 0.0
    %4604 = vmatprep.subr.mxu0 0.0
    %4605 = vmatpush2.msra.mxu0 0.0
    %4606 = vmatprep.subr.mxu0 0.0
    %4607 = vmatpush2.msra.mxu0 0.0
    %4608 = vmatprep.subr.mxu0 0.0
    %4609 = vmatpush2.msra.mxu0 0.0
    %4610 = vmatprep.subr.mxu0 0.0
    %4611 = vmatpush2.msra.mxu0 0.0
    %4612 = vmatprep.mubr.f32.mxu0 0.0
    %4613 = vmatmul.mubr.f32.gmra.mxu0 %v4524
    %v4614 = vpop.f32.mrf.mxu0
    %v4615 = vadd.f32 %v4546, %v4614
    %v4616 = vpop.f32.mrf.mxu0
    %4617 = vdwg.mxu0
    %vm4618 = vcmask 33792
    %v4619 = vsel %vm4618, %v4615, -inf
    %4620 = vmax.xlane.f32.xlu0 %v4619
    %v4621 = vpop.xlane.xlu0 %4620
    %v4622 = vsub.f32 %v4615, %v4621
    %v4623 = vmul.f32 %v4622, 1.442695
    %v4624 = vpow.pop %v4623
    %v4625 = vsel %vm4618, %v4624, 0.0
    %4626 = vadd.xlane.f32.xlu0 %v4625
    %v4627 = vpop.xlane.xlu0 %4626
    %v4628 = vlog2.pop %v4627
    %v4629 = vmul.f32 %v4628, 0.6931472
    %v4630 = vsub.f32 %v4622, %v4629
    %4631 = vst.msk [vmem:[#allocation2] sm:$0x3] %vm4618, %v4630
    // Predicated region
    $region34: #{tpu_custom_call.1} parent=1 // pred_check
      _
    $region35: #{tpu_custom_call.1} parent=1 // pred_check_branch
      %4633 = sbr.rel (0) target = $region37
    $region36: #{tpu_custom_call.1} parent=1 // pred_region
      %s4635 = ssub.s32 32, 32
      %4636 = vsyncadd [#allocation3], %s4635
      %s4638 = sshll.u32 [#allocation2], 4
      %s4639 = int_to_ptr.vmem [resolvable:$true] %s4638
      %4641 = dma.vmem_to_hbm [thread:$0]  %s4639, 32, %s8, [#allocation3]
    $region37: #{tpu_custom_call.1} parent=1 // pred_fallthru
      _
    // Predicated region
    $region38: #{tpu_custom_call.1} parent=1 // pred_check
      _
    $region39: #{tpu_custom_call.1} parent=1 // pred_check_branch
      %4643 = sbr.rel (0) target = $region41
    $region40: #{tpu_custom_call.1} parent=1 // pred_region
      %4644 = dma.done [#allocation3], 32
    $region41: #{tpu_custom_call.1} parent=1 // pred_fallthru
      _
    %4645 = vsyncpa [#allocation3], 1

</llo_original>
